<compile_context>
chip_gen: v7x
topology: tpu7x:2x2x1
jax: 0.10.0
libtpu: 0.0.40
codegen_flags: <defaults>
</compile_context>

<pallas_src>
import functools

import numpy as np
import jax
import jax.numpy as jnp
from jax.experimental import pallas as pl
from jax.experimental.pallas import tpu as pltpu

_TAPS = tuple((kh, kw) for kh in range(3) for kw in range(3))   # tap index t = kh*3 + kw


def _policy_fwd_kernel(p1_ref, w1t_ref, b1_ref, w2t_ref, b2_ref, w3t_ref,
                       masks_ref, base_ref, sel_ref, o_ref, col2_ref,
                       *, H, W, nb, b3_eff):
    """conv1 -> LeakyReLU -> conv2 -> LeakyReLU -> 1-ch conv3 -> action gather.

    Layout: channels on sublanes, flattened (batch*H*W) positions on lanes, so a
    3x3 tap is a static lane roll + edge mask instead of a tile-crossing slice.
    """
    HW = H * W
    M = nb * HW
    C1 = 128

    def shifted_lanes(x, delta):
        # column q of the result holds column (q + delta) mod M of x.
        if delta == 0:
            return x
        return pltpu.roll(x, (-delta) % M, axis=1)

    # ---- conv1: one K=(9*Cin) bf16 MXU matmul on wrapper-built im2col patches
    h1 = jax.lax.dot_general(w1t_ref[...], p1_ref[...],
                             (((1,), (0,)), ((), ())),
                             preferred_element_type=jnp.float32)          # (128, M) f32
    h1 = h1 + b1_ref[...]                                                 # (128,1) bcast
    h1 = jnp.where(h1 >= 0.0, h1, 0.01 * h1)                              # LeakyReLU(0.01)

    # ---- conv2: build the (9*128, M) im2col once via masked f32 lane rolls,
    #      cast to bf16 on the aligned store, then ONE K=1152 matmul ----------
    for t, (kh, kw) in enumerate(_TAPS):
        delta = (kh - 1) * W + (kw - 1)
        shifted = shifted_lanes(h1, delta)                                # XLU lane roll
        if delta != 0:
            valid = masks_ref[t:t + 1, :] > 0.5                           # (1, M) bcast
            shifted = jnp.where(valid, shifted, 0.0)
        col2_ref[t * C1:(t + 1) * C1, :] = shifted.astype(jnp.bfloat16)

    h2 = jax.lax.dot_general(w2t_ref[...], col2_ref[...],
                             (((1,), (0,)), ((), ())),
                             preferred_element_type=jnp.float32)          # (256, M) f32
    h2 = h2 + b2_ref[...]
    h2 = jnp.where(h2 >= 0.0, h2, 0.01 * h2)
    h2_bf = h2.astype(jnp.bfloat16)

    # ---- conv3 head (1 output channel, delta_scale pre-folded into w3/b3):
    #      contract channels first with one small (16,256)x(256,M) matmul, then
    #      combine the 9 taps with cheap (1, M) rolls + masks -----------------
    tmat = jax.lax.dot_general(w3t_ref[...], h2_bf,
                               (((1,), (0,)), ((), ())),
                               preferred_element_type=jnp.float32)        # (16, M) f32
    head = jnp.full((1, M), b3_eff, jnp.float32)
    for t, (kh, kw) in enumerate(_TAPS):
        delta = (kh - 1) * W + (kw - 1)
        row = shifted_lanes(tmat[t:t + 1, :], delta)                      # (1, M)
        if delta != 0:
            row = jnp.where(masks_ref[t:t + 1, :] > 0.5, row, 0.0)
        head = head + row

    # ---- epilogue + valid-actuator gather (gainCL pre-folded into sel) ------
    # head already equals delta_scale * mean2D; sel holds gainCL at one-hot spots.
    full = base_ref[...] + head                                           # (1, M) f32
    for b in range(nb):                                                   # lane-aligned slices
        seg = full[:, b * HW:(b + 1) * HW]                                # (1, HW)
        o_ref[b:b + 1, :] = jax.lax.dot_general(
            seg, sel_ref[...], (((1,), (0,)), ((), ())),
            preferred_element_type=jnp.float32)


def _reference_forward(state, W1, b1, W2, b2, W3, b3, xvalid, yvalid, delta_scale, gain):
    """Pure-JAX f32 reference of PolicyNet.forward (for the in-script check)."""
    dn = ('NCHW', 'OIHW', 'NCHW')
    prec = jax.lax.Precision.HIGHEST

    def conv(x, w, b):
        y = jax.lax.conv_general_dilated(x, w, (1, 1), ((1, 1), (1, 1)),
                                         dimension_numbers=dn, precision=prec)
        return y + b.reshape(1, -1, 1, 1)

    h = jax.nn.leaky_relu(conv(state, W1, b1), 0.01)
    h = jax.nn.leaky_relu(conv(h, W2, b2), 0.01)
    mean2d = conv(h, W3, b3)[:, 0]                                        # (N, H, W)
    mean_vec = mean2d[:, xvalid, yvalid]
    base = state[:, 0, xvalid, yvalid]
    return (base + delta_scale * mean_vec) * gain, mean_vec


class PolicyNetPallas:
    """Pallas/JAX port of PolicyNet.forward (deterministic synthetic weights)."""

    def __init__(self, state_dim, nValidAct, xvalid, yvalid, gainCL=0.5, *, key):
        cin, H, W = state_dim
        self.C, self.H, self.W = int(cin), int(H), int(W)
        k1, k2, k3 = jax.random.split(key, 3)

        def conv_params(kk, c_in, c_out):
            kw_, kb_ = jax.random.split(kk)
            bound = 1.0 / np.sqrt(3 * 3 * c_in)
            w = jax.random.uniform(kw_, (c_out, c_in, 3, 3), jnp.float32, -bound, bound)
            b = jax.random.uniform(kb_, (c_out,), jnp.float32, -bound, bound)
            return w, b

        # f32 "master" weights (OIHW, PyTorch layout) — also used by the reference.
        self.W1f, self.b1f = conv_params(k1, cin, 128)
        self.W2f, self.b2f = conv_params(k2, 128, 256)
        self.W3f, self.b3f = conv_params(k3, 256, 1)

        self.delta_scale = 0.001
        self.gainCL = float(gainCL)
        self.log_std = jnp.ones((nValidAct,), jnp.float32) * 1e-6   # unused by forward()

        # Kernel-side parameter layouts (bf16 for the MXU, f32 biases).
        K1 = 9 * self.C
        self.K1 = K1
        self.K1p = ((K1 + 7) // 8) * 8
        w1t = self.W1f.transpose(0, 2, 3, 1).reshape(128, K1)       # (co, (kh,kw,ci))
        w1t = jnp.pad(w1t, ((0, 0), (0, self.K1p - K1)))
        self.w1t = w1t.astype(jnp.bfloat16)
        self.b1c = self.b1f.reshape(128, 1)

        self.w2t = self.W2f.transpose(0, 2, 3, 1).reshape(256, 9 * 128).astype(jnp.bfloat16)
        self.b2c = self.b2f.reshape(256, 1)

        w3t = self.W3f[0].transpose(1, 2, 0).reshape(9, 256) * self.delta_scale
        self.w3t = jnp.pad(w3t, ((0, 16 - 9), (0, 0))).astype(jnp.bfloat16)
        self.b3_eff = float(self.b3f[0]) * self.delta_scale

        # One-hot gather matrix with gainCL folded in: action = (base + head) @ sel.
        # mean2D[:, xvalid, yvalid] => xvalid indexes rows (H), yvalid columns (W).
        self.nValidAct = int(nValidAct)
        self.A_pad = max(128, ((self.nValidAct + 127) // 128) * 128)
        xv = np.asarray(xvalid, np.int64)
        yv = np.asarray(yvalid, np.int64)
        flat = xv * W + yv
        sel = np.zeros((H * W, self.A_pad), np.float32)
        sel[flat, np.arange(self.nValidAct)] = float(gainCL)
        self.sel = jnp.asarray(sel)

        self._fwd = jax.jit(self._forward_impl)

    def _tap_masks(self, n):
        """(9, n*H*W) f32 validity of the shifted source position for each tap."""
        H, W = self.H, self.W
        q = np.arange(n * H * W)
        y = (q // W) % H
        x = q % W
        masks = np.zeros((9, n * H * W), np.float32)
        for t, (kh, kw) in enumerate(_TAPS):
            dh, dw = kh - 1, kw - 1
            valid = (y + dh >= 0) & (y + dh < H) & (x + dw >= 0) & (x + dw < W)
            masks[t] = valid.astype(np.float32)
        return jnp.asarray(masks)

    def _forward_impl(self, state_nchw):
        N, C, H, W = state_nchw.shape
        HW = H * W
        M = N * HW
        x = state_nchw.astype(jnp.float32)

        # conv1 im2col patches, transposed to (K1p, N*H*W), bf16 — built by XLA in
        # the wrapper (~73 KB) so the kernel's conv1 is one lane-dense K=36 matmul.
        xp = jnp.pad(x, ((0, 0), (0, 0), (1, 1), (1, 1)))
        cols = [xp[:, :, kh:kh + H, kw:kw + W] for kh, kw in _TAPS]       # 9 x (N,C,H,W)
        p1 = jnp.stack(cols, axis=1).reshape(N, 9 * C, HW)
        p1 = p1.transpose(1, 0, 2).reshape(9 * C, M)
        p1 = jnp.pad(p1, ((0, self.K1p - self.K1), (0, 0))).astype(jnp.bfloat16)

        base = x[:, 0, :, :].reshape(1, M)                                # lane-dense channel 0
        masks = self._tap_masks(N)

        kern = functools.partial(_policy_fwd_kernel, H=H, W=W, nb=N, b3_eff=self.b3_eff)

        # Whole batch in ONE grid step (M = N*H*W matmul rows): best M-fill and no
        # per-step overhead on single-TC v5e/v6e.  On v7x, split the batch over >=2
        # "parallel" steps and mark constant weights pipeline_mode=pl.Buffered(1).
        out = pl.pallas_call(
            kern,
            out_shape=jax.ShapeDtypeStruct((N, self.A_pad), jnp.float32),
            grid=(1,),
            in_specs=[
                pl.BlockSpec((self.K1p, M), lambda i: (0, 0)),            # conv1 patches
                pl.BlockSpec((128, self.K1p), lambda i: (0, 0)),          # W1 (bf16)
                pl.BlockSpec((128, 1), lambda i: (0, 0)),                 # b1
                pl.BlockSpec((256, 9 * 128), lambda i: (0, 0)),           # W2 (bf16)
                pl.BlockSpec((256, 1), lambda i: (0, 0)),                 # b2
                pl.BlockSpec((16, 256), lambda i: (0, 0)),                # W3*delta (bf16)
                pl.BlockSpec((9, M), lambda i: (0, 0)),                   # tap masks
                pl.BlockSpec((1, M), lambda i: (0, 0)),                   # base (chan 0)
                pl.BlockSpec((HW, self.A_pad), lambda i: (0, 0)),         # one-hot*gain
            ],
            out_specs=pl.BlockSpec((N, self.A_pad), lambda i: (0, 0)),
            scratch_shapes=[pltpu.VMEM((9 * 128, M), jnp.bfloat16)],      # conv2 im2col
            compiler_params=pltpu.CompilerParams(dimension_semantics=("arbitrary",)),
        )(p1, self.w1t, self.b1c, self.w2t, self.b2c, self.w3t, masks, base, self.sel)
        return out[:, :self.nValidAct]

    def forward(self, state_nchw):
        return self._fwd(state_nchw)


if __name__ == "__main__":
    key = jax.random.PRNGKey(0)
    k_state, k_net = jax.random.split(key)

    # Small shapes consistent with the module: batch=2, channels=4, spatial=16x16.
    N, C, H, W = 2, 4, 16, 16
    state = jax.random.normal(k_state, (N, C, H, W), jnp.float32)

    # Valid actuator positions: circular pupil mask on the 16x16 grid (deterministic).
    yy, xx = np.mgrid[0:H, 0:W]
    pupil = np.sqrt((xx - (W - 1) / 2) ** 2 + (yy - (H - 1) / 2) ** 2) <= 6.5
    xvalid, yvalid = np.nonzero(pupil)
    nValidAct = len(xvalid)

    net = PolicyNetPallas((C, H, W), nValidAct, xvalid, yvalid, gainCL=0.5, key=k_net)
    action = net.forward(state)
    jax.block_until_ready(action)
    assert action.shape == (N, nValidAct)

    # Correctness vs. a pure-JAX f32 reference (kernel conv path runs bf16 on the MXU,
    # so tolerances are set for bf16 rounding; they still flag any layout/shift bug).
    ref_action, ref_mean = _reference_forward(
        state, net.W1f, net.b1f, net.W2f, net.b2f, net.W3f, net.b3f,
        xvalid, yvalid, net.delta_scale, net.gainCL)
    act = np.asarray(jax.block_until_ready(action))
    ref_action = np.asarray(jax.block_until_ready(ref_action))
    ref_mean = np.asarray(ref_mean)
    np.testing.assert_allclose(act, ref_action, rtol=1e-3, atol=1e-4)
    base_valid = np.asarray(state)[:, 0][:, xvalid, yvalid]
    mean_from_kernel = (act / net.gainCL - base_valid) / net.delta_scale
    np.testing.assert_allclose(mean_from_kernel, ref_mean, rtol=0.1, atol=0.02)

    print("KERNEL_OK")
</pallas_src>

<mosaic_0001>
module attributes {stable_mosaic.version = 11 : i64} {
  func.func @_policy_fwd_kernel(%arg0: i32, %arg1: memref<40x512xbf16, #tpu.memory_space<vmem>>, %arg2: memref<128x40xbf16, #tpu.memory_space<vmem>>, %arg3: memref<128x1xf32, #tpu.memory_space<vmem>>, %arg4: memref<256x1152xbf16, #tpu.memory_space<vmem>>, %arg5: memref<256x1xf32, #tpu.memory_space<vmem>>, %arg6: memref<16x256xbf16, #tpu.memory_space<vmem>>, %arg7: memref<9x512xf32, #tpu.memory_space<vmem>>, %arg8: memref<1x512xf32, #tpu.memory_space<vmem>>, %arg9: memref<256x128xf32, #tpu.memory_space<vmem>>, %arg10: memref<2x128xf32, #tpu.memory_space<vmem>>, %arg11: memref<1152x512xbf16, #tpu.memory_space<vmem>>) attributes {dimension_semantics = [#tpu.dimension_semantics<arbitrary>], iteration_bounds = array<i64: 1>, scalar_prefetch = 0 : i64, scratch_operands = 1 : i64, tpu.core_type = #tpu.core_type<tc>, window_params = [{pipeline_mode = #tpu.pipeline_mode<synchronous>, transform_indices = @transform_0, window_bounds = array<i64: 40, 512>}, {pipeline_mode = #tpu.pipeline_mode<synchronous>, transform_indices = @transform_1, window_bounds = array<i64: 128, 40>}, {pipeline_mode = #tpu.pipeline_mode<synchronous>, transform_indices = @transform_2, window_bounds = array<i64: 128, 1>}, {pipeline_mode = #tpu.pipeline_mode<synchronous>, transform_indices = @transform_3, window_bounds = array<i64: 256, 1152>}, {pipeline_mode = #tpu.pipeline_mode<synchronous>, transform_indices = @transform_4, window_bounds = array<i64: 256, 1>}, {pipeline_mode = #tpu.pipeline_mode<synchronous>, transform_indices = @transform_5, window_bounds = array<i64: 16, 256>}, {pipeline_mode = #tpu.pipeline_mode<synchronous>, transform_indices = @transform_6, window_bounds = array<i64: 9, 512>}, {pipeline_mode = #tpu.pipeline_mode<synchronous>, transform_indices = @transform_7, window_bounds = array<i64: 1, 512>}, {pipeline_mode = #tpu.pipeline_mode<synchronous>, transform_indices = @transform_8, window_bounds = array<i64: 256, 128>}, {pipeline_mode = #tpu.pipeline_mode<synchronous>, transform_indices = @transform_9, window_bounds = array<i64: 2, 128>}]} {
    %c0 = arith.constant 0 : index
    %c0_0 = arith.constant 0 : index
    %0 = vector.load %arg2[%c0, %c0_0] : memref<128x40xbf16, #tpu.memory_space<vmem>>, vector<128x40xbf16>
    %c0_1 = arith.constant 0 : index
    %c0_2 = arith.constant 0 : index
    %1 = vector.load %arg1[%c0_1, %c0_2] : memref<40x512xbf16, #tpu.memory_space<vmem>>, vector<40x512xbf16>
    %cst = arith.constant dense<0.000000e+00> : vector<128x512xf32>
    %2 = tpu.matmul %0, %1, %cst {dimension_numbers = #tpu.dot_dimension_numbers<[1], [0], [0], [1], [0, 0, 1, 1], [], []>} : vector<128x40xbf16>, vector<40x512xbf16>, vector<128x512xf32> -> vector<128x512xf32>
    %c0_3 = arith.constant 0 : index
    %c0_4 = arith.constant 0 : index
    %3 = vector.load %arg3[%c0_3, %c0_4] : memref<128x1xf32, #tpu.memory_space<vmem>>, vector<128x1xf32>
    %4 = vector.broadcast %3 : vector<128x1xf32> to vector<128x512xf32>
    %5 = arith.addf %2, %4 : vector<128x512xf32>
    %cst_5 = arith.constant 0.000000e+00 : f32
    %6 = vector.broadcast %cst_5 : f32 to vector<128x512xf32>
    %7 = arith.cmpf oge, %5, %6 : vector<128x512xf32>
    %cst_6 = arith.constant 0.00999999977 : f32
    %8 = vector.broadcast %cst_6 : f32 to vector<128x512xf32>
    %9 = arith.mulf %8, %5 : vector<128x512xf32>
    %10 = arith.select %7, %5, %9 : vector<128x512xi1>, vector<128x512xf32>
    %c17_i32 = arith.constant 17 : i32
    %11 = tpu.dynamic_rotate %10 by %c17_i32 dim 1 : vector<128x512xf32>, i32 -> vector<128x512xf32>
    %c0_7 = arith.constant 0 : index
    %c0_8 = arith.constant 0 : index
    %12 = vector.load %arg7[%c0_7, %c0_8] : memref<9x512xf32, #tpu.memory_space<vmem>>, vector<1x512xf32>
    %cst_9 = arith.constant 5.000000e-01 : f32
    %13 = vector.broadcast %cst_9 : f32 to vector<1x512xf32>
    %14 = arith.cmpf ogt, %12, %13 : vector<1x512xf32>
    %cst_10 = arith.constant 0.000000e+00 : f32
    %15 = vector.shape_cast %14 : vector<1x512xi1> to vector<1x512xi1>
    %16 = vector.broadcast %15 : vector<1x512xi1> to vector<128x512xi1>
    %17 = vector.broadcast %cst_10 : f32 to vector<128x512xf32>
    %18 = arith.select %16, %11, %17 : vector<128x512xi1>, vector<128x512xf32>
    %19 = arith.truncf %18 : vector<128x512xf32> to vector<128x512xbf16>
    %c0_11 = arith.constant 0 : index
    %c0_12 = arith.constant 0 : index
    %20 = vector.load %arg11[%c0_11, %c0_12] : memref<1152x512xbf16, #tpu.memory_space<vmem>>, vector<128x512xbf16>
    tpu.vector_store %arg11[%c0_11, %c0_12], %19 {strides = array<i32>} : memref<1152x512xbf16, #tpu.memory_space<vmem>>, vector<128x512xbf16>,
    %c16_i32 = arith.constant 16 : i32
    %21 = tpu.dynamic_rotate %10 by %c16_i32 dim 1 : vector<128x512xf32>, i32 -> vector<128x512xf32>
    %c1 = arith.constant 1 : index
    %c0_13 = arith.constant 0 : index
    %22 = vector.load %arg7[%c1, %c0_13] : memref<9x512xf32, #tpu.memory_space<vmem>>, vector<1x512xf32>
    %cst_14 = arith.constant 5.000000e-01 : f32
    %23 = vector.broadcast %cst_14 : f32 to vector<1x512xf32>
    %24 = arith.cmpf ogt, %22, %23 : vector<1x512xf32>
    %cst_15 = arith.constant 0.000000e+00 : f32
    %25 = vector.shape_cast %24 : vector<1x512xi1> to vector<1x512xi1>
    %26 = vector.broadcast %25 : vector<1x512xi1> to vector<128x512xi1>
    %27 = vector.broadcast %cst_15 : f32 to vector<128x512xf32>
    %28 = arith.select %26, %21, %27 : vector<128x512xi1>, vector<128x512xf32>
    %29 = arith.truncf %28 : vector<128x512xf32> to vector<128x512xbf16>
    %c128 = arith.constant 128 : index
    %c0_16 = arith.constant 0 : index
    %30 = vector.load %arg11[%c128, %c0_16] : memref<1152x512xbf16, #tpu.memory_space<vmem>>, vector<128x512xbf16>
    tpu.vector_store %arg11[%c128, %c0_16], %29 {strides = array<i32>} : memref<1152x512xbf16, #tpu.memory_space<vmem>>, vector<128x512xbf16>,
    %c15_i32 = arith.constant 15 : i32
    %31 = tpu.dynamic_rotate %10 by %c15_i32 dim 1 : vector<128x512xf32>, i32 -> vector<128x512xf32>
    %c2 = arith.constant 2 : index
    %c0_17 = arith.constant 0 : index
    %32 = vector.load %arg7[%c2, %c0_17] : memref<9x512xf32, #tpu.memory_space<vmem>>, vector<1x512xf32>
    %cst_18 = arith.constant 5.000000e-01 : f32
    %33 = vector.broadcast %cst_18 : f32 to vector<1x512xf32>
    %34 = arith.cmpf ogt, %32, %33 : vector<1x512xf32>
    %cst_19 = arith.constant 0.000000e+00 : f32
    %35 = vector.shape_cast %34 : vector<1x512xi1> to vector<1x512xi1>
    %36 = vector.broadcast %35 : vector<1x512xi1> to vector<128x512xi1>
    %37 = vector.broadcast %cst_19 : f32 to vector<128x512xf32>
    %38 = arith.select %36, %31, %37 : vector<128x512xi1>, vector<128x512xf32>
    %39 = arith.truncf %38 : vector<128x512xf32> to vector<128x512xbf16>
    %c256 = arith.constant 256 : index
    %c0_20 = arith.constant 0 : index
    %40 = vector.load %arg11[%c256, %c0_20] : memref<1152x512xbf16, #tpu.memory_space<vmem>>, vector<128x512xbf16>
    tpu.vector_store %arg11[%c256, %c0_20], %39 {strides = array<i32>} : memref<1152x512xbf16, #tpu.memory_space<vmem>>, vector<128x512xbf16>,
    %c1_i32 = arith.constant 1 : i32
    %41 = tpu.dynamic_rotate %10 by %c1_i32 dim 1 : vector<128x512xf32>, i32 -> vector<128x512xf32>
    %c3 = arith.constant 3 : index
    %c0_21 = arith.constant 0 : index
    %42 = vector.load %arg7[%c3, %c0_21] : memref<9x512xf32, #tpu.memory_space<vmem>>, vector<1x512xf32>
    %cst_22 = arith.constant 5.000000e-01 : f32
    %43 = vector.broadcast %cst_22 : f32 to vector<1x512xf32>
    %44 = arith.cmpf ogt, %42, %43 : vector<1x512xf32>
    %cst_23 = arith.constant 0.000000e+00 : f32
    %45 = vector.shape_cast %44 : vector<1x512xi1> to vector<1x512xi1>
    %46 = vector.broadcast %45 : vector<1x512xi1> to vector<128x512xi1>
    %47 = vector.broadcast %cst_23 : f32 to vector<128x512xf32>
    %48 = arith.select %46, %41, %47 : vector<128x512xi1>, vector<128x512xf32>
    %49 = arith.truncf %48 : vector<128x512xf32> to vector<128x512xbf16>
    %c384 = arith.constant 384 : index
    %c0_24 = arith.constant 0 : index
    %50 = vector.load %arg11[%c384, %c0_24] : memref<1152x512xbf16, #tpu.memory_space<vmem>>, vector<128x512xbf16>
    tpu.vector_store %arg11[%c384, %c0_24], %49 {strides = array<i32>} : memref<1152x512xbf16, #tpu.memory_space<vmem>>, vector<128x512xbf16>,
    %51 = arith.truncf %10 : vector<128x512xf32> to vector<128x512xbf16>
    %c512 = arith.constant 512 : index
    %c0_25 = arith.constant 0 : index
    %52 = vector.load %arg11[%c512, %c0_25] : memref<1152x512xbf16, #tpu.memory_space<vmem>>, vector<128x512xbf16>
    tpu.vector_store %arg11[%c512, %c0_25], %51 {strides = array<i32>} : memref<1152x512xbf16, #tpu.memory_space<vmem>>, vector<128x512xbf16>,
    %c511_i32 = arith.constant 511 : i32
    %53 = tpu.dynamic_rotate %10 by %c511_i32 dim 1 : vector<128x512xf32>, i32 -> vector<128x512xf32>
    %c5 = arith.constant 5 : index
    %c0_26 = arith.constant 0 : index
    %54 = vector.load %arg7[%c5, %c0_26] : memref<9x512xf32, #tpu.memory_space<vmem>>, vector<1x512xf32>
    %cst_27 = arith.constant 5.000000e-01 : f32
    %55 = vector.broadcast %cst_27 : f32 to vector<1x512xf32>
    %56 = arith.cmpf ogt, %54, %55 : vector<1x512xf32>
    %cst_28 = arith.constant 0.000000e+00 : f32
    %57 = vector.shape_cast %56 : vector<1x512xi1> to vector<1x512xi1>
    %58 = vector.broadcast %57 : vector<1x512xi1> to vector<128x512xi1>
    %59 = vector.broadcast %cst_28 : f32 to vector<128x512xf32>
    %60 = arith.select %58, %53, %59 : vector<128x512xi1>, vector<128x512xf32>
    %61 = arith.truncf %60 : vector<128x512xf32> to vector<128x512xbf16>
    %c640 = arith.constant 640 : index
    %c0_29 = arith.constant 0 : index
    %62 = vector.load %arg11[%c640, %c0_29] : memref<1152x512xbf16, #tpu.memory_space<vmem>>, vector<128x512xbf16>
    tpu.vector_store %arg11[%c640, %c0_29], %61 {strides = array<i32>} : memref<1152x512xbf16, #tpu.memory_space<vmem>>, vector<128x512xbf16>,
    %c497_i32 = arith.constant 497 : i32
    %63 = tpu.dynamic_rotate %10 by %c497_i32 dim 1 : vector<128x512xf32>, i32 -> vector<128x512xf32>
    %c6 = arith.constant 6 : index
    %c0_30 = arith.constant 0 : index
    %64 = vector.load %arg7[%c6, %c0_30] : memref<9x512xf32, #tpu.memory_space<vmem>>, vector<1x512xf32>
    %cst_31 = arith.constant 5.000000e-01 : f32
    %65 = vector.broadcast %cst_31 : f32 to vector<1x512xf32>
    %66 = arith.cmpf ogt, %64, %65 : vector<1x512xf32>
    %cst_32 = arith.constant 0.000000e+00 : f32
    %67 = vector.shape_cast %66 : vector<1x512xi1> to vector<1x512xi1>
    %68 = vector.broadcast %67 : vector<1x512xi1> to vector<128x512xi1>
    %69 = vector.broadcast %cst_32 : f32 to vector<128x512xf32>
    %70 = arith.select %68, %63, %69 : vector<128x512xi1>, vector<128x512xf32>
    %71 = arith.truncf %70 : vector<128x512xf32> to vector<128x512xbf16>
    %c768 = arith.constant 768 : index
    %c0_33 = arith.constant 0 : index
    %72 = vector.load %arg11[%c768, %c0_33] : memref<1152x512xbf16, #tpu.memory_space<vmem>>, vector<128x512xbf16>
    tpu.vector_store %arg11[%c768, %c0_33], %71 {strides = array<i32>} : memref<1152x512xbf16, #tpu.memory_space<vmem>>, vector<128x512xbf16>,
    %c496_i32 = arith.constant 496 : i32
    %73 = tpu.dynamic_rotate %10 by %c496_i32 dim 1 : vector<128x512xf32>, i32 -> vector<128x512xf32>
    %c7 = arith.constant 7 : index
    %c0_34 = arith.constant 0 : index
    %74 = vector.load %arg7[%c7, %c0_34] : memref<9x512xf32, #tpu.memory_space<vmem>>, vector<1x512xf32>
    %cst_35 = arith.constant 5.000000e-01 : f32
    %75 = vector.broadcast %cst_35 : f32 to vector<1x512xf32>
    %76 = arith.cmpf ogt, %74, %75 : vector<1x512xf32>
    %cst_36 = arith.constant 0.000000e+00 : f32
    %77 = vector.shape_cast %76 : vector<1x512xi1> to vector<1x512xi1>
    %78 = vector.broadcast %77 : vector<1x512xi1> to vector<128x512xi1>
    %79 = vector.broadcast %cst_36 : f32 to vector<128x512xf32>
    %80 = arith.select %78, %73, %79 : vector<128x512xi1>, vector<128x512xf32>
    %81 = arith.truncf %80 : vector<128x512xf32> to vector<128x512xbf16>
    %c896 = arith.constant 896 : index
    %c0_37 = arith.constant 0 : index
    %82 = vector.load %arg11[%c896, %c0_37] : memref<1152x512xbf16, #tpu.memory_space<vmem>>, vector<128x512xbf16>
    tpu.vector_store %arg11[%c896, %c0_37], %81 {strides = array<i32>} : memref<1152x512xbf16, #tpu.memory_space<vmem>>, vector<128x512xbf16>,
    %c495_i32 = arith.constant 495 : i32
    %83 = tpu.dynamic_rotate %10 by %c495_i32 dim 1 : vector<128x512xf32>, i32 -> vector<128x512xf32>
    %c8 = arith.constant 8 : index
    %c0_38 = arith.constant 0 : index
    %84 = vector.load %arg7[%c8, %c0_38] : memref<9x512xf32, #tpu.memory_space<vmem>>, vector<1x512xf32>
    %cst_39 = arith.constant 5.000000e-01 : f32
    %85 = vector.broadcast %cst_39 : f32 to vector<1x512xf32>
    %86 = arith.cmpf ogt, %84, %85 : vector<1x512xf32>
    %cst_40 = arith.constant 0.000000e+00 : f32
    %87 = vector.shape_cast %86 : vector<1x512xi1> to vector<1x512xi1>
    %88 = vector.broadcast %87 : vector<1x512xi1> to vector<128x512xi1>
    %89 = vector.broadcast %cst_40 : f32 to vector<128x512xf32>
    %90 = arith.select %88, %83, %89 : vector<128x512xi1>, vector<128x512xf32>
    %91 = arith.truncf %90 : vector<128x512xf32> to vector<128x512xbf16>
    %c1024 = arith.constant 1024 : index
    %c0_41 = arith.constant 0 : index
    %92 = vector.load %arg11[%c1024, %c0_41] : memref<1152x512xbf16, #tpu.memory_space<vmem>>, vector<128x512xbf16>
    tpu.vector_store %arg11[%c1024, %c0_41], %91 {strides = array<i32>} : memref<1152x512xbf16, #tpu.memory_space<vmem>>, vector<128x512xbf16>,
    %c0_42 = arith.constant 0 : index
    %c0_43 = arith.constant 0 : index
    %93 = vector.load %arg4[%c0_42, %c0_43] : memref<256x1152xbf16, #tpu.memory_space<vmem>>, vector<256x1152xbf16>
    %c0_44 = arith.constant 0 : index
    %c0_45 = arith.constant 0 : index
    %94 = vector.load %arg11[%c0_44, %c0_45] : memref<1152x512xbf16, #tpu.memory_space<vmem>>, vector<1152x512xbf16>
    %cst_46 = arith.constant dense<0.000000e+00> : vector<256x512xf32>
    %95 = tpu.matmul %93, %94, %cst_46 {dimension_numbers = #tpu.dot_dimension_numbers<[1], [0], [0], [1], [0, 0, 1, 1], [], []>} : vector<256x1152xbf16>, vector<1152x512xbf16>, vector<256x512xf32> -> vector<256x512xf32>
    %c0_47 = arith.constant 0 : index
    %c0_48 = arith.constant 0 : index
    %96 = vector.load %arg5[%c0_47, %c0_48] : memref<256x1xf32, #tpu.memory_space<vmem>>, vector<256x1xf32>
    %97 = vector.broadcast %96 : vector<256x1xf32> to vector<256x512xf32>
    %98 = arith.addf %95, %97 : vector<256x512xf32>
    %cst_49 = arith.constant 0.000000e+00 : f32
    %99 = vector.broadcast %cst_49 : f32 to vector<256x512xf32>
    %100 = arith.cmpf oge, %98, %99 : vector<256x512xf32>
    %cst_50 = arith.constant 0.00999999977 : f32
    %101 = vector.broadcast %cst_50 : f32 to vector<256x512xf32>
    %102 = arith.mulf %101, %98 : vector<256x512xf32>
    %103 = arith.select %100, %98, %102 : vector<256x512xi1>, vector<256x512xf32>
    %104 = arith.truncf %103 : vector<256x512xf32> to vector<256x512xbf16>
    %c0_51 = arith.constant 0 : index
    %c0_52 = arith.constant 0 : index
    %105 = vector.load %arg6[%c0_51, %c0_52] : memref<16x256xbf16, #tpu.memory_space<vmem>>, vector<16x256xbf16>
    %cst_53 = arith.constant dense<0.000000e+00> : vector<16x512xf32>
    %106 = tpu.matmul %105, %104, %cst_53 {dimension_numbers = #tpu.dot_dimension_numbers<[1], [0], [0], [1], [0, 0, 1, 1], [], []>} : vector<16x256xbf16>, vector<256x512xbf16>, vector<16x512xf32> -> vector<16x512xf32>
    %cst_54 = arith.constant 3.18073239E-6 : f32
    %107 = vector.broadcast %cst_54 : f32 to vector<1x512xf32>
    %108 = vector.extract_strided_slice %106 {offsets = [0, 0], sizes = [1, 512], strides = [1, 1]} : vector<16x512xf32> to vector<1x512xf32>
    %c17_i32_55 = arith.constant 17 : i32
    %109 = tpu.dynamic_rotate %108 by %c17_i32_55 dim 1 : vector<1x512xf32>, i32 -> vector<1x512xf32>
    %c0_56 = arith.constant 0 : index
    %c0_57 = arith.constant 0 : index
    %110 = vector.load %arg7[%c0_56, %c0_57] : memref<9x512xf32, #tpu.memory_space<vmem>>, vector<1x512xf32>
    %cst_58 = arith.constant 5.000000e-01 : f32
    %111 = vector.broadcast %cst_58 : f32 to vector<1x512xf32>
    %112 = arith.cmpf ogt, %110, %111 : vector<1x512xf32>
    %cst_59 = arith.constant 0.000000e+00 : f32
    %113 = vector.broadcast %cst_59 : f32 to vector<1x512xf32>
    %114 = arith.select %112, %109, %113 : vector<1x512xi1>, vector<1x512xf32>
    %115 = arith.addf %107, %114 : vector<1x512xf32>
    %116 = vector.extract_strided_slice %106 {offsets = [1, 0], sizes = [1, 512], strides = [1, 1]} : vector<16x512xf32> to vector<1x512xf32>
    %c16_i32_60 = arith.constant 16 : i32
    %117 = tpu.dynamic_rotate %116 by %c16_i32_60 dim 1 : vector<1x512xf32>, i32 -> vector<1x512xf32>
    %c1_61 = arith.constant 1 : index
    %c0_62 = arith.constant 0 : index
    %118 = vector.load %arg7[%c1_61, %c0_62] : memref<9x512xf32, #tpu.memory_space<vmem>>, vector<1x512xf32>
    %cst_63 = arith.constant 5.000000e-01 : f32
    %119 = vector.broadcast %cst_63 : f32 to vector<1x512xf32>
    %120 = arith.cmpf ogt, %118, %119 : vector<1x512xf32>
    %cst_64 = arith.constant 0.000000e+00 : f32
    %121 = vector.broadcast %cst_64 : f32 to vector<1x512xf32>
    %122 = arith.select %120, %117, %121 : vector<1x512xi1>, vector<1x512xf32>
    %123 = arith.addf %115, %122 : vector<1x512xf32>
    %124 = vector.extract_strided_slice %106 {offsets = [2, 0], sizes = [1, 512], strides = [1, 1]} : vector<16x512xf32> to vector<1x512xf32>
    %c15_i32_65 = arith.constant 15 : i32
    %125 = tpu.dynamic_rotate %124 by %c15_i32_65 dim 1 : vector<1x512xf32>, i32 -> vector<1x512xf32>
    %c2_66 = arith.constant 2 : index
    %c0_67 = arith.constant 0 : index
    %126 = vector.load %arg7[%c2_66, %c0_67] : memref<9x512xf32, #tpu.memory_space<vmem>>, vector<1x512xf32>
    %cst_68 = arith.constant 5.000000e-01 : f32
    %127 = vector.broadcast %cst_68 : f32 to vector<1x512xf32>
    %128 = arith.cmpf ogt, %126, %127 : vector<1x512xf32>
    %cst_69 = arith.constant 0.000000e+00 : f32
    %129 = vector.broadcast %cst_69 : f32 to vector<1x512xf32>
    %130 = arith.select %128, %125, %129 : vector<1x512xi1>, vector<1x512xf32>
    %131 = arith.addf %123, %130 : vector<1x512xf32>
    %132 = vector.extract_strided_slice %106 {offsets = [3, 0], sizes = [1, 512], strides = [1, 1]} : vector<16x512xf32> to vector<1x512xf32>
    %c1_i32_70 = arith.constant 1 : i32
    %133 = tpu.dynamic_rotate %132 by %c1_i32_70 dim 1 : vector<1x512xf32>, i32 -> vector<1x512xf32>
    %c3_71 = arith.constant 3 : index
    %c0_72 = arith.constant 0 : index
    %134 = vector.load %arg7[%c3_71, %c0_72] : memref<9x512xf32, #tpu.memory_space<vmem>>, vector<1x512xf32>
    %cst_73 = arith.constant 5.000000e-01 : f32
    %135 = vector.broadcast %cst_73 : f32 to vector<1x512xf32>
    %136 = arith.cmpf ogt, %134, %135 : vector<1x512xf32>
    %cst_74 = arith.constant 0.000000e+00 : f32
    %137 = vector.broadcast %cst_74 : f32 to vector<1x512xf32>
    %138 = arith.select %136, %133, %137 : vector<1x512xi1>, vector<1x512xf32>
    %139 = arith.addf %131, %138 : vector<1x512xf32>
    %140 = vector.extract_strided_slice %106 {offsets = [4, 0], sizes = [1, 512], strides = [1, 1]} : vector<16x512xf32> to vector<1x512xf32>
    %141 = arith.addf %139, %140 : vector<1x512xf32>
    %142 = vector.extract_strided_slice %106 {offsets = [5, 0], sizes = [1, 512], strides = [1, 1]} : vector<16x512xf32> to vector<1x512xf32>
    %c511_i32_75 = arith.constant 511 : i32
    %143 = tpu.dynamic_rotate %142 by %c511_i32_75 dim 1 : vector<1x512xf32>, i32 -> vector<1x512xf32>
    %c5_76 = arith.constant 5 : index
    %c0_77 = arith.constant 0 : index
    %144 = vector.load %arg7[%c5_76, %c0_77] : memref<9x512xf32, #tpu.memory_space<vmem>>, vector<1x512xf32>
    %cst_78 = arith.constant 5.000000e-01 : f32
    %145 = vector.broadcast %cst_78 : f32 to vector<1x512xf32>
    %146 = arith.cmpf ogt, %144, %145 : vector<1x512xf32>
    %cst_79 = arith.constant 0.000000e+00 : f32
    %147 = vector.broadcast %cst_79 : f32 to vector<1x512xf32>
    %148 = arith.select %146, %143, %147 : vector<1x512xi1>, vector<1x512xf32>
    %149 = arith.addf %141, %148 : vector<1x512xf32>
    %150 = vector.extract_strided_slice %106 {offsets = [6, 0], sizes = [1, 512], strides = [1, 1]} : vector<16x512xf32> to vector<1x512xf32>
    %c497_i32_80 = arith.constant 497 : i32
    %151 = tpu.dynamic_rotate %150 by %c497_i32_80 dim 1 : vector<1x512xf32>, i32 -> vector<1x512xf32>
    %c6_81 = arith.constant 6 : index
    %c0_82 = arith.constant 0 : index
    %152 = vector.load %arg7[%c6_81, %c0_82] : memref<9x512xf32, #tpu.memory_space<vmem>>, vector<1x512xf32>
    %cst_83 = arith.constant 5.000000e-01 : f32
    %153 = vector.broadcast %cst_83 : f32 to vector<1x512xf32>
    %154 = arith.cmpf ogt, %152, %153 : vector<1x512xf32>
    %cst_84 = arith.constant 0.000000e+00 : f32
    %155 = vector.broadcast %cst_84 : f32 to vector<1x512xf32>
    %156 = arith.select %154, %151, %155 : vector<1x512xi1>, vector<1x512xf32>
    %157 = arith.addf %149, %156 : vector<1x512xf32>
    %158 = vector.extract_strided_slice %106 {offsets = [7, 0], sizes = [1, 512], strides = [1, 1]} : vector<16x512xf32> to vector<1x512xf32>
    %c496_i32_85 = arith.constant 496 : i32
    %159 = tpu.dynamic_rotate %158 by %c496_i32_85 dim 1 : vector<1x512xf32>, i32 -> vector<1x512xf32>
    %c7_86 = arith.constant 7 : index
    %c0_87 = arith.constant 0 : index
    %160 = vector.load %arg7[%c7_86, %c0_87] : memref<9x512xf32, #tpu.memory_space<vmem>>, vector<1x512xf32>
    %cst_88 = arith.constant 5.000000e-01 : f32
    %161 = vector.broadcast %cst_88 : f32 to vector<1x512xf32>
    %162 = arith.cmpf ogt, %160, %161 : vector<1x512xf32>
    %cst_89 = arith.constant 0.000000e+00 : f32
    %163 = vector.broadcast %cst_89 : f32 to vector<1x512xf32>
    %164 = arith.select %162, %159, %163 : vector<1x512xi1>, vector<1x512xf32>
    %165 = arith.addf %157, %164 : vector<1x512xf32>
    %166 = vector.extract_strided_slice %106 {offsets = [8, 0], sizes = [1, 512], strides = [1, 1]} : vector<16x512xf32> to vector<1x512xf32>
    %c495_i32_90 = arith.constant 495 : i32
    %167 = tpu.dynamic_rotate %166 by %c495_i32_90 dim 1 : vector<1x512xf32>, i32 -> vector<1x512xf32>
    %c8_91 = arith.constant 8 : index
    %c0_92 = arith.constant 0 : index
    %168 = vector.load %arg7[%c8_91, %c0_92] : memref<9x512xf32, #tpu.memory_space<vmem>>, vector<1x512xf32>
    %cst_93 = arith.constant 5.000000e-01 : f32
    %169 = vector.broadcast %cst_93 : f32 to vector<1x512xf32>
    %170 = arith.cmpf ogt, %168, %169 : vector<1x512xf32>
    %cst_94 = arith.constant 0.000000e+00 : f32
    %171 = vector.broadcast %cst_94 : f32 to vector<1x512xf32>
    %172 = arith.select %170, %167, %171 : vector<1x512xi1>, vector<1x512xf32>
    %173 = arith.addf %165, %172 : vector<1x512xf32>
    %c0_95 = arith.constant 0 : index
    %c0_96 = arith.constant 0 : index
    %174 = vector.load %arg8[%c0_95, %c0_96] : memref<1x512xf32, #tpu.memory_space<vmem>>, vector<1x512xf32>
    %175 = arith.addf %174, %173 : vector<1x512xf32>
    %176 = vector.extract_strided_slice %175 {offsets = [0, 0], sizes = [1, 256], strides = [1, 1]} : vector<1x512xf32> to vector<1x256xf32>
    %c0_97 = arith.constant 0 : index
    %c0_98 = arith.constant 0 : index
    %177 = vector.load %arg9[%c0_97, %c0_98] : memref<256x128xf32, #tpu.memory_space<vmem>>, vector<256x128xf32>
    %cst_99 = arith.constant dense<0.000000e+00> : vector<1x128xf32>
    %178 = tpu.matmul %176, %177, %cst_99 {dimension_numbers = #tpu.dot_dimension_numbers<[1], [0], [0], [1], [0, 0, 1, 1], [], []>} : vector<1x256xf32>, vector<256x128xf32>, vector<1x128xf32> -> vector<1x128xf32>
    %c0_100 = arith.constant 0 : index
    %c0_101 = arith.constant 0 : index
    %179 = vector.load %arg10[%c0_100, %c0_101] : memref<2x128xf32, #tpu.memory_space<vmem>>, vector<1x128xf32>
    tpu.vector_store %arg10[%c0_100, %c0_101], %178 {strides = array<i32>} : memref<2x128xf32, #tpu.memory_space<vmem>>, vector<1x128xf32>,
    %180 = vector.extract_strided_slice %175 {offsets = [0, 256], sizes = [1, 256], strides = [1, 1]} : vector<1x512xf32> to vector<1x256xf32>
    %c0_102 = arith.constant 0 : index
    %c0_103 = arith.constant 0 : index
    %181 = vector.load %arg9[%c0_102, %c0_103] : memref<256x128xf32, #tpu.memory_space<vmem>>, vector<256x128xf32>
    %cst_104 = arith.constant dense<0.000000e+00> : vector<1x128xf32>
    %182 = tpu.matmul %180, %181, %cst_104 {dimension_numbers = #tpu.dot_dimension_numbers<[1], [0], [0], [1], [0, 0, 1, 1], [], []>} : vector<1x256xf32>, vector<256x128xf32>, vector<1x128xf32> -> vector<1x128xf32>
    %c1_105 = arith.constant 1 : index
    %c0_106 = arith.constant 0 : index
    %183 = vector.load %arg10[%c1_105, %c0_106] : memref<2x128xf32, #tpu.memory_space<vmem>>, vector<1x128xf32>
    tpu.vector_store %arg10[%c1_105, %c0_106], %182 {strides = array<i32>} : memref<2x128xf32, #tpu.memory_space<vmem>>, vector<1x128xf32>,
    return
  }
  func.func @transform_0(%arg0: i32) -> (i32, i32) {
    %c0_i32 = arith.constant 0 : i32
    %c0_i32_0 = arith.constant 0 : i32
    %c0_i32_1 = arith.constant 0 : i32
    return %c0_i32, %c0_i32_0 : i32, i32
  }
  func.func @transform_1(%arg0: i32) -> (i32, i32) {
    %c0_i32 = arith.constant 0 : i32
    %c0_i32_0 = arith.constant 0 : i32
    %c0_i32_1 = arith.constant 0 : i32
    return %c0_i32, %c0_i32_0 : i32, i32
  }
  func.func @transform_2(%arg0: i32) -> (i32, i32) {
    %c0_i32 = arith.constant 0 : i32
    %c0_i32_0 = arith.constant 0 : i32
    %c0_i32_1 = arith.constant 0 : i32
    return %c0_i32, %c0_i32_0 : i32, i32
  }
  func.func @transform_3(%arg0: i32) -> (i32, i32) {
    %c0_i32 = arith.constant 0 : i32
    %c0_i32_0 = arith.constant 0 : i32
    %c0_i32_1 = arith.constant 0 : i32
    return %c0_i32, %c0_i32_0 : i32, i32
  }
  func.func @transform_4(%arg0: i32) -> (i32, i32) {
    %c0_i32 = arith.constant 0 : i32
    %c0_i32_0 = arith.constant 0 : i32
    %c0_i32_1 = arith.constant 0 : i32
    return %c0_i32, %c0_i32_0 : i32, i32
  }
  func.func @transform_5(%arg0: i32) -> (i32, i32) {
    %c0_i32 = arith.constant 0 : i32
    %c0_i32_0 = arith.constant 0 : i32
    %c0_i32_1 = arith.constant 0 : i32
    return %c0_i32, %c0_i32_0 : i32, i32
  }
  func.func @transform_6(%arg0: i32) -> (i32, i32) {
    %c0_i32 = arith.constant 0 : i32
    %c0_i32_0 = arith.constant 0 : i32
    %c0_i32_1 = arith.constant 0 : i32
    return %c0_i32, %c0_i32_0 : i32, i32
  }
  func.func @transform_7(%arg0: i32) -> (i32, i32) {
    %c0_i32 = arith.constant 0 : i32
    %c0_i32_0 = arith.constant 0 : i32
    %c0_i32_1 = arith.constant 0 : i32
    return %c0_i32, %c0_i32_0 : i32, i32
  }
  func.func @transform_8(%arg0: i32) -> (i32, i32) {
    %c0_i32 = arith.constant 0 : i32
    %c0_i32_0 = arith.constant 0 : i32
    %c0_i32_1 = arith.constant 0 : i32
    return %c0_i32, %c0_i32_0 : i32, i32
  }
  func.func @transform_9(%arg0: i32) -> (i32, i32) {
    %c0_i32 = arith.constant 0 : i32
    %c0_i32_0 = arith.constant 0 : i32
    %c0_i32_1 = arith.constant 0 : i32
    return %c0_i32, %c0_i32_0 : i32, i32
  }
}

</mosaic_0001>

<llo_original>
// kernel: squeeze.1
$region0: #{squeeze.1}
  %s0 = inlined_call_operand.vmem [shape: f32[2,1,16,16], index: 0, kind: input, shape index: {}]
  %s1 = inlined_call_operand.vmem [shape: f32[1,512], index: 1, kind: output, shape index: {}]
  $region1: #{squeeze.1} parent=0
    #allocation0 [shape = 'u8[16384]{0}', space=vmem, size = 0x4000, scoped, tag = 'scoped mem for output reshape']
    %v2 = vld [vmem:[%s0] ss:$8 sm:$0xf]
    %vm3 = vcmask 130048
    %4 = vst.msk [vmem:[#allocation0] ss:$8 sm:$0xf] %vm3, %v2
    %s5 = scalar_lea.vmem %s0, 7
    %v6 = vld [vmem:[%s5] ss:$8 sm:$0xf]
    %7 = vrot.lane.b32.xlu0 %v6, 112
    %v8 = vpop.permute.xlu0 %7
    %vm9 = vcmask 1048448
    %10 = vst.msk [vmem:[#allocation0] ss:$8 sm:$0xf] %vm9, %v8
    %s11 = scalar_lea.vmem %s0, 6
    %v12 = vld [vmem:[%s11] ss:$8 sm:$0xf]
    %13 = vrot.lane.b32.xlu0 %v12, 96
    %v14 = vpop.permute.xlu0 %13
    %vm15 = vcmask 917248
    %16 = vst.msk [vmem:[#allocation0] ss:$8 sm:$0xf] %vm15, %v14
    %s17 = scalar_lea.vmem %s0, 5
    %v18 = vld [vmem:[%s17] ss:$8 sm:$0xf]
    %19 = vrot.lane.b32.xlu0 %v18, 80
    %v20 = vpop.permute.xlu0 %19
    %vm21 = vcmask 786048
    %22 = vst.msk [vmem:[#allocation0] ss:$8 sm:$0xf] %vm21, %v20
    %s23 = scalar_lea.vmem %s0, 4
    %v24 = vld [vmem:[%s23] ss:$8 sm:$0xf]
    %25 = vrot.lane.b32.xlu0 %v24, 64
    %v26 = vpop.permute.xlu0 %25
    %vm27 = vcmask 654848
    %28 = vst.msk [vmem:[#allocation0] ss:$8 sm:$0xf] %vm27, %v26
    %s29 = scalar_lea.vmem %s0, 3
    %v30 = vld [vmem:[%s29] ss:$8 sm:$0xf]
    %31 = vrot.lane.b32.xlu0 %v30, 48
    %v32 = vpop.permute.xlu0 %31
    %vm33 = vcmask 523648
    %34 = vst.msk [vmem:[#allocation0] ss:$8 sm:$0xf] %vm33, %v32
    %s35 = scalar_lea.vmem %s0, 2
    %v36 = vld [vmem:[%s35] ss:$8 sm:$0xf]
    %37 = vrot.lane.b32.xlu0 %v36, 32
    %v38 = vpop.permute.xlu0 %37
    %vm39 = vcmask 392448
    %40 = vst.msk [vmem:[#allocation0] ss:$8 sm:$0xf] %vm39, %v38
    %s41 = scalar_lea.vmem %s0, 1
    %v42 = vld [vmem:[%s41] ss:$8 sm:$0xf]
    %43 = vrot.lane.b32.xlu0 %v42, 16
    %v44 = vpop.permute.xlu0 %43
    %vm45 = vcmask 261248
    %46 = vst.msk [vmem:[#allocation0] ss:$8 sm:$0xf] %vm45, %v44
    %s48 = sshllo.u32 0, 1
    %v50 = vld [vmem:[#allocation0] sm:%s48]
    %s51 = sshllo.u32 0, 1
    %52 = vst [vmem:[%s1] sm:%s51] %v50
    %s53 = scalar_lea.vmem [#allocation0], 8
    %v54 = vld [vmem:[%s53] sm:%s48]
    %s55 = sshllo.u32 0, 1
    %s56 = scalar_lea.vmem %s1, 1
    %57 = vst [vmem:[%s56] sm:%s55] %v54
    %s58 = scalar_lea.vmem [#allocation0], 16
    %v59 = vld [vmem:[%s58] sm:%s48]
    %s60 = sshllo.u32 0, 1
    %s61 = smul.addr 1, 2
    %s62 = scalar_lea.vmem %s1, %s61
    %63 = vst [vmem:[%s62] sm:%s60] %v59
    %s64 = scalar_lea.vmem [#allocation0], 24
    %v65 = vld [vmem:[%s64] sm:%s48]
    %s66 = sshllo.u32 0, 1
    %s67 = smul.addr 1, 3
    %s68 = scalar_lea.vmem %s1, %s67
    %69 = vst [vmem:[%s68] sm:%s66] %v65

// kernel: _forward_impl.1
$region0: #{_forward_impl.1}
  #allocation0 [shape = 'u32[]', space=smem, size = 0x4, offset = 0x4, fixed_abs, tag = 'smem constant byte address 0x4 - core index']
  #allocation1 [shape = 'u32[144,128]{1,0:T(1,128)}', space=vmem, size = 0x12000, scoped, tag = 'internal scratch']
  #allocation2 [shape = 'bf16[1152,512]{1,0:T(16,128)(2,1)}', space=vmem, size = 0x120000, scoped, tag = 'scratch operand']
  %s0 = inlined_call_operand.vmem [shape: bf16[40,512], index: 0, kind: input, shape index: {}]
  %s1 = inlined_call_operand.vmem [shape: bf16[128,40], index: 1, kind: input, shape index: {}]
  %s2 = inlined_call_operand.vmem [shape: f32[128,1], index: 2, kind: input, shape index: {}]
  %s3 = inlined_call_operand.vmem [shape: bf16[256,1152], index: 3, kind: input, shape index: {}]
  %s4 = inlined_call_operand.vmem [shape: f32[256,1], index: 4, kind: input, shape index: {}]
  %s5 = inlined_call_operand.vmem [shape: bf16[16,256], index: 5, kind: input, shape index: {}]
  %s6 = inlined_call_operand.vmem [shape: f32[9,512], index: 6, kind: input, shape index: {}]
  %s7 = inlined_call_operand.vmem [shape: f32[1,512], index: 7, kind: input, shape index: {}]
  %s8 = inlined_call_operand.vmem [shape: f32[256,128], index: 8, kind: input, shape index: {}]
  %s9 = inlined_call_operand.hbm [shape: f32[2,128], index: 9, kind: output, shape index: {}]
  %s10 = sld [smem:[#allocation0]]
  $region46: #{_forward_impl.1} parent=0
    _
  %s12 = ssub.s32 1, %s10
  %s13 = scalar_select 0, %s12, %s10
  $region1: #{_forward_impl.1} parent=0
    #allocation3 [shape = 'u8[1024]{0}', space=vmem, size = 0x400, scoped, tag = 'output window, operand 0, single buffered']
    #allocation4 [shape = 's32[1]{0}', space=sflag, size = 0x4, scoped, tag = 'scoped memory for _forward_impl.1']
    %14 = vsyncpa [#allocation4], 0
    // Predicated region
    $region2: #{_forward_impl.1} parent=1 // pred_check
      _
    $region3: #{_forward_impl.1} parent=1 // pred_check_branch
      %16 = sbr.rel (0) target = $region5
    $region4: #{_forward_impl.1} parent=1 // pred_region
      _
    $region5: #{_forward_impl.1} parent=1 // pred_fallthru
      _
    // Predicated region
    $region6: #{_forward_impl.1} parent=1 // pred_check
      _
    $region7: #{_forward_impl.1} parent=1 // pred_check_branch
      %18 = sbr.rel (0) target = $region9
    $region8: #{_forward_impl.1} parent=1 // pred_region
      _
    $region9: #{_forward_impl.1} parent=1 // pred_fallthru
      _
    // Predicated region
    $region10: #{_forward_impl.1} parent=1 // pred_check
      _
    $region11: #{_forward_impl.1} parent=1 // pred_check_branch
      %20 = sbr.rel (0) target = $region13
    $region12: #{_forward_impl.1} parent=1 // pred_region
      _
    $region13: #{_forward_impl.1} parent=1 // pred_fallthru
      _
    // Predicated region
    $region14: #{_forward_impl.1} parent=1 // pred_check
      _
    $region15: #{_forward_impl.1} parent=1 // pred_check_branch
      %22 = sbr.rel (0) target = $region17
    $region16: #{_forward_impl.1} parent=1 // pred_region
      _
    $region17: #{_forward_impl.1} parent=1 // pred_fallthru
      _
    // Predicated region
    $region18: #{_forward_impl.1} parent=1 // pred_check
      _
    $region19: #{_forward_impl.1} parent=1 // pred_check_branch
      %24 = sbr.rel (0) target = $region21
    $region20: #{_forward_impl.1} parent=1 // pred_region
      _
    $region21: #{_forward_impl.1} parent=1 // pred_fallthru
      _
    // Predicated region
    $region22: #{_forward_impl.1} parent=1 // pred_check
      _
    $region23: #{_forward_impl.1} parent=1 // pred_check_branch
      %26 = sbr.rel (0) target = $region25
    $region24: #{_forward_impl.1} parent=1 // pred_region
      _
    $region25: #{_forward_impl.1} parent=1 // pred_fallthru
      _
    // Predicated region
    $region26: #{_forward_impl.1} parent=1 // pred_check
      _
    $region27: #{_forward_impl.1} parent=1 // pred_check_branch
      %28 = sbr.rel (0) target = $region29
    $region28: #{_forward_impl.1} parent=1 // pred_region
      _
    $region29: #{_forward_impl.1} parent=1 // pred_fallthru
      _
    // Predicated region
    $region30: #{_forward_impl.1} parent=1 // pred_check
      _
    $region31: #{_forward_impl.1} parent=1 // pred_check_branch
      %30 = sbr.rel (0) target = $region33
    $region32: #{_forward_impl.1} parent=1 // pred_region
      _
    $region33: #{_forward_impl.1} parent=1 // pred_fallthru
      _
    // Predicated region
    $region34: #{_forward_impl.1} parent=1 // pred_check
      _
    $region35: #{_forward_impl.1} parent=1 // pred_check_branch
      %32 = sbr.rel (0) target = $region37
    $region36: #{_forward_impl.1} parent=1 // pred_region
      _
    $region37: #{_forward_impl.1} parent=1 // pred_fallthru
      _
    %v34 = vld [vmem:[%s1] sm:$0xf]
    %v35 = vld [vmem:[%s1 + $0x4] sm:$0xf]
    %v36 = vld [vmem:[%s1 + $0x8] sm:$0xf]
    %v37 = vld [vmem:[%s1 + $0xc] sm:$0xf]
    %v38 = vld [vmem:[%s1 + $0x10] sm:$0xf]
    %v39 = vld [vmem:[%s1 + $0x14] sm:$0xf]
    %v40 = vld [vmem:[%s1 + $0x18] sm:$0xf]
    %v41 = vld [vmem:[%s1 + $0x1c] sm:$0xf]
    %v42 = vld [vmem:[%s1 + $0x20] sm:$0xf]
    %v43 = vld [vmem:[%s1 + $0x24] sm:$0xf]
    %v44 = vld [vmem:[%s1 + $0x28] sm:$0xf]
    %v45 = vld [vmem:[%s1 + $0x2c] sm:$0xf]
    %v46 = vld [vmem:[%s1 + $0x30] sm:$0xf]
    %v47 = vld [vmem:[%s1 + $0x34] sm:$0xf]
    %v48 = vld [vmem:[%s1 + $0x38] sm:$0xf]
    %v49 = vld [vmem:[%s1 + $0x3c] sm:$0xf]
    %v50 = vld [vmem:[%s0] sm:$0xff]
    %v51 = vld [vmem:[%s0 + $0x8] sm:$0xff]
    %v52 = vld [vmem:[%s0 + $0x10] sm:$0xff]
    %v53 = vld [vmem:[%s0 + $0x18] sm:$0xff]
    %v54 = vld [vmem:[%s0 + $0x20] sm:$0xff]
    %v55 = vld [vmem:[%s0 + $0x28] sm:$0xff]
    %v56 = vld [vmem:[%s0 + $0x30] sm:$0xff]
    %v57 = vld [vmem:[%s0 + $0x38] sm:$0xff]
    %v58 = vld [vmem:[%s0 + $0x40] sm:$0xff]
    %v59 = vld [vmem:[%s0 + $0x48] sm:$0xff]
    %v60 = vld [vmem:[%s2] sm:$0xff]
    %v61 = vld [vmem:[%s2 + $0x8] sm:$0xff]
    %v62 = vld [vmem:[%s2 + $0x10] sm:$0xff]
    %v63 = vld [vmem:[%s2 + $0x18] sm:$0xff]
    %v64 = vld [vmem:[%s2 + $0x20] sm:$0xff]
    %v65 = vld [vmem:[%s2 + $0x28] sm:$0xff]
    %v66 = vld [vmem:[%s2 + $0x30] sm:$0xff]
    %v67 = vld [vmem:[%s2 + $0x38] sm:$0xff]
    %v68 = vld [vmem:[%s2 + $0x40] sm:$0xff]
    %v69 = vld [vmem:[%s2 + $0x48] sm:$0xff]
    %v70 = vld [vmem:[%s2 + $0x50] sm:$0xff]
    %v71 = vld [vmem:[%s2 + $0x58] sm:$0xff]
    %v72 = vld [vmem:[%s2 + $0x60] sm:$0xff]
    %v73 = vld [vmem:[%s2 + $0x68] sm:$0xff]
    %v74 = vld [vmem:[%s2 + $0x70] sm:$0xff]
    %v75 = vld [vmem:[%s2 + $0x78] sm:$0xff]
    %77 = vset.pattern.permute.xlu0 0
    %78 = vperm.xlu0 %77, %v60
    %v79 = vpop.permute.xlu0 %78
    %82 = vset.pattern.permute.xlu0 0
    %83 = vperm.xlu0 %82, %v61
    %v84 = vpop.permute.xlu0 %83
    %87 = vset.pattern.permute.xlu0 0
    %88 = vperm.xlu0 %87, %v62
    %v89 = vpop.permute.xlu0 %88
    %92 = vset.pattern.permute.xlu0 0
    %93 = vperm.xlu0 %92, %v63
    %v94 = vpop.permute.xlu0 %93
    %97 = vset.pattern.permute.xlu0 0
    %98 = vperm.xlu0 %97, %v64
    %v99 = vpop.permute.xlu0 %98
    %102 = vset.pattern.permute.xlu0 0
    %103 = vperm.xlu0 %102, %v65
    %v104 = vpop.permute.xlu0 %103
    %107 = vset.pattern.permute.xlu0 0
    %108 = vperm.xlu0 %107, %v66
    %v109 = vpop.permute.xlu0 %108
    %112 = vset.pattern.permute.xlu0 0
    %113 = vperm.xlu0 %112, %v67
    %v114 = vpop.permute.xlu0 %113
    %117 = vset.pattern.permute.xlu0 0
    %118 = vperm.xlu0 %117, %v68
    %v119 = vpop.permute.xlu0 %118
    %122 = vset.pattern.permute.xlu0 0
    %123 = vperm.xlu0 %122, %v69
    %v124 = vpop.permute.xlu0 %123
    %127 = vset.pattern.permute.xlu0 0
    %128 = vperm.xlu0 %127, %v70
    %v129 = vpop.permute.xlu0 %128
    %132 = vset.pattern.permute.xlu0 0
    %133 = vperm.xlu0 %132, %v71
    %v134 = vpop.permute.xlu0 %133
    %137 = vset.pattern.permute.xlu0 0
    %138 = vperm.xlu0 %137, %v72
    %v139 = vpop.permute.xlu0 %138
    %142 = vset.pattern.permute.xlu0 0
    %143 = vperm.xlu0 %142, %v73
    %v144 = vpop.permute.xlu0 %143
    %147 = vset.pattern.permute.xlu0 0
    %148 = vperm.xlu0 %147, %v74
    %v149 = vpop.permute.xlu0 %148
    %152 = vset.pattern.permute.xlu0 0
    %153 = vperm.xlu0 %152, %v75
    %v154 = vpop.permute.xlu0 %153
    %v172 = vunpack.c.l.b16 %v34
    %v173 = vunpack.c.l.b16 %v35
    %v174 = vunpack.c.l.b16 %v36
    %v175 = vunpack.c.l.b16 %v37
    %v176 = vunpack.c.l.b16 %v38
    %v177 = vunpack.c.l.b16 %v39
    %v178 = vunpack.c.l.b16 %v40
    %v179 = vunpack.c.l.b16 %v41
    %v180 = vunpack.c.l.b16 %v42
    %v181 = vunpack.c.l.b16 %v43
    %v182 = vunpack.c.l.b16 %v44
    %v183 = vunpack.c.l.b16 %v45
    %v184 = vunpack.c.l.b16 %v46
    %v185 = vunpack.c.l.b16 %v47
    %v186 = vunpack.c.l.b16 %v48
    %v187 = vunpack.c.l.b16 %v49
    %v188 = vpack.c.b16 %v173, %v172
    %v189 = vpack.c.b16 %v175, %v174
    %v190 = vpack.c.b16 %v177, %v176
    %v191 = vpack.c.b16 %v179, %v178
    %v192 = vpack.c.b16 %v181, %v180
    %v193 = vpack.c.b16 %v183, %v182
    %v194 = vpack.c.b16 %v185, %v184
    %v195 = vpack.c.b16 %v187, %v186
    %v206 = vunpack.c.l.b16 %v50
    %v207 = vunpack.c.h.b16 %v50
    %v208 = vunpack.c.l.b16 %v51
    %v209 = vunpack.c.h.b16 %v51
    %v210 = vunpack.c.l.b16 %v52
    %v211 = vunpack.c.h.b16 %v52
    %v212 = vunpack.c.l.b16 %v53
    %v213 = vunpack.c.h.b16 %v53
    %v214 = vunpack.c.l.b16 %v54
    %v215 = vunpack.c.h.b16 %v54
    %v216 = vunpack.c.l.b16 %v55
    %v217 = vunpack.c.h.b16 %v55
    %v218 = vunpack.c.l.b16 %v56
    %v219 = vunpack.c.h.b16 %v56
    %v220 = vunpack.c.l.b16 %v57
    %v221 = vunpack.c.h.b16 %v57
    %v222 = vunpack.c.l.b16 %v58
    %v223 = vunpack.c.h.b16 %v58
    %v224 = vunpack.c.l.b16 %v59
    %v225 = vunpack.c.h.b16 %v59
    %v226 = vpack.c.b16 %v210, %v206
    %v227 = vpack.c.b16 %v211, %v207
    %v228 = vpack.c.b16 %v212, %v208
    %v229 = vpack.c.b16 %v213, %v209
    %v230 = vpack.c.b16 %v218, %v214
    %v231 = vpack.c.b16 %v219, %v215
    %v232 = vpack.c.b16 %v220, %v216
    %v233 = vpack.c.b16 %v221, %v217
    %v234 = vpack.c.b16 %v222, %v222
    %v235 = vpack.c.b16 %v223, %v223
    %v236 = vpack.c.b16 %v224, %v224
    %v237 = vpack.c.b16 %v225, %v225
    %vm246 = vcmask 326656
    %v248 = vsel %vm246, %v188, 0
    %v251 = vsel %vm246, %v189, 0
    %v254 = vsel %vm246, %v190, 0
    %v257 = vsel %vm246, %v191, 0
    %v260 = vsel %vm246, %v192, 0
    %v263 = vsel %vm246, %v193, 0
    %v266 = vsel %vm246, %v194, 0
    %v269 = vsel %vm246, %v195, 0
    %vm271 = vcmask 1043456
    %v273 = vsel %vm271, %v234, 0
    %v276 = vsel %vm271, %v235, 0
    %v279 = vsel %vm271, %v236, 0
    %v282 = vsel %vm271, %v237, 0
    %284 = vmatprep.subr.bf16.mxu0 %v227
    %285 = vmatpush1.bf16.msra.mxu0 %v226
    %286 = vmatprep.subr.bf16.mxu0 %v231
    %287 = vmatpush1.bf16.msra.mxu0 %v230
    %288 = vmatprep.subr.bf16.mxu0 %v276
    %289 = vmatpush1.bf16.msra.mxu0 %v273
    %290 = vmatprep.subr.bf16.mxu0 0
    %291 = vmatpush1.bf16.msra.mxu0 0
    %292 = vmatprep.subr.bf16.mxu0 0
    %293 = vmatpush1.bf16.msra.mxu0 0
    %294 = vmatprep.subr.bf16.mxu0 0
    %295 = vmatpush1.bf16.msra.mxu0 0
    %296 = vmatprep.subr.bf16.mxu0 0
    %297 = vmatpush1.bf16.msra.mxu0 0
    %298 = vmatprep.subr.bf16.mxu0 0
    %299 = vmatpush1.bf16.msra.mxu0 0
    %300 = vmatprep.subr.bf16.mxu0 0
    %301 = vmatpush1.bf16.msra.mxu0 0
    %302 = vmatprep.subr.bf16.mxu0 0
    %303 = vmatpush1.bf16.msra.mxu0 0
    %304 = vmatprep.subr.bf16.mxu0 0
    %305 = vmatpush1.bf16.msra.mxu0 0
    %306 = vmatprep.subr.bf16.mxu0 0
    %307 = vmatpush1.bf16.msra.mxu0 0
    %308 = vmatprep.subr.bf16.mxu0 0
    %309 = vmatpush1.bf16.msra.mxu0 0
    %310 = vmatprep.subr.bf16.mxu0 0
    %311 = vmatpush1.bf16.msra.mxu0 0
    %312 = vmatprep.subr.bf16.mxu0 0
    %313 = vmatpush1.bf16.msra.mxu0 0
    %314 = vmatprep.subr.bf16.mxu0 0
    %315 = vmatpush1.bf16.msra.mxu0 0
    %316 = vmatprep.mubr.bf16.mxu0 0
    %317 = vmatmul.mubr.bf16.gmra.mrb[0].mxu0 %v248
    %v318 = vpop.f32.mrb[0].mxu0
    %v319 = vadd.f32 %v79, %v318
    %v320 = vpop.f32.mrb[0].mxu0
    %v321 = vadd.f32 %v79, %v320
    %v322 = vpop.f32.mrb[0].mxu0
    %v323 = vadd.f32 %v84, %v322
    %v324 = vpop.f32.mrb[0].mxu0
    %v325 = vadd.f32 %v84, %v324
    %326 = vmatprep.mubr.bf16.mxu0 0
    %327 = vmatmul.mubr.bf16.gmra.mrb[0].mxu0 %v251
    %v328 = vpop.f32.mrb[0].mxu0
    %v329 = vadd.f32 %v89, %v328
    %v330 = vpop.f32.mrb[0].mxu0
    %v331 = vadd.f32 %v89, %v330
    %v332 = vpop.f32.mrb[0].mxu0
    %v333 = vadd.f32 %v94, %v332
    %v334 = vpop.f32.mrb[0].mxu0
    %v335 = vadd.f32 %v94, %v334
    %336 = vmatprep.mubr.bf16.mxu0 0
    %337 = vmatmul.mubr.bf16.gmra.mrb[0].mxu0 %v254
    %v338 = vpop.f32.mrb[0].mxu0
    %v339 = vadd.f32 %v99, %v338
    %v340 = vpop.f32.mrb[0].mxu0
    %v341 = vadd.f32 %v99, %v340
    %v342 = vpop.f32.mrb[0].mxu0
    %v343 = vadd.f32 %v104, %v342
    %v344 = vpop.f32.mrb[0].mxu0
    %v345 = vadd.f32 %v104, %v344
    %346 = vmatprep.mubr.bf16.mxu0 0
    %347 = vmatmul.mubr.bf16.gmra.mrb[0].mxu0 %v257
    %v348 = vpop.f32.mrb[0].mxu0
    %v349 = vadd.f32 %v109, %v348
    %v350 = vpop.f32.mrb[0].mxu0
    %v351 = vadd.f32 %v109, %v350
    %v352 = vpop.f32.mrb[0].mxu0
    %v353 = vadd.f32 %v114, %v352
    %v354 = vpop.f32.mrb[0].mxu0
    %v355 = vadd.f32 %v114, %v354
    %356 = vmatprep.mubr.bf16.mxu0 0
    %357 = vmatmul.mubr.bf16.gmra.mrb[0].mxu0 %v260
    %v358 = vpop.f32.mrb[0].mxu0
    %v359 = vadd.f32 %v119, %v358
    %v360 = vpop.f32.mrb[0].mxu0
    %v361 = vadd.f32 %v119, %v360
    %v362 = vpop.f32.mrb[0].mxu0
    %v363 = vadd.f32 %v124, %v362
    %v364 = vpop.f32.mrb[0].mxu0
    %v365 = vadd.f32 %v124, %v364
    %366 = vmatprep.mubr.bf16.mxu0 0
    %367 = vmatmul.mubr.bf16.gmra.mrb[0].mxu0 %v263
    %v368 = vpop.f32.mrb[0].mxu0
    %v369 = vadd.f32 %v129, %v368
    %v370 = vpop.f32.mrb[0].mxu0
    %v371 = vadd.f32 %v129, %v370
    %v372 = vpop.f32.mrb[0].mxu0
    %v373 = vadd.f32 %v134, %v372
    %v374 = vpop.f32.mrb[0].mxu0
    %v375 = vadd.f32 %v134, %v374
    %376 = vmatprep.mubr.bf16.mxu0 0
    %377 = vmatmul.mubr.bf16.gmra.mrb[0].mxu0 %v266
    %v378 = vpop.f32.mrb[0].mxu0
    %v379 = vadd.f32 %v139, %v378
    %v380 = vpop.f32.mrb[0].mxu0
    %v381 = vadd.f32 %v139, %v380
    %v382 = vpop.f32.mrb[0].mxu0
    %v383 = vadd.f32 %v144, %v382
    %v384 = vpop.f32.mrb[0].mxu0
    %v385 = vadd.f32 %v144, %v384
    %386 = vmatprep.mubr.bf16.mxu0 0
    %387 = vmatmul.mubr.bf16.gmra.mrb[0].mxu0 %v269
    %v388 = vpop.f32.mrb[0].mxu0
    %v389 = vadd.f32 %v149, %v388
    %v390 = vpop.f32.mrb[0].mxu0
    %v391 = vadd.f32 %v149, %v390
    %v392 = vpop.f32.mrb[0].mxu0
    %v393 = vadd.f32 %v154, %v392
    %v394 = vpop.f32.mrb[0].mxu0
    %v395 = vadd.f32 %v154, %v394
    %396 = vdwg.mxu0
    %397 = vmatprep.subr.bf16.mxu0 %v229
    %398 = vmatpush1.bf16.msra.mxu0 %v228
    %399 = vmatprep.subr.bf16.mxu0 %v233
    %400 = vmatpush1.bf16.msra.mxu0 %v232
    %401 = vmatprep.subr.bf16.mxu0 %v282
    %402 = vmatpush1.bf16.msra.mxu0 %v279
    %403 = vmatprep.subr.bf16.mxu0 0
    %404 = vmatpush1.bf16.msra.mxu0 0
    %405 = vmatprep.subr.bf16.mxu0 0
    %406 = vmatpush1.bf16.msra.mxu0 0
    %407 = vmatprep.subr.bf16.mxu0 0
    %408 = vmatpush1.bf16.msra.mxu0 0
    %409 = vmatprep.subr.bf16.mxu0 0
    %410 = vmatpush1.bf16.msra.mxu0 0
    %411 = vmatprep.subr.bf16.mxu0 0
    %412 = vmatpush1.bf16.msra.mxu0 0
    %413 = vmatprep.subr.bf16.mxu0 0
    %414 = vmatpush1.bf16.msra.mxu0 0
    %415 = vmatprep.subr.bf16.mxu0 0
    %416 = vmatpush1.bf16.msra.mxu0 0
    %417 = vmatprep.subr.bf16.mxu0 0
    %418 = vmatpush1.bf16.msra.mxu0 0
    %419 = vmatprep.subr.bf16.mxu0 0
    %420 = vmatpush1.bf16.msra.mxu0 0
    %421 = vmatprep.subr.bf16.mxu0 0
    %422 = vmatpush1.bf16.msra.mxu0 0
    %423 = vmatprep.subr.bf16.mxu0 0
    %424 = vmatpush1.bf16.msra.mxu0 0
    %425 = vmatprep.subr.bf16.mxu0 0
    %426 = vmatpush1.bf16.msra.mxu0 0
    %427 = vmatprep.subr.bf16.mxu0 0
    %428 = vmatpush1.bf16.msra.mxu0 0
    %429 = vmatprep.mubr.bf16.mxu0 0
    %430 = vmatmul.mubr.bf16.gmra.mrb[0].mxu0 %v248
    %v431 = vpop.f32.mrb[0].mxu0
    %v432 = vadd.f32 %v79, %v431
    %v433 = vpop.f32.mrb[0].mxu0
    %v434 = vadd.f32 %v79, %v433
    %v435 = vpop.f32.mrb[0].mxu0
    %v436 = vadd.f32 %v84, %v435
    %v437 = vpop.f32.mrb[0].mxu0
    %v438 = vadd.f32 %v84, %v437
    %439 = vmatprep.mubr.bf16.mxu0 0
    %440 = vmatmul.mubr.bf16.gmra.mrb[0].mxu0 %v251
    %v441 = vpop.f32.mrb[0].mxu0
    %v442 = vadd.f32 %v89, %v441
    %v443 = vpop.f32.mrb[0].mxu0
    %v444 = vadd.f32 %v89, %v443
    %v445 = vpop.f32.mrb[0].mxu0
    %v446 = vadd.f32 %v94, %v445
    %v447 = vpop.f32.mrb[0].mxu0
    %v448 = vadd.f32 %v94, %v447
    %449 = vmatprep.mubr.bf16.mxu0 0
    %450 = vmatmul.mubr.bf16.gmra.mrb[0].mxu0 %v254
    %v451 = vpop.f32.mrb[0].mxu0
    %v452 = vadd.f32 %v99, %v451
    %v453 = vpop.f32.mrb[0].mxu0
    %v454 = vadd.f32 %v99, %v453
    %v455 = vpop.f32.mrb[0].mxu0
    %v456 = vadd.f32 %v104, %v455
    %v457 = vpop.f32.mrb[0].mxu0
    %v458 = vadd.f32 %v104, %v457
    %459 = vmatprep.mubr.bf16.mxu0 0
    %460 = vmatmul.mubr.bf16.gmra.mrb[0].mxu0 %v257
    %v461 = vpop.f32.mrb[0].mxu0
    %v462 = vadd.f32 %v109, %v461
    %v463 = vpop.f32.mrb[0].mxu0
    %v464 = vadd.f32 %v109, %v463
    %v465 = vpop.f32.mrb[0].mxu0
    %v466 = vadd.f32 %v114, %v465
    %v467 = vpop.f32.mrb[0].mxu0
    %v468 = vadd.f32 %v114, %v467
    %469 = vmatprep.mubr.bf16.mxu0 0
    %470 = vmatmul.mubr.bf16.gmra.mrb[0].mxu0 %v260
    %v471 = vpop.f32.mrb[0].mxu0
    %v472 = vadd.f32 %v119, %v471
    %v473 = vpop.f32.mrb[0].mxu0
    %v474 = vadd.f32 %v119, %v473
    %v475 = vpop.f32.mrb[0].mxu0
    %v476 = vadd.f32 %v124, %v475
    %v477 = vpop.f32.mrb[0].mxu0
    %v478 = vadd.f32 %v124, %v477
    %479 = vmatprep.mubr.bf16.mxu0 0
    %480 = vmatmul.mubr.bf16.gmra.mrb[0].mxu0 %v263
    %v481 = vpop.f32.mrb[0].mxu0
    %v482 = vadd.f32 %v129, %v481
    %v483 = vpop.f32.mrb[0].mxu0
    %v484 = vadd.f32 %v129, %v483
    %v485 = vpop.f32.mrb[0].mxu0
    %v486 = vadd.f32 %v134, %v485
    %v487 = vpop.f32.mrb[0].mxu0
    %v488 = vadd.f32 %v134, %v487
    %489 = vmatprep.mubr.bf16.mxu0 0
    %490 = vmatmul.mubr.bf16.gmra.mrb[0].mxu0 %v266
    %v491 = vpop.f32.mrb[0].mxu0
    %v492 = vadd.f32 %v139, %v491
    %v493 = vpop.f32.mrb[0].mxu0
    %v494 = vadd.f32 %v139, %v493
    %v495 = vpop.f32.mrb[0].mxu0
    %v496 = vadd.f32 %v144, %v495
    %v497 = vpop.f32.mrb[0].mxu0
    %v498 = vadd.f32 %v144, %v497
    %499 = vmatprep.mubr.bf16.mxu0 0
    %500 = vmatmul.mubr.bf16.gmra.mrb[0].mxu0 %v269
    %v501 = vpop.f32.mrb[0].mxu0
    %v502 = vadd.f32 %v149, %v501
    %v503 = vpop.f32.mrb[0].mxu0
    %v504 = vadd.f32 %v149, %v503
    %v505 = vpop.f32.mrb[0].mxu0
    %v506 = vadd.f32 %v154, %v505
    %v507 = vpop.f32.mrb[0].mxu0
    %v508 = vadd.f32 %v154, %v507
    %509 = vdwg.mxu0
    %vm510 = vcmp.ge.f32.partialorder %v319, 0.0
    %vm511 = vcmp.ge.f32.partialorder %v321, 0.0
    %vm512 = vcmp.ge.f32.partialorder %v432, 0.0
    %vm513 = vcmp.ge.f32.partialorder %v434, 0.0
    %vm514 = vcmp.ge.f32.partialorder %v323, 0.0
    %vm515 = vcmp.ge.f32.partialorder %v325, 0.0
    %vm516 = vcmp.ge.f32.partialorder %v436, 0.0
    %vm517 = vcmp.ge.f32.partialorder %v438, 0.0
    %vm518 = vcmp.ge.f32.partialorder %v329, 0.0
    %vm519 = vcmp.ge.f32.partialorder %v331, 0.0
    %vm520 = vcmp.ge.f32.partialorder %v442, 0.0
    %vm521 = vcmp.ge.f32.partialorder %v444, 0.0
    %vm522 = vcmp.ge.f32.partialorder %v333, 0.0
    %vm523 = vcmp.ge.f32.partialorder %v335, 0.0
    %vm524 = vcmp.ge.f32.partialorder %v446, 0.0
    %vm525 = vcmp.ge.f32.partialorder %v448, 0.0
    %vm526 = vcmp.ge.f32.partialorder %v339, 0.0
    %vm527 = vcmp.ge.f32.partialorder %v341, 0.0
    %vm528 = vcmp.ge.f32.partialorder %v452, 0.0
    %vm529 = vcmp.ge.f32.partialorder %v454, 0.0
    %vm530 = vcmp.ge.f32.partialorder %v343, 0.0
    %vm531 = vcmp.ge.f32.partialorder %v345, 0.0
    %vm532 = vcmp.ge.f32.partialorder %v456, 0.0
    %vm533 = vcmp.ge.f32.partialorder %v458, 0.0
    %vm534 = vcmp.ge.f32.partialorder %v349, 0.0
    %vm535 = vcmp.ge.f32.partialorder %v351, 0.0
    %vm536 = vcmp.ge.f32.partialorder %v462, 0.0
    %vm537 = vcmp.ge.f32.partialorder %v464, 0.0
    %vm538 = vcmp.ge.f32.partialorder %v353, 0.0
    %vm539 = vcmp.ge.f32.partialorder %v355, 0.0
    %vm540 = vcmp.ge.f32.partialorder %v466, 0.0
    %vm541 = vcmp.ge.f32.partialorder %v468, 0.0
    %vm542 = vcmp.ge.f32.partialorder %v359, 0.0
    %vm543 = vcmp.ge.f32.partialorder %v361, 0.0
    %vm544 = vcmp.ge.f32.partialorder %v472, 0.0
    %vm545 = vcmp.ge.f32.partialorder %v474, 0.0
    %vm546 = vcmp.ge.f32.partialorder %v363, 0.0
    %vm547 = vcmp.ge.f32.partialorder %v365, 0.0
    %vm548 = vcmp.ge.f32.partialorder %v476, 0.0
    %vm549 = vcmp.ge.f32.partialorder %v478, 0.0
    %vm550 = vcmp.ge.f32.partialorder %v369, 0.0
    %vm551 = vcmp.ge.f32.partialorder %v371, 0.0
    %vm552 = vcmp.ge.f32.partialorder %v482, 0.0
    %vm553 = vcmp.ge.f32.partialorder %v484, 0.0
    %vm554 = vcmp.ge.f32.partialorder %v373, 0.0
    %vm555 = vcmp.ge.f32.partialorder %v375, 0.0
    %vm556 = vcmp.ge.f32.partialorder %v486, 0.0
    %vm557 = vcmp.ge.f32.partialorder %v488, 0.0
    %vm558 = vcmp.ge.f32.partialorder %v379, 0.0
    %vm559 = vcmp.ge.f32.partialorder %v381, 0.0
    %vm560 = vcmp.ge.f32.partialorder %v492, 0.0
    %vm561 = vcmp.ge.f32.partialorder %v494, 0.0
    %vm562 = vcmp.ge.f32.partialorder %v383, 0.0
    %vm563 = vcmp.ge.f32.partialorder %v385, 0.0
    %vm564 = vcmp.ge.f32.partialorder %v496, 0.0
    %vm565 = vcmp.ge.f32.partialorder %v498, 0.0
    %vm566 = vcmp.ge.f32.partialorder %v389, 0.0
    %vm567 = vcmp.ge.f32.partialorder %v391, 0.0
    %vm568 = vcmp.ge.f32.partialorder %v502, 0.0
    %vm569 = vcmp.ge.f32.partialorder %v504, 0.0
    %vm570 = vcmp.ge.f32.partialorder %v393, 0.0
    %vm571 = vcmp.ge.f32.partialorder %v395, 0.0
    %vm572 = vcmp.ge.f32.partialorder %v506, 0.0
    %vm573 = vcmp.ge.f32.partialorder %v508, 0.0
    %v574 = vmul.f32 %v319, 0.01
    %v575 = vmul.f32 %v321, 0.01
    %v576 = vmul.f32 %v432, 0.01
    %v577 = vmul.f32 %v434, 0.01
    %v578 = vmul.f32 %v323, 0.01
    %v579 = vmul.f32 %v325, 0.01
    %v580 = vmul.f32 %v436, 0.01
    %v581 = vmul.f32 %v438, 0.01
    %v582 = vmul.f32 %v329, 0.01
    %v583 = vmul.f32 %v331, 0.01
    %v584 = vmul.f32 %v442, 0.01
    %v585 = vmul.f32 %v444, 0.01
    %v586 = vmul.f32 %v333, 0.01
    %v587 = vmul.f32 %v335, 0.01
    %v588 = vmul.f32 %v446, 0.01
    %v589 = vmul.f32 %v448, 0.01
    %v590 = vmul.f32 %v339, 0.01
    %v591 = vmul.f32 %v341, 0.01
    %v592 = vmul.f32 %v452, 0.01
    %v593 = vmul.f32 %v454, 0.01
    %v594 = vmul.f32 %v343, 0.01
    %v595 = vmul.f32 %v345, 0.01
    %v596 = vmul.f32 %v456, 0.01
    %v597 = vmul.f32 %v458, 0.01
    %v598 = vmul.f32 %v349, 0.01
    %v599 = vmul.f32 %v351, 0.01
    %v600 = vmul.f32 %v462, 0.01
    %v601 = vmul.f32 %v464, 0.01
    %v602 = vmul.f32 %v353, 0.01
    %v603 = vmul.f32 %v355, 0.01
    %v604 = vmul.f32 %v466, 0.01
    %v605 = vmul.f32 %v468, 0.01
    %v606 = vmul.f32 %v359, 0.01
    %v607 = vmul.f32 %v361, 0.01
    %v608 = vmul.f32 %v472, 0.01
    %v609 = vmul.f32 %v474, 0.01
    %v610 = vmul.f32 %v363, 0.01
    %v611 = vmul.f32 %v365, 0.01
    %v612 = vmul.f32 %v476, 0.01
    %v613 = vmul.f32 %v478, 0.01
    %v614 = vmul.f32 %v369, 0.01
    %v615 = vmul.f32 %v371, 0.01
    %v616 = vmul.f32 %v482, 0.01
    %v617 = vmul.f32 %v484, 0.01
    %v618 = vmul.f32 %v373, 0.01
    %v619 = vmul.f32 %v375, 0.01
    %v620 = vmul.f32 %v486, 0.01
    %v621 = vmul.f32 %v488, 0.01
    %v622 = vmul.f32 %v379, 0.01
    %v623 = vmul.f32 %v381, 0.01
    %v624 = vmul.f32 %v492, 0.01
    %v625 = vmul.f32 %v494, 0.01
    %v626 = vmul.f32 %v383, 0.01
    %v627 = vmul.f32 %v385, 0.01
    %v628 = vmul.f32 %v496, 0.01
    %v629 = vmul.f32 %v498, 0.01
    %v630 = vmul.f32 %v389, 0.01
    %v631 = vmul.f32 %v391, 0.01
    %v632 = vmul.f32 %v502, 0.01
    %v633 = vmul.f32 %v504, 0.01
    %v634 = vmul.f32 %v393, 0.01
    %v635 = vmul.f32 %v395, 0.01
    %v636 = vmul.f32 %v506, 0.01
    %v637 = vmul.f32 %v508, 0.01
    %v638 = vsel %vm510, %v319, %v574
    %v639 = vsel %vm511, %v321, %v575
    %v640 = vsel %vm512, %v432, %v576
    %v641 = vsel %vm513, %v434, %v577
    %v642 = vsel %vm514, %v323, %v578
    %v643 = vsel %vm515, %v325, %v579
    %v644 = vsel %vm516, %v436, %v580
    %v645 = vsel %vm517, %v438, %v581
    %v646 = vsel %vm518, %v329, %v582
    %v647 = vsel %vm519, %v331, %v583
    %v648 = vsel %vm520, %v442, %v584
    %v649 = vsel %vm521, %v444, %v585
    %v650 = vsel %vm522, %v333, %v586
    %v651 = vsel %vm523, %v335, %v587
    %v652 = vsel %vm524, %v446, %v588
    %v653 = vsel %vm525, %v448, %v589
    %v654 = vsel %vm526, %v339, %v590
    %v655 = vsel %vm527, %v341, %v591
    %v656 = vsel %vm528, %v452, %v592
    %v657 = vsel %vm529, %v454, %v593
    %v658 = vsel %vm530, %v343, %v594
    %v659 = vsel %vm531, %v345, %v595
    %v660 = vsel %vm532, %v456, %v596
    %v661 = vsel %vm533, %v458, %v597
    %v662 = vsel %vm534, %v349, %v598
    %v663 = vsel %vm535, %v351, %v599
    %v664 = vsel %vm536, %v462, %v600
    %v665 = vsel %vm537, %v464, %v601
    %v666 = vsel %vm538, %v353, %v602
    %v667 = vsel %vm539, %v355, %v603
    %v668 = vsel %vm540, %v466, %v604
    %v669 = vsel %vm541, %v468, %v605
    %v670 = vsel %vm542, %v359, %v606
    %v671 = vsel %vm543, %v361, %v607
    %v672 = vsel %vm544, %v472, %v608
    %v673 = vsel %vm545, %v474, %v609
    %v674 = vsel %vm546, %v363, %v610
    %v675 = vsel %vm547, %v365, %v611
    %v676 = vsel %vm548, %v476, %v612
    %v677 = vsel %vm549, %v478, %v613
    %v678 = vsel %vm550, %v369, %v614
    %v679 = vsel %vm551, %v371, %v615
    %v680 = vsel %vm552, %v482, %v616
    %v681 = vsel %vm553, %v484, %v617
    %v682 = vsel %vm554, %v373, %v618
    %v683 = vsel %vm555, %v375, %v619
    %v684 = vsel %vm556, %v486, %v620
    %v685 = vsel %vm557, %v488, %v621
    %v686 = vsel %vm558, %v379, %v622
    %v687 = vsel %vm559, %v381, %v623
    %v688 = vsel %vm560, %v492, %v624
    %v689 = vsel %vm561, %v494, %v625
    %v690 = vsel %vm562, %v383, %v626
    %v691 = vsel %vm563, %v385, %v627
    %v692 = vsel %vm564, %v496, %v628
    %v693 = vsel %vm565, %v498, %v629
    %v694 = vsel %vm566, %v389, %v630
    %v695 = vsel %vm567, %v391, %v631
    %v696 = vsel %vm568, %v502, %v632
    %v697 = vsel %vm569, %v504, %v633
    %v698 = vsel %vm570, %v393, %v634
    %v699 = vsel %vm571, %v395, %v635
    %v700 = vsel %vm572, %v506, %v636
    %v701 = vsel %vm573, %v508, %v637
    %702 = vrot.lane.b32.xlu0 %v638, 17
    %v703 = vpop.permute.xlu0 %702
    %704 = vrot.lane.b32.xlu0 %v642, 17
    %v705 = vpop.permute.xlu0 %704
    %706 = vrot.lane.b32.xlu0 %v646, 17
    %v707 = vpop.permute.xlu0 %706
    %708 = vrot.lane.b32.xlu0 %v650, 17
    %v709 = vpop.permute.xlu0 %708
    %710 = vrot.lane.b32.xlu0 %v654, 17
    %v711 = vpop.permute.xlu0 %710
    %712 = vrot.lane.b32.xlu0 %v658, 17
    %v713 = vpop.permute.xlu0 %712
    %714 = vrot.lane.b32.xlu0 %v662, 17
    %v715 = vpop.permute.xlu0 %714
    %716 = vrot.lane.b32.xlu0 %v666, 17
    %v717 = vpop.permute.xlu0 %716
    %718 = vrot.lane.b32.xlu0 %v670, 17
    %v719 = vpop.permute.xlu0 %718
    %720 = vrot.lane.b32.xlu0 %v674, 17
    %v721 = vpop.permute.xlu0 %720
    %722 = vrot.lane.b32.xlu0 %v678, 17
    %v723 = vpop.permute.xlu0 %722
    %724 = vrot.lane.b32.xlu0 %v682, 17
    %v725 = vpop.permute.xlu0 %724
    %726 = vrot.lane.b32.xlu0 %v686, 17
    %v727 = vpop.permute.xlu0 %726
    %728 = vrot.lane.b32.xlu0 %v690, 17
    %v729 = vpop.permute.xlu0 %728
    %730 = vrot.lane.b32.xlu0 %v694, 17
    %v731 = vpop.permute.xlu0 %730
    %732 = vrot.lane.b32.xlu0 %v698, 17
    %v733 = vpop.permute.xlu0 %732
    %734 = vrot.lane.b32.xlu0 %v639, 17
    %v735 = vpop.permute.xlu0 %734
    %736 = vrot.lane.b32.xlu0 %v643, 17
    %v737 = vpop.permute.xlu0 %736
    %738 = vrot.lane.b32.xlu0 %v647, 17
    %v739 = vpop.permute.xlu0 %738
    %740 = vrot.lane.b32.xlu0 %v651, 17
    %v741 = vpop.permute.xlu0 %740
    %742 = vrot.lane.b32.xlu0 %v655, 17
    %v743 = vpop.permute.xlu0 %742
    %744 = vrot.lane.b32.xlu0 %v659, 17
    %v745 = vpop.permute.xlu0 %744
    %746 = vrot.lane.b32.xlu0 %v663, 17
    %v747 = vpop.permute.xlu0 %746
    %748 = vrot.lane.b32.xlu0 %v667, 17
    %v749 = vpop.permute.xlu0 %748
    %750 = vrot.lane.b32.xlu0 %v671, 17
    %v751 = vpop.permute.xlu0 %750
    %752 = vrot.lane.b32.xlu0 %v675, 17
    %v753 = vpop.permute.xlu0 %752
    %754 = vrot.lane.b32.xlu0 %v679, 17
    %v755 = vpop.permute.xlu0 %754
    %756 = vrot.lane.b32.xlu0 %v683, 17
    %v757 = vpop.permute.xlu0 %756
    %758 = vrot.lane.b32.xlu0 %v687, 17
    %v759 = vpop.permute.xlu0 %758
    %760 = vrot.lane.b32.xlu0 %v691, 17
    %v761 = vpop.permute.xlu0 %760
    %762 = vrot.lane.b32.xlu0 %v695, 17
    %v763 = vpop.permute.xlu0 %762
    %764 = vrot.lane.b32.xlu0 %v699, 17
    %v765 = vpop.permute.xlu0 %764
    %766 = vrot.lane.b32.xlu0 %v640, 17
    %v767 = vpop.permute.xlu0 %766
    %768 = vrot.lane.b32.xlu0 %v644, 17
    %v769 = vpop.permute.xlu0 %768
    %770 = vrot.lane.b32.xlu0 %v648, 17
    %v771 = vpop.permute.xlu0 %770
    %772 = vrot.lane.b32.xlu0 %v652, 17
    %v773 = vpop.permute.xlu0 %772
    %774 = vrot.lane.b32.xlu0 %v656, 17
    %v775 = vpop.permute.xlu0 %774
    %776 = vrot.lane.b32.xlu0 %v660, 17
    %v777 = vpop.permute.xlu0 %776
    %778 = vrot.lane.b32.xlu0 %v664, 17
    %v779 = vpop.permute.xlu0 %778
    %780 = vrot.lane.b32.xlu0 %v668, 17
    %v781 = vpop.permute.xlu0 %780
    %782 = vrot.lane.b32.xlu0 %v672, 17
    %v783 = vpop.permute.xlu0 %782
    %784 = vrot.lane.b32.xlu0 %v676, 17
    %v785 = vpop.permute.xlu0 %784
    %786 = vrot.lane.b32.xlu0 %v680, 17
    %v787 = vpop.permute.xlu0 %786
    %788 = vrot.lane.b32.xlu0 %v684, 17
    %v789 = vpop.permute.xlu0 %788
    %790 = vrot.lane.b32.xlu0 %v688, 17
    %v791 = vpop.permute.xlu0 %790
    %792 = vrot.lane.b32.xlu0 %v692, 17
    %v793 = vpop.permute.xlu0 %792
    %794 = vrot.lane.b32.xlu0 %v696, 17
    %v795 = vpop.permute.xlu0 %794
    %796 = vrot.lane.b32.xlu0 %v700, 17
    %v797 = vpop.permute.xlu0 %796
    %798 = vrot.lane.b32.xlu0 %v641, 17
    %v799 = vpop.permute.xlu0 %798
    %800 = vrot.lane.b32.xlu0 %v645, 17
    %v801 = vpop.permute.xlu0 %800
    %802 = vrot.lane.b32.xlu0 %v649, 17
    %v803 = vpop.permute.xlu0 %802
    %804 = vrot.lane.b32.xlu0 %v653, 17
    %v805 = vpop.permute.xlu0 %804
    %806 = vrot.lane.b32.xlu0 %v657, 17
    %v807 = vpop.permute.xlu0 %806
    %808 = vrot.lane.b32.xlu0 %v661, 17
    %v809 = vpop.permute.xlu0 %808
    %810 = vrot.lane.b32.xlu0 %v665, 17
    %v811 = vpop.permute.xlu0 %810
    %812 = vrot.lane.b32.xlu0 %v669, 17
    %v813 = vpop.permute.xlu0 %812
    %814 = vrot.lane.b32.xlu0 %v673, 17
    %v815 = vpop.permute.xlu0 %814
    %816 = vrot.lane.b32.xlu0 %v677, 17
    %v817 = vpop.permute.xlu0 %816
    %818 = vrot.lane.b32.xlu0 %v681, 17
    %v819 = vpop.permute.xlu0 %818
    %820 = vrot.lane.b32.xlu0 %v685, 17
    %v821 = vpop.permute.xlu0 %820
    %822 = vrot.lane.b32.xlu0 %v689, 17
    %v823 = vpop.permute.xlu0 %822
    %824 = vrot.lane.b32.xlu0 %v693, 17
    %v825 = vpop.permute.xlu0 %824
    %826 = vrot.lane.b32.xlu0 %v697, 17
    %v827 = vpop.permute.xlu0 %826
    %828 = vrot.lane.b32.xlu0 %v701, 17
    %v829 = vpop.permute.xlu0 %828
    %v830 = vlaneseq
    %v831 = vand.u32 %v830, 127
    %vm832 = vcmp.lt.s32.totalorder %v831, 17
    %v833 = vsel %vm832, %v767, %v799
    %v834 = vsel %vm832, %v769, %v801
    %v835 = vsel %vm832, %v771, %v803
    %v836 = vsel %vm832, %v773, %v805
    %v837 = vsel %vm832, %v775, %v807
    %v838 = vsel %vm832, %v777, %v809
    %v839 = vsel %vm832, %v779, %v811
    %v840 = vsel %vm832, %v781, %v813
    %v841 = vsel %vm832, %v783, %v815
    %v842 = vsel %vm832, %v785, %v817
    %v843 = vsel %vm832, %v787, %v819
    %v844 = vsel %vm832, %v789, %v821
    %v845 = vsel %vm832, %v791, %v823
    %v846 = vsel %vm832, %v793, %v825
    %v847 = vsel %vm832, %v795, %v827
    %v848 = vsel %vm832, %v797, %v829
    %v849 = vsel %vm832, %v735, %v767
    %v850 = vsel %vm832, %v737, %v769
    %v851 = vsel %vm832, %v739, %v771
    %v852 = vsel %vm832, %v741, %v773
    %v853 = vsel %vm832, %v743, %v775
    %v854 = vsel %vm832, %v745, %v777
    %v855 = vsel %vm832, %v747, %v779
    %v856 = vsel %vm832, %v749, %v781
    %v857 = vsel %vm832, %v751, %v783
    %v858 = vsel %vm832, %v753, %v785
    %v859 = vsel %vm832, %v755, %v787
    %v860 = vsel %vm832, %v757, %v789
    %v861 = vsel %vm832, %v759, %v791
    %v862 = vsel %vm832, %v761, %v793
    %v863 = vsel %vm832, %v763, %v795
    %v864 = vsel %vm832, %v765, %v797
    %v865 = vsel %vm832, %v703, %v735
    %v866 = vsel %vm832, %v705, %v737
    %v867 = vsel %vm832, %v707, %v739
    %v868 = vsel %vm832, %v709, %v741
    %v869 = vsel %vm832, %v711, %v743
    %v870 = vsel %vm832, %v713, %v745
    %v871 = vsel %vm832, %v715, %v747
    %v872 = vsel %vm832, %v717, %v749
    %v873 = vsel %vm832, %v719, %v751
    %v874 = vsel %vm832, %v721, %v753
    %v875 = vsel %vm832, %v723, %v755
    %v876 = vsel %vm832, %v725, %v757
    %v877 = vsel %vm832, %v727, %v759
    %v878 = vsel %vm832, %v729, %v761
    %v879 = vsel %vm832, %v731, %v763
    %v880 = vsel %vm832, %v733, %v765
    %v881 = vsel %vm832, %v799, %v703
    %v882 = vsel %vm832, %v801, %v705
    %v883 = vsel %vm832, %v803, %v707
    %v884 = vsel %vm832, %v805, %v709
    %v885 = vsel %vm832, %v807, %v711
    %v886 = vsel %vm832, %v809, %v713
    %v887 = vsel %vm832, %v811, %v715
    %v888 = vsel %vm832, %v813, %v717
    %v889 = vsel %vm832, %v815, %v719
    %v890 = vsel %vm832, %v817, %v721
    %v891 = vsel %vm832, %v819, %v723
    %v892 = vsel %vm832, %v821, %v725
    %v893 = vsel %vm832, %v823, %v727
    %v894 = vsel %vm832, %v825, %v729
    %v895 = vsel %vm832, %v827, %v731
    %v896 = vsel %vm832, %v829, %v733
    %v897 = vld [vmem:[%s6] ss:$8 sm:$0xf]
    %vm898 = vcmp.gt.f32.partialorder %v897, 0.5
    %v899 = vsel %vm898, 1, 0
    %v900 = vlaneseq
    %v901 = vshrl.u32 %v900, 7
    %v902 = vsub.s32 0, %v901
    %v903 = vrot.slane %v899, %v902
    %v904 = vlaneseq
    %v905 = vshrl.u32 %v904, 7
    %v906 = vsub.s32 1, %v905
    %v907 = vrot.slane %v899, %v906
    %v908 = vlaneseq
    %v909 = vshrl.u32 %v908, 7
    %v910 = vsub.s32 2, %v909
    %v911 = vrot.slane %v899, %v910
    %v912 = vlaneseq
    %v913 = vshrl.u32 %v912, 7
    %v914 = vsub.s32 3, %v913
    %v915 = vrot.slane %v899, %v914
    %vm916 = vcmp.eq.s32.totalorder %v903, 1
    %vm917 = vcmp.eq.s32.totalorder %v907, 1
    %vm918 = vcmp.eq.s32.totalorder %v911, 1
    %vm919 = vcmp.eq.s32.totalorder %v915, 1
    %v920 = vsel %vm916, %v881, 0.0
    %v921 = vsel %vm917, %v865, 0.0
    %v922 = vsel %vm918, %v849, 0.0
    %v923 = vsel %vm919, %v833, 0.0
    %v924 = vsel %vm916, %v882, 0.0
    %v925 = vsel %vm917, %v866, 0.0
    %v926 = vsel %vm918, %v850, 0.0
    %v927 = vsel %vm919, %v834, 0.0
    %v928 = vsel %vm916, %v883, 0.0
    %v929 = vsel %vm917, %v867, 0.0
    %v930 = vsel %vm918, %v851, 0.0
    %v931 = vsel %vm919, %v835, 0.0
    %v932 = vsel %vm916, %v884, 0.0
    %v933 = vsel %vm917, %v868, 0.0
    %v934 = vsel %vm918, %v852, 0.0
    %v935 = vsel %vm919, %v836, 0.0
    %v936 = vsel %vm916, %v885, 0.0
    %v937 = vsel %vm917, %v869, 0.0
    %v938 = vsel %vm918, %v853, 0.0
    %v939 = vsel %vm919, %v837, 0.0
    %v940 = vsel %vm916, %v886, 0.0
    %v941 = vsel %vm917, %v870, 0.0
    %v942 = vsel %vm918, %v854, 0.0
    %v943 = vsel %vm919, %v838, 0.0
    %v944 = vsel %vm916, %v887, 0.0
    %v945 = vsel %vm917, %v871, 0.0
    %v946 = vsel %vm918, %v855, 0.0
    %v947 = vsel %vm919, %v839, 0.0
    %v948 = vsel %vm916, %v888, 0.0
    %v949 = vsel %vm917, %v872, 0.0
    %v950 = vsel %vm918, %v856, 0.0
    %v951 = vsel %vm919, %v840, 0.0
    %v952 = vsel %vm916, %v889, 0.0
    %v953 = vsel %vm917, %v873, 0.0
    %v954 = vsel %vm918, %v857, 0.0
    %v955 = vsel %vm919, %v841, 0.0
    %v956 = vsel %vm916, %v890, 0.0
    %v957 = vsel %vm917, %v874, 0.0
    %v958 = vsel %vm918, %v858, 0.0
    %v959 = vsel %vm919, %v842, 0.0
    %v960 = vsel %vm916, %v891, 0.0
    %v961 = vsel %vm917, %v875, 0.0
    %v962 = vsel %vm918, %v859, 0.0
    %v963 = vsel %vm919, %v843, 0.0
    %v964 = vsel %vm916, %v892, 0.0
    %v965 = vsel %vm917, %v876, 0.0
    %v966 = vsel %vm918, %v860, 0.0
    %v967 = vsel %vm919, %v844, 0.0
    %v968 = vsel %vm916, %v893, 0.0
    %v969 = vsel %vm917, %v877, 0.0
    %v970 = vsel %vm918, %v861, 0.0
    %v971 = vsel %vm919, %v845, 0.0
    %v972 = vsel %vm916, %v894, 0.0
    %v973 = vsel %vm917, %v878, 0.0
    %v974 = vsel %vm918, %v862, 0.0
    %v975 = vsel %vm919, %v846, 0.0
    %v976 = vsel %vm916, %v895, 0.0
    %v977 = vsel %vm917, %v879, 0.0
    %v978 = vsel %vm918, %v863, 0.0
    %v979 = vsel %vm919, %v847, 0.0
    %v980 = vsel %vm916, %v896, 0.0
    %v981 = vsel %vm917, %v880, 0.0
    %v982 = vsel %vm918, %v864, 0.0
    %v983 = vsel %vm919, %v848, 0.0
    %v984 = vpack.c.bf16 %v924, %v920
    %v985 = vpack.c.bf16 %v925, %v921
    %v986 = vpack.c.bf16 %v926, %v922
    %v987 = vpack.c.bf16 %v927, %v923
    %v988 = vpack.c.bf16 %v932, %v928
    %v989 = vpack.c.bf16 %v933, %v929
    %v990 = vpack.c.bf16 %v934, %v930
    %v991 = vpack.c.bf16 %v935, %v931
    %v992 = vpack.c.bf16 %v940, %v936
    %v993 = vpack.c.bf16 %v941, %v937
    %v994 = vpack.c.bf16 %v942, %v938
    %v995 = vpack.c.bf16 %v943, %v939
    %v996 = vpack.c.bf16 %v948, %v944
    %v997 = vpack.c.bf16 %v949, %v945
    %v998 = vpack.c.bf16 %v950, %v946
    %v999 = vpack.c.bf16 %v951, %v947
    %v1000 = vpack.c.bf16 %v956, %v952
    %v1001 = vpack.c.bf16 %v957, %v953
    %v1002 = vpack.c.bf16 %v958, %v954
    %v1003 = vpack.c.bf16 %v959, %v955
    %v1004 = vpack.c.bf16 %v964, %v960
    %v1005 = vpack.c.bf16 %v965, %v961
    %v1006 = vpack.c.bf16 %v966, %v962
    %v1007 = vpack.c.bf16 %v967, %v963
    %v1008 = vpack.c.bf16 %v972, %v968
    %v1009 = vpack.c.bf16 %v973, %v969
    %v1010 = vpack.c.bf16 %v974, %v970
    %v1011 = vpack.c.bf16 %v975, %v971
    %v1012 = vpack.c.bf16 %v980, %v976
    %v1013 = vpack.c.bf16 %v981, %v977
    %v1014 = vpack.c.bf16 %v982, %v978
    %v1015 = vpack.c.bf16 %v983, %v979
    %1016 = vst [vmem:[#allocation2] sm:$0xff] %v984
    %1017 = vst [vmem:[#allocation2 + $0x8] sm:$0xff] %v985
    %1018 = vst [vmem:[#allocation2 + $0x10] sm:$0xff] %v986
    %1019 = vst [vmem:[#allocation2 + $0x18] sm:$0xff] %v987
    %1020 = vst [vmem:[#allocation2 + $0x20] sm:$0xff] %v988
    %1021 = vst [vmem:[#allocation2 + $0x28] sm:$0xff] %v989
    %1022 = vst [vmem:[#allocation2 + $0x30] sm:$0xff] %v990
    %1023 = vst [vmem:[#allocation2 + $0x38] sm:$0xff] %v991
    %1024 = vst [vmem:[#allocation2 + $0x40] sm:$0xff] %v992
    %1025 = vst [vmem:[#allocation2 + $0x48] sm:$0xff] %v993
    %1026 = vst [vmem:[#allocation2 + $0x50] sm:$0xff] %v994
    %1027 = vst [vmem:[#allocation2 + $0x58] sm:$0xff] %v995
    %1028 = vst [vmem:[#allocation2 + $0x60] sm:$0xff] %v996
    %1029 = vst [vmem:[#allocation2 + $0x68] sm:$0xff] %v997
    %1030 = vst [vmem:[#allocation2 + $0x70] sm:$0xff] %v998
    %1031 = vst [vmem:[#allocation2 + $0x78] sm:$0xff] %v999
    %1032 = vst [vmem:[#allocation2 + $0x80] sm:$0xff] %v1000
    %1033 = vst [vmem:[#allocation2 + $0x88] sm:$0xff] %v1001
    %1034 = vst [vmem:[#allocation2 + $0x90] sm:$0xff] %v1002
    %1035 = vst [vmem:[#allocation2 + $0x98] sm:$0xff] %v1003
    %1036 = vst [vmem:[#allocation2 + $0xa0] sm:$0xff] %v1004
    %1037 = vst [vmem:[#allocation2 + $0xa8] sm:$0xff] %v1005
    %1038 = vst [vmem:[#allocation2 + $0xb0] sm:$0xff] %v1006
    %1039 = vst [vmem:[#allocation2 + $0xb8] sm:$0xff] %v1007
    %1040 = vst [vmem:[#allocation2 + $0xc0] sm:$0xff] %v1008
    %1041 = vst [vmem:[#allocation2 + $0xc8] sm:$0xff] %v1009
    %1042 = vst [vmem:[#allocation2 + $0xd0] sm:$0xff] %v1010
    %1043 = vst [vmem:[#allocation2 + $0xd8] sm:$0xff] %v1011
    %1044 = vst [vmem:[#allocation2 + $0xe0] sm:$0xff] %v1012
    %1045 = vst [vmem:[#allocation2 + $0xe8] sm:$0xff] %v1013
    %1046 = vst [vmem:[#allocation2 + $0xf0] sm:$0xff] %v1014
    %1047 = vst [vmem:[#allocation2 + $0xf8] sm:$0xff] %v1015
    %1048 = vrot.lane.b32.xlu0 %v638, 16
    %v1049 = vpop.permute.xlu0 %1048
    %1050 = vrot.lane.b32.xlu0 %v642, 16
    %v1051 = vpop.permute.xlu0 %1050
    %1052 = vrot.lane.b32.xlu0 %v646, 16
    %v1053 = vpop.permute.xlu0 %1052
    %1054 = vrot.lane.b32.xlu0 %v650, 16
    %v1055 = vpop.permute.xlu0 %1054
    %1056 = vrot.lane.b32.xlu0 %v654, 16
    %v1057 = vpop.permute.xlu0 %1056
    %1058 = vrot.lane.b32.xlu0 %v658, 16
    %v1059 = vpop.permute.xlu0 %1058
    %1060 = vrot.lane.b32.xlu0 %v662, 16
    %v1061 = vpop.permute.xlu0 %1060
    %1062 = vrot.lane.b32.xlu0 %v666, 16
    %v1063 = vpop.permute.xlu0 %1062
    %1064 = vrot.lane.b32.xlu0 %v670, 16
    %v1065 = vpop.permute.xlu0 %1064
    %1066 = vrot.lane.b32.xlu0 %v674, 16
    %v1067 = vpop.permute.xlu0 %1066
    %1068 = vrot.lane.b32.xlu0 %v678, 16
    %v1069 = vpop.permute.xlu0 %1068
    %1070 = vrot.lane.b32.xlu0 %v682, 16
    %v1071 = vpop.permute.xlu0 %1070
    %1072 = vrot.lane.b32.xlu0 %v686, 16
    %v1073 = vpop.permute.xlu0 %1072
    %1074 = vrot.lane.b32.xlu0 %v690, 16
    %v1075 = vpop.permute.xlu0 %1074
    %1076 = vrot.lane.b32.xlu0 %v694, 16
    %v1077 = vpop.permute.xlu0 %1076
    %1078 = vrot.lane.b32.xlu0 %v698, 16
    %v1079 = vpop.permute.xlu0 %1078
    %1080 = vrot.lane.b32.xlu0 %v639, 16
    %v1081 = vpop.permute.xlu0 %1080
    %1082 = vrot.lane.b32.xlu0 %v643, 16
    %v1083 = vpop.permute.xlu0 %1082
    %1084 = vrot.lane.b32.xlu0 %v647, 16
    %v1085 = vpop.permute.xlu0 %1084
    %1086 = vrot.lane.b32.xlu0 %v651, 16
    %v1087 = vpop.permute.xlu0 %1086
    %1088 = vrot.lane.b32.xlu0 %v655, 16
    %v1089 = vpop.permute.xlu0 %1088
    %1090 = vrot.lane.b32.xlu0 %v659, 16
    %v1091 = vpop.permute.xlu0 %1090
    %1092 = vrot.lane.b32.xlu0 %v663, 16
    %v1093 = vpop.permute.xlu0 %1092
    %1094 = vrot.lane.b32.xlu0 %v667, 16
    %v1095 = vpop.permute.xlu0 %1094
    %1096 = vrot.lane.b32.xlu0 %v671, 16
    %v1097 = vpop.permute.xlu0 %1096
    %1098 = vrot.lane.b32.xlu0 %v675, 16
    %v1099 = vpop.permute.xlu0 %1098
    %1100 = vrot.lane.b32.xlu0 %v679, 16
    %v1101 = vpop.permute.xlu0 %1100
    %1102 = vrot.lane.b32.xlu0 %v683, 16
    %v1103 = vpop.permute.xlu0 %1102
    %1104 = vrot.lane.b32.xlu0 %v687, 16
    %v1105 = vpop.permute.xlu0 %1104
    %1106 = vrot.lane.b32.xlu0 %v691, 16
    %v1107 = vpop.permute.xlu0 %1106
    %1108 = vrot.lane.b32.xlu0 %v695, 16
    %v1109 = vpop.permute.xlu0 %1108
    %1110 = vrot.lane.b32.xlu0 %v699, 16
    %v1111 = vpop.permute.xlu0 %1110
    %1112 = vrot.lane.b32.xlu0 %v640, 16
    %v1113 = vpop.permute.xlu0 %1112
    %1114 = vrot.lane.b32.xlu0 %v644, 16
    %v1115 = vpop.permute.xlu0 %1114
    %1116 = vrot.lane.b32.xlu0 %v648, 16
    %v1117 = vpop.permute.xlu0 %1116
    %1118 = vrot.lane.b32.xlu0 %v652, 16
    %v1119 = vpop.permute.xlu0 %1118
    %1120 = vrot.lane.b32.xlu0 %v656, 16
    %v1121 = vpop.permute.xlu0 %1120
    %1122 = vrot.lane.b32.xlu0 %v660, 16
    %v1123 = vpop.permute.xlu0 %1122
    %1124 = vrot.lane.b32.xlu0 %v664, 16
    %v1125 = vpop.permute.xlu0 %1124
    %1126 = vrot.lane.b32.xlu0 %v668, 16
    %v1127 = vpop.permute.xlu0 %1126
    %1128 = vrot.lane.b32.xlu0 %v672, 16
    %v1129 = vpop.permute.xlu0 %1128
    %1130 = vrot.lane.b32.xlu0 %v676, 16
    %v1131 = vpop.permute.xlu0 %1130
    %1132 = vrot.lane.b32.xlu0 %v680, 16
    %v1133 = vpop.permute.xlu0 %1132
    %1134 = vrot.lane.b32.xlu0 %v684, 16
    %v1135 = vpop.permute.xlu0 %1134
    %1136 = vrot.lane.b32.xlu0 %v688, 16
    %v1137 = vpop.permute.xlu0 %1136
    %1138 = vrot.lane.b32.xlu0 %v692, 16
    %v1139 = vpop.permute.xlu0 %1138
    %1140 = vrot.lane.b32.xlu0 %v696, 16
    %v1141 = vpop.permute.xlu0 %1140
    %1142 = vrot.lane.b32.xlu0 %v700, 16
    %v1143 = vpop.permute.xlu0 %1142
    %1144 = vrot.lane.b32.xlu0 %v641, 16
    %v1145 = vpop.permute.xlu0 %1144
    %1146 = vrot.lane.b32.xlu0 %v645, 16
    %v1147 = vpop.permute.xlu0 %1146
    %1148 = vrot.lane.b32.xlu0 %v649, 16
    %v1149 = vpop.permute.xlu0 %1148
    %1150 = vrot.lane.b32.xlu0 %v653, 16
    %v1151 = vpop.permute.xlu0 %1150
    %1152 = vrot.lane.b32.xlu0 %v657, 16
    %v1153 = vpop.permute.xlu0 %1152
    %1154 = vrot.lane.b32.xlu0 %v661, 16
    %v1155 = vpop.permute.xlu0 %1154
    %1156 = vrot.lane.b32.xlu0 %v665, 16
    %v1157 = vpop.permute.xlu0 %1156
    %1158 = vrot.lane.b32.xlu0 %v669, 16
    %v1159 = vpop.permute.xlu0 %1158
    %1160 = vrot.lane.b32.xlu0 %v673, 16
    %v1161 = vpop.permute.xlu0 %1160
    %1162 = vrot.lane.b32.xlu0 %v677, 16
    %v1163 = vpop.permute.xlu0 %1162
    %1164 = vrot.lane.b32.xlu0 %v681, 16
    %v1165 = vpop.permute.xlu0 %1164
    %1166 = vrot.lane.b32.xlu0 %v685, 16
    %v1167 = vpop.permute.xlu0 %1166
    %1168 = vrot.lane.b32.xlu0 %v689, 16
    %v1169 = vpop.permute.xlu0 %1168
    %1170 = vrot.lane.b32.xlu0 %v693, 16
    %v1171 = vpop.permute.xlu0 %1170
    %1172 = vrot.lane.b32.xlu0 %v697, 16
    %v1173 = vpop.permute.xlu0 %1172
    %1174 = vrot.lane.b32.xlu0 %v701, 16
    %v1175 = vpop.permute.xlu0 %1174
    %vm1176 = vcmp.lt.s32.totalorder %v831, 16
    %v1177 = vsel %vm1176, %v1113, %v1145
    %v1178 = vsel %vm1176, %v1115, %v1147
    %v1179 = vsel %vm1176, %v1117, %v1149
    %v1180 = vsel %vm1176, %v1119, %v1151
    %v1181 = vsel %vm1176, %v1121, %v1153
    %v1182 = vsel %vm1176, %v1123, %v1155
    %v1183 = vsel %vm1176, %v1125, %v1157
    %v1184 = vsel %vm1176, %v1127, %v1159
    %v1185 = vsel %vm1176, %v1129, %v1161
    %v1186 = vsel %vm1176, %v1131, %v1163
    %v1187 = vsel %vm1176, %v1133, %v1165
    %v1188 = vsel %vm1176, %v1135, %v1167
    %v1189 = vsel %vm1176, %v1137, %v1169
    %v1190 = vsel %vm1176, %v1139, %v1171
    %v1191 = vsel %vm1176, %v1141, %v1173
    %v1192 = vsel %vm1176, %v1143, %v1175
    %v1193 = vsel %vm1176, %v1081, %v1113
    %v1194 = vsel %vm1176, %v1083, %v1115
    %v1195 = vsel %vm1176, %v1085, %v1117
    %v1196 = vsel %vm1176, %v1087, %v1119
    %v1197 = vsel %vm1176, %v1089, %v1121
    %v1198 = vsel %vm1176, %v1091, %v1123
    %v1199 = vsel %vm1176, %v1093, %v1125
    %v1200 = vsel %vm1176, %v1095, %v1127
    %v1201 = vsel %vm1176, %v1097, %v1129
    %v1202 = vsel %vm1176, %v1099, %v1131
    %v1203 = vsel %vm1176, %v1101, %v1133
    %v1204 = vsel %vm1176, %v1103, %v1135
    %v1205 = vsel %vm1176, %v1105, %v1137
    %v1206 = vsel %vm1176, %v1107, %v1139
    %v1207 = vsel %vm1176, %v1109, %v1141
    %v1208 = vsel %vm1176, %v1111, %v1143
    %v1209 = vsel %vm1176, %v1049, %v1081
    %v1210 = vsel %vm1176, %v1051, %v1083
    %v1211 = vsel %vm1176, %v1053, %v1085
    %v1212 = vsel %vm1176, %v1055, %v1087
    %v1213 = vsel %vm1176, %v1057, %v1089
    %v1214 = vsel %vm1176, %v1059, %v1091
    %v1215 = vsel %vm1176, %v1061, %v1093
    %v1216 = vsel %vm1176, %v1063, %v1095
    %v1217 = vsel %vm1176, %v1065, %v1097
    %v1218 = vsel %vm1176, %v1067, %v1099
    %v1219 = vsel %vm1176, %v1069, %v1101
    %v1220 = vsel %vm1176, %v1071, %v1103
    %v1221 = vsel %vm1176, %v1073, %v1105
    %v1222 = vsel %vm1176, %v1075, %v1107
    %v1223 = vsel %vm1176, %v1077, %v1109
    %v1224 = vsel %vm1176, %v1079, %v1111
    %v1225 = vsel %vm1176, %v1145, %v1049
    %v1226 = vsel %vm1176, %v1147, %v1051
    %v1227 = vsel %vm1176, %v1149, %v1053
    %v1228 = vsel %vm1176, %v1151, %v1055
    %v1229 = vsel %vm1176, %v1153, %v1057
    %v1230 = vsel %vm1176, %v1155, %v1059
    %v1231 = vsel %vm1176, %v1157, %v1061
    %v1232 = vsel %vm1176, %v1159, %v1063
    %v1233 = vsel %vm1176, %v1161, %v1065
    %v1234 = vsel %vm1176, %v1163, %v1067
    %v1235 = vsel %vm1176, %v1165, %v1069
    %v1236 = vsel %vm1176, %v1167, %v1071
    %v1237 = vsel %vm1176, %v1169, %v1073
    %v1238 = vsel %vm1176, %v1171, %v1075
    %v1239 = vsel %vm1176, %v1173, %v1077
    %v1240 = vsel %vm1176, %v1175, %v1079
    %s1241 = scalar_lea.vmem %s6, 1
    %v1242 = vld [vmem:[%s1241] ss:$8 sm:$0xf]
    %vm1243 = vcmp.gt.f32.partialorder %v1242, 0.5
    %v1244 = vsel %vm1243, 1, 0
    %v1245 = vlaneseq
    %v1246 = vshrl.u32 %v1245, 7
    %v1247 = vsub.s32 0, %v1246
    %v1248 = vrot.slane %v1244, %v1247
    %v1249 = vlaneseq
    %v1250 = vshrl.u32 %v1249, 7
    %v1251 = vsub.s32 1, %v1250
    %v1252 = vrot.slane %v1244, %v1251
    %v1253 = vlaneseq
    %v1254 = vshrl.u32 %v1253, 7
    %v1255 = vsub.s32 2, %v1254
    %v1256 = vrot.slane %v1244, %v1255
    %v1257 = vlaneseq
    %v1258 = vshrl.u32 %v1257, 7
    %v1259 = vsub.s32 3, %v1258
    %v1260 = vrot.slane %v1244, %v1259
    %vm1261 = vcmp.eq.s32.totalorder %v1248, 1
    %vm1262 = vcmp.eq.s32.totalorder %v1252, 1
    %vm1263 = vcmp.eq.s32.totalorder %v1256, 1
    %vm1264 = vcmp.eq.s32.totalorder %v1260, 1
    %v1265 = vsel %vm1261, %v1225, 0.0
    %v1266 = vsel %vm1262, %v1209, 0.0
    %v1267 = vsel %vm1263, %v1193, 0.0
    %v1268 = vsel %vm1264, %v1177, 0.0
    %v1269 = vsel %vm1261, %v1226, 0.0
    %v1270 = vsel %vm1262, %v1210, 0.0
    %v1271 = vsel %vm1263, %v1194, 0.0
    %v1272 = vsel %vm1264, %v1178, 0.0
    %v1273 = vsel %vm1261, %v1227, 0.0
    %v1274 = vsel %vm1262, %v1211, 0.0
    %v1275 = vsel %vm1263, %v1195, 0.0
    %v1276 = vsel %vm1264, %v1179, 0.0
    %v1277 = vsel %vm1261, %v1228, 0.0
    %v1278 = vsel %vm1262, %v1212, 0.0
    %v1279 = vsel %vm1263, %v1196, 0.0
    %v1280 = vsel %vm1264, %v1180, 0.0
    %v1281 = vsel %vm1261, %v1229, 0.0
    %v1282 = vsel %vm1262, %v1213, 0.0
    %v1283 = vsel %vm1263, %v1197, 0.0
    %v1284 = vsel %vm1264, %v1181, 0.0
    %v1285 = vsel %vm1261, %v1230, 0.0
    %v1286 = vsel %vm1262, %v1214, 0.0
    %v1287 = vsel %vm1263, %v1198, 0.0
    %v1288 = vsel %vm1264, %v1182, 0.0
    %v1289 = vsel %vm1261, %v1231, 0.0
    %v1290 = vsel %vm1262, %v1215, 0.0
    %v1291 = vsel %vm1263, %v1199, 0.0
    %v1292 = vsel %vm1264, %v1183, 0.0
    %v1293 = vsel %vm1261, %v1232, 0.0
    %v1294 = vsel %vm1262, %v1216, 0.0
    %v1295 = vsel %vm1263, %v1200, 0.0
    %v1296 = vsel %vm1264, %v1184, 0.0
    %v1297 = vsel %vm1261, %v1233, 0.0
    %v1298 = vsel %vm1262, %v1217, 0.0
    %v1299 = vsel %vm1263, %v1201, 0.0
    %v1300 = vsel %vm1264, %v1185, 0.0
    %v1301 = vsel %vm1261, %v1234, 0.0
    %v1302 = vsel %vm1262, %v1218, 0.0
    %v1303 = vsel %vm1263, %v1202, 0.0
    %v1304 = vsel %vm1264, %v1186, 0.0
    %v1305 = vsel %vm1261, %v1235, 0.0
    %v1306 = vsel %vm1262, %v1219, 0.0
    %v1307 = vsel %vm1263, %v1203, 0.0
    %v1308 = vsel %vm1264, %v1187, 0.0
    %v1309 = vsel %vm1261, %v1236, 0.0
    %v1310 = vsel %vm1262, %v1220, 0.0
    %v1311 = vsel %vm1263, %v1204, 0.0
    %v1312 = vsel %vm1264, %v1188, 0.0
    %v1313 = vsel %vm1261, %v1237, 0.0
    %v1314 = vsel %vm1262, %v1221, 0.0
    %v1315 = vsel %vm1263, %v1205, 0.0
    %v1316 = vsel %vm1264, %v1189, 0.0
    %v1317 = vsel %vm1261, %v1238, 0.0
    %v1318 = vsel %vm1262, %v1222, 0.0
    %v1319 = vsel %vm1263, %v1206, 0.0
    %v1320 = vsel %vm1264, %v1190, 0.0
    %v1321 = vsel %vm1261, %v1239, 0.0
    %v1322 = vsel %vm1262, %v1223, 0.0
    %v1323 = vsel %vm1263, %v1207, 0.0
    %v1324 = vsel %vm1264, %v1191, 0.0
    %v1325 = vsel %vm1261, %v1240, 0.0
    %v1326 = vsel %vm1262, %v1224, 0.0
    %v1327 = vsel %vm1263, %v1208, 0.0
    %v1328 = vsel %vm1264, %v1192, 0.0
    %v1329 = vpack.c.bf16 %v1269, %v1265
    %v1330 = vpack.c.bf16 %v1270, %v1266
    %v1331 = vpack.c.bf16 %v1271, %v1267
    %v1332 = vpack.c.bf16 %v1272, %v1268
    %v1333 = vpack.c.bf16 %v1277, %v1273
    %v1334 = vpack.c.bf16 %v1278, %v1274
    %v1335 = vpack.c.bf16 %v1279, %v1275
    %v1336 = vpack.c.bf16 %v1280, %v1276
    %v1337 = vpack.c.bf16 %v1285, %v1281
    %v1338 = vpack.c.bf16 %v1286, %v1282
    %v1339 = vpack.c.bf16 %v1287, %v1283
    %v1340 = vpack.c.bf16 %v1288, %v1284
    %v1341 = vpack.c.bf16 %v1293, %v1289
    %v1342 = vpack.c.bf16 %v1294, %v1290
    %v1343 = vpack.c.bf16 %v1295, %v1291
    %v1344 = vpack.c.bf16 %v1296, %v1292
    %v1345 = vpack.c.bf16 %v1301, %v1297
    %v1346 = vpack.c.bf16 %v1302, %v1298
    %v1347 = vpack.c.bf16 %v1303, %v1299
    %v1348 = vpack.c.bf16 %v1304, %v1300
    %v1349 = vpack.c.bf16 %v1309, %v1305
    %v1350 = vpack.c.bf16 %v1310, %v1306
    %v1351 = vpack.c.bf16 %v1311, %v1307
    %v1352 = vpack.c.bf16 %v1312, %v1308
    %v1353 = vpack.c.bf16 %v1317, %v1313
    %v1354 = vpack.c.bf16 %v1318, %v1314
    %v1355 = vpack.c.bf16 %v1319, %v1315
    %v1356 = vpack.c.bf16 %v1320, %v1316
    %v1357 = vpack.c.bf16 %v1325, %v1321
    %v1358 = vpack.c.bf16 %v1326, %v1322
    %v1359 = vpack.c.bf16 %v1327, %v1323
    %v1360 = vpack.c.bf16 %v1328, %v1324
    %1361 = vst [vmem:[#allocation2 + $0x100] sm:$0xff] %v1329
    %1362 = vst [vmem:[#allocation2 + $0x108] sm:$0xff] %v1330
    %1363 = vst [vmem:[#allocation2 + $0x110] sm:$0xff] %v1331
    %1364 = vst [vmem:[#allocation2 + $0x118] sm:$0xff] %v1332
    %1365 = vst [vmem:[#allocation2 + $0x120] sm:$0xff] %v1333
    %1366 = vst [vmem:[#allocation2 + $0x128] sm:$0xff] %v1334
    %1367 = vst [vmem:[#allocation2 + $0x130] sm:$0xff] %v1335
    %1368 = vst [vmem:[#allocation2 + $0x138] sm:$0xff] %v1336
    %1369 = vst [vmem:[#allocation2 + $0x140] sm:$0xff] %v1337
    %1370 = vst [vmem:[#allocation2 + $0x148] sm:$0xff] %v1338
    %1371 = vst [vmem:[#allocation2 + $0x150] sm:$0xff] %v1339
    %1372 = vst [vmem:[#allocation2 + $0x158] sm:$0xff] %v1340
    %1373 = vst [vmem:[#allocation2 + $0x160] sm:$0xff] %v1341
    %1374 = vst [vmem:[#allocation2 + $0x168] sm:$0xff] %v1342
    %1375 = vst [vmem:[#allocation2 + $0x170] sm:$0xff] %v1343
    %1376 = vst [vmem:[#allocation2 + $0x178] sm:$0xff] %v1344
    %1377 = vst [vmem:[#allocation2 + $0x180] sm:$0xff] %v1345
    %1378 = vst [vmem:[#allocation2 + $0x188] sm:$0xff] %v1346
    %1379 = vst [vmem:[#allocation2 + $0x190] sm:$0xff] %v1347
    %1380 = vst [vmem:[#allocation2 + $0x198] sm:$0xff] %v1348
    %1381 = vst [vmem:[#allocation2 + $0x1a0] sm:$0xff] %v1349
    %1382 = vst [vmem:[#allocation2 + $0x1a8] sm:$0xff] %v1350
    %1383 = vst [vmem:[#allocation2 + $0x1b0] sm:$0xff] %v1351
    %1384 = vst [vmem:[#allocation2 + $0x1b8] sm:$0xff] %v1352
    %1385 = vst [vmem:[#allocation2 + $0x1c0] sm:$0xff] %v1353
    %1386 = vst [vmem:[#allocation2 + $0x1c8] sm:$0xff] %v1354
    %1387 = vst [vmem:[#allocation2 + $0x1d0] sm:$0xff] %v1355
    %1388 = vst [vmem:[#allocation2 + $0x1d8] sm:$0xff] %v1356
    %1389 = vst [vmem:[#allocation2 + $0x1e0] sm:$0xff] %v1357
    %1390 = vst [vmem:[#allocation2 + $0x1e8] sm:$0xff] %v1358
    %1391 = vst [vmem:[#allocation2 + $0x1f0] sm:$0xff] %v1359
    %1392 = vst [vmem:[#allocation2 + $0x1f8] sm:$0xff] %v1360
    %1393 = vrot.lane.b32.xlu0 %v638, 15
    %v1394 = vpop.permute.xlu0 %1393
    %1395 = vrot.lane.b32.xlu0 %v642, 15
    %v1396 = vpop.permute.xlu0 %1395
    %1397 = vrot.lane.b32.xlu0 %v646, 15
    %v1398 = vpop.permute.xlu0 %1397
    %1399 = vrot.lane.b32.xlu0 %v650, 15
    %v1400 = vpop.permute.xlu0 %1399
    %1401 = vrot.lane.b32.xlu0 %v654, 15
    %v1402 = vpop.permute.xlu0 %1401
    %1403 = vrot.lane.b32.xlu0 %v658, 15
    %v1404 = vpop.permute.xlu0 %1403
    %1405 = vrot.lane.b32.xlu0 %v662, 15
    %v1406 = vpop.permute.xlu0 %1405
    %1407 = vrot.lane.b32.xlu0 %v666, 15
    %v1408 = vpop.permute.xlu0 %1407
    %1409 = vrot.lane.b32.xlu0 %v670, 15
    %v1410 = vpop.permute.xlu0 %1409
    %1411 = vrot.lane.b32.xlu0 %v674, 15
    %v1412 = vpop.permute.xlu0 %1411
    %1413 = vrot.lane.b32.xlu0 %v678, 15
    %v1414 = vpop.permute.xlu0 %1413
    %1415 = vrot.lane.b32.xlu0 %v682, 15
    %v1416 = vpop.permute.xlu0 %1415
    %1417 = vrot.lane.b32.xlu0 %v686, 15
    %v1418 = vpop.permute.xlu0 %1417
    %1419 = vrot.lane.b32.xlu0 %v690, 15
    %v1420 = vpop.permute.xlu0 %1419
    %1421 = vrot.lane.b32.xlu0 %v694, 15
    %v1422 = vpop.permute.xlu0 %1421
    %1423 = vrot.lane.b32.xlu0 %v698, 15
    %v1424 = vpop.permute.xlu0 %1423
    %1425 = vrot.lane.b32.xlu0 %v639, 15
    %v1426 = vpop.permute.xlu0 %1425
    %1427 = vrot.lane.b32.xlu0 %v643, 15
    %v1428 = vpop.permute.xlu0 %1427
    %1429 = vrot.lane.b32.xlu0 %v647, 15
    %v1430 = vpop.permute.xlu0 %1429
    %1431 = vrot.lane.b32.xlu0 %v651, 15
    %v1432 = vpop.permute.xlu0 %1431
    %1433 = vrot.lane.b32.xlu0 %v655, 15
    %v1434 = vpop.permute.xlu0 %1433
    %1435 = vrot.lane.b32.xlu0 %v659, 15
    %v1436 = vpop.permute.xlu0 %1435
    %1437 = vrot.lane.b32.xlu0 %v663, 15
    %v1438 = vpop.permute.xlu0 %1437
    %1439 = vrot.lane.b32.xlu0 %v667, 15
    %v1440 = vpop.permute.xlu0 %1439
    %1441 = vrot.lane.b32.xlu0 %v671, 15
    %v1442 = vpop.permute.xlu0 %1441
    %1443 = vrot.lane.b32.xlu0 %v675, 15
    %v1444 = vpop.permute.xlu0 %1443
    %1445 = vrot.lane.b32.xlu0 %v679, 15
    %v1446 = vpop.permute.xlu0 %1445
    %1447 = vrot.lane.b32.xlu0 %v683, 15
    %v1448 = vpop.permute.xlu0 %1447
    %1449 = vrot.lane.b32.xlu0 %v687, 15
    %v1450 = vpop.permute.xlu0 %1449
    %1451 = vrot.lane.b32.xlu0 %v691, 15
    %v1452 = vpop.permute.xlu0 %1451
    %1453 = vrot.lane.b32.xlu0 %v695, 15
    %v1454 = vpop.permute.xlu0 %1453
    %1455 = vrot.lane.b32.xlu0 %v699, 15
    %v1456 = vpop.permute.xlu0 %1455
    %1457 = vrot.lane.b32.xlu0 %v640, 15
    %v1458 = vpop.permute.xlu0 %1457
    %1459 = vrot.lane.b32.xlu0 %v644, 15
    %v1460 = vpop.permute.xlu0 %1459
    %1461 = vrot.lane.b32.xlu0 %v648, 15
    %v1462 = vpop.permute.xlu0 %1461
    %1463 = vrot.lane.b32.xlu0 %v652, 15
    %v1464 = vpop.permute.xlu0 %1463
    %1465 = vrot.lane.b32.xlu0 %v656, 15
    %v1466 = vpop.permute.xlu0 %1465
    %1467 = vrot.lane.b32.xlu0 %v660, 15
    %v1468 = vpop.permute.xlu0 %1467
    %1469 = vrot.lane.b32.xlu0 %v664, 15
    %v1470 = vpop.permute.xlu0 %1469
    %1471 = vrot.lane.b32.xlu0 %v668, 15
    %v1472 = vpop.permute.xlu0 %1471
    %1473 = vrot.lane.b32.xlu0 %v672, 15
    %v1474 = vpop.permute.xlu0 %1473
    %1475 = vrot.lane.b32.xlu0 %v676, 15
    %v1476 = vpop.permute.xlu0 %1475
    %1477 = vrot.lane.b32.xlu0 %v680, 15
    %v1478 = vpop.permute.xlu0 %1477
    %1479 = vrot.lane.b32.xlu0 %v684, 15
    %v1480 = vpop.permute.xlu0 %1479
    %1481 = vrot.lane.b32.xlu0 %v688, 15
    %v1482 = vpop.permute.xlu0 %1481
    %1483 = vrot.lane.b32.xlu0 %v692, 15
    %v1484 = vpop.permute.xlu0 %1483
    %1485 = vrot.lane.b32.xlu0 %v696, 15
    %v1486 = vpop.permute.xlu0 %1485
    %1487 = vrot.lane.b32.xlu0 %v700, 15
    %v1488 = vpop.permute.xlu0 %1487
    %1489 = vrot.lane.b32.xlu0 %v641, 15
    %v1490 = vpop.permute.xlu0 %1489
    %1491 = vrot.lane.b32.xlu0 %v645, 15
    %v1492 = vpop.permute.xlu0 %1491
    %1493 = vrot.lane.b32.xlu0 %v649, 15
    %v1494 = vpop.permute.xlu0 %1493
    %1495 = vrot.lane.b32.xlu0 %v653, 15
    %v1496 = vpop.permute.xlu0 %1495
    %1497 = vrot.lane.b32.xlu0 %v657, 15
    %v1498 = vpop.permute.xlu0 %1497
    %1499 = vrot.lane.b32.xlu0 %v661, 15
    %v1500 = vpop.permute.xlu0 %1499
    %1501 = vrot.lane.b32.xlu0 %v665, 15
    %v1502 = vpop.permute.xlu0 %1501
    %1503 = vrot.lane.b32.xlu0 %v669, 15
    %v1504 = vpop.permute.xlu0 %1503
    %1505 = vrot.lane.b32.xlu0 %v673, 15
    %v1506 = vpop.permute.xlu0 %1505
    %1507 = vrot.lane.b32.xlu0 %v677, 15
    %v1508 = vpop.permute.xlu0 %1507
    %1509 = vrot.lane.b32.xlu0 %v681, 15
    %v1510 = vpop.permute.xlu0 %1509
    %1511 = vrot.lane.b32.xlu0 %v685, 15
    %v1512 = vpop.permute.xlu0 %1511
    %1513 = vrot.lane.b32.xlu0 %v689, 15
    %v1514 = vpop.permute.xlu0 %1513
    %1515 = vrot.lane.b32.xlu0 %v693, 15
    %v1516 = vpop.permute.xlu0 %1515
    %1517 = vrot.lane.b32.xlu0 %v697, 15
    %v1518 = vpop.permute.xlu0 %1517
    %1519 = vrot.lane.b32.xlu0 %v701, 15
    %v1520 = vpop.permute.xlu0 %1519
    %vm1521 = vcmp.lt.s32.totalorder %v831, 15
    %v1522 = vsel %vm1521, %v1458, %v1490
    %v1523 = vsel %vm1521, %v1460, %v1492
    %v1524 = vsel %vm1521, %v1462, %v1494
    %v1525 = vsel %vm1521, %v1464, %v1496
    %v1526 = vsel %vm1521, %v1466, %v1498
    %v1527 = vsel %vm1521, %v1468, %v1500
    %v1528 = vsel %vm1521, %v1470, %v1502
    %v1529 = vsel %vm1521, %v1472, %v1504
    %v1530 = vsel %vm1521, %v1474, %v1506
    %v1531 = vsel %vm1521, %v1476, %v1508
    %v1532 = vsel %vm1521, %v1478, %v1510
    %v1533 = vsel %vm1521, %v1480, %v1512
    %v1534 = vsel %vm1521, %v1482, %v1514
    %v1535 = vsel %vm1521, %v1484, %v1516
    %v1536 = vsel %vm1521, %v1486, %v1518
    %v1537 = vsel %vm1521, %v1488, %v1520
    %v1538 = vsel %vm1521, %v1426, %v1458
    %v1539 = vsel %vm1521, %v1428, %v1460
    %v1540 = vsel %vm1521, %v1430, %v1462
    %v1541 = vsel %vm1521, %v1432, %v1464
    %v1542 = vsel %vm1521, %v1434, %v1466
    %v1543 = vsel %vm1521, %v1436, %v1468
    %v1544 = vsel %vm1521, %v1438, %v1470
    %v1545 = vsel %vm1521, %v1440, %v1472
    %v1546 = vsel %vm1521, %v1442, %v1474
    %v1547 = vsel %vm1521, %v1444, %v1476
    %v1548 = vsel %vm1521, %v1446, %v1478
    %v1549 = vsel %vm1521, %v1448, %v1480
    %v1550 = vsel %vm1521, %v1450, %v1482
    %v1551 = vsel %vm1521, %v1452, %v1484
    %v1552 = vsel %vm1521, %v1454, %v1486
    %v1553 = vsel %vm1521, %v1456, %v1488
    %v1554 = vsel %vm1521, %v1394, %v1426
    %v1555 = vsel %vm1521, %v1396, %v1428
    %v1556 = vsel %vm1521, %v1398, %v1430
    %v1557 = vsel %vm1521, %v1400, %v1432
    %v1558 = vsel %vm1521, %v1402, %v1434
    %v1559 = vsel %vm1521, %v1404, %v1436
    %v1560 = vsel %vm1521, %v1406, %v1438
    %v1561 = vsel %vm1521, %v1408, %v1440
    %v1562 = vsel %vm1521, %v1410, %v1442
    %v1563 = vsel %vm1521, %v1412, %v1444
    %v1564 = vsel %vm1521, %v1414, %v1446
    %v1565 = vsel %vm1521, %v1416, %v1448
    %v1566 = vsel %vm1521, %v1418, %v1450
    %v1567 = vsel %vm1521, %v1420, %v1452
    %v1568 = vsel %vm1521, %v1422, %v1454
    %v1569 = vsel %vm1521, %v1424, %v1456
    %v1570 = vsel %vm1521, %v1490, %v1394
    %v1571 = vsel %vm1521, %v1492, %v1396
    %v1572 = vsel %vm1521, %v1494, %v1398
    %v1573 = vsel %vm1521, %v1496, %v1400
    %v1574 = vsel %vm1521, %v1498, %v1402
    %v1575 = vsel %vm1521, %v1500, %v1404
    %v1576 = vsel %vm1521, %v1502, %v1406
    %v1577 = vsel %vm1521, %v1504, %v1408
    %v1578 = vsel %vm1521, %v1506, %v1410
    %v1579 = vsel %vm1521, %v1508, %v1412
    %v1580 = vsel %vm1521, %v1510, %v1414
    %v1581 = vsel %vm1521, %v1512, %v1416
    %v1582 = vsel %vm1521, %v1514, %v1418
    %v1583 = vsel %vm1521, %v1516, %v1420
    %v1584 = vsel %vm1521, %v1518, %v1422
    %v1585 = vsel %vm1521, %v1520, %v1424
    %s1586 = scalar_lea.vmem %s6, 2
    %v1587 = vld [vmem:[%s1586] ss:$8 sm:$0xf]
    %vm1588 = vcmp.gt.f32.partialorder %v1587, 0.5
    %v1589 = vsel %vm1588, 1, 0
    %v1590 = vlaneseq
    %v1591 = vshrl.u32 %v1590, 7
    %v1592 = vsub.s32 0, %v1591
    %v1593 = vrot.slane %v1589, %v1592
    %v1594 = vlaneseq
    %v1595 = vshrl.u32 %v1594, 7
    %v1596 = vsub.s32 1, %v1595
    %v1597 = vrot.slane %v1589, %v1596
    %v1598 = vlaneseq
    %v1599 = vshrl.u32 %v1598, 7
    %v1600 = vsub.s32 2, %v1599
    %v1601 = vrot.slane %v1589, %v1600
    %v1602 = vlaneseq
    %v1603 = vshrl.u32 %v1602, 7
    %v1604 = vsub.s32 3, %v1603
    %v1605 = vrot.slane %v1589, %v1604
    %vm1606 = vcmp.eq.s32.totalorder %v1593, 1
    %vm1607 = vcmp.eq.s32.totalorder %v1597, 1
    %vm1608 = vcmp.eq.s32.totalorder %v1601, 1
    %vm1609 = vcmp.eq.s32.totalorder %v1605, 1
    %v1610 = vsel %vm1606, %v1570, 0.0
    %v1611 = vsel %vm1607, %v1554, 0.0
    %v1612 = vsel %vm1608, %v1538, 0.0
    %v1613 = vsel %vm1609, %v1522, 0.0
    %v1614 = vsel %vm1606, %v1571, 0.0
    %v1615 = vsel %vm1607, %v1555, 0.0
    %v1616 = vsel %vm1608, %v1539, 0.0
    %v1617 = vsel %vm1609, %v1523, 0.0
    %v1618 = vsel %vm1606, %v1572, 0.0
    %v1619 = vsel %vm1607, %v1556, 0.0
    %v1620 = vsel %vm1608, %v1540, 0.0
    %v1621 = vsel %vm1609, %v1524, 0.0
    %v1622 = vsel %vm1606, %v1573, 0.0
    %v1623 = vsel %vm1607, %v1557, 0.0
    %v1624 = vsel %vm1608, %v1541, 0.0
    %v1625 = vsel %vm1609, %v1525, 0.0
    %v1626 = vsel %vm1606, %v1574, 0.0
    %v1627 = vsel %vm1607, %v1558, 0.0
    %v1628 = vsel %vm1608, %v1542, 0.0
    %v1629 = vsel %vm1609, %v1526, 0.0
    %v1630 = vsel %vm1606, %v1575, 0.0
    %v1631 = vsel %vm1607, %v1559, 0.0
    %v1632 = vsel %vm1608, %v1543, 0.0
    %v1633 = vsel %vm1609, %v1527, 0.0
    %v1634 = vsel %vm1606, %v1576, 0.0
    %v1635 = vsel %vm1607, %v1560, 0.0
    %v1636 = vsel %vm1608, %v1544, 0.0
    %v1637 = vsel %vm1609, %v1528, 0.0
    %v1638 = vsel %vm1606, %v1577, 0.0
    %v1639 = vsel %vm1607, %v1561, 0.0
    %v1640 = vsel %vm1608, %v1545, 0.0
    %v1641 = vsel %vm1609, %v1529, 0.0
    %v1642 = vsel %vm1606, %v1578, 0.0
    %v1643 = vsel %vm1607, %v1562, 0.0
    %v1644 = vsel %vm1608, %v1546, 0.0
    %v1645 = vsel %vm1609, %v1530, 0.0
    %v1646 = vsel %vm1606, %v1579, 0.0
    %v1647 = vsel %vm1607, %v1563, 0.0
    %v1648 = vsel %vm1608, %v1547, 0.0
    %v1649 = vsel %vm1609, %v1531, 0.0
    %v1650 = vsel %vm1606, %v1580, 0.0
    %v1651 = vsel %vm1607, %v1564, 0.0
    %v1652 = vsel %vm1608, %v1548, 0.0
    %v1653 = vsel %vm1609, %v1532, 0.0
    %v1654 = vsel %vm1606, %v1581, 0.0
    %v1655 = vsel %vm1607, %v1565, 0.0
    %v1656 = vsel %vm1608, %v1549, 0.0
    %v1657 = vsel %vm1609, %v1533, 0.0
    %v1658 = vsel %vm1606, %v1582, 0.0
    %v1659 = vsel %vm1607, %v1566, 0.0
    %v1660 = vsel %vm1608, %v1550, 0.0
    %v1661 = vsel %vm1609, %v1534, 0.0
    %v1662 = vsel %vm1606, %v1583, 0.0
    %v1663 = vsel %vm1607, %v1567, 0.0
    %v1664 = vsel %vm1608, %v1551, 0.0
    %v1665 = vsel %vm1609, %v1535, 0.0
    %v1666 = vsel %vm1606, %v1584, 0.0
    %v1667 = vsel %vm1607, %v1568, 0.0
    %v1668 = vsel %vm1608, %v1552, 0.0
    %v1669 = vsel %vm1609, %v1536, 0.0
    %v1670 = vsel %vm1606, %v1585, 0.0
    %v1671 = vsel %vm1607, %v1569, 0.0
    %v1672 = vsel %vm1608, %v1553, 0.0
    %v1673 = vsel %vm1609, %v1537, 0.0
    %v1674 = vpack.c.bf16 %v1614, %v1610
    %v1675 = vpack.c.bf16 %v1615, %v1611
    %v1676 = vpack.c.bf16 %v1616, %v1612
    %v1677 = vpack.c.bf16 %v1617, %v1613
    %v1678 = vpack.c.bf16 %v1622, %v1618
    %v1679 = vpack.c.bf16 %v1623, %v1619
    %v1680 = vpack.c.bf16 %v1624, %v1620
    %v1681 = vpack.c.bf16 %v1625, %v1621
    %v1682 = vpack.c.bf16 %v1630, %v1626
    %v1683 = vpack.c.bf16 %v1631, %v1627
    %v1684 = vpack.c.bf16 %v1632, %v1628
    %v1685 = vpack.c.bf16 %v1633, %v1629
    %v1686 = vpack.c.bf16 %v1638, %v1634
    %v1687 = vpack.c.bf16 %v1639, %v1635
    %v1688 = vpack.c.bf16 %v1640, %v1636
    %v1689 = vpack.c.bf16 %v1641, %v1637
    %v1690 = vpack.c.bf16 %v1646, %v1642
    %v1691 = vpack.c.bf16 %v1647, %v1643
    %v1692 = vpack.c.bf16 %v1648, %v1644
    %v1693 = vpack.c.bf16 %v1649, %v1645
    %v1694 = vpack.c.bf16 %v1654, %v1650
    %v1695 = vpack.c.bf16 %v1655, %v1651
    %v1696 = vpack.c.bf16 %v1656, %v1652
    %v1697 = vpack.c.bf16 %v1657, %v1653
    %v1698 = vpack.c.bf16 %v1662, %v1658
    %v1699 = vpack.c.bf16 %v1663, %v1659
    %v1700 = vpack.c.bf16 %v1664, %v1660
    %v1701 = vpack.c.bf16 %v1665, %v1661
    %v1702 = vpack.c.bf16 %v1670, %v1666
    %v1703 = vpack.c.bf16 %v1671, %v1667
    %v1704 = vpack.c.bf16 %v1672, %v1668
    %v1705 = vpack.c.bf16 %v1673, %v1669
    %1706 = vst [vmem:[#allocation2 + $0x200] sm:$0xff] %v1674
    %1707 = vst [vmem:[#allocation2 + $0x208] sm:$0xff] %v1675
    %1708 = vst [vmem:[#allocation2 + $0x210] sm:$0xff] %v1676
    %1709 = vst [vmem:[#allocation2 + $0x218] sm:$0xff] %v1677
    %1710 = vst [vmem:[#allocation2 + $0x220] sm:$0xff] %v1678
    %1711 = vst [vmem:[#allocation2 + $0x228] sm:$0xff] %v1679
    %1712 = vst [vmem:[#allocation2 + $0x230] sm:$0xff] %v1680
    %1713 = vst [vmem:[#allocation2 + $0x238] sm:$0xff] %v1681
    %1714 = vst [vmem:[#allocation2 + $0x240] sm:$0xff] %v1682
    %1715 = vst [vmem:[#allocation2 + $0x248] sm:$0xff] %v1683
    %1716 = vst [vmem:[#allocation2 + $0x250] sm:$0xff] %v1684
    %1717 = vst [vmem:[#allocation2 + $0x258] sm:$0xff] %v1685
    %1718 = vst [vmem:[#allocation2 + $0x260] sm:$0xff] %v1686
    %1719 = vst [vmem:[#allocation2 + $0x268] sm:$0xff] %v1687
    %1720 = vst [vmem:[#allocation2 + $0x270] sm:$0xff] %v1688
    %1721 = vst [vmem:[#allocation2 + $0x278] sm:$0xff] %v1689
    %1722 = vst [vmem:[#allocation2 + $0x280] sm:$0xff] %v1690
    %1723 = vst [vmem:[#allocation2 + $0x288] sm:$0xff] %v1691
    %1724 = vst [vmem:[#allocation2 + $0x290] sm:$0xff] %v1692
    %1725 = vst [vmem:[#allocation2 + $0x298] sm:$0xff] %v1693
    %1726 = vst [vmem:[#allocation2 + $0x2a0] sm:$0xff] %v1694
    %1727 = vst [vmem:[#allocation2 + $0x2a8] sm:$0xff] %v1695
    %1728 = vst [vmem:[#allocation2 + $0x2b0] sm:$0xff] %v1696
    %1729 = vst [vmem:[#allocation2 + $0x2b8] sm:$0xff] %v1697
    %1730 = vst [vmem:[#allocation2 + $0x2c0] sm:$0xff] %v1698
    %1731 = vst [vmem:[#allocation2 + $0x2c8] sm:$0xff] %v1699
    %1732 = vst [vmem:[#allocation2 + $0x2d0] sm:$0xff] %v1700
    %1733 = vst [vmem:[#allocation2 + $0x2d8] sm:$0xff] %v1701
    %1734 = vst [vmem:[#allocation2 + $0x2e0] sm:$0xff] %v1702
    %1735 = vst [vmem:[#allocation2 + $0x2e8] sm:$0xff] %v1703
    %1736 = vst [vmem:[#allocation2 + $0x2f0] sm:$0xff] %v1704
    %1737 = vst [vmem:[#allocation2 + $0x2f8] sm:$0xff] %v1705
    %1738 = vrot.lane.b32.xlu0 %v638, 1
    %v1739 = vpop.permute.xlu0 %1738
    %1740 = vrot.lane.b32.xlu0 %v642, 1
    %v1741 = vpop.permute.xlu0 %1740
    %1742 = vrot.lane.b32.xlu0 %v646, 1
    %v1743 = vpop.permute.xlu0 %1742
    %1744 = vrot.lane.b32.xlu0 %v650, 1
    %v1745 = vpop.permute.xlu0 %1744
    %1746 = vrot.lane.b32.xlu0 %v654, 1
    %v1747 = vpop.permute.xlu0 %1746
    %1748 = vrot.lane.b32.xlu0 %v658, 1
    %v1749 = vpop.permute.xlu0 %1748
    %1750 = vrot.lane.b32.xlu0 %v662, 1
    %v1751 = vpop.permute.xlu0 %1750
    %1752 = vrot.lane.b32.xlu0 %v666, 1
    %v1753 = vpop.permute.xlu0 %1752
    %1754 = vrot.lane.b32.xlu0 %v670, 1
    %v1755 = vpop.permute.xlu0 %1754
    %1756 = vrot.lane.b32.xlu0 %v674, 1
    %v1757 = vpop.permute.xlu0 %1756
    %1758 = vrot.lane.b32.xlu0 %v678, 1
    %v1759 = vpop.permute.xlu0 %1758
    %1760 = vrot.lane.b32.xlu0 %v682, 1
    %v1761 = vpop.permute.xlu0 %1760
    %1762 = vrot.lane.b32.xlu0 %v686, 1
    %v1763 = vpop.permute.xlu0 %1762
    %1764 = vrot.lane.b32.xlu0 %v690, 1
    %v1765 = vpop.permute.xlu0 %1764
    %1766 = vrot.lane.b32.xlu0 %v694, 1
    %v1767 = vpop.permute.xlu0 %1766
    %1768 = vrot.lane.b32.xlu0 %v698, 1
    %v1769 = vpop.permute.xlu0 %1768
    %1770 = vrot.lane.b32.xlu0 %v639, 1
    %v1771 = vpop.permute.xlu0 %1770
    %1772 = vrot.lane.b32.xlu0 %v643, 1
    %v1773 = vpop.permute.xlu0 %1772
    %1774 = vrot.lane.b32.xlu0 %v647, 1
    %v1775 = vpop.permute.xlu0 %1774
    %1776 = vrot.lane.b32.xlu0 %v651, 1
    %v1777 = vpop.permute.xlu0 %1776
    %1778 = vrot.lane.b32.xlu0 %v655, 1
    %v1779 = vpop.permute.xlu0 %1778
    %1780 = vrot.lane.b32.xlu0 %v659, 1
    %v1781 = vpop.permute.xlu0 %1780
    %1782 = vrot.lane.b32.xlu0 %v663, 1
    %v1783 = vpop.permute.xlu0 %1782
    %1784 = vrot.lane.b32.xlu0 %v667, 1
    %v1785 = vpop.permute.xlu0 %1784
    %1786 = vrot.lane.b32.xlu0 %v671, 1
    %v1787 = vpop.permute.xlu0 %1786
    %1788 = vrot.lane.b32.xlu0 %v675, 1
    %v1789 = vpop.permute.xlu0 %1788
    %1790 = vrot.lane.b32.xlu0 %v679, 1
    %v1791 = vpop.permute.xlu0 %1790
    %1792 = vrot.lane.b32.xlu0 %v683, 1
    %v1793 = vpop.permute.xlu0 %1792
    %1794 = vrot.lane.b32.xlu0 %v687, 1
    %v1795 = vpop.permute.xlu0 %1794
    %1796 = vrot.lane.b32.xlu0 %v691, 1
    %v1797 = vpop.permute.xlu0 %1796
    %1798 = vrot.lane.b32.xlu0 %v695, 1
    %v1799 = vpop.permute.xlu0 %1798
    %1800 = vrot.lane.b32.xlu0 %v699, 1
    %v1801 = vpop.permute.xlu0 %1800
    %1802 = vrot.lane.b32.xlu0 %v640, 1
    %v1803 = vpop.permute.xlu0 %1802
    %1804 = vrot.lane.b32.xlu0 %v644, 1
    %v1805 = vpop.permute.xlu0 %1804
    %1806 = vrot.lane.b32.xlu0 %v648, 1
    %v1807 = vpop.permute.xlu0 %1806
    %1808 = vrot.lane.b32.xlu0 %v652, 1
    %v1809 = vpop.permute.xlu0 %1808
    %1810 = vrot.lane.b32.xlu0 %v656, 1
    %v1811 = vpop.permute.xlu0 %1810
    %1812 = vrot.lane.b32.xlu0 %v660, 1
    %v1813 = vpop.permute.xlu0 %1812
    %1814 = vrot.lane.b32.xlu0 %v664, 1
    %v1815 = vpop.permute.xlu0 %1814
    %1816 = vrot.lane.b32.xlu0 %v668, 1
    %v1817 = vpop.permute.xlu0 %1816
    %1818 = vrot.lane.b32.xlu0 %v672, 1
    %v1819 = vpop.permute.xlu0 %1818
    %1820 = vrot.lane.b32.xlu0 %v676, 1
    %v1821 = vpop.permute.xlu0 %1820
    %1822 = vrot.lane.b32.xlu0 %v680, 1
    %v1823 = vpop.permute.xlu0 %1822
    %1824 = vrot.lane.b32.xlu0 %v684, 1
    %v1825 = vpop.permute.xlu0 %1824
    %1826 = vrot.lane.b32.xlu0 %v688, 1
    %v1827 = vpop.permute.xlu0 %1826
    %1828 = vrot.lane.b32.xlu0 %v692, 1
    %v1829 = vpop.permute.xlu0 %1828
    %1830 = vrot.lane.b32.xlu0 %v696, 1
    %v1831 = vpop.permute.xlu0 %1830
    %1832 = vrot.lane.b32.xlu0 %v700, 1
    %v1833 = vpop.permute.xlu0 %1832
    %1834 = vrot.lane.b32.xlu0 %v641, 1
    %v1835 = vpop.permute.xlu0 %1834
    %1836 = vrot.lane.b32.xlu0 %v645, 1
    %v1837 = vpop.permute.xlu0 %1836
    %1838 = vrot.lane.b32.xlu0 %v649, 1
    %v1839 = vpop.permute.xlu0 %1838
    %1840 = vrot.lane.b32.xlu0 %v653, 1
    %v1841 = vpop.permute.xlu0 %1840
    %1842 = vrot.lane.b32.xlu0 %v657, 1
    %v1843 = vpop.permute.xlu0 %1842
    %1844 = vrot.lane.b32.xlu0 %v661, 1
    %v1845 = vpop.permute.xlu0 %1844
    %1846 = vrot.lane.b32.xlu0 %v665, 1
    %v1847 = vpop.permute.xlu0 %1846
    %1848 = vrot.lane.b32.xlu0 %v669, 1
    %v1849 = vpop.permute.xlu0 %1848
    %1850 = vrot.lane.b32.xlu0 %v673, 1
    %v1851 = vpop.permute.xlu0 %1850
    %1852 = vrot.lane.b32.xlu0 %v677, 1
    %v1853 = vpop.permute.xlu0 %1852
    %1854 = vrot.lane.b32.xlu0 %v681, 1
    %v1855 = vpop.permute.xlu0 %1854
    %1856 = vrot.lane.b32.xlu0 %v685, 1
    %v1857 = vpop.permute.xlu0 %1856
    %1858 = vrot.lane.b32.xlu0 %v689, 1
    %v1859 = vpop.permute.xlu0 %1858
    %1860 = vrot.lane.b32.xlu0 %v693, 1
    %v1861 = vpop.permute.xlu0 %1860
    %1862 = vrot.lane.b32.xlu0 %v697, 1
    %v1863 = vpop.permute.xlu0 %1862
    %1864 = vrot.lane.b32.xlu0 %v701, 1
    %v1865 = vpop.permute.xlu0 %1864
    %vm1866 = vcmp.lt.s32.totalorder %v831, 1
    %v1867 = vsel %vm1866, %v1803, %v1835
    %v1868 = vsel %vm1866, %v1805, %v1837
    %v1869 = vsel %vm1866, %v1807, %v1839
    %v1870 = vsel %vm1866, %v1809, %v1841
    %v1871 = vsel %vm1866, %v1811, %v1843
    %v1872 = vsel %vm1866, %v1813, %v1845
    %v1873 = vsel %vm1866, %v1815, %v1847
    %v1874 = vsel %vm1866, %v1817, %v1849
    %v1875 = vsel %vm1866, %v1819, %v1851
    %v1876 = vsel %vm1866, %v1821, %v1853
    %v1877 = vsel %vm1866, %v1823, %v1855
    %v1878 = vsel %vm1866, %v1825, %v1857
    %v1879 = vsel %vm1866, %v1827, %v1859
    %v1880 = vsel %vm1866, %v1829, %v1861
    %v1881 = vsel %vm1866, %v1831, %v1863
    %v1882 = vsel %vm1866, %v1833, %v1865
    %v1883 = vsel %vm1866, %v1771, %v1803
    %v1884 = vsel %vm1866, %v1773, %v1805
    %v1885 = vsel %vm1866, %v1775, %v1807
    %v1886 = vsel %vm1866, %v1777, %v1809
    %v1887 = vsel %vm1866, %v1779, %v1811
    %v1888 = vsel %vm1866, %v1781, %v1813
    %v1889 = vsel %vm1866, %v1783, %v1815
    %v1890 = vsel %vm1866, %v1785, %v1817
    %v1891 = vsel %vm1866, %v1787, %v1819
    %v1892 = vsel %vm1866, %v1789, %v1821
    %v1893 = vsel %vm1866, %v1791, %v1823
    %v1894 = vsel %vm1866, %v1793, %v1825
    %v1895 = vsel %vm1866, %v1795, %v1827
    %v1896 = vsel %vm1866, %v1797, %v1829
    %v1897 = vsel %vm1866, %v1799, %v1831
    %v1898 = vsel %vm1866, %v1801, %v1833
    %v1899 = vsel %vm1866, %v1739, %v1771
    %v1900 = vsel %vm1866, %v1741, %v1773
    %v1901 = vsel %vm1866, %v1743, %v1775
    %v1902 = vsel %vm1866, %v1745, %v1777
    %v1903 = vsel %vm1866, %v1747, %v1779
    %v1904 = vsel %vm1866, %v1749, %v1781
    %v1905 = vsel %vm1866, %v1751, %v1783
    %v1906 = vsel %vm1866, %v1753, %v1785
    %v1907 = vsel %vm1866, %v1755, %v1787
    %v1908 = vsel %vm1866, %v1757, %v1789
    %v1909 = vsel %vm1866, %v1759, %v1791
    %v1910 = vsel %vm1866, %v1761, %v1793
    %v1911 = vsel %vm1866, %v1763, %v1795
    %v1912 = vsel %vm1866, %v1765, %v1797
    %v1913 = vsel %vm1866, %v1767, %v1799
    %v1914 = vsel %vm1866, %v1769, %v1801
    %v1915 = vsel %vm1866, %v1835, %v1739
    %v1916 = vsel %vm1866, %v1837, %v1741
    %v1917 = vsel %vm1866, %v1839, %v1743
    %v1918 = vsel %vm1866, %v1841, %v1745
    %v1919 = vsel %vm1866, %v1843, %v1747
    %v1920 = vsel %vm1866, %v1845, %v1749
    %v1921 = vsel %vm1866, %v1847, %v1751
    %v1922 = vsel %vm1866, %v1849, %v1753
    %v1923 = vsel %vm1866, %v1851, %v1755
    %v1924 = vsel %vm1866, %v1853, %v1757
    %v1925 = vsel %vm1866, %v1855, %v1759
    %v1926 = vsel %vm1866, %v1857, %v1761
    %v1927 = vsel %vm1866, %v1859, %v1763
    %v1928 = vsel %vm1866, %v1861, %v1765
    %v1929 = vsel %vm1866, %v1863, %v1767
    %v1930 = vsel %vm1866, %v1865, %v1769
    %s1931 = scalar_lea.vmem %s6, 3
    %v1932 = vld [vmem:[%s1931] ss:$8 sm:$0xf]
    %vm1933 = vcmp.gt.f32.partialorder %v1932, 0.5
    %v1934 = vsel %vm1933, 1, 0
    %v1935 = vlaneseq
    %v1936 = vshrl.u32 %v1935, 7
    %v1937 = vsub.s32 0, %v1936
    %v1938 = vrot.slane %v1934, %v1937
    %v1939 = vlaneseq
    %v1940 = vshrl.u32 %v1939, 7
    %v1941 = vsub.s32 1, %v1940
    %v1942 = vrot.slane %v1934, %v1941
    %v1943 = vlaneseq
    %v1944 = vshrl.u32 %v1943, 7
    %v1945 = vsub.s32 2, %v1944
    %v1946 = vrot.slane %v1934, %v1945
    %v1947 = vlaneseq
    %v1948 = vshrl.u32 %v1947, 7
    %v1949 = vsub.s32 3, %v1948
    %v1950 = vrot.slane %v1934, %v1949
    %vm1951 = vcmp.eq.s32.totalorder %v1938, 1
    %vm1952 = vcmp.eq.s32.totalorder %v1942, 1
    %vm1953 = vcmp.eq.s32.totalorder %v1946, 1
    %vm1954 = vcmp.eq.s32.totalorder %v1950, 1
    %v1955 = vsel %vm1951, %v1915, 0.0
    %v1956 = vsel %vm1952, %v1899, 0.0
    %v1957 = vsel %vm1953, %v1883, 0.0
    %v1958 = vsel %vm1954, %v1867, 0.0
    %v1959 = vsel %vm1951, %v1916, 0.0
    %v1960 = vsel %vm1952, %v1900, 0.0
    %v1961 = vsel %vm1953, %v1884, 0.0
    %v1962 = vsel %vm1954, %v1868, 0.0
    %v1963 = vsel %vm1951, %v1917, 0.0
    %v1964 = vsel %vm1952, %v1901, 0.0
    %v1965 = vsel %vm1953, %v1885, 0.0
    %v1966 = vsel %vm1954, %v1869, 0.0
    %v1967 = vsel %vm1951, %v1918, 0.0
    %v1968 = vsel %vm1952, %v1902, 0.0
    %v1969 = vsel %vm1953, %v1886, 0.0
    %v1970 = vsel %vm1954, %v1870, 0.0
    %v1971 = vsel %vm1951, %v1919, 0.0
    %v1972 = vsel %vm1952, %v1903, 0.0
    %v1973 = vsel %vm1953, %v1887, 0.0
    %v1974 = vsel %vm1954, %v1871, 0.0
    %v1975 = vsel %vm1951, %v1920, 0.0
    %v1976 = vsel %vm1952, %v1904, 0.0
    %v1977 = vsel %vm1953, %v1888, 0.0
    %v1978 = vsel %vm1954, %v1872, 0.0
    %v1979 = vsel %vm1951, %v1921, 0.0
    %v1980 = vsel %vm1952, %v1905, 0.0
    %v1981 = vsel %vm1953, %v1889, 0.0
    %v1982 = vsel %vm1954, %v1873, 0.0
    %v1983 = vsel %vm1951, %v1922, 0.0
    %v1984 = vsel %vm1952, %v1906, 0.0
    %v1985 = vsel %vm1953, %v1890, 0.0
    %v1986 = vsel %vm1954, %v1874, 0.0
    %v1987 = vsel %vm1951, %v1923, 0.0
    %v1988 = vsel %vm1952, %v1907, 0.0
    %v1989 = vsel %vm1953, %v1891, 0.0
    %v1990 = vsel %vm1954, %v1875, 0.0
    %v1991 = vsel %vm1951, %v1924, 0.0
    %v1992 = vsel %vm1952, %v1908, 0.0
    %v1993 = vsel %vm1953, %v1892, 0.0
    %v1994 = vsel %vm1954, %v1876, 0.0
    %v1995 = vsel %vm1951, %v1925, 0.0
    %v1996 = vsel %vm1952, %v1909, 0.0
    %v1997 = vsel %vm1953, %v1893, 0.0
    %v1998 = vsel %vm1954, %v1877, 0.0
    %v1999 = vsel %vm1951, %v1926, 0.0
    %v2000 = vsel %vm1952, %v1910, 0.0
    %v2001 = vsel %vm1953, %v1894, 0.0
    %v2002 = vsel %vm1954, %v1878, 0.0
    %v2003 = vsel %vm1951, %v1927, 0.0
    %v2004 = vsel %vm1952, %v1911, 0.0
    %v2005 = vsel %vm1953, %v1895, 0.0
    %v2006 = vsel %vm1954, %v1879, 0.0
    %v2007 = vsel %vm1951, %v1928, 0.0
    %v2008 = vsel %vm1952, %v1912, 0.0
    %v2009 = vsel %vm1953, %v1896, 0.0
    %v2010 = vsel %vm1954, %v1880, 0.0
    %v2011 = vsel %vm1951, %v1929, 0.0
    %v2012 = vsel %vm1952, %v1913, 0.0
    %v2013 = vsel %vm1953, %v1897, 0.0
    %v2014 = vsel %vm1954, %v1881, 0.0
    %v2015 = vsel %vm1951, %v1930, 0.0
    %v2016 = vsel %vm1952, %v1914, 0.0
    %v2017 = vsel %vm1953, %v1898, 0.0
    %v2018 = vsel %vm1954, %v1882, 0.0
    %v2019 = vpack.c.bf16 %v1959, %v1955
    %v2020 = vpack.c.bf16 %v1960, %v1956
    %v2021 = vpack.c.bf16 %v1961, %v1957
    %v2022 = vpack.c.bf16 %v1962, %v1958
    %v2023 = vpack.c.bf16 %v1967, %v1963
    %v2024 = vpack.c.bf16 %v1968, %v1964
    %v2025 = vpack.c.bf16 %v1969, %v1965
    %v2026 = vpack.c.bf16 %v1970, %v1966
    %v2027 = vpack.c.bf16 %v1975, %v1971
    %v2028 = vpack.c.bf16 %v1976, %v1972
    %v2029 = vpack.c.bf16 %v1977, %v1973
    %v2030 = vpack.c.bf16 %v1978, %v1974
    %v2031 = vpack.c.bf16 %v1983, %v1979
    %v2032 = vpack.c.bf16 %v1984, %v1980
    %v2033 = vpack.c.bf16 %v1985, %v1981
    %v2034 = vpack.c.bf16 %v1986, %v1982
    %v2035 = vpack.c.bf16 %v1991, %v1987
    %v2036 = vpack.c.bf16 %v1992, %v1988
    %v2037 = vpack.c.bf16 %v1993, %v1989
    %v2038 = vpack.c.bf16 %v1994, %v1990
    %v2039 = vpack.c.bf16 %v1999, %v1995
    %v2040 = vpack.c.bf16 %v2000, %v1996
    %v2041 = vpack.c.bf16 %v2001, %v1997
    %v2042 = vpack.c.bf16 %v2002, %v1998
    %v2043 = vpack.c.bf16 %v2007, %v2003
    %v2044 = vpack.c.bf16 %v2008, %v2004
    %v2045 = vpack.c.bf16 %v2009, %v2005
    %v2046 = vpack.c.bf16 %v2010, %v2006
    %v2047 = vpack.c.bf16 %v2015, %v2011
    %v2048 = vpack.c.bf16 %v2016, %v2012
    %v2049 = vpack.c.bf16 %v2017, %v2013
    %v2050 = vpack.c.bf16 %v2018, %v2014
    %2051 = vst [vmem:[#allocation2 + $0x300] sm:$0xff] %v2019
    %2052 = vst [vmem:[#allocation2 + $0x308] sm:$0xff] %v2020
    %2053 = vst [vmem:[#allocation2 + $0x310] sm:$0xff] %v2021
    %2054 = vst [vmem:[#allocation2 + $0x318] sm:$0xff] %v2022
    %2055 = vst [vmem:[#allocation2 + $0x320] sm:$0xff] %v2023
    %2056 = vst [vmem:[#allocation2 + $0x328] sm:$0xff] %v2024
    %2057 = vst [vmem:[#allocation2 + $0x330] sm:$0xff] %v2025
    %2058 = vst [vmem:[#allocation2 + $0x338] sm:$0xff] %v2026
    %2059 = vst [vmem:[#allocation2 + $0x340] sm:$0xff] %v2027
    %2060 = vst [vmem:[#allocation2 + $0x348] sm:$0xff] %v2028
    %2061 = vst [vmem:[#allocation2 + $0x350] sm:$0xff] %v2029
    %2062 = vst [vmem:[#allocation2 + $0x358] sm:$0xff] %v2030
    %2063 = vst [vmem:[#allocation2 + $0x360] sm:$0xff] %v2031
    %2064 = vst [vmem:[#allocation2 + $0x368] sm:$0xff] %v2032
    %2065 = vst [vmem:[#allocation2 + $0x370] sm:$0xff] %v2033
    %2066 = vst [vmem:[#allocation2 + $0x378] sm:$0xff] %v2034
    %2067 = vst [vmem:[#allocation2 + $0x380] sm:$0xff] %v2035
    %2068 = vst [vmem:[#allocation2 + $0x388] sm:$0xff] %v2036
    %2069 = vst [vmem:[#allocation2 + $0x390] sm:$0xff] %v2037
    %2070 = vst [vmem:[#allocation2 + $0x398] sm:$0xff] %v2038
    %2071 = vst [vmem:[#allocation2 + $0x3a0] sm:$0xff] %v2039
    %2072 = vst [vmem:[#allocation2 + $0x3a8] sm:$0xff] %v2040
    %2073 = vst [vmem:[#allocation2 + $0x3b0] sm:$0xff] %v2041
    %2074 = vst [vmem:[#allocation2 + $0x3b8] sm:$0xff] %v2042
    %2075 = vst [vmem:[#allocation2 + $0x3c0] sm:$0xff] %v2043
    %2076 = vst [vmem:[#allocation2 + $0x3c8] sm:$0xff] %v2044
    %2077 = vst [vmem:[#allocation2 + $0x3d0] sm:$0xff] %v2045
    %2078 = vst [vmem:[#allocation2 + $0x3d8] sm:$0xff] %v2046
    %2079 = vst [vmem:[#allocation2 + $0x3e0] sm:$0xff] %v2047
    %2080 = vst [vmem:[#allocation2 + $0x3e8] sm:$0xff] %v2048
    %2081 = vst [vmem:[#allocation2 + $0x3f0] sm:$0xff] %v2049
    %2082 = vst [vmem:[#allocation2 + $0x3f8] sm:$0xff] %v2050
    %v2083 = vpack.c.bf16 %v642, %v638
    %v2084 = vpack.c.bf16 %v643, %v639
    %v2085 = vpack.c.bf16 %v644, %v640
    %v2086 = vpack.c.bf16 %v645, %v641
    %v2087 = vpack.c.bf16 %v650, %v646
    %v2088 = vpack.c.bf16 %v651, %v647
    %v2089 = vpack.c.bf16 %v652, %v648
    %v2090 = vpack.c.bf16 %v653, %v649
    %v2091 = vpack.c.bf16 %v658, %v654
    %v2092 = vpack.c.bf16 %v659, %v655
    %v2093 = vpack.c.bf16 %v660, %v656
    %v2094 = vpack.c.bf16 %v661, %v657
    %v2095 = vpack.c.bf16 %v666, %v662
    %v2096 = vpack.c.bf16 %v667, %v663
    %v2097 = vpack.c.bf16 %v668, %v664
    %v2098 = vpack.c.bf16 %v669, %v665
    %v2099 = vpack.c.bf16 %v674, %v670
    %v2100 = vpack.c.bf16 %v675, %v671
    %v2101 = vpack.c.bf16 %v676, %v672
    %v2102 = vpack.c.bf16 %v677, %v673
    %v2103 = vpack.c.bf16 %v682, %v678
    %v2104 = vpack.c.bf16 %v683, %v679
    %v2105 = vpack.c.bf16 %v684, %v680
    %v2106 = vpack.c.bf16 %v685, %v681
    %v2107 = vpack.c.bf16 %v690, %v686
    %v2108 = vpack.c.bf16 %v691, %v687
    %v2109 = vpack.c.bf16 %v692, %v688
    %v2110 = vpack.c.bf16 %v693, %v689
    %v2111 = vpack.c.bf16 %v698, %v694
    %v2112 = vpack.c.bf16 %v699, %v695
    %v2113 = vpack.c.bf16 %v700, %v696
    %v2114 = vpack.c.bf16 %v701, %v697
    %2115 = vst [vmem:[#allocation2 + $0x400] sm:$0xff] %v2083
    %2116 = vst [vmem:[#allocation2 + $0x408] sm:$0xff] %v2084
    %2117 = vst [vmem:[#allocation2 + $0x410] sm:$0xff] %v2085
    %2118 = vst [vmem:[#allocation2 + $0x418] sm:$0xff] %v2086
    %2119 = vst [vmem:[#allocation2 + $0x420] sm:$0xff] %v2087
    %2120 = vst [vmem:[#allocation2 + $0x428] sm:$0xff] %v2088
    %2121 = vst [vmem:[#allocation2 + $0x430] sm:$0xff] %v2089
    %2122 = vst [vmem:[#allocation2 + $0x438] sm:$0xff] %v2090
    %2123 = vst [vmem:[#allocation2 + $0x440] sm:$0xff] %v2091
    %2124 = vst [vmem:[#allocation2 + $0x448] sm:$0xff] %v2092
    %2125 = vst [vmem:[#allocation2 + $0x450] sm:$0xff] %v2093
    %2126 = vst [vmem:[#allocation2 + $0x458] sm:$0xff] %v2094
    %2127 = vst [vmem:[#allocation2 + $0x460] sm:$0xff] %v2095
    %2128 = vst [vmem:[#allocation2 + $0x468] sm:$0xff] %v2096
    %2129 = vst [vmem:[#allocation2 + $0x470] sm:$0xff] %v2097
    %2130 = vst [vmem:[#allocation2 + $0x478] sm:$0xff] %v2098
    %2131 = vst [vmem:[#allocation2 + $0x480] sm:$0xff] %v2099
    %2132 = vst [vmem:[#allocation2 + $0x488] sm:$0xff] %v2100
    %2133 = vst [vmem:[#allocation2 + $0x490] sm:$0xff] %v2101
    %2134 = vst [vmem:[#allocation2 + $0x498] sm:$0xff] %v2102
    %2135 = vst [vmem:[#allocation2 + $0x4a0] sm:$0xff] %v2103
    %2136 = vst [vmem:[#allocation2 + $0x4a8] sm:$0xff] %v2104
    %2137 = vst [vmem:[#allocation2 + $0x4b0] sm:$0xff] %v2105
    %2138 = vst [vmem:[#allocation2 + $0x4b8] sm:$0xff] %v2106
    %2139 = vst [vmem:[#allocation2 + $0x4c0] sm:$0xff] %v2107
    %2140 = vst [vmem:[#allocation2 + $0x4c8] sm:$0xff] %v2108
    %2141 = vst [vmem:[#allocation2 + $0x4d0] sm:$0xff] %v2109
    %2142 = vst [vmem:[#allocation2 + $0x4d8] sm:$0xff] %v2110
    %2143 = vst [vmem:[#allocation2 + $0x4e0] sm:$0xff] %v2111
    %2144 = vst [vmem:[#allocation2 + $0x4e8] sm:$0xff] %v2112
    %2145 = vst [vmem:[#allocation2 + $0x4f0] sm:$0xff] %v2113
    %2146 = vst [vmem:[#allocation2 + $0x4f8] sm:$0xff] %v2114
    %2147 = vrot.lane.b32.xlu0 %v638, 127
    %v2148 = vpop.permute.xlu0 %2147
    %2149 = vrot.lane.b32.xlu0 %v642, 127
    %v2150 = vpop.permute.xlu0 %2149
    %2151 = vrot.lane.b32.xlu0 %v646, 127
    %v2152 = vpop.permute.xlu0 %2151
    %2153 = vrot.lane.b32.xlu0 %v650, 127
    %v2154 = vpop.permute.xlu0 %2153
    %2155 = vrot.lane.b32.xlu0 %v654, 127
    %v2156 = vpop.permute.xlu0 %2155
    %2157 = vrot.lane.b32.xlu0 %v658, 127
    %v2158 = vpop.permute.xlu0 %2157
    %2159 = vrot.lane.b32.xlu0 %v662, 127
    %v2160 = vpop.permute.xlu0 %2159
    %2161 = vrot.lane.b32.xlu0 %v666, 127
    %v2162 = vpop.permute.xlu0 %2161
    %2163 = vrot.lane.b32.xlu0 %v670, 127
    %v2164 = vpop.permute.xlu0 %2163
    %2165 = vrot.lane.b32.xlu0 %v674, 127
    %v2166 = vpop.permute.xlu0 %2165
    %2167 = vrot.lane.b32.xlu0 %v678, 127
    %v2168 = vpop.permute.xlu0 %2167
    %2169 = vrot.lane.b32.xlu0 %v682, 127
    %v2170 = vpop.permute.xlu0 %2169
    %2171 = vrot.lane.b32.xlu0 %v686, 127
    %v2172 = vpop.permute.xlu0 %2171
    %2173 = vrot.lane.b32.xlu0 %v690, 127
    %v2174 = vpop.permute.xlu0 %2173
    %2175 = vrot.lane.b32.xlu0 %v694, 127
    %v2176 = vpop.permute.xlu0 %2175
    %2177 = vrot.lane.b32.xlu0 %v698, 127
    %v2178 = vpop.permute.xlu0 %2177
    %2179 = vrot.lane.b32.xlu0 %v639, 127
    %v2180 = vpop.permute.xlu0 %2179
    %2181 = vrot.lane.b32.xlu0 %v643, 127
    %v2182 = vpop.permute.xlu0 %2181
    %2183 = vrot.lane.b32.xlu0 %v647, 127
    %v2184 = vpop.permute.xlu0 %2183
    %2185 = vrot.lane.b32.xlu0 %v651, 127
    %v2186 = vpop.permute.xlu0 %2185
    %2187 = vrot.lane.b32.xlu0 %v655, 127
    %v2188 = vpop.permute.xlu0 %2187
    %2189 = vrot.lane.b32.xlu0 %v659, 127
    %v2190 = vpop.permute.xlu0 %2189
    %2191 = vrot.lane.b32.xlu0 %v663, 127
    %v2192 = vpop.permute.xlu0 %2191
    %2193 = vrot.lane.b32.xlu0 %v667, 127
    %v2194 = vpop.permute.xlu0 %2193
    %2195 = vrot.lane.b32.xlu0 %v671, 127
    %v2196 = vpop.permute.xlu0 %2195
    %2197 = vrot.lane.b32.xlu0 %v675, 127
    %v2198 = vpop.permute.xlu0 %2197
    %2199 = vrot.lane.b32.xlu0 %v679, 127
    %v2200 = vpop.permute.xlu0 %2199
    %2201 = vrot.lane.b32.xlu0 %v683, 127
    %v2202 = vpop.permute.xlu0 %2201
    %2203 = vrot.lane.b32.xlu0 %v687, 127
    %v2204 = vpop.permute.xlu0 %2203
    %2205 = vrot.lane.b32.xlu0 %v691, 127
    %v2206 = vpop.permute.xlu0 %2205
    %2207 = vrot.lane.b32.xlu0 %v695, 127
    %v2208 = vpop.permute.xlu0 %2207
    %2209 = vrot.lane.b32.xlu0 %v699, 127
    %v2210 = vpop.permute.xlu0 %2209
    %2211 = vrot.lane.b32.xlu0 %v640, 127
    %v2212 = vpop.permute.xlu0 %2211
    %2213 = vrot.lane.b32.xlu0 %v644, 127
    %v2214 = vpop.permute.xlu0 %2213
    %2215 = vrot.lane.b32.xlu0 %v648, 127
    %v2216 = vpop.permute.xlu0 %2215
    %2217 = vrot.lane.b32.xlu0 %v652, 127
    %v2218 = vpop.permute.xlu0 %2217
    %2219 = vrot.lane.b32.xlu0 %v656, 127
    %v2220 = vpop.permute.xlu0 %2219
    %2221 = vrot.lane.b32.xlu0 %v660, 127
    %v2222 = vpop.permute.xlu0 %2221
    %2223 = vrot.lane.b32.xlu0 %v664, 127
    %v2224 = vpop.permute.xlu0 %2223
    %2225 = vrot.lane.b32.xlu0 %v668, 127
    %v2226 = vpop.permute.xlu0 %2225
    %2227 = vrot.lane.b32.xlu0 %v672, 127
    %v2228 = vpop.permute.xlu0 %2227
    %2229 = vrot.lane.b32.xlu0 %v676, 127
    %v2230 = vpop.permute.xlu0 %2229
    %2231 = vrot.lane.b32.xlu0 %v680, 127
    %v2232 = vpop.permute.xlu0 %2231
    %2233 = vrot.lane.b32.xlu0 %v684, 127
    %v2234 = vpop.permute.xlu0 %2233
    %2235 = vrot.lane.b32.xlu0 %v688, 127
    %v2236 = vpop.permute.xlu0 %2235
    %2237 = vrot.lane.b32.xlu0 %v692, 127
    %v2238 = vpop.permute.xlu0 %2237
    %2239 = vrot.lane.b32.xlu0 %v696, 127
    %v2240 = vpop.permute.xlu0 %2239
    %2241 = vrot.lane.b32.xlu0 %v700, 127
    %v2242 = vpop.permute.xlu0 %2241
    %2243 = vrot.lane.b32.xlu0 %v641, 127
    %v2244 = vpop.permute.xlu0 %2243
    %2245 = vrot.lane.b32.xlu0 %v645, 127
    %v2246 = vpop.permute.xlu0 %2245
    %2247 = vrot.lane.b32.xlu0 %v649, 127
    %v2248 = vpop.permute.xlu0 %2247
    %2249 = vrot.lane.b32.xlu0 %v653, 127
    %v2250 = vpop.permute.xlu0 %2249
    %2251 = vrot.lane.b32.xlu0 %v657, 127
    %v2252 = vpop.permute.xlu0 %2251
    %2253 = vrot.lane.b32.xlu0 %v661, 127
    %v2254 = vpop.permute.xlu0 %2253
    %2255 = vrot.lane.b32.xlu0 %v665, 127
    %v2256 = vpop.permute.xlu0 %2255
    %2257 = vrot.lane.b32.xlu0 %v669, 127
    %v2258 = vpop.permute.xlu0 %2257
    %2259 = vrot.lane.b32.xlu0 %v673, 127
    %v2260 = vpop.permute.xlu0 %2259
    %2261 = vrot.lane.b32.xlu0 %v677, 127
    %v2262 = vpop.permute.xlu0 %2261
    %2263 = vrot.lane.b32.xlu0 %v681, 127
    %v2264 = vpop.permute.xlu0 %2263
    %2265 = vrot.lane.b32.xlu0 %v685, 127
    %v2266 = vpop.permute.xlu0 %2265
    %2267 = vrot.lane.b32.xlu0 %v689, 127
    %v2268 = vpop.permute.xlu0 %2267
    %2269 = vrot.lane.b32.xlu0 %v693, 127
    %v2270 = vpop.permute.xlu0 %2269
    %2271 = vrot.lane.b32.xlu0 %v697, 127
    %v2272 = vpop.permute.xlu0 %2271
    %2273 = vrot.lane.b32.xlu0 %v701, 127
    %v2274 = vpop.permute.xlu0 %2273
    %vm2275 = vcmp.lt.s32.totalorder %v831, 127
    %v2276 = vsel %vm2275, %v2212, %v2244
    %v2277 = vsel %vm2275, %v2214, %v2246
    %v2278 = vsel %vm2275, %v2216, %v2248
    %v2279 = vsel %vm2275, %v2218, %v2250
    %v2280 = vsel %vm2275, %v2220, %v2252
    %v2281 = vsel %vm2275, %v2222, %v2254
    %v2282 = vsel %vm2275, %v2224, %v2256
    %v2283 = vsel %vm2275, %v2226, %v2258
    %v2284 = vsel %vm2275, %v2228, %v2260
    %v2285 = vsel %vm2275, %v2230, %v2262
    %v2286 = vsel %vm2275, %v2232, %v2264
    %v2287 = vsel %vm2275, %v2234, %v2266
    %v2288 = vsel %vm2275, %v2236, %v2268
    %v2289 = vsel %vm2275, %v2238, %v2270
    %v2290 = vsel %vm2275, %v2240, %v2272
    %v2291 = vsel %vm2275, %v2242, %v2274
    %v2292 = vsel %vm2275, %v2180, %v2212
    %v2293 = vsel %vm2275, %v2182, %v2214
    %v2294 = vsel %vm2275, %v2184, %v2216
    %v2295 = vsel %vm2275, %v2186, %v2218
    %v2296 = vsel %vm2275, %v2188, %v2220
    %v2297 = vsel %vm2275, %v2190, %v2222
    %v2298 = vsel %vm2275, %v2192, %v2224
    %v2299 = vsel %vm2275, %v2194, %v2226
    %v2300 = vsel %vm2275, %v2196, %v2228
    %v2301 = vsel %vm2275, %v2198, %v2230
    %v2302 = vsel %vm2275, %v2200, %v2232
    %v2303 = vsel %vm2275, %v2202, %v2234
    %v2304 = vsel %vm2275, %v2204, %v2236
    %v2305 = vsel %vm2275, %v2206, %v2238
    %v2306 = vsel %vm2275, %v2208, %v2240
    %v2307 = vsel %vm2275, %v2210, %v2242
    %v2308 = vsel %vm2275, %v2148, %v2180
    %v2309 = vsel %vm2275, %v2150, %v2182
    %v2310 = vsel %vm2275, %v2152, %v2184
    %v2311 = vsel %vm2275, %v2154, %v2186
    %v2312 = vsel %vm2275, %v2156, %v2188
    %v2313 = vsel %vm2275, %v2158, %v2190
    %v2314 = vsel %vm2275, %v2160, %v2192
    %v2315 = vsel %vm2275, %v2162, %v2194
    %v2316 = vsel %vm2275, %v2164, %v2196
    %v2317 = vsel %vm2275, %v2166, %v2198
    %v2318 = vsel %vm2275, %v2168, %v2200
    %v2319 = vsel %vm2275, %v2170, %v2202
    %v2320 = vsel %vm2275, %v2172, %v2204
    %v2321 = vsel %vm2275, %v2174, %v2206
    %v2322 = vsel %vm2275, %v2176, %v2208
    %v2323 = vsel %vm2275, %v2178, %v2210
    %v2324 = vsel %vm2275, %v2244, %v2148
    %v2325 = vsel %vm2275, %v2246, %v2150
    %v2326 = vsel %vm2275, %v2248, %v2152
    %v2327 = vsel %vm2275, %v2250, %v2154
    %v2328 = vsel %vm2275, %v2252, %v2156
    %v2329 = vsel %vm2275, %v2254, %v2158
    %v2330 = vsel %vm2275, %v2256, %v2160
    %v2331 = vsel %vm2275, %v2258, %v2162
    %v2332 = vsel %vm2275, %v2260, %v2164
    %v2333 = vsel %vm2275, %v2262, %v2166
    %v2334 = vsel %vm2275, %v2264, %v2168
    %v2335 = vsel %vm2275, %v2266, %v2170
    %v2336 = vsel %vm2275, %v2268, %v2172
    %v2337 = vsel %vm2275, %v2270, %v2174
    %v2338 = vsel %vm2275, %v2272, %v2176
    %v2339 = vsel %vm2275, %v2274, %v2178
    %s2340 = scalar_lea.vmem %s6, 5
    %v2341 = vld [vmem:[%s2340] ss:$8 sm:$0xf]
    %vm2342 = vcmp.gt.f32.partialorder %v2341, 0.5
    %v2343 = vsel %vm2342, 1, 0
    %v2344 = vlaneseq
    %v2345 = vshrl.u32 %v2344, 7
    %v2346 = vsub.s32 0, %v2345
    %v2347 = vrot.slane %v2343, %v2346
    %v2348 = vlaneseq
    %v2349 = vshrl.u32 %v2348, 7
    %v2350 = vsub.s32 1, %v2349
    %v2351 = vrot.slane %v2343, %v2350
    %v2352 = vlaneseq
    %v2353 = vshrl.u32 %v2352, 7
    %v2354 = vsub.s32 2, %v2353
    %v2355 = vrot.slane %v2343, %v2354
    %v2356 = vlaneseq
    %v2357 = vshrl.u32 %v2356, 7
    %v2358 = vsub.s32 3, %v2357
    %v2359 = vrot.slane %v2343, %v2358
    %vm2360 = vcmp.eq.s32.totalorder %v2347, 1
    %vm2361 = vcmp.eq.s32.totalorder %v2351, 1
    %vm2362 = vcmp.eq.s32.totalorder %v2355, 1
    %vm2363 = vcmp.eq.s32.totalorder %v2359, 1
    %v2364 = vsel %vm2360, %v2308, 0.0
    %v2365 = vsel %vm2361, %v2292, 0.0
    %v2366 = vsel %vm2362, %v2276, 0.0
    %v2367 = vsel %vm2363, %v2324, 0.0
    %v2368 = vsel %vm2360, %v2309, 0.0
    %v2369 = vsel %vm2361, %v2293, 0.0
    %v2370 = vsel %vm2362, %v2277, 0.0
    %v2371 = vsel %vm2363, %v2325, 0.0
    %v2372 = vsel %vm2360, %v2310, 0.0
    %v2373 = vsel %vm2361, %v2294, 0.0
    %v2374 = vsel %vm2362, %v2278, 0.0
    %v2375 = vsel %vm2363, %v2326, 0.0
    %v2376 = vsel %vm2360, %v2311, 0.0
    %v2377 = vsel %vm2361, %v2295, 0.0
    %v2378 = vsel %vm2362, %v2279, 0.0
    %v2379 = vsel %vm2363, %v2327, 0.0
    %v2380 = vsel %vm2360, %v2312, 0.0
    %v2381 = vsel %vm2361, %v2296, 0.0
    %v2382 = vsel %vm2362, %v2280, 0.0
    %v2383 = vsel %vm2363, %v2328, 0.0
    %v2384 = vsel %vm2360, %v2313, 0.0
    %v2385 = vsel %vm2361, %v2297, 0.0
    %v2386 = vsel %vm2362, %v2281, 0.0
    %v2387 = vsel %vm2363, %v2329, 0.0
    %v2388 = vsel %vm2360, %v2314, 0.0
    %v2389 = vsel %vm2361, %v2298, 0.0
    %v2390 = vsel %vm2362, %v2282, 0.0
    %v2391 = vsel %vm2363, %v2330, 0.0
    %v2392 = vsel %vm2360, %v2315, 0.0
    %v2393 = vsel %vm2361, %v2299, 0.0
    %v2394 = vsel %vm2362, %v2283, 0.0
    %v2395 = vsel %vm2363, %v2331, 0.0
    %v2396 = vsel %vm2360, %v2316, 0.0
    %v2397 = vsel %vm2361, %v2300, 0.0
    %v2398 = vsel %vm2362, %v2284, 0.0
    %v2399 = vsel %vm2363, %v2332, 0.0
    %v2400 = vsel %vm2360, %v2317, 0.0
    %v2401 = vsel %vm2361, %v2301, 0.0
    %v2402 = vsel %vm2362, %v2285, 0.0
    %v2403 = vsel %vm2363, %v2333, 0.0
    %v2404 = vsel %vm2360, %v2318, 0.0
    %v2405 = vsel %vm2361, %v2302, 0.0
    %v2406 = vsel %vm2362, %v2286, 0.0
    %v2407 = vsel %vm2363, %v2334, 0.0
    %v2408 = vsel %vm2360, %v2319, 0.0
    %v2409 = vsel %vm2361, %v2303, 0.0
    %v2410 = vsel %vm2362, %v2287, 0.0
    %v2411 = vsel %vm2363, %v2335, 0.0
    %v2412 = vsel %vm2360, %v2320, 0.0
    %v2413 = vsel %vm2361, %v2304, 0.0
    %v2414 = vsel %vm2362, %v2288, 0.0
    %v2415 = vsel %vm2363, %v2336, 0.0
    %v2416 = vsel %vm2360, %v2321, 0.0
    %v2417 = vsel %vm2361, %v2305, 0.0
    %v2418 = vsel %vm2362, %v2289, 0.0
    %v2419 = vsel %vm2363, %v2337, 0.0
    %v2420 = vsel %vm2360, %v2322, 0.0
    %v2421 = vsel %vm2361, %v2306, 0.0
    %v2422 = vsel %vm2362, %v2290, 0.0
    %v2423 = vsel %vm2363, %v2338, 0.0
    %v2424 = vsel %vm2360, %v2323, 0.0
    %v2425 = vsel %vm2361, %v2307, 0.0
    %v2426 = vsel %vm2362, %v2291, 0.0
    %v2427 = vsel %vm2363, %v2339, 0.0
    %v2428 = vpack.c.bf16 %v2368, %v2364
    %v2429 = vpack.c.bf16 %v2369, %v2365
    %v2430 = vpack.c.bf16 %v2370, %v2366
    %v2431 = vpack.c.bf16 %v2371, %v2367
    %v2432 = vpack.c.bf16 %v2376, %v2372
    %v2433 = vpack.c.bf16 %v2377, %v2373
    %v2434 = vpack.c.bf16 %v2378, %v2374
    %v2435 = vpack.c.bf16 %v2379, %v2375
    %v2436 = vpack.c.bf16 %v2384, %v2380
    %v2437 = vpack.c.bf16 %v2385, %v2381
    %v2438 = vpack.c.bf16 %v2386, %v2382
    %v2439 = vpack.c.bf16 %v2387, %v2383
    %v2440 = vpack.c.bf16 %v2392, %v2388
    %v2441 = vpack.c.bf16 %v2393, %v2389
    %v2442 = vpack.c.bf16 %v2394, %v2390
    %v2443 = vpack.c.bf16 %v2395, %v2391
    %v2444 = vpack.c.bf16 %v2400, %v2396
    %v2445 = vpack.c.bf16 %v2401, %v2397
    %v2446 = vpack.c.bf16 %v2402, %v2398
    %v2447 = vpack.c.bf16 %v2403, %v2399
    %v2448 = vpack.c.bf16 %v2408, %v2404
    %v2449 = vpack.c.bf16 %v2409, %v2405
    %v2450 = vpack.c.bf16 %v2410, %v2406
    %v2451 = vpack.c.bf16 %v2411, %v2407
    %v2452 = vpack.c.bf16 %v2416, %v2412
    %v2453 = vpack.c.bf16 %v2417, %v2413
    %v2454 = vpack.c.bf16 %v2418, %v2414
    %v2455 = vpack.c.bf16 %v2419, %v2415
    %v2456 = vpack.c.bf16 %v2424, %v2420
    %v2457 = vpack.c.bf16 %v2425, %v2421
    %v2458 = vpack.c.bf16 %v2426, %v2422
    %v2459 = vpack.c.bf16 %v2427, %v2423
    %2460 = vst [vmem:[#allocation2 + $0x500] sm:$0xff] %v2428
    %2461 = vst [vmem:[#allocation2 + $0x508] sm:$0xff] %v2429
    %2462 = vst [vmem:[#allocation2 + $0x510] sm:$0xff] %v2430
    %2463 = vst [vmem:[#allocation2 + $0x518] sm:$0xff] %v2431
    %2464 = vst [vmem:[#allocation2 + $0x520] sm:$0xff] %v2432
    %2465 = vst [vmem:[#allocation2 + $0x528] sm:$0xff] %v2433
    %2466 = vst [vmem:[#allocation2 + $0x530] sm:$0xff] %v2434
    %2467 = vst [vmem:[#allocation2 + $0x538] sm:$0xff] %v2435
    %2468 = vst [vmem:[#allocation2 + $0x540] sm:$0xff] %v2436
    %2469 = vst [vmem:[#allocation2 + $0x548] sm:$0xff] %v2437
    %2470 = vst [vmem:[#allocation2 + $0x550] sm:$0xff] %v2438
    %2471 = vst [vmem:[#allocation2 + $0x558] sm:$0xff] %v2439
    %2472 = vst [vmem:[#allocation2 + $0x560] sm:$0xff] %v2440
    %2473 = vst [vmem:[#allocation2 + $0x568] sm:$0xff] %v2441
    %2474 = vst [vmem:[#allocation2 + $0x570] sm:$0xff] %v2442
    %2475 = vst [vmem:[#allocation2 + $0x578] sm:$0xff] %v2443
    %2476 = vst [vmem:[#allocation2 + $0x580] sm:$0xff] %v2444
    %2477 = vst [vmem:[#allocation2 + $0x588] sm:$0xff] %v2445
    %2478 = vst [vmem:[#allocation2 + $0x590] sm:$0xff] %v2446
    %2479 = vst [vmem:[#allocation2 + $0x598] sm:$0xff] %v2447
    %2480 = vst [vmem:[#allocation2 + $0x5a0] sm:$0xff] %v2448
    %2481 = vst [vmem:[#allocation2 + $0x5a8] sm:$0xff] %v2449
    %2482 = vst [vmem:[#allocation2 + $0x5b0] sm:$0xff] %v2450
    %2483 = vst [vmem:[#allocation2 + $0x5b8] sm:$0xff] %v2451
    %2484 = vst [vmem:[#allocation2 + $0x5c0] sm:$0xff] %v2452
    %2485 = vst [vmem:[#allocation2 + $0x5c8] sm:$0xff] %v2453
    %2486 = vst [vmem:[#allocation2 + $0x5d0] sm:$0xff] %v2454
    %2487 = vst [vmem:[#allocation2 + $0x5d8] sm:$0xff] %v2455
    %2488 = vst [vmem:[#allocation2 + $0x5e0] sm:$0xff] %v2456
    %2489 = vst [vmem:[#allocation2 + $0x5e8] sm:$0xff] %v2457
    %2490 = vst [vmem:[#allocation2 + $0x5f0] sm:$0xff] %v2458
    %2491 = vst [vmem:[#allocation2 + $0x5f8] sm:$0xff] %v2459
    %2492 = vrot.lane.b32.xlu0 %v638, 113
    %v2493 = vpop.permute.xlu0 %2492
    %2494 = vrot.lane.b32.xlu0 %v642, 113
    %v2495 = vpop.permute.xlu0 %2494
    %2496 = vrot.lane.b32.xlu0 %v646, 113
    %v2497 = vpop.permute.xlu0 %2496
    %2498 = vrot.lane.b32.xlu0 %v650, 113
    %v2499 = vpop.permute.xlu0 %2498
    %2500 = vrot.lane.b32.xlu0 %v654, 113
    %v2501 = vpop.permute.xlu0 %2500
    %2502 = vrot.lane.b32.xlu0 %v658, 113
    %v2503 = vpop.permute.xlu0 %2502
    %2504 = vrot.lane.b32.xlu0 %v662, 113
    %v2505 = vpop.permute.xlu0 %2504
    %2506 = vrot.lane.b32.xlu0 %v666, 113
    %v2507 = vpop.permute.xlu0 %2506
    %2508 = vrot.lane.b32.xlu0 %v670, 113
    %v2509 = vpop.permute.xlu0 %2508
    %2510 = vrot.lane.b32.xlu0 %v674, 113
    %v2511 = vpop.permute.xlu0 %2510
    %2512 = vrot.lane.b32.xlu0 %v678, 113
    %v2513 = vpop.permute.xlu0 %2512
    %2514 = vrot.lane.b32.xlu0 %v682, 113
    %v2515 = vpop.permute.xlu0 %2514
    %2516 = vrot.lane.b32.xlu0 %v686, 113
    %v2517 = vpop.permute.xlu0 %2516
    %2518 = vrot.lane.b32.xlu0 %v690, 113
    %v2519 = vpop.permute.xlu0 %2518
    %2520 = vrot.lane.b32.xlu0 %v694, 113
    %v2521 = vpop.permute.xlu0 %2520
    %2522 = vrot.lane.b32.xlu0 %v698, 113
    %v2523 = vpop.permute.xlu0 %2522
    %2524 = vrot.lane.b32.xlu0 %v639, 113
    %v2525 = vpop.permute.xlu0 %2524
    %2526 = vrot.lane.b32.xlu0 %v643, 113
    %v2527 = vpop.permute.xlu0 %2526
    %2528 = vrot.lane.b32.xlu0 %v647, 113
    %v2529 = vpop.permute.xlu0 %2528
    %2530 = vrot.lane.b32.xlu0 %v651, 113
    %v2531 = vpop.permute.xlu0 %2530
    %2532 = vrot.lane.b32.xlu0 %v655, 113
    %v2533 = vpop.permute.xlu0 %2532
    %2534 = vrot.lane.b32.xlu0 %v659, 113
    %v2535 = vpop.permute.xlu0 %2534
    %2536 = vrot.lane.b32.xlu0 %v663, 113
    %v2537 = vpop.permute.xlu0 %2536
    %2538 = vrot.lane.b32.xlu0 %v667, 113
    %v2539 = vpop.permute.xlu0 %2538
    %2540 = vrot.lane.b32.xlu0 %v671, 113
    %v2541 = vpop.permute.xlu0 %2540
    %2542 = vrot.lane.b32.xlu0 %v675, 113
    %v2543 = vpop.permute.xlu0 %2542
    %2544 = vrot.lane.b32.xlu0 %v679, 113
    %v2545 = vpop.permute.xlu0 %2544
    %2546 = vrot.lane.b32.xlu0 %v683, 113
    %v2547 = vpop.permute.xlu0 %2546
    %2548 = vrot.lane.b32.xlu0 %v687, 113
    %v2549 = vpop.permute.xlu0 %2548
    %2550 = vrot.lane.b32.xlu0 %v691, 113
    %v2551 = vpop.permute.xlu0 %2550
    %2552 = vrot.lane.b32.xlu0 %v695, 113
    %v2553 = vpop.permute.xlu0 %2552
    %2554 = vrot.lane.b32.xlu0 %v699, 113
    %v2555 = vpop.permute.xlu0 %2554
    %2556 = vrot.lane.b32.xlu0 %v640, 113
    %v2557 = vpop.permute.xlu0 %2556
    %2558 = vrot.lane.b32.xlu0 %v644, 113
    %v2559 = vpop.permute.xlu0 %2558
    %2560 = vrot.lane.b32.xlu0 %v648, 113
    %v2561 = vpop.permute.xlu0 %2560
    %2562 = vrot.lane.b32.xlu0 %v652, 113
    %v2563 = vpop.permute.xlu0 %2562
    %2564 = vrot.lane.b32.xlu0 %v656, 113
    %v2565 = vpop.permute.xlu0 %2564
    %2566 = vrot.lane.b32.xlu0 %v660, 113
    %v2567 = vpop.permute.xlu0 %2566
    %2568 = vrot.lane.b32.xlu0 %v664, 113
    %v2569 = vpop.permute.xlu0 %2568
    %2570 = vrot.lane.b32.xlu0 %v668, 113
    %v2571 = vpop.permute.xlu0 %2570
    %2572 = vrot.lane.b32.xlu0 %v672, 113
    %v2573 = vpop.permute.xlu0 %2572
    %2574 = vrot.lane.b32.xlu0 %v676, 113
    %v2575 = vpop.permute.xlu0 %2574
    %2576 = vrot.lane.b32.xlu0 %v680, 113
    %v2577 = vpop.permute.xlu0 %2576
    %2578 = vrot.lane.b32.xlu0 %v684, 113
    %v2579 = vpop.permute.xlu0 %2578
    %2580 = vrot.lane.b32.xlu0 %v688, 113
    %v2581 = vpop.permute.xlu0 %2580
    %2582 = vrot.lane.b32.xlu0 %v692, 113
    %v2583 = vpop.permute.xlu0 %2582
    %2584 = vrot.lane.b32.xlu0 %v696, 113
    %v2585 = vpop.permute.xlu0 %2584
    %2586 = vrot.lane.b32.xlu0 %v700, 113
    %v2587 = vpop.permute.xlu0 %2586
    %2588 = vrot.lane.b32.xlu0 %v641, 113
    %v2589 = vpop.permute.xlu0 %2588
    %2590 = vrot.lane.b32.xlu0 %v645, 113
    %v2591 = vpop.permute.xlu0 %2590
    %2592 = vrot.lane.b32.xlu0 %v649, 113
    %v2593 = vpop.permute.xlu0 %2592
    %2594 = vrot.lane.b32.xlu0 %v653, 113
    %v2595 = vpop.permute.xlu0 %2594
    %2596 = vrot.lane.b32.xlu0 %v657, 113
    %v2597 = vpop.permute.xlu0 %2596
    %2598 = vrot.lane.b32.xlu0 %v661, 113
    %v2599 = vpop.permute.xlu0 %2598
    %2600 = vrot.lane.b32.xlu0 %v665, 113
    %v2601 = vpop.permute.xlu0 %2600
    %2602 = vrot.lane.b32.xlu0 %v669, 113
    %v2603 = vpop.permute.xlu0 %2602
    %2604 = vrot.lane.b32.xlu0 %v673, 113
    %v2605 = vpop.permute.xlu0 %2604
    %2606 = vrot.lane.b32.xlu0 %v677, 113
    %v2607 = vpop.permute.xlu0 %2606
    %2608 = vrot.lane.b32.xlu0 %v681, 113
    %v2609 = vpop.permute.xlu0 %2608
    %2610 = vrot.lane.b32.xlu0 %v685, 113
    %v2611 = vpop.permute.xlu0 %2610
    %2612 = vrot.lane.b32.xlu0 %v689, 113
    %v2613 = vpop.permute.xlu0 %2612
    %2614 = vrot.lane.b32.xlu0 %v693, 113
    %v2615 = vpop.permute.xlu0 %2614
    %2616 = vrot.lane.b32.xlu0 %v697, 113
    %v2617 = vpop.permute.xlu0 %2616
    %2618 = vrot.lane.b32.xlu0 %v701, 113
    %v2619 = vpop.permute.xlu0 %2618
    %vm2620 = vcmp.lt.s32.totalorder %v831, 113
    %v2621 = vsel %vm2620, %v2557, %v2589
    %v2622 = vsel %vm2620, %v2559, %v2591
    %v2623 = vsel %vm2620, %v2561, %v2593
    %v2624 = vsel %vm2620, %v2563, %v2595
    %v2625 = vsel %vm2620, %v2565, %v2597
    %v2626 = vsel %vm2620, %v2567, %v2599
    %v2627 = vsel %vm2620, %v2569, %v2601
    %v2628 = vsel %vm2620, %v2571, %v2603
    %v2629 = vsel %vm2620, %v2573, %v2605
    %v2630 = vsel %vm2620, %v2575, %v2607
    %v2631 = vsel %vm2620, %v2577, %v2609
    %v2632 = vsel %vm2620, %v2579, %v2611
    %v2633 = vsel %vm2620, %v2581, %v2613
    %v2634 = vsel %vm2620, %v2583, %v2615
    %v2635 = vsel %vm2620, %v2585, %v2617
    %v2636 = vsel %vm2620, %v2587, %v2619
    %v2637 = vsel %vm2620, %v2525, %v2557
    %v2638 = vsel %vm2620, %v2527, %v2559
    %v2639 = vsel %vm2620, %v2529, %v2561
    %v2640 = vsel %vm2620, %v2531, %v2563
    %v2641 = vsel %vm2620, %v2533, %v2565
    %v2642 = vsel %vm2620, %v2535, %v2567
    %v2643 = vsel %vm2620, %v2537, %v2569
    %v2644 = vsel %vm2620, %v2539, %v2571
    %v2645 = vsel %vm2620, %v2541, %v2573
    %v2646 = vsel %vm2620, %v2543, %v2575
    %v2647 = vsel %vm2620, %v2545, %v2577
    %v2648 = vsel %vm2620, %v2547, %v2579
    %v2649 = vsel %vm2620, %v2549, %v2581
    %v2650 = vsel %vm2620, %v2551, %v2583
    %v2651 = vsel %vm2620, %v2553, %v2585
    %v2652 = vsel %vm2620, %v2555, %v2587
    %v2653 = vsel %vm2620, %v2493, %v2525
    %v2654 = vsel %vm2620, %v2495, %v2527
    %v2655 = vsel %vm2620, %v2497, %v2529
    %v2656 = vsel %vm2620, %v2499, %v2531
    %v2657 = vsel %vm2620, %v2501, %v2533
    %v2658 = vsel %vm2620, %v2503, %v2535
    %v2659 = vsel %vm2620, %v2505, %v2537
    %v2660 = vsel %vm2620, %v2507, %v2539
    %v2661 = vsel %vm2620, %v2509, %v2541
    %v2662 = vsel %vm2620, %v2511, %v2543
    %v2663 = vsel %vm2620, %v2513, %v2545
    %v2664 = vsel %vm2620, %v2515, %v2547
    %v2665 = vsel %vm2620, %v2517, %v2549
    %v2666 = vsel %vm2620, %v2519, %v2551
    %v2667 = vsel %vm2620, %v2521, %v2553
    %v2668 = vsel %vm2620, %v2523, %v2555
    %v2669 = vsel %vm2620, %v2589, %v2493
    %v2670 = vsel %vm2620, %v2591, %v2495
    %v2671 = vsel %vm2620, %v2593, %v2497
    %v2672 = vsel %vm2620, %v2595, %v2499
    %v2673 = vsel %vm2620, %v2597, %v2501
    %v2674 = vsel %vm2620, %v2599, %v2503
    %v2675 = vsel %vm2620, %v2601, %v2505
    %v2676 = vsel %vm2620, %v2603, %v2507
    %v2677 = vsel %vm2620, %v2605, %v2509
    %v2678 = vsel %vm2620, %v2607, %v2511
    %v2679 = vsel %vm2620, %v2609, %v2513
    %v2680 = vsel %vm2620, %v2611, %v2515
    %v2681 = vsel %vm2620, %v2613, %v2517
    %v2682 = vsel %vm2620, %v2615, %v2519
    %v2683 = vsel %vm2620, %v2617, %v2521
    %v2684 = vsel %vm2620, %v2619, %v2523
    %s2685 = scalar_lea.vmem %s6, 6
    %v2686 = vld [vmem:[%s2685] ss:$8 sm:$0xf]
    %vm2687 = vcmp.gt.f32.partialorder %v2686, 0.5
    %v2688 = vsel %vm2687, 1, 0
    %v2689 = vlaneseq
    %v2690 = vshrl.u32 %v2689, 7
    %v2691 = vsub.s32 0, %v2690
    %v2692 = vrot.slane %v2688, %v2691
    %v2693 = vlaneseq
    %v2694 = vshrl.u32 %v2693, 7
    %v2695 = vsub.s32 1, %v2694
    %v2696 = vrot.slane %v2688, %v2695
    %v2697 = vlaneseq
    %v2698 = vshrl.u32 %v2697, 7
    %v2699 = vsub.s32 2, %v2698
    %v2700 = vrot.slane %v2688, %v2699
    %v2701 = vlaneseq
    %v2702 = vshrl.u32 %v2701, 7
    %v2703 = vsub.s32 3, %v2702
    %v2704 = vrot.slane %v2688, %v2703
    %vm2705 = vcmp.eq.s32.totalorder %v2692, 1
    %vm2706 = vcmp.eq.s32.totalorder %v2696, 1
    %vm2707 = vcmp.eq.s32.totalorder %v2700, 1
    %vm2708 = vcmp.eq.s32.totalorder %v2704, 1
    %v2709 = vsel %vm2705, %v2653, 0.0
    %v2710 = vsel %vm2706, %v2637, 0.0
    %v2711 = vsel %vm2707, %v2621, 0.0
    %v2712 = vsel %vm2708, %v2669, 0.0
    %v2713 = vsel %vm2705, %v2654, 0.0
    %v2714 = vsel %vm2706, %v2638, 0.0
    %v2715 = vsel %vm2707, %v2622, 0.0
    %v2716 = vsel %vm2708, %v2670, 0.0
    %v2717 = vsel %vm2705, %v2655, 0.0
    %v2718 = vsel %vm2706, %v2639, 0.0
    %v2719 = vsel %vm2707, %v2623, 0.0
    %v2720 = vsel %vm2708, %v2671, 0.0
    %v2721 = vsel %vm2705, %v2656, 0.0
    %v2722 = vsel %vm2706, %v2640, 0.0
    %v2723 = vsel %vm2707, %v2624, 0.0
    %v2724 = vsel %vm2708, %v2672, 0.0
    %v2725 = vsel %vm2705, %v2657, 0.0
    %v2726 = vsel %vm2706, %v2641, 0.0
    %v2727 = vsel %vm2707, %v2625, 0.0
    %v2728 = vsel %vm2708, %v2673, 0.0
    %v2729 = vsel %vm2705, %v2658, 0.0
    %v2730 = vsel %vm2706, %v2642, 0.0
    %v2731 = vsel %vm2707, %v2626, 0.0
    %v2732 = vsel %vm2708, %v2674, 0.0
    %v2733 = vsel %vm2705, %v2659, 0.0
    %v2734 = vsel %vm2706, %v2643, 0.0
    %v2735 = vsel %vm2707, %v2627, 0.0
    %v2736 = vsel %vm2708, %v2675, 0.0
    %v2737 = vsel %vm2705, %v2660, 0.0
    %v2738 = vsel %vm2706, %v2644, 0.0
    %v2739 = vsel %vm2707, %v2628, 0.0
    %v2740 = vsel %vm2708, %v2676, 0.0
    %v2741 = vsel %vm2705, %v2661, 0.0
    %v2742 = vsel %vm2706, %v2645, 0.0
    %v2743 = vsel %vm2707, %v2629, 0.0
    %v2744 = vsel %vm2708, %v2677, 0.0
    %v2745 = vsel %vm2705, %v2662, 0.0
    %v2746 = vsel %vm2706, %v2646, 0.0
    %v2747 = vsel %vm2707, %v2630, 0.0
    %v2748 = vsel %vm2708, %v2678, 0.0
    %v2749 = vsel %vm2705, %v2663, 0.0
    %v2750 = vsel %vm2706, %v2647, 0.0
    %v2751 = vsel %vm2707, %v2631, 0.0
    %v2752 = vsel %vm2708, %v2679, 0.0
    %v2753 = vsel %vm2705, %v2664, 0.0
    %v2754 = vsel %vm2706, %v2648, 0.0
    %v2755 = vsel %vm2707, %v2632, 0.0
    %v2756 = vsel %vm2708, %v2680, 0.0
    %v2757 = vsel %vm2705, %v2665, 0.0
    %v2758 = vsel %vm2706, %v2649, 0.0
    %v2759 = vsel %vm2707, %v2633, 0.0
    %v2760 = vsel %vm2708, %v2681, 0.0
    %v2761 = vsel %vm2705, %v2666, 0.0
    %v2762 = vsel %vm2706, %v2650, 0.0
    %v2763 = vsel %vm2707, %v2634, 0.0
    %v2764 = vsel %vm2708, %v2682, 0.0
    %v2765 = vsel %vm2705, %v2667, 0.0
    %v2766 = vsel %vm2706, %v2651, 0.0
    %v2767 = vsel %vm2707, %v2635, 0.0
    %v2768 = vsel %vm2708, %v2683, 0.0
    %v2769 = vsel %vm2705, %v2668, 0.0
    %v2770 = vsel %vm2706, %v2652, 0.0
    %v2771 = vsel %vm2707, %v2636, 0.0
    %v2772 = vsel %vm2708, %v2684, 0.0
    %v2773 = vpack.c.bf16 %v2713, %v2709
    %v2774 = vpack.c.bf16 %v2714, %v2710
    %v2775 = vpack.c.bf16 %v2715, %v2711
    %v2776 = vpack.c.bf16 %v2716, %v2712
    %v2777 = vpack.c.bf16 %v2721, %v2717
    %v2778 = vpack.c.bf16 %v2722, %v2718
    %v2779 = vpack.c.bf16 %v2723, %v2719
    %v2780 = vpack.c.bf16 %v2724, %v2720
    %v2781 = vpack.c.bf16 %v2729, %v2725
    %v2782 = vpack.c.bf16 %v2730, %v2726
    %v2783 = vpack.c.bf16 %v2731, %v2727
    %v2784 = vpack.c.bf16 %v2732, %v2728
    %v2785 = vpack.c.bf16 %v2737, %v2733
    %v2786 = vpack.c.bf16 %v2738, %v2734
    %v2787 = vpack.c.bf16 %v2739, %v2735
    %v2788 = vpack.c.bf16 %v2740, %v2736
    %v2789 = vpack.c.bf16 %v2745, %v2741
    %v2790 = vpack.c.bf16 %v2746, %v2742
    %v2791 = vpack.c.bf16 %v2747, %v2743
    %v2792 = vpack.c.bf16 %v2748, %v2744
    %v2793 = vpack.c.bf16 %v2753, %v2749
    %v2794 = vpack.c.bf16 %v2754, %v2750
    %v2795 = vpack.c.bf16 %v2755, %v2751
    %v2796 = vpack.c.bf16 %v2756, %v2752
    %v2797 = vpack.c.bf16 %v2761, %v2757
    %v2798 = vpack.c.bf16 %v2762, %v2758
    %v2799 = vpack.c.bf16 %v2763, %v2759
    %v2800 = vpack.c.bf16 %v2764, %v2760
    %v2801 = vpack.c.bf16 %v2769, %v2765
    %v2802 = vpack.c.bf16 %v2770, %v2766
    %v2803 = vpack.c.bf16 %v2771, %v2767
    %v2804 = vpack.c.bf16 %v2772, %v2768
    %2805 = vst [vmem:[#allocation2 + $0x600] sm:$0xff] %v2773
    %2806 = vst [vmem:[#allocation2 + $0x608] sm:$0xff] %v2774
    %2807 = vst [vmem:[#allocation2 + $0x610] sm:$0xff] %v2775
    %2808 = vst [vmem:[#allocation2 + $0x618] sm:$0xff] %v2776
    %2809 = vst [vmem:[#allocation2 + $0x620] sm:$0xff] %v2777
    %2810 = vst [vmem:[#allocation2 + $0x628] sm:$0xff] %v2778
    %2811 = vst [vmem:[#allocation2 + $0x630] sm:$0xff] %v2779
    %2812 = vst [vmem:[#allocation2 + $0x638] sm:$0xff] %v2780
    %2813 = vst [vmem:[#allocation2 + $0x640] sm:$0xff] %v2781
    %2814 = vst [vmem:[#allocation2 + $0x648] sm:$0xff] %v2782
    %2815 = vst [vmem:[#allocation2 + $0x650] sm:$0xff] %v2783
    %2816 = vst [vmem:[#allocation2 + $0x658] sm:$0xff] %v2784
    %2817 = vst [vmem:[#allocation2 + $0x660] sm:$0xff] %v2785
    %2818 = vst [vmem:[#allocation2 + $0x668] sm:$0xff] %v2786
    %2819 = vst [vmem:[#allocation2 + $0x670] sm:$0xff] %v2787
    %2820 = vst [vmem:[#allocation2 + $0x678] sm:$0xff] %v2788
    %2821 = vst [vmem:[#allocation2 + $0x680] sm:$0xff] %v2789
    %2822 = vst [vmem:[#allocation2 + $0x688] sm:$0xff] %v2790
    %2823 = vst [vmem:[#allocation2 + $0x690] sm:$0xff] %v2791
    %2824 = vst [vmem:[#allocation2 + $0x698] sm:$0xff] %v2792
    %2825 = vst [vmem:[#allocation2 + $0x6a0] sm:$0xff] %v2793
    %2826 = vst [vmem:[#allocation2 + $0x6a8] sm:$0xff] %v2794
    %2827 = vst [vmem:[#allocation2 + $0x6b0] sm:$0xff] %v2795
    %2828 = vst [vmem:[#allocation2 + $0x6b8] sm:$0xff] %v2796
    %2829 = vst [vmem:[#allocation2 + $0x6c0] sm:$0xff] %v2797
    %2830 = vst [vmem:[#allocation2 + $0x6c8] sm:$0xff] %v2798
    %2831 = vst [vmem:[#allocation2 + $0x6d0] sm:$0xff] %v2799
    %2832 = vst [vmem:[#allocation2 + $0x6d8] sm:$0xff] %v2800
    %2833 = vst [vmem:[#allocation2 + $0x6e0] sm:$0xff] %v2801
    %2834 = vst [vmem:[#allocation2 + $0x6e8] sm:$0xff] %v2802
    %2835 = vst [vmem:[#allocation2 + $0x6f0] sm:$0xff] %v2803
    %2836 = vst [vmem:[#allocation2 + $0x6f8] sm:$0xff] %v2804
    %2837 = vrot.lane.b32.xlu0 %v638, 112
    %v2838 = vpop.permute.xlu0 %2837
    %2839 = vrot.lane.b32.xlu0 %v642, 112
    %v2840 = vpop.permute.xlu0 %2839
    %2841 = vrot.lane.b32.xlu0 %v646, 112
    %v2842 = vpop.permute.xlu0 %2841
    %2843 = vrot.lane.b32.xlu0 %v650, 112
    %v2844 = vpop.permute.xlu0 %2843
    %2845 = vrot.lane.b32.xlu0 %v654, 112
    %v2846 = vpop.permute.xlu0 %2845
    %2847 = vrot.lane.b32.xlu0 %v658, 112
    %v2848 = vpop.permute.xlu0 %2847
    %2849 = vrot.lane.b32.xlu0 %v662, 112
    %v2850 = vpop.permute.xlu0 %2849
    %2851 = vrot.lane.b32.xlu0 %v666, 112
    %v2852 = vpop.permute.xlu0 %2851
    %2853 = vrot.lane.b32.xlu0 %v670, 112
    %v2854 = vpop.permute.xlu0 %2853
    %2855 = vrot.lane.b32.xlu0 %v674, 112
    %v2856 = vpop.permute.xlu0 %2855
    %2857 = vrot.lane.b32.xlu0 %v678, 112
    %v2858 = vpop.permute.xlu0 %2857
    %2859 = vrot.lane.b32.xlu0 %v682, 112
    %v2860 = vpop.permute.xlu0 %2859
    %2861 = vrot.lane.b32.xlu0 %v686, 112
    %v2862 = vpop.permute.xlu0 %2861
    %2863 = vrot.lane.b32.xlu0 %v690, 112
    %v2864 = vpop.permute.xlu0 %2863
    %2865 = vrot.lane.b32.xlu0 %v694, 112
    %v2866 = vpop.permute.xlu0 %2865
    %2867 = vrot.lane.b32.xlu0 %v698, 112
    %v2868 = vpop.permute.xlu0 %2867
    %2869 = vrot.lane.b32.xlu0 %v639, 112
    %v2870 = vpop.permute.xlu0 %2869
    %2871 = vrot.lane.b32.xlu0 %v643, 112
    %v2872 = vpop.permute.xlu0 %2871
    %2873 = vrot.lane.b32.xlu0 %v647, 112
    %v2874 = vpop.permute.xlu0 %2873
    %2875 = vrot.lane.b32.xlu0 %v651, 112
    %v2876 = vpop.permute.xlu0 %2875
    %2877 = vrot.lane.b32.xlu0 %v655, 112
    %v2878 = vpop.permute.xlu0 %2877
    %2879 = vrot.lane.b32.xlu0 %v659, 112
    %v2880 = vpop.permute.xlu0 %2879
    %2881 = vrot.lane.b32.xlu0 %v663, 112
    %v2882 = vpop.permute.xlu0 %2881
    %2883 = vrot.lane.b32.xlu0 %v667, 112
    %v2884 = vpop.permute.xlu0 %2883
    %2885 = vrot.lane.b32.xlu0 %v671, 112
    %v2886 = vpop.permute.xlu0 %2885
    %2887 = vrot.lane.b32.xlu0 %v675, 112
    %v2888 = vpop.permute.xlu0 %2887
    %2889 = vrot.lane.b32.xlu0 %v679, 112
    %v2890 = vpop.permute.xlu0 %2889
    %2891 = vrot.lane.b32.xlu0 %v683, 112
    %v2892 = vpop.permute.xlu0 %2891
    %2893 = vrot.lane.b32.xlu0 %v687, 112
    %v2894 = vpop.permute.xlu0 %2893
    %2895 = vrot.lane.b32.xlu0 %v691, 112
    %v2896 = vpop.permute.xlu0 %2895
    %2897 = vrot.lane.b32.xlu0 %v695, 112
    %v2898 = vpop.permute.xlu0 %2897
    %2899 = vrot.lane.b32.xlu0 %v699, 112
    %v2900 = vpop.permute.xlu0 %2899
    %2901 = vrot.lane.b32.xlu0 %v640, 112
    %v2902 = vpop.permute.xlu0 %2901
    %2903 = vrot.lane.b32.xlu0 %v644, 112
    %v2904 = vpop.permute.xlu0 %2903
    %2905 = vrot.lane.b32.xlu0 %v648, 112
    %v2906 = vpop.permute.xlu0 %2905
    %2907 = vrot.lane.b32.xlu0 %v652, 112
    %v2908 = vpop.permute.xlu0 %2907
    %2909 = vrot.lane.b32.xlu0 %v656, 112
    %v2910 = vpop.permute.xlu0 %2909
    %2911 = vrot.lane.b32.xlu0 %v660, 112
    %v2912 = vpop.permute.xlu0 %2911
    %2913 = vrot.lane.b32.xlu0 %v664, 112
    %v2914 = vpop.permute.xlu0 %2913
    %2915 = vrot.lane.b32.xlu0 %v668, 112
    %v2916 = vpop.permute.xlu0 %2915
    %2917 = vrot.lane.b32.xlu0 %v672, 112
    %v2918 = vpop.permute.xlu0 %2917
    %2919 = vrot.lane.b32.xlu0 %v676, 112
    %v2920 = vpop.permute.xlu0 %2919
    %2921 = vrot.lane.b32.xlu0 %v680, 112
    %v2922 = vpop.permute.xlu0 %2921
    %2923 = vrot.lane.b32.xlu0 %v684, 112
    %v2924 = vpop.permute.xlu0 %2923
    %2925 = vrot.lane.b32.xlu0 %v688, 112
    %v2926 = vpop.permute.xlu0 %2925
    %2927 = vrot.lane.b32.xlu0 %v692, 112
    %v2928 = vpop.permute.xlu0 %2927
    %2929 = vrot.lane.b32.xlu0 %v696, 112
    %v2930 = vpop.permute.xlu0 %2929
    %2931 = vrot.lane.b32.xlu0 %v700, 112
    %v2932 = vpop.permute.xlu0 %2931
    %2933 = vrot.lane.b32.xlu0 %v641, 112
    %v2934 = vpop.permute.xlu0 %2933
    %2935 = vrot.lane.b32.xlu0 %v645, 112
    %v2936 = vpop.permute.xlu0 %2935
    %2937 = vrot.lane.b32.xlu0 %v649, 112
    %v2938 = vpop.permute.xlu0 %2937
    %2939 = vrot.lane.b32.xlu0 %v653, 112
    %v2940 = vpop.permute.xlu0 %2939
    %2941 = vrot.lane.b32.xlu0 %v657, 112
    %v2942 = vpop.permute.xlu0 %2941
    %2943 = vrot.lane.b32.xlu0 %v661, 112
    %v2944 = vpop.permute.xlu0 %2943
    %2945 = vrot.lane.b32.xlu0 %v665, 112
    %v2946 = vpop.permute.xlu0 %2945
    %2947 = vrot.lane.b32.xlu0 %v669, 112
    %v2948 = vpop.permute.xlu0 %2947
    %2949 = vrot.lane.b32.xlu0 %v673, 112
    %v2950 = vpop.permute.xlu0 %2949
    %2951 = vrot.lane.b32.xlu0 %v677, 112
    %v2952 = vpop.permute.xlu0 %2951
    %2953 = vrot.lane.b32.xlu0 %v681, 112
    %v2954 = vpop.permute.xlu0 %2953
    %2955 = vrot.lane.b32.xlu0 %v685, 112
    %v2956 = vpop.permute.xlu0 %2955
    %2957 = vrot.lane.b32.xlu0 %v689, 112
    %v2958 = vpop.permute.xlu0 %2957
    %2959 = vrot.lane.b32.xlu0 %v693, 112
    %v2960 = vpop.permute.xlu0 %2959
    %2961 = vrot.lane.b32.xlu0 %v697, 112
    %v2962 = vpop.permute.xlu0 %2961
    %2963 = vrot.lane.b32.xlu0 %v701, 112
    %v2964 = vpop.permute.xlu0 %2963
    %vm2965 = vcmp.lt.s32.totalorder %v831, 112
    %v2966 = vsel %vm2965, %v2902, %v2934
    %v2967 = vsel %vm2965, %v2904, %v2936
    %v2968 = vsel %vm2965, %v2906, %v2938
    %v2969 = vsel %vm2965, %v2908, %v2940
    %v2970 = vsel %vm2965, %v2910, %v2942
    %v2971 = vsel %vm2965, %v2912, %v2944
    %v2972 = vsel %vm2965, %v2914, %v2946
    %v2973 = vsel %vm2965, %v2916, %v2948
    %v2974 = vsel %vm2965, %v2918, %v2950
    %v2975 = vsel %vm2965, %v2920, %v2952
    %v2976 = vsel %vm2965, %v2922, %v2954
    %v2977 = vsel %vm2965, %v2924, %v2956
    %v2978 = vsel %vm2965, %v2926, %v2958
    %v2979 = vsel %vm2965, %v2928, %v2960
    %v2980 = vsel %vm2965, %v2930, %v2962
    %v2981 = vsel %vm2965, %v2932, %v2964
    %v2982 = vsel %vm2965, %v2870, %v2902
    %v2983 = vsel %vm2965, %v2872, %v2904
    %v2984 = vsel %vm2965, %v2874, %v2906
    %v2985 = vsel %vm2965, %v2876, %v2908
    %v2986 = vsel %vm2965, %v2878, %v2910
    %v2987 = vsel %vm2965, %v2880, %v2912
    %v2988 = vsel %vm2965, %v2882, %v2914
    %v2989 = vsel %vm2965, %v2884, %v2916
    %v2990 = vsel %vm2965, %v2886, %v2918
    %v2991 = vsel %vm2965, %v2888, %v2920
    %v2992 = vsel %vm2965, %v2890, %v2922
    %v2993 = vsel %vm2965, %v2892, %v2924
    %v2994 = vsel %vm2965, %v2894, %v2926
    %v2995 = vsel %vm2965, %v2896, %v2928
    %v2996 = vsel %vm2965, %v2898, %v2930
    %v2997 = vsel %vm2965, %v2900, %v2932
    %v2998 = vsel %vm2965, %v2838, %v2870
    %v2999 = vsel %vm2965, %v2840, %v2872
    %v3000 = vsel %vm2965, %v2842, %v2874
    %v3001 = vsel %vm2965, %v2844, %v2876
    %v3002 = vsel %vm2965, %v2846, %v2878
    %v3003 = vsel %vm2965, %v2848, %v2880
    %v3004 = vsel %vm2965, %v2850, %v2882
    %v3005 = vsel %vm2965, %v2852, %v2884
    %v3006 = vsel %vm2965, %v2854, %v2886
    %v3007 = vsel %vm2965, %v2856, %v2888
    %v3008 = vsel %vm2965, %v2858, %v2890
    %v3009 = vsel %vm2965, %v2860, %v2892
    %v3010 = vsel %vm2965, %v2862, %v2894
    %v3011 = vsel %vm2965, %v2864, %v2896
    %v3012 = vsel %vm2965, %v2866, %v2898
    %v3013 = vsel %vm2965, %v2868, %v2900
    %v3014 = vsel %vm2965, %v2934, %v2838
    %v3015 = vsel %vm2965, %v2936, %v2840
    %v3016 = vsel %vm2965, %v2938, %v2842
    %v3017 = vsel %vm2965, %v2940, %v2844
    %v3018 = vsel %vm2965, %v2942, %v2846
    %v3019 = vsel %vm2965, %v2944, %v2848
    %v3020 = vsel %vm2965, %v2946, %v2850
    %v3021 = vsel %vm2965, %v2948, %v2852
    %v3022 = vsel %vm2965, %v2950, %v2854
    %v3023 = vsel %vm2965, %v2952, %v2856
    %v3024 = vsel %vm2965, %v2954, %v2858
    %v3025 = vsel %vm2965, %v2956, %v2860
    %v3026 = vsel %vm2965, %v2958, %v2862
    %v3027 = vsel %vm2965, %v2960, %v2864
    %v3028 = vsel %vm2965, %v2962, %v2866
    %v3029 = vsel %vm2965, %v2964, %v2868
    %s3030 = scalar_lea.vmem %s6, 7
    %v3031 = vld [vmem:[%s3030] ss:$8 sm:$0xf]
    %vm3032 = vcmp.gt.f32.partialorder %v3031, 0.5
    %v3033 = vsel %vm3032, 1, 0
    %v3034 = vlaneseq
    %v3035 = vshrl.u32 %v3034, 7
    %v3036 = vsub.s32 0, %v3035
    %v3037 = vrot.slane %v3033, %v3036
    %v3038 = vlaneseq
    %v3039 = vshrl.u32 %v3038, 7
    %v3040 = vsub.s32 1, %v3039
    %v3041 = vrot.slane %v3033, %v3040
    %v3042 = vlaneseq
    %v3043 = vshrl.u32 %v3042, 7
    %v3044 = vsub.s32 2, %v3043
    %v3045 = vrot.slane %v3033, %v3044
    %v3046 = vlaneseq
    %v3047 = vshrl.u32 %v3046, 7
    %v3048 = vsub.s32 3, %v3047
    %v3049 = vrot.slane %v3033, %v3048
    %vm3050 = vcmp.eq.s32.totalorder %v3037, 1
    %vm3051 = vcmp.eq.s32.totalorder %v3041, 1
    %vm3052 = vcmp.eq.s32.totalorder %v3045, 1
    %vm3053 = vcmp.eq.s32.totalorder %v3049, 1
    %v3054 = vsel %vm3050, %v2998, 0.0
    %v3055 = vsel %vm3051, %v2982, 0.0
    %v3056 = vsel %vm3052, %v2966, 0.0
    %v3057 = vsel %vm3053, %v3014, 0.0
    %v3058 = vsel %vm3050, %v2999, 0.0
    %v3059 = vsel %vm3051, %v2983, 0.0
    %v3060 = vsel %vm3052, %v2967, 0.0
    %v3061 = vsel %vm3053, %v3015, 0.0
    %v3062 = vsel %vm3050, %v3000, 0.0
    %v3063 = vsel %vm3051, %v2984, 0.0
    %v3064 = vsel %vm3052, %v2968, 0.0
    %v3065 = vsel %vm3053, %v3016, 0.0
    %v3066 = vsel %vm3050, %v3001, 0.0
    %v3067 = vsel %vm3051, %v2985, 0.0
    %v3068 = vsel %vm3052, %v2969, 0.0
    %v3069 = vsel %vm3053, %v3017, 0.0
    %v3070 = vsel %vm3050, %v3002, 0.0
    %v3071 = vsel %vm3051, %v2986, 0.0
    %v3072 = vsel %vm3052, %v2970, 0.0
    %v3073 = vsel %vm3053, %v3018, 0.0
    %v3074 = vsel %vm3050, %v3003, 0.0
    %v3075 = vsel %vm3051, %v2987, 0.0
    %v3076 = vsel %vm3052, %v2971, 0.0
    %v3077 = vsel %vm3053, %v3019, 0.0
    %v3078 = vsel %vm3050, %v3004, 0.0
    %v3079 = vsel %vm3051, %v2988, 0.0
    %v3080 = vsel %vm3052, %v2972, 0.0
    %v3081 = vsel %vm3053, %v3020, 0.0
    %v3082 = vsel %vm3050, %v3005, 0.0
    %v3083 = vsel %vm3051, %v2989, 0.0
    %v3084 = vsel %vm3052, %v2973, 0.0
    %v3085 = vsel %vm3053, %v3021, 0.0
    %v3086 = vsel %vm3050, %v3006, 0.0
    %v3087 = vsel %vm3051, %v2990, 0.0
    %v3088 = vsel %vm3052, %v2974, 0.0
    %v3089 = vsel %vm3053, %v3022, 0.0
    %v3090 = vsel %vm3050, %v3007, 0.0
    %v3091 = vsel %vm3051, %v2991, 0.0
    %v3092 = vsel %vm3052, %v2975, 0.0
    %v3093 = vsel %vm3053, %v3023, 0.0
    %v3094 = vsel %vm3050, %v3008, 0.0
    %v3095 = vsel %vm3051, %v2992, 0.0
    %v3096 = vsel %vm3052, %v2976, 0.0
    %v3097 = vsel %vm3053, %v3024, 0.0
    %v3098 = vsel %vm3050, %v3009, 0.0
    %v3099 = vsel %vm3051, %v2993, 0.0
    %v3100 = vsel %vm3052, %v2977, 0.0
    %v3101 = vsel %vm3053, %v3025, 0.0
    %v3102 = vsel %vm3050, %v3010, 0.0
    %v3103 = vsel %vm3051, %v2994, 0.0
    %v3104 = vsel %vm3052, %v2978, 0.0
    %v3105 = vsel %vm3053, %v3026, 0.0
    %v3106 = vsel %vm3050, %v3011, 0.0
    %v3107 = vsel %vm3051, %v2995, 0.0
    %v3108 = vsel %vm3052, %v2979, 0.0
    %v3109 = vsel %vm3053, %v3027, 0.0
    %v3110 = vsel %vm3050, %v3012, 0.0
    %v3111 = vsel %vm3051, %v2996, 0.0
    %v3112 = vsel %vm3052, %v2980, 0.0
    %v3113 = vsel %vm3053, %v3028, 0.0
    %v3114 = vsel %vm3050, %v3013, 0.0
    %v3115 = vsel %vm3051, %v2997, 0.0
    %v3116 = vsel %vm3052, %v2981, 0.0
    %v3117 = vsel %vm3053, %v3029, 0.0
    %v3118 = vpack.c.bf16 %v3058, %v3054
    %v3119 = vpack.c.bf16 %v3059, %v3055
    %v3120 = vpack.c.bf16 %v3060, %v3056
    %v3121 = vpack.c.bf16 %v3061, %v3057
    %v3122 = vpack.c.bf16 %v3066, %v3062
    %v3123 = vpack.c.bf16 %v3067, %v3063
    %v3124 = vpack.c.bf16 %v3068, %v3064
    %v3125 = vpack.c.bf16 %v3069, %v3065
    %v3126 = vpack.c.bf16 %v3074, %v3070
    %v3127 = vpack.c.bf16 %v3075, %v3071
    %v3128 = vpack.c.bf16 %v3076, %v3072
    %v3129 = vpack.c.bf16 %v3077, %v3073
    %v3130 = vpack.c.bf16 %v3082, %v3078
    %v3131 = vpack.c.bf16 %v3083, %v3079
    %v3132 = vpack.c.bf16 %v3084, %v3080
    %v3133 = vpack.c.bf16 %v3085, %v3081
    %v3134 = vpack.c.bf16 %v3090, %v3086
    %v3135 = vpack.c.bf16 %v3091, %v3087
    %v3136 = vpack.c.bf16 %v3092, %v3088
    %v3137 = vpack.c.bf16 %v3093, %v3089
    %v3138 = vpack.c.bf16 %v3098, %v3094
    %v3139 = vpack.c.bf16 %v3099, %v3095
    %v3140 = vpack.c.bf16 %v3100, %v3096
    %v3141 = vpack.c.bf16 %v3101, %v3097
    %v3142 = vpack.c.bf16 %v3106, %v3102
    %v3143 = vpack.c.bf16 %v3107, %v3103
    %v3144 = vpack.c.bf16 %v3108, %v3104
    %v3145 = vpack.c.bf16 %v3109, %v3105
    %v3146 = vpack.c.bf16 %v3114, %v3110
    %v3147 = vpack.c.bf16 %v3115, %v3111
    %v3148 = vpack.c.bf16 %v3116, %v3112
    %v3149 = vpack.c.bf16 %v3117, %v3113
    %3150 = vst [vmem:[#allocation2 + $0x700] sm:$0xff] %v3118
    %3151 = vst [vmem:[#allocation2 + $0x708] sm:$0xff] %v3119
    %3152 = vst [vmem:[#allocation2 + $0x710] sm:$0xff] %v3120
    %3153 = vst [vmem:[#allocation2 + $0x718] sm:$0xff] %v3121
    %3154 = vst [vmem:[#allocation2 + $0x720] sm:$0xff] %v3122
    %3155 = vst [vmem:[#allocation2 + $0x728] sm:$0xff] %v3123
    %3156 = vst [vmem:[#allocation2 + $0x730] sm:$0xff] %v3124
    %3157 = vst [vmem:[#allocation2 + $0x738] sm:$0xff] %v3125
    %3158 = vst [vmem:[#allocation2 + $0x740] sm:$0xff] %v3126
    %3159 = vst [vmem:[#allocation2 + $0x748] sm:$0xff] %v3127
    %3160 = vst [vmem:[#allocation2 + $0x750] sm:$0xff] %v3128
    %3161 = vst [vmem:[#allocation2 + $0x758] sm:$0xff] %v3129
    %3162 = vst [vmem:[#allocation2 + $0x760] sm:$0xff] %v3130
    %3163 = vst [vmem:[#allocation2 + $0x768] sm:$0xff] %v3131
    %3164 = vst [vmem:[#allocation2 + $0x770] sm:$0xff] %v3132
    %3165 = vst [vmem:[#allocation2 + $0x778] sm:$0xff] %v3133
    %3166 = vst [vmem:[#allocation2 + $0x780] sm:$0xff] %v3134
    %3167 = vst [vmem:[#allocation2 + $0x788] sm:$0xff] %v3135
    %3168 = vst [vmem:[#allocation2 + $0x790] sm:$0xff] %v3136
    %3169 = vst [vmem:[#allocation2 + $0x798] sm:$0xff] %v3137
    %3170 = vst [vmem:[#allocation2 + $0x7a0] sm:$0xff] %v3138
    %3171 = vst [vmem:[#allocation2 + $0x7a8] sm:$0xff] %v3139
    %3172 = vst [vmem:[#allocation2 + $0x7b0] sm:$0xff] %v3140
    %3173 = vst [vmem:[#allocation2 + $0x7b8] sm:$0xff] %v3141
    %3174 = vst [vmem:[#allocation2 + $0x7c0] sm:$0xff] %v3142
    %3175 = vst [vmem:[#allocation2 + $0x7c8] sm:$0xff] %v3143
    %3176 = vst [vmem:[#allocation2 + $0x7d0] sm:$0xff] %v3144
    %3177 = vst [vmem:[#allocation2 + $0x7d8] sm:$0xff] %v3145
    %3178 = vst [vmem:[#allocation2 + $0x7e0] sm:$0xff] %v3146
    %3179 = vst [vmem:[#allocation2 + $0x7e8] sm:$0xff] %v3147
    %3180 = vst [vmem:[#allocation2 + $0x7f0] sm:$0xff] %v3148
    %3181 = vst [vmem:[#allocation2 + $0x7f8] sm:$0xff] %v3149
    %3182 = vrot.lane.b32.xlu0 %v638, 111
    %v3183 = vpop.permute.xlu0 %3182
    %3184 = vrot.lane.b32.xlu0 %v642, 111
    %v3185 = vpop.permute.xlu0 %3184
    %3186 = vrot.lane.b32.xlu0 %v646, 111
    %v3187 = vpop.permute.xlu0 %3186
    %3188 = vrot.lane.b32.xlu0 %v650, 111
    %v3189 = vpop.permute.xlu0 %3188
    %3190 = vrot.lane.b32.xlu0 %v654, 111
    %v3191 = vpop.permute.xlu0 %3190
    %3192 = vrot.lane.b32.xlu0 %v658, 111
    %v3193 = vpop.permute.xlu0 %3192
    %3194 = vrot.lane.b32.xlu0 %v662, 111
    %v3195 = vpop.permute.xlu0 %3194
    %3196 = vrot.lane.b32.xlu0 %v666, 111
    %v3197 = vpop.permute.xlu0 %3196
    %3198 = vrot.lane.b32.xlu0 %v670, 111
    %v3199 = vpop.permute.xlu0 %3198
    %3200 = vrot.lane.b32.xlu0 %v674, 111
    %v3201 = vpop.permute.xlu0 %3200
    %3202 = vrot.lane.b32.xlu0 %v678, 111
    %v3203 = vpop.permute.xlu0 %3202
    %3204 = vrot.lane.b32.xlu0 %v682, 111
    %v3205 = vpop.permute.xlu0 %3204
    %3206 = vrot.lane.b32.xlu0 %v686, 111
    %v3207 = vpop.permute.xlu0 %3206
    %3208 = vrot.lane.b32.xlu0 %v690, 111
    %v3209 = vpop.permute.xlu0 %3208
    %3210 = vrot.lane.b32.xlu0 %v694, 111
    %v3211 = vpop.permute.xlu0 %3210
    %3212 = vrot.lane.b32.xlu0 %v698, 111
    %v3213 = vpop.permute.xlu0 %3212
    %3214 = vrot.lane.b32.xlu0 %v639, 111
    %v3215 = vpop.permute.xlu0 %3214
    %3216 = vrot.lane.b32.xlu0 %v643, 111
    %v3217 = vpop.permute.xlu0 %3216
    %3218 = vrot.lane.b32.xlu0 %v647, 111
    %v3219 = vpop.permute.xlu0 %3218
    %3220 = vrot.lane.b32.xlu0 %v651, 111
    %v3221 = vpop.permute.xlu0 %3220
    %3222 = vrot.lane.b32.xlu0 %v655, 111
    %v3223 = vpop.permute.xlu0 %3222
    %3224 = vrot.lane.b32.xlu0 %v659, 111
    %v3225 = vpop.permute.xlu0 %3224
    %3226 = vrot.lane.b32.xlu0 %v663, 111
    %v3227 = vpop.permute.xlu0 %3226
    %3228 = vrot.lane.b32.xlu0 %v667, 111
    %v3229 = vpop.permute.xlu0 %3228
    %3230 = vrot.lane.b32.xlu0 %v671, 111
    %v3231 = vpop.permute.xlu0 %3230
    %3232 = vrot.lane.b32.xlu0 %v675, 111
    %v3233 = vpop.permute.xlu0 %3232
    %3234 = vrot.lane.b32.xlu0 %v679, 111
    %v3235 = vpop.permute.xlu0 %3234
    %3236 = vrot.lane.b32.xlu0 %v683, 111
    %v3237 = vpop.permute.xlu0 %3236
    %3238 = vrot.lane.b32.xlu0 %v687, 111
    %v3239 = vpop.permute.xlu0 %3238
    %3240 = vrot.lane.b32.xlu0 %v691, 111
    %v3241 = vpop.permute.xlu0 %3240
    %3242 = vrot.lane.b32.xlu0 %v695, 111
    %v3243 = vpop.permute.xlu0 %3242
    %3244 = vrot.lane.b32.xlu0 %v699, 111
    %v3245 = vpop.permute.xlu0 %3244
    %3246 = vrot.lane.b32.xlu0 %v640, 111
    %v3247 = vpop.permute.xlu0 %3246
    %3248 = vrot.lane.b32.xlu0 %v644, 111
    %v3249 = vpop.permute.xlu0 %3248
    %3250 = vrot.lane.b32.xlu0 %v648, 111
    %v3251 = vpop.permute.xlu0 %3250
    %3252 = vrot.lane.b32.xlu0 %v652, 111
    %v3253 = vpop.permute.xlu0 %3252
    %3254 = vrot.lane.b32.xlu0 %v656, 111
    %v3255 = vpop.permute.xlu0 %3254
    %3256 = vrot.lane.b32.xlu0 %v660, 111
    %v3257 = vpop.permute.xlu0 %3256
    %3258 = vrot.lane.b32.xlu0 %v664, 111
    %v3259 = vpop.permute.xlu0 %3258
    %3260 = vrot.lane.b32.xlu0 %v668, 111
    %v3261 = vpop.permute.xlu0 %3260
    %3262 = vrot.lane.b32.xlu0 %v672, 111
    %v3263 = vpop.permute.xlu0 %3262
    %3264 = vrot.lane.b32.xlu0 %v676, 111
    %v3265 = vpop.permute.xlu0 %3264
    %3266 = vrot.lane.b32.xlu0 %v680, 111
    %v3267 = vpop.permute.xlu0 %3266
    %3268 = vrot.lane.b32.xlu0 %v684, 111
    %v3269 = vpop.permute.xlu0 %3268
    %3270 = vrot.lane.b32.xlu0 %v688, 111
    %v3271 = vpop.permute.xlu0 %3270
    %3272 = vrot.lane.b32.xlu0 %v692, 111
    %v3273 = vpop.permute.xlu0 %3272
    %3274 = vrot.lane.b32.xlu0 %v696, 111
    %v3275 = vpop.permute.xlu0 %3274
    %3276 = vrot.lane.b32.xlu0 %v700, 111
    %v3277 = vpop.permute.xlu0 %3276
    %3278 = vrot.lane.b32.xlu0 %v641, 111
    %v3279 = vpop.permute.xlu0 %3278
    %3280 = vrot.lane.b32.xlu0 %v645, 111
    %v3281 = vpop.permute.xlu0 %3280
    %3282 = vrot.lane.b32.xlu0 %v649, 111
    %v3283 = vpop.permute.xlu0 %3282
    %3284 = vrot.lane.b32.xlu0 %v653, 111
    %v3285 = vpop.permute.xlu0 %3284
    %3286 = vrot.lane.b32.xlu0 %v657, 111
    %v3287 = vpop.permute.xlu0 %3286
    %3288 = vrot.lane.b32.xlu0 %v661, 111
    %v3289 = vpop.permute.xlu0 %3288
    %3290 = vrot.lane.b32.xlu0 %v665, 111
    %v3291 = vpop.permute.xlu0 %3290
    %3292 = vrot.lane.b32.xlu0 %v669, 111
    %v3293 = vpop.permute.xlu0 %3292
    %3294 = vrot.lane.b32.xlu0 %v673, 111
    %v3295 = vpop.permute.xlu0 %3294
    %3296 = vrot.lane.b32.xlu0 %v677, 111
    %v3297 = vpop.permute.xlu0 %3296
    %3298 = vrot.lane.b32.xlu0 %v681, 111
    %v3299 = vpop.permute.xlu0 %3298
    %3300 = vrot.lane.b32.xlu0 %v685, 111
    %v3301 = vpop.permute.xlu0 %3300
    %3302 = vrot.lane.b32.xlu0 %v689, 111
    %v3303 = vpop.permute.xlu0 %3302
    %3304 = vrot.lane.b32.xlu0 %v693, 111
    %v3305 = vpop.permute.xlu0 %3304
    %3306 = vrot.lane.b32.xlu0 %v697, 111
    %v3307 = vpop.permute.xlu0 %3306
    %3308 = vrot.lane.b32.xlu0 %v701, 111
    %v3309 = vpop.permute.xlu0 %3308
    %vm3310 = vcmp.lt.s32.totalorder %v831, 111
    %v3311 = vsel %vm3310, %v3247, %v3279
    %v3312 = vsel %vm3310, %v3249, %v3281
    %v3313 = vsel %vm3310, %v3251, %v3283
    %v3314 = vsel %vm3310, %v3253, %v3285
    %v3315 = vsel %vm3310, %v3255, %v3287
    %v3316 = vsel %vm3310, %v3257, %v3289
    %v3317 = vsel %vm3310, %v3259, %v3291
    %v3318 = vsel %vm3310, %v3261, %v3293
    %v3319 = vsel %vm3310, %v3263, %v3295
    %v3320 = vsel %vm3310, %v3265, %v3297
    %v3321 = vsel %vm3310, %v3267, %v3299
    %v3322 = vsel %vm3310, %v3269, %v3301
    %v3323 = vsel %vm3310, %v3271, %v3303
    %v3324 = vsel %vm3310, %v3273, %v3305
    %v3325 = vsel %vm3310, %v3275, %v3307
    %v3326 = vsel %vm3310, %v3277, %v3309
    %v3327 = vsel %vm3310, %v3215, %v3247
    %v3328 = vsel %vm3310, %v3217, %v3249
    %v3329 = vsel %vm3310, %v3219, %v3251
    %v3330 = vsel %vm3310, %v3221, %v3253
    %v3331 = vsel %vm3310, %v3223, %v3255
    %v3332 = vsel %vm3310, %v3225, %v3257
    %v3333 = vsel %vm3310, %v3227, %v3259
    %v3334 = vsel %vm3310, %v3229, %v3261
    %v3335 = vsel %vm3310, %v3231, %v3263
    %v3336 = vsel %vm3310, %v3233, %v3265
    %v3337 = vsel %vm3310, %v3235, %v3267
    %v3338 = vsel %vm3310, %v3237, %v3269
    %v3339 = vsel %vm3310, %v3239, %v3271
    %v3340 = vsel %vm3310, %v3241, %v3273
    %v3341 = vsel %vm3310, %v3243, %v3275
    %v3342 = vsel %vm3310, %v3245, %v3277
    %v3343 = vsel %vm3310, %v3183, %v3215
    %v3344 = vsel %vm3310, %v3185, %v3217
    %v3345 = vsel %vm3310, %v3187, %v3219
    %v3346 = vsel %vm3310, %v3189, %v3221
    %v3347 = vsel %vm3310, %v3191, %v3223
    %v3348 = vsel %vm3310, %v3193, %v3225
    %v3349 = vsel %vm3310, %v3195, %v3227
    %v3350 = vsel %vm3310, %v3197, %v3229
    %v3351 = vsel %vm3310, %v3199, %v3231
    %v3352 = vsel %vm3310, %v3201, %v3233
    %v3353 = vsel %vm3310, %v3203, %v3235
    %v3354 = vsel %vm3310, %v3205, %v3237
    %v3355 = vsel %vm3310, %v3207, %v3239
    %v3356 = vsel %vm3310, %v3209, %v3241
    %v3357 = vsel %vm3310, %v3211, %v3243
    %v3358 = vsel %vm3310, %v3213, %v3245
    %v3359 = vsel %vm3310, %v3279, %v3183
    %v3360 = vsel %vm3310, %v3281, %v3185
    %v3361 = vsel %vm3310, %v3283, %v3187
    %v3362 = vsel %vm3310, %v3285, %v3189
    %v3363 = vsel %vm3310, %v3287, %v3191
    %v3364 = vsel %vm3310, %v3289, %v3193
    %v3365 = vsel %vm3310, %v3291, %v3195
    %v3366 = vsel %vm3310, %v3293, %v3197
    %v3367 = vsel %vm3310, %v3295, %v3199
    %v3368 = vsel %vm3310, %v3297, %v3201
    %v3369 = vsel %vm3310, %v3299, %v3203
    %v3370 = vsel %vm3310, %v3301, %v3205
    %v3371 = vsel %vm3310, %v3303, %v3207
    %v3372 = vsel %vm3310, %v3305, %v3209
    %v3373 = vsel %vm3310, %v3307, %v3211
    %v3374 = vsel %vm3310, %v3309, %v3213
    %s3375 = scalar_lea.vmem %s6, 32
    %v3376 = vld [vmem:[%s3375] ss:$8 sm:$0xf]
    %vm3377 = vcmp.gt.f32.partialorder %v3376, 0.5
    %v3378 = vsel %vm3377, 1, 0
    %v3379 = vlaneseq
    %v3380 = vshrl.u32 %v3379, 7
    %v3381 = vsub.s32 0, %v3380
    %v3382 = vrot.slane %v3378, %v3381
    %v3383 = vlaneseq
    %v3384 = vshrl.u32 %v3383, 7
    %v3385 = vsub.s32 1, %v3384
    %v3386 = vrot.slane %v3378, %v3385
    %v3387 = vlaneseq
    %v3388 = vshrl.u32 %v3387, 7
    %v3389 = vsub.s32 2, %v3388
    %v3390 = vrot.slane %v3378, %v3389
    %v3391 = vlaneseq
    %v3392 = vshrl.u32 %v3391, 7
    %v3393 = vsub.s32 3, %v3392
    %v3394 = vrot.slane %v3378, %v3393
    %vm3395 = vcmp.eq.s32.totalorder %v3382, 1
    %vm3396 = vcmp.eq.s32.totalorder %v3386, 1
    %vm3397 = vcmp.eq.s32.totalorder %v3390, 1
    %vm3398 = vcmp.eq.s32.totalorder %v3394, 1
    %v3399 = vsel %vm3395, %v3343, 0.0
    %v3400 = vsel %vm3396, %v3327, 0.0
    %v3401 = vsel %vm3397, %v3311, 0.0
    %v3402 = vsel %vm3398, %v3359, 0.0
    %v3403 = vsel %vm3395, %v3344, 0.0
    %v3404 = vsel %vm3396, %v3328, 0.0
    %v3405 = vsel %vm3397, %v3312, 0.0
    %v3406 = vsel %vm3398, %v3360, 0.0
    %v3407 = vsel %vm3395, %v3345, 0.0
    %v3408 = vsel %vm3396, %v3329, 0.0
    %v3409 = vsel %vm3397, %v3313, 0.0
    %v3410 = vsel %vm3398, %v3361, 0.0
    %v3411 = vsel %vm3395, %v3346, 0.0
    %v3412 = vsel %vm3396, %v3330, 0.0
    %v3413 = vsel %vm3397, %v3314, 0.0
    %v3414 = vsel %vm3398, %v3362, 0.0
    %v3415 = vsel %vm3395, %v3347, 0.0
    %v3416 = vsel %vm3396, %v3331, 0.0
    %v3417 = vsel %vm3397, %v3315, 0.0
    %v3418 = vsel %vm3398, %v3363, 0.0
    %v3419 = vsel %vm3395, %v3348, 0.0
    %v3420 = vsel %vm3396, %v3332, 0.0
    %v3421 = vsel %vm3397, %v3316, 0.0
    %v3422 = vsel %vm3398, %v3364, 0.0
    %v3423 = vsel %vm3395, %v3349, 0.0
    %v3424 = vsel %vm3396, %v3333, 0.0
    %v3425 = vsel %vm3397, %v3317, 0.0
    %v3426 = vsel %vm3398, %v3365, 0.0
    %v3427 = vsel %vm3395, %v3350, 0.0
    %v3428 = vsel %vm3396, %v3334, 0.0
    %v3429 = vsel %vm3397, %v3318, 0.0
    %v3430 = vsel %vm3398, %v3366, 0.0
    %v3431 = vsel %vm3395, %v3351, 0.0
    %v3432 = vsel %vm3396, %v3335, 0.0
    %v3433 = vsel %vm3397, %v3319, 0.0
    %v3434 = vsel %vm3398, %v3367, 0.0
    %v3435 = vsel %vm3395, %v3352, 0.0
    %v3436 = vsel %vm3396, %v3336, 0.0
    %v3437 = vsel %vm3397, %v3320, 0.0
    %v3438 = vsel %vm3398, %v3368, 0.0
    %v3439 = vsel %vm3395, %v3353, 0.0
    %v3440 = vsel %vm3396, %v3337, 0.0
    %v3441 = vsel %vm3397, %v3321, 0.0
    %v3442 = vsel %vm3398, %v3369, 0.0
    %v3443 = vsel %vm3395, %v3354, 0.0
    %v3444 = vsel %vm3396, %v3338, 0.0
    %v3445 = vsel %vm3397, %v3322, 0.0
    %v3446 = vsel %vm3398, %v3370, 0.0
    %v3447 = vsel %vm3395, %v3355, 0.0
    %v3448 = vsel %vm3396, %v3339, 0.0
    %v3449 = vsel %vm3397, %v3323, 0.0
    %v3450 = vsel %vm3398, %v3371, 0.0
    %v3451 = vsel %vm3395, %v3356, 0.0
    %v3452 = vsel %vm3396, %v3340, 0.0
    %v3453 = vsel %vm3397, %v3324, 0.0
    %v3454 = vsel %vm3398, %v3372, 0.0
    %v3455 = vsel %vm3395, %v3357, 0.0
    %v3456 = vsel %vm3396, %v3341, 0.0
    %v3457 = vsel %vm3397, %v3325, 0.0
    %v3458 = vsel %vm3398, %v3373, 0.0
    %v3459 = vsel %vm3395, %v3358, 0.0
    %v3460 = vsel %vm3396, %v3342, 0.0
    %v3461 = vsel %vm3397, %v3326, 0.0
    %v3462 = vsel %vm3398, %v3374, 0.0
    %v3463 = vpack.c.bf16 %v3403, %v3399
    %v3464 = vpack.c.bf16 %v3404, %v3400
    %v3465 = vpack.c.bf16 %v3405, %v3401
    %v3466 = vpack.c.bf16 %v3406, %v3402
    %v3467 = vpack.c.bf16 %v3411, %v3407
    %v3468 = vpack.c.bf16 %v3412, %v3408
    %v3469 = vpack.c.bf16 %v3413, %v3409
    %v3470 = vpack.c.bf16 %v3414, %v3410
    %v3471 = vpack.c.bf16 %v3419, %v3415
    %v3472 = vpack.c.bf16 %v3420, %v3416
    %v3473 = vpack.c.bf16 %v3421, %v3417
    %v3474 = vpack.c.bf16 %v3422, %v3418
    %v3475 = vpack.c.bf16 %v3427, %v3423
    %v3476 = vpack.c.bf16 %v3428, %v3424
    %v3477 = vpack.c.bf16 %v3429, %v3425
    %v3478 = vpack.c.bf16 %v3430, %v3426
    %v3479 = vpack.c.bf16 %v3435, %v3431
    %v3480 = vpack.c.bf16 %v3436, %v3432
    %v3481 = vpack.c.bf16 %v3437, %v3433
    %v3482 = vpack.c.bf16 %v3438, %v3434
    %v3483 = vpack.c.bf16 %v3443, %v3439
    %v3484 = vpack.c.bf16 %v3444, %v3440
    %v3485 = vpack.c.bf16 %v3445, %v3441
    %v3486 = vpack.c.bf16 %v3446, %v3442
    %v3487 = vpack.c.bf16 %v3451, %v3447
    %v3488 = vpack.c.bf16 %v3452, %v3448
    %v3489 = vpack.c.bf16 %v3453, %v3449
    %v3490 = vpack.c.bf16 %v3454, %v3450
    %v3491 = vpack.c.bf16 %v3459, %v3455
    %v3492 = vpack.c.bf16 %v3460, %v3456
    %v3493 = vpack.c.bf16 %v3461, %v3457
    %v3494 = vpack.c.bf16 %v3462, %v3458
    %3495 = vst [vmem:[#allocation2 + $0x800] sm:$0xff] %v3463
    %3496 = vst [vmem:[#allocation2 + $0x808] sm:$0xff] %v3464
    %3497 = vst [vmem:[#allocation2 + $0x810] sm:$0xff] %v3465
    %3498 = vst [vmem:[#allocation2 + $0x818] sm:$0xff] %v3466
    %3499 = vst [vmem:[#allocation2 + $0x820] sm:$0xff] %v3467
    %3500 = vst [vmem:[#allocation2 + $0x828] sm:$0xff] %v3468
    %3501 = vst [vmem:[#allocation2 + $0x830] sm:$0xff] %v3469
    %3502 = vst [vmem:[#allocation2 + $0x838] sm:$0xff] %v3470
    %3503 = vst [vmem:[#allocation2 + $0x840] sm:$0xff] %v3471
    %3504 = vst [vmem:[#allocation2 + $0x848] sm:$0xff] %v3472
    %3505 = vst [vmem:[#allocation2 + $0x850] sm:$0xff] %v3473
    %3506 = vst [vmem:[#allocation2 + $0x858] sm:$0xff] %v3474
    %3507 = vst [vmem:[#allocation2 + $0x860] sm:$0xff] %v3475
    %3508 = vst [vmem:[#allocation2 + $0x868] sm:$0xff] %v3476
    %3509 = vst [vmem:[#allocation2 + $0x870] sm:$0xff] %v3477
    %3510 = vst [vmem:[#allocation2 + $0x878] sm:$0xff] %v3478
    %3511 = vst [vmem:[#allocation2 + $0x880] sm:$0xff] %v3479
    %3512 = vst [vmem:[#allocation2 + $0x888] sm:$0xff] %v3480
    %3513 = vst [vmem:[#allocation2 + $0x890] sm:$0xff] %v3481
    %3514 = vst [vmem:[#allocation2 + $0x898] sm:$0xff] %v3482
    %3515 = vst [vmem:[#allocation2 + $0x8a0] sm:$0xff] %v3483
    %3516 = vst [vmem:[#allocation2 + $0x8a8] sm:$0xff] %v3484
    %3517 = vst [vmem:[#allocation2 + $0x8b0] sm:$0xff] %v3485
    %3518 = vst [vmem:[#allocation2 + $0x8b8] sm:$0xff] %v3486
    %3519 = vst [vmem:[#allocation2 + $0x8c0] sm:$0xff] %v3487
    %3520 = vst [vmem:[#allocation2 + $0x8c8] sm:$0xff] %v3488
    %3521 = vst [vmem:[#allocation2 + $0x8d0] sm:$0xff] %v3489
    %3522 = vst [vmem:[#allocation2 + $0x8d8] sm:$0xff] %v3490
    %3523 = vst [vmem:[#allocation2 + $0x8e0] sm:$0xff] %v3491
    %3524 = vst [vmem:[#allocation2 + $0x8e8] sm:$0xff] %v3492
    %3525 = vst [vmem:[#allocation2 + $0x8f0] sm:$0xff] %v3493
    %3526 = vst [vmem:[#allocation2 + $0x8f8] sm:$0xff] %v3494
    %v3527 = vld [vmem:[%s3] sm:$0xff]
    %v3528 = vld [vmem:[%s3 + $0x8] sm:$0xff]
    %v3529 = vld [vmem:[%s3 + $0x10] sm:$0xff]
    %v3530 = vld [vmem:[%s3 + $0x18] sm:$0xff]
    %v3531 = vld [vmem:[%s3 + $0x20] sm:$0xf]
    %v3532 = vld [vmem:[%s3 + $0x24] sm:$0xff]
    %v3533 = vld [vmem:[%s3 + $0x2c] sm:$0xff]
    %v3534 = vld [vmem:[%s3 + $0x34] sm:$0xff]
    %v3535 = vld [vmem:[%s3 + $0x3c] sm:$0xff]
    %v3536 = vld [vmem:[%s3 + $0x44] sm:$0xf]
    %v3537 = vld [vmem:[%s3 + $0x48] sm:$0xff]
    %v3538 = vld [vmem:[%s3 + $0x50] sm:$0xff]
    %v3539 = vld [vmem:[%s3 + $0x58] sm:$0xff]
    %v3540 = vld [vmem:[%s3 + $0x60] sm:$0xff]
    %v3541 = vld [vmem:[%s3 + $0x68] sm:$0xf]
    %v3542 = vld [vmem:[%s3 + $0x6c] sm:$0xff]
    %v3543 = vld [vmem:[%s3 + $0x74] sm:$0xff]
    %v3544 = vld [vmem:[%s3 + $0x7c] sm:$0xff]
    %v3545 = vld [vmem:[%s3 + $0x84] sm:$0xff]
    %v3546 = vld [vmem:[%s3 + $0x8c] sm:$0xf]
    %v3547 = vld [vmem:[%s3 + $0x90] sm:$0xff]
    %v3548 = vld [vmem:[%s3 + $0x98] sm:$0xff]
    %v3549 = vld [vmem:[%s3 + $0xa0] sm:$0xff]
    %v3550 = vld [vmem:[%s3 + $0xa8] sm:$0xff]
    %v3551 = vld [vmem:[%s3 + $0xb0] sm:$0xf]
    %v3552 = vld [vmem:[%s3 + $0xb4] sm:$0xff]
    %v3553 = vld [vmem:[%s3 + $0xbc] sm:$0xff]
    %v3554 = vld [vmem:[%s3 + $0xc4] sm:$0xff]
    %v3555 = vld [vmem:[%s3 + $0xcc] sm:$0xff]
    %v3556 = vld [vmem:[%s3 + $0xd4] sm:$0xf]
    %v3557 = vld [vmem:[%s3 + $0xd8] sm:$0xff]
    %v3558 = vld [vmem:[%s3 + $0xe0] sm:$0xff]
    %v3559 = vld [vmem:[%s3 + $0xe8] sm:$0xff]
    %v3560 = vld [vmem:[%s3 + $0xf0] sm:$0xff]
    %v3561 = vld [vmem:[%s3 + $0xf8] sm:$0xf]
    %v3562 = vld [vmem:[%s3 + $0xfc] sm:$0xff]
    %v3563 = vld [vmem:[%s3 + $0x104] sm:$0xff]
    %v3564 = vld [vmem:[%s3 + $0x10c] sm:$0xff]
    %v3565 = vld [vmem:[%s3 + $0x114] sm:$0xff]
    %v3566 = vld [vmem:[%s3 + $0x11c] sm:$0xf]
    %v3567 = vld [vmem:[%s3 + $0x120] sm:$0xff]
    %v3568 = vld [vmem:[%s3 + $0x128] sm:$0xff]
    %v3569 = vld [vmem:[%s3 + $0x130] sm:$0xff]
    %v3570 = vld [vmem:[%s3 + $0x138] sm:$0xff]
    %v3571 = vld [vmem:[%s3 + $0x140] sm:$0xf]
    %v3572 = vld [vmem:[%s3 + $0x144] sm:$0xff]
    %v3573 = vld [vmem:[%s3 + $0x14c] sm:$0xff]
    %v3574 = vld [vmem:[%s3 + $0x154] sm:$0xff]
    %v3575 = vld [vmem:[%s3 + $0x15c] sm:$0xff]
    %v3576 = vld [vmem:[%s3 + $0x164] sm:$0xf]
    %v3577 = vld [vmem:[%s3 + $0x168] sm:$0xff]
    %v3578 = vld [vmem:[%s3 + $0x170] sm:$0xff]
    %v3579 = vld [vmem:[%s3 + $0x178] sm:$0xff]
    %v3580 = vld [vmem:[%s3 + $0x180] sm:$0xff]
    %v3581 = vld [vmem:[%s3 + $0x188] sm:$0xf]
    %v3582 = vld [vmem:[%s3 + $0x18c] sm:$0xff]
    %v3583 = vld [vmem:[%s3 + $0x194] sm:$0xff]
    %v3584 = vld [vmem:[%s3 + $0x19c] sm:$0xff]
    %v3585 = vld [vmem:[%s3 + $0x1a4] sm:$0xff]
    %v3586 = vld [vmem:[%s3 + $0x1ac] sm:$0xf]
    %v3587 = vld [vmem:[%s3 + $0x1b0] sm:$0xff]
    %v3588 = vld [vmem:[%s3 + $0x1b8] sm:$0xff]
    %v3589 = vld [vmem:[%s3 + $0x1c0] sm:$0xff]
    %v3590 = vld [vmem:[%s3 + $0x1c8] sm:$0xff]
    %v3591 = vld [vmem:[%s3 + $0x1d0] sm:$0xf]
    %v3592 = vld [vmem:[%s3 + $0x1d4] sm:$0xff]
    %v3593 = vld [vmem:[%s3 + $0x1dc] sm:$0xff]
    %v3594 = vld [vmem:[%s3 + $0x1e4] sm:$0xff]
    %v3595 = vld [vmem:[%s3 + $0x1ec] sm:$0xff]
    %v3596 = vld [vmem:[%s3 + $0x1f4] sm:$0xf]
    %v3597 = vld [vmem:[%s3 + $0x1f8] sm:$0xff]
    %v3598 = vld [vmem:[%s3 + $0x200] sm:$0xff]
    %v3599 = vld [vmem:[%s3 + $0x208] sm:$0xff]
    %v3600 = vld [vmem:[%s3 + $0x210] sm:$0xff]
    %v3601 = vld [vmem:[%s3 + $0x218] sm:$0xf]
    %v3602 = vld [vmem:[%s3 + $0x21c] sm:$0xff]
    %v3603 = vld [vmem:[%s3 + $0x224] sm:$0xff]
    %v3604 = vld [vmem:[%s3 + $0x22c] sm:$0xff]
    %v3605 = vld [vmem:[%s3 + $0x234] sm:$0xff]
    %v3606 = vld [vmem:[%s3 + $0x23c] sm:$0xf]
    %v3607 = vld [vmem:[%s3 + $0x240] sm:$0xff]
    %v3608 = vld [vmem:[%s3 + $0x248] sm:$0xff]
    %v3609 = vld [vmem:[%s3 + $0x250] sm:$0xff]
    %v3610 = vld [vmem:[%s3 + $0x258] sm:$0xff]
    %v3611 = vld [vmem:[%s3 + $0x260] sm:$0xf]
    %v3612 = vld [vmem:[%s3 + $0x264] sm:$0xff]
    %v3613 = vld [vmem:[%s3 + $0x26c] sm:$0xff]
    %v3614 = vld [vmem:[%s3 + $0x274] sm:$0xff]
    %v3615 = vld [vmem:[%s3 + $0x27c] sm:$0xff]
    %v3616 = vld [vmem:[%s3 + $0x284] sm:$0xf]
    %v3617 = vld [vmem:[%s3 + $0x288] sm:$0xff]
    %v3618 = vld [vmem:[%s3 + $0x290] sm:$0xff]
    %v3619 = vld [vmem:[%s3 + $0x298] sm:$0xff]
    %v3620 = vld [vmem:[%s3 + $0x2a0] sm:$0xff]
    %v3621 = vld [vmem:[%s3 + $0x2a8] sm:$0xf]
    %v3622 = vld [vmem:[%s3 + $0x2ac] sm:$0xff]
    %v3623 = vld [vmem:[%s3 + $0x2b4] sm:$0xff]
    %v3624 = vld [vmem:[%s3 + $0x2bc] sm:$0xff]
    %v3625 = vld [vmem:[%s3 + $0x2c4] sm:$0xff]
    %v3626 = vld [vmem:[%s3 + $0x2cc] sm:$0xf]
    %v3627 = vld [vmem:[%s3 + $0x2d0] sm:$0xff]
    %v3628 = vld [vmem:[%s3 + $0x2d8] sm:$0xff]
    %v3629 = vld [vmem:[%s3 + $0x2e0] sm:$0xff]
    %v3630 = vld [vmem:[%s3 + $0x2e8] sm:$0xff]
    %v3631 = vld [vmem:[%s3 + $0x2f0] sm:$0xf]
    %v3632 = vld [vmem:[%s3 + $0x2f4] sm:$0xff]
    %v3633 = vld [vmem:[%s3 + $0x2fc] sm:$0xff]
    %v3634 = vld [vmem:[%s3 + $0x304] sm:$0xff]
    %v3635 = vld [vmem:[%s3 + $0x30c] sm:$0xff]
    %v3636 = vld [vmem:[%s3 + $0x314] sm:$0xf]
    %v3637 = vld [vmem:[%s3 + $0x318] sm:$0xff]
    %v3638 = vld [vmem:[%s3 + $0x320] sm:$0xff]
    %v3639 = vld [vmem:[%s3 + $0x328] sm:$0xff]
    %v3640 = vld [vmem:[%s3 + $0x330] sm:$0xff]
    %v3641 = vld [vmem:[%s3 + $0x338] sm:$0xf]
    %v3642 = vld [vmem:[%s3 + $0x33c] sm:$0xff]
    %v3643 = vld [vmem:[%s3 + $0x344] sm:$0xff]
    %v3644 = vld [vmem:[%s3 + $0x34c] sm:$0xff]
    %v3645 = vld [vmem:[%s3 + $0x354] sm:$0xff]
    %v3646 = vld [vmem:[%s3 + $0x35c] sm:$0xf]
    %v3647 = vld [vmem:[%s3 + $0x360] sm:$0xff]
    %v3648 = vld [vmem:[%s3 + $0x368] sm:$0xff]
    %v3649 = vld [vmem:[%s3 + $0x370] sm:$0xff]
    %v3650 = vld [vmem:[%s3 + $0x378] sm:$0xff]
    %v3651 = vld [vmem:[%s3 + $0x380] sm:$0xf]
    %v3652 = vld [vmem:[%s3 + $0x384] sm:$0xff]
    %v3653 = vld [vmem:[%s3 + $0x38c] sm:$0xff]
    %v3654 = vld [vmem:[%s3 + $0x394] sm:$0xff]
    %v3655 = vld [vmem:[%s3 + $0x39c] sm:$0xff]
    %v3656 = vld [vmem:[%s3 + $0x3a4] sm:$0xf]
    %v3657 = vld [vmem:[%s3 + $0x3a8] sm:$0xff]
    %v3658 = vld [vmem:[%s3 + $0x3b0] sm:$0xff]
    %v3659 = vld [vmem:[%s3 + $0x3b8] sm:$0xff]
    %v3660 = vld [vmem:[%s3 + $0x3c0] sm:$0xff]
    %v3661 = vld [vmem:[%s3 + $0x3c8] sm:$0xf]
    %v3662 = vld [vmem:[%s3 + $0x3cc] sm:$0xff]
    %v3663 = vld [vmem:[%s3 + $0x3d4] sm:$0xff]
    %v3664 = vld [vmem:[%s3 + $0x3dc] sm:$0xff]
    %v3665 = vld [vmem:[%s3 + $0x3e4] sm:$0xff]
    %v3666 = vld [vmem:[%s3 + $0x3ec] sm:$0xf]
    %v3667 = vld [vmem:[%s3 + $0x3f0] sm:$0xff]
    %v3668 = vld [vmem:[%s3 + $0x3f8] sm:$0xff]
    %v3669 = vld [vmem:[%s3 + $0x400] sm:$0xff]
    %v3670 = vld [vmem:[%s3 + $0x408] sm:$0xff]
    %v3671 = vld [vmem:[%s3 + $0x410] sm:$0xf]
    %v3672 = vld [vmem:[%s3 + $0x414] sm:$0xff]
    %v3673 = vld [vmem:[%s3 + $0x41c] sm:$0xff]
    %v3674 = vld [vmem:[%s3 + $0x424] sm:$0xff]
    %v3675 = vld [vmem:[%s3 + $0x42c] sm:$0xff]
    %v3676 = vld [vmem:[%s3 + $0x434] sm:$0xf]
    %v3677 = vld [vmem:[%s3 + $0x438] sm:$0xff]
    %v3678 = vld [vmem:[%s3 + $0x440] sm:$0xff]
    %v3679 = vld [vmem:[%s3 + $0x448] sm:$0xff]
    %v3680 = vld [vmem:[%s3 + $0x450] sm:$0xff]
    %v3681 = vld [vmem:[%s3 + $0x458] sm:$0xf]
    %v3682 = vld [vmem:[%s3 + $0x45c] sm:$0xff]
    %v3683 = vld [vmem:[%s3 + $0x464] sm:$0xff]
    %v3684 = vld [vmem:[%s3 + $0x46c] sm:$0xff]
    %v3685 = vld [vmem:[%s3 + $0x474] sm:$0xff]
    %v3686 = vld [vmem:[%s3 + $0x47c] sm:$0xf]
    %v3687 = vld [vmem:[#allocation2] sm:$0xff]
    %v3688 = vld [vmem:[#allocation2 + $0x8] sm:$0xff]
    %v3689 = vld [vmem:[#allocation2 + $0x10] sm:$0xff]
    %v3690 = vld [vmem:[#allocation2 + $0x18] sm:$0xff]
    %v3691 = vld [vmem:[#allocation2 + $0x20] sm:$0xff]
    %v3692 = vld [vmem:[#allocation2 + $0x28] sm:$0xff]
    %v3693 = vld [vmem:[#allocation2 + $0x30] sm:$0xff]
    %v3694 = vld [vmem:[#allocation2 + $0x38] sm:$0xff]
    %v3695 = vld [vmem:[#allocation2 + $0x40] sm:$0xff]
    %v3696 = vld [vmem:[#allocation2 + $0x48] sm:$0xff]
    %v3697 = vld [vmem:[#allocation2 + $0x50] sm:$0xff]
    %v3698 = vld [vmem:[#allocation2 + $0x58] sm:$0xff]
    %v3699 = vld [vmem:[#allocation2 + $0x60] sm:$0xff]
    %v3700 = vld [vmem:[#allocation2 + $0x68] sm:$0xff]
    %v3701 = vld [vmem:[#allocation2 + $0x70] sm:$0xff]
    %v3702 = vld [vmem:[#allocation2 + $0x78] sm:$0xff]
    %v3703 = vld [vmem:[#allocation2 + $0x80] sm:$0xff]
    %v3704 = vld [vmem:[#allocation2 + $0x88] sm:$0xff]
    %v3705 = vld [vmem:[#allocation2 + $0x90] sm:$0xff]
    %v3706 = vld [vmem:[#allocation2 + $0x98] sm:$0xff]
    %v3707 = vld [vmem:[#allocation2 + $0xa0] sm:$0xff]
    %v3708 = vld [vmem:[#allocation2 + $0xa8] sm:$0xff]
    %v3709 = vld [vmem:[#allocation2 + $0xb0] sm:$0xff]
    %v3710 = vld [vmem:[#allocation2 + $0xb8] sm:$0xff]
    %v3711 = vld [vmem:[#allocation2 + $0xc0] sm:$0xff]
    %v3712 = vld [vmem:[#allocation2 + $0xc8] sm:$0xff]
    %v3713 = vld [vmem:[#allocation2 + $0xd0] sm:$0xff]
    %v3714 = vld [vmem:[#allocation2 + $0xd8] sm:$0xff]
    %v3715 = vld [vmem:[#allocation2 + $0xe0] sm:$0xff]
    %v3716 = vld [vmem:[#allocation2 + $0xe8] sm:$0xff]
    %v3717 = vld [vmem:[#allocation2 + $0xf0] sm:$0xff]
    %v3718 = vld [vmem:[#allocation2 + $0xf8] sm:$0xff]
    %v3719 = vld [vmem:[#allocation2 + $0x100] sm:$0xff]
    %v3720 = vld [vmem:[#allocation2 + $0x108] sm:$0xff]
    %v3721 = vld [vmem:[#allocation2 + $0x110] sm:$0xff]
    %v3722 = vld [vmem:[#allocation2 + $0x118] sm:$0xff]
    %v3723 = vld [vmem:[#allocation2 + $0x120] sm:$0xff]
    %v3724 = vld [vmem:[#allocation2 + $0x128] sm:$0xff]
    %v3725 = vld [vmem:[#allocation2 + $0x130] sm:$0xff]
    %v3726 = vld [vmem:[#allocation2 + $0x138] sm:$0xff]
    %v3727 = vld [vmem:[#allocation2 + $0x140] sm:$0xff]
    %v3728 = vld [vmem:[#allocation2 + $0x148] sm:$0xff]
    %v3729 = vld [vmem:[#allocation2 + $0x150] sm:$0xff]
    %v3730 = vld [vmem:[#allocation2 + $0x158] sm:$0xff]
    %v3731 = vld [vmem:[#allocation2 + $0x160] sm:$0xff]
    %v3732 = vld [vmem:[#allocation2 + $0x168] sm:$0xff]
    %v3733 = vld [vmem:[#allocation2 + $0x170] sm:$0xff]
    %v3734 = vld [vmem:[#allocation2 + $0x178] sm:$0xff]
    %v3735 = vld [vmem:[#allocation2 + $0x180] sm:$0xff]
    %v3736 = vld [vmem:[#allocation2 + $0x188] sm:$0xff]
    %v3737 = vld [vmem:[#allocation2 + $0x190] sm:$0xff]
    %v3738 = vld [vmem:[#allocation2 + $0x198] sm:$0xff]
    %v3739 = vld [vmem:[#allocation2 + $0x1a0] sm:$0xff]
    %v3740 = vld [vmem:[#allocation2 + $0x1a8] sm:$0xff]
    %v3741 = vld [vmem:[#allocation2 + $0x1b0] sm:$0xff]
    %v3742 = vld [vmem:[#allocation2 + $0x1b8] sm:$0xff]
    %v3743 = vld [vmem:[#allocation2 + $0x1c0] sm:$0xff]
    %v3744 = vld [vmem:[#allocation2 + $0x1c8] sm:$0xff]
    %v3745 = vld [vmem:[#allocation2 + $0x1d0] sm:$0xff]
    %v3746 = vld [vmem:[#allocation2 + $0x1d8] sm:$0xff]
    %v3747 = vld [vmem:[#allocation2 + $0x1e0] sm:$0xff]
    %v3748 = vld [vmem:[#allocation2 + $0x1e8] sm:$0xff]
    %v3749 = vld [vmem:[#allocation2 + $0x1f0] sm:$0xff]
    %v3750 = vld [vmem:[#allocation2 + $0x1f8] sm:$0xff]
    %v3751 = vld [vmem:[#allocation2 + $0x200] sm:$0xff]
    %v3752 = vld [vmem:[#allocation2 + $0x208] sm:$0xff]
    %v3753 = vld [vmem:[#allocation2 + $0x210] sm:$0xff]
    %v3754 = vld [vmem:[#allocation2 + $0x218] sm:$0xff]
    %v3755 = vld [vmem:[#allocation2 + $0x220] sm:$0xff]
    %v3756 = vld [vmem:[#allocation2 + $0x228] sm:$0xff]
    %v3757 = vld [vmem:[#allocation2 + $0x230] sm:$0xff]
    %v3758 = vld [vmem:[#allocation2 + $0x238] sm:$0xff]
    %v3759 = vld [vmem:[#allocation2 + $0x240] sm:$0xff]
    %v3760 = vld [vmem:[#allocation2 + $0x248] sm:$0xff]
    %v3761 = vld [vmem:[#allocation2 + $0x250] sm:$0xff]
    %v3762 = vld [vmem:[#allocation2 + $0x258] sm:$0xff]
    %v3763 = vld [vmem:[#allocation2 + $0x260] sm:$0xff]
    %v3764 = vld [vmem:[#allocation2 + $0x268] sm:$0xff]
    %v3765 = vld [vmem:[#allocation2 + $0x270] sm:$0xff]
    %v3766 = vld [vmem:[#allocation2 + $0x278] sm:$0xff]
    %v3767 = vld [vmem:[#allocation2 + $0x280] sm:$0xff]
    %v3768 = vld [vmem:[#allocation2 + $0x288] sm:$0xff]
    %v3769 = vld [vmem:[#allocation2 + $0x290] sm:$0xff]
    %v3770 = vld [vmem:[#allocation2 + $0x298] sm:$0xff]
    %v3771 = vld [vmem:[#allocation2 + $0x2a0] sm:$0xff]
    %v3772 = vld [vmem:[#allocation2 + $0x2a8] sm:$0xff]
    %v3773 = vld [vmem:[#allocation2 + $0x2b0] sm:$0xff]
    %v3774 = vld [vmem:[#allocation2 + $0x2b8] sm:$0xff]
    %v3775 = vld [vmem:[#allocation2 + $0x2c0] sm:$0xff]
    %v3776 = vld [vmem:[#allocation2 + $0x2c8] sm:$0xff]
    %v3777 = vld [vmem:[#allocation2 + $0x2d0] sm:$0xff]
    %v3778 = vld [vmem:[#allocation2 + $0x2d8] sm:$0xff]
    %v3779 = vld [vmem:[#allocation2 + $0x2e0] sm:$0xff]
    %v3780 = vld [vmem:[#allocation2 + $0x2e8] sm:$0xff]
    %v3781 = vld [vmem:[#allocation2 + $0x2f0] sm:$0xff]
    %v3782 = vld [vmem:[#allocation2 + $0x2f8] sm:$0xff]
    %v3783 = vld [vmem:[#allocation2 + $0x300] sm:$0xff]
    %v3784 = vld [vmem:[#allocation2 + $0x308] sm:$0xff]
    %v3785 = vld [vmem:[#allocation2 + $0x310] sm:$0xff]
    %v3786 = vld [vmem:[#allocation2 + $0x318] sm:$0xff]
    %v3787 = vld [vmem:[#allocation2 + $0x320] sm:$0xff]
    %v3788 = vld [vmem:[#allocation2 + $0x328] sm:$0xff]
    %v3789 = vld [vmem:[#allocation2 + $0x330] sm:$0xff]
    %v3790 = vld [vmem:[#allocation2 + $0x338] sm:$0xff]
    %v3791 = vld [vmem:[#allocation2 + $0x340] sm:$0xff]
    %v3792 = vld [vmem:[#allocation2 + $0x348] sm:$0xff]
    %v3793 = vld [vmem:[#allocation2 + $0x350] sm:$0xff]
    %v3794 = vld [vmem:[#allocation2 + $0x358] sm:$0xff]
    %v3795 = vld [vmem:[#allocation2 + $0x360] sm:$0xff]
    %v3796 = vld [vmem:[#allocation2 + $0x368] sm:$0xff]
    %v3797 = vld [vmem:[#allocation2 + $0x370] sm:$0xff]
    %v3798 = vld [vmem:[#allocation2 + $0x378] sm:$0xff]
    %v3799 = vld [vmem:[#allocation2 + $0x380] sm:$0xff]
    %v3800 = vld [vmem:[#allocation2 + $0x388] sm:$0xff]
    %v3801 = vld [vmem:[#allocation2 + $0x390] sm:$0xff]
    %v3802 = vld [vmem:[#allocation2 + $0x398] sm:$0xff]
    %v3803 = vld [vmem:[#allocation2 + $0x3a0] sm:$0xff]
    %v3804 = vld [vmem:[#allocation2 + $0x3a8] sm:$0xff]
    %v3805 = vld [vmem:[#allocation2 + $0x3b0] sm:$0xff]
    %v3806 = vld [vmem:[#allocation2 + $0x3b8] sm:$0xff]
    %v3807 = vld [vmem:[#allocation2 + $0x3c0] sm:$0xff]
    %v3808 = vld [vmem:[#allocation2 + $0x3c8] sm:$0xff]
    %v3809 = vld [vmem:[#allocation2 + $0x3d0] sm:$0xff]
    %v3810 = vld [vmem:[#allocation2 + $0x3d8] sm:$0xff]
    %v3811 = vld [vmem:[#allocation2 + $0x3e0] sm:$0xff]
    %v3812 = vld [vmem:[#allocation2 + $0x3e8] sm:$0xff]
    %v3813 = vld [vmem:[#allocation2 + $0x3f0] sm:$0xff]
    %v3814 = vld [vmem:[#allocation2 + $0x3f8] sm:$0xff]
    %v3815 = vld [vmem:[#allocation2 + $0x400] sm:$0xff]
    %v3816 = vld [vmem:[#allocation2 + $0x408] sm:$0xff]
    %v3817 = vld [vmem:[#allocation2 + $0x410] sm:$0xff]
    %v3818 = vld [vmem:[#allocation2 + $0x418] sm:$0xff]
    %v3819 = vld [vmem:[#allocation2 + $0x420] sm:$0xff]
    %v3820 = vld [vmem:[#allocation2 + $0x428] sm:$0xff]
    %v3821 = vld [vmem:[#allocation2 + $0x430] sm:$0xff]
    %v3822 = vld [vmem:[#allocation2 + $0x438] sm:$0xff]
    %v3823 = vld [vmem:[#allocation2 + $0x440] sm:$0xff]
    %v3824 = vld [vmem:[#allocation2 + $0x448] sm:$0xff]
    %v3825 = vld [vmem:[#allocation2 + $0x450] sm:$0xff]
    %v3826 = vld [vmem:[#allocation2 + $0x458] sm:$0xff]
    %v3827 = vld [vmem:[#allocation2 + $0x460] sm:$0xff]
    %v3828 = vld [vmem:[#allocation2 + $0x468] sm:$0xff]
    %v3829 = vld [vmem:[#allocation2 + $0x470] sm:$0xff]
    %v3830 = vld [vmem:[#allocation2 + $0x478] sm:$0xff]
    %v3831 = vld [vmem:[#allocation2 + $0x480] sm:$0xff]
    %v3832 = vld [vmem:[#allocation2 + $0x488] sm:$0xff]
    %v3833 = vld [vmem:[#allocation2 + $0x490] sm:$0xff]
    %v3834 = vld [vmem:[#allocation2 + $0x498] sm:$0xff]
    %v3835 = vld [vmem:[#allocation2 + $0x4a0] sm:$0xff]
    %v3836 = vld [vmem:[#allocation2 + $0x4a8] sm:$0xff]
    %v3837 = vld [vmem:[#allocation2 + $0x4b0] sm:$0xff]
    %v3838 = vld [vmem:[#allocation2 + $0x4b8] sm:$0xff]
    %v3839 = vld [vmem:[#allocation2 + $0x4c0] sm:$0xff]
    %v3840 = vld [vmem:[#allocation2 + $0x4c8] sm:$0xff]
    %v3841 = vld [vmem:[#allocation2 + $0x4d0] sm:$0xff]
    %v3842 = vld [vmem:[#allocation2 + $0x4d8] sm:$0xff]
    %v3843 = vld [vmem:[#allocation2 + $0x4e0] sm:$0xff]
    %v3844 = vld [vmem:[#allocation2 + $0x4e8] sm:$0xff]
    %v3845 = vld [vmem:[#allocation2 + $0x4f0] sm:$0xff]
    %v3846 = vld [vmem:[#allocation2 + $0x4f8] sm:$0xff]
    %v3847 = vld [vmem:[#allocation2 + $0x500] sm:$0xff]
    %v3848 = vld [vmem:[#allocation2 + $0x508] sm:$0xff]
    %v3849 = vld [vmem:[#allocation2 + $0x510] sm:$0xff]
    %v3850 = vld [vmem:[#allocation2 + $0x518] sm:$0xff]
    %v3851 = vld [vmem:[#allocation2 + $0x520] sm:$0xff]
    %v3852 = vld [vmem:[#allocation2 + $0x528] sm:$0xff]
    %v3853 = vld [vmem:[#allocation2 + $0x530] sm:$0xff]
    %v3854 = vld [vmem:[#allocation2 + $0x538] sm:$0xff]
    %v3855 = vld [vmem:[#allocation2 + $0x540] sm:$0xff]
    %v3856 = vld [vmem:[#allocation2 + $0x548] sm:$0xff]
    %v3857 = vld [vmem:[#allocation2 + $0x550] sm:$0xff]
    %v3858 = vld [vmem:[#allocation2 + $0x558] sm:$0xff]
    %v3859 = vld [vmem:[#allocation2 + $0x560] sm:$0xff]
    %v3860 = vld [vmem:[#allocation2 + $0x568] sm:$0xff]
    %v3861 = vld [vmem:[#allocation2 + $0x570] sm:$0xff]
    %v3862 = vld [vmem:[#allocation2 + $0x578] sm:$0xff]
    %v3863 = vld [vmem:[#allocation2 + $0x580] sm:$0xff]
    %v3864 = vld [vmem:[#allocation2 + $0x588] sm:$0xff]
    %v3865 = vld [vmem:[#allocation2 + $0x590] sm:$0xff]
    %v3866 = vld [vmem:[#allocation2 + $0x598] sm:$0xff]
    %v3867 = vld [vmem:[#allocation2 + $0x5a0] sm:$0xff]
    %v3868 = vld [vmem:[#allocation2 + $0x5a8] sm:$0xff]
    %v3869 = vld [vmem:[#allocation2 + $0x5b0] sm:$0xff]
    %v3870 = vld [vmem:[#allocation2 + $0x5b8] sm:$0xff]
    %v3871 = vld [vmem:[#allocation2 + $0x5c0] sm:$0xff]
    %v3872 = vld [vmem:[#allocation2 + $0x5c8] sm:$0xff]
    %v3873 = vld [vmem:[#allocation2 + $0x5d0] sm:$0xff]
    %v3874 = vld [vmem:[#allocation2 + $0x5d8] sm:$0xff]
    %v3875 = vld [vmem:[#allocation2 + $0x5e0] sm:$0xff]
    %v3876 = vld [vmem:[#allocation2 + $0x5e8] sm:$0xff]
    %v3877 = vld [vmem:[#allocation2 + $0x5f0] sm:$0xff]
    %v3878 = vld [vmem:[#allocation2 + $0x5f8] sm:$0xff]
    %v3879 = vld [vmem:[#allocation2 + $0x600] sm:$0xff]
    %v3880 = vld [vmem:[#allocation2 + $0x608] sm:$0xff]
    %v3881 = vld [vmem:[#allocation2 + $0x610] sm:$0xff]
    %v3882 = vld [vmem:[#allocation2 + $0x618] sm:$0xff]
    %v3883 = vld [vmem:[#allocation2 + $0x620] sm:$0xff]
    %v3884 = vld [vmem:[#allocation2 + $0x628] sm:$0xff]
    %v3885 = vld [vmem:[#allocation2 + $0x630] sm:$0xff]
    %v3886 = vld [vmem:[#allocation2 + $0x638] sm:$0xff]
    %v3887 = vld [vmem:[#allocation2 + $0x640] sm:$0xff]
    %v3888 = vld [vmem:[#allocation2 + $0x648] sm:$0xff]
    %v3889 = vld [vmem:[#allocation2 + $0x650] sm:$0xff]
    %v3890 = vld [vmem:[#allocation2 + $0x658] sm:$0xff]
    %v3891 = vld [vmem:[#allocation2 + $0x660] sm:$0xff]
    %v3892 = vld [vmem:[#allocation2 + $0x668] sm:$0xff]
    %v3893 = vld [vmem:[#allocation2 + $0x670] sm:$0xff]
    %v3894 = vld [vmem:[#allocation2 + $0x678] sm:$0xff]
    %v3895 = vld [vmem:[#allocation2 + $0x680] sm:$0xff]
    %v3896 = vld [vmem:[#allocation2 + $0x688] sm:$0xff]
    %v3897 = vld [vmem:[#allocation2 + $0x690] sm:$0xff]
    %v3898 = vld [vmem:[#allocation2 + $0x698] sm:$0xff]
    %v3899 = vld [vmem:[#allocation2 + $0x6a0] sm:$0xff]
    %v3900 = vld [vmem:[#allocation2 + $0x6a8] sm:$0xff]
    %v3901 = vld [vmem:[#allocation2 + $0x6b0] sm:$0xff]
    %v3902 = vld [vmem:[#allocation2 + $0x6b8] sm:$0xff]
    %v3903 = vld [vmem:[#allocation2 + $0x6c0] sm:$0xff]
    %v3904 = vld [vmem:[#allocation2 + $0x6c8] sm:$0xff]
    %v3905 = vld [vmem:[#allocation2 + $0x6d0] sm:$0xff]
    %v3906 = vld [vmem:[#allocation2 + $0x6d8] sm:$0xff]
    %v3907 = vld [vmem:[#allocation2 + $0x6e0] sm:$0xff]
    %v3908 = vld [vmem:[#allocation2 + $0x6e8] sm:$0xff]
    %v3909 = vld [vmem:[#allocation2 + $0x6f0] sm:$0xff]
    %v3910 = vld [vmem:[#allocation2 + $0x6f8] sm:$0xff]
    %v3911 = vld [vmem:[#allocation2 + $0x700] sm:$0xff]
    %v3912 = vld [vmem:[#allocation2 + $0x708] sm:$0xff]
    %v3913 = vld [vmem:[#allocation2 + $0x710] sm:$0xff]
    %v3914 = vld [vmem:[#allocation2 + $0x718] sm:$0xff]
    %v3915 = vld [vmem:[#allocation2 + $0x720] sm:$0xff]
    %v3916 = vld [vmem:[#allocation2 + $0x728] sm:$0xff]
    %v3917 = vld [vmem:[#allocation2 + $0x730] sm:$0xff]
    %v3918 = vld [vmem:[#allocation2 + $0x738] sm:$0xff]
    %v3919 = vld [vmem:[#allocation2 + $0x740] sm:$0xff]
    %v3920 = vld [vmem:[#allocation2 + $0x748] sm:$0xff]
    %v3921 = vld [vmem:[#allocation2 + $0x750] sm:$0xff]
    %v3922 = vld [vmem:[#allocation2 + $0x758] sm:$0xff]
    %v3923 = vld [vmem:[#allocation2 + $0x760] sm:$0xff]
    %v3924 = vld [vmem:[#allocation2 + $0x768] sm:$0xff]
    %v3925 = vld [vmem:[#allocation2 + $0x770] sm:$0xff]
    %v3926 = vld [vmem:[#allocation2 + $0x778] sm:$0xff]
    %v3927 = vld [vmem:[#allocation2 + $0x780] sm:$0xff]
    %v3928 = vld [vmem:[#allocation2 + $0x788] sm:$0xff]
    %v3929 = vld [vmem:[#allocation2 + $0x790] sm:$0xff]
    %v3930 = vld [vmem:[#allocation2 + $0x798] sm:$0xff]
    %v3931 = vld [vmem:[#allocation2 + $0x7a0] sm:$0xff]
    %v3932 = vld [vmem:[#allocation2 + $0x7a8] sm:$0xff]
    %v3933 = vld [vmem:[#allocation2 + $0x7b0] sm:$0xff]
    %v3934 = vld [vmem:[#allocation2 + $0x7b8] sm:$0xff]
    %v3935 = vld [vmem:[#allocation2 + $0x7c0] sm:$0xff]
    %v3936 = vld [vmem:[#allocation2 + $0x7c8] sm:$0xff]
    %v3937 = vld [vmem:[#allocation2 + $0x7d0] sm:$0xff]
    %v3938 = vld [vmem:[#allocation2 + $0x7d8] sm:$0xff]
    %v3939 = vld [vmem:[#allocation2 + $0x7e0] sm:$0xff]
    %v3940 = vld [vmem:[#allocation2 + $0x7e8] sm:$0xff]
    %v3941 = vld [vmem:[#allocation2 + $0x7f0] sm:$0xff]
    %v3942 = vld [vmem:[#allocation2 + $0x7f8] sm:$0xff]
    %v3943 = vld [vmem:[#allocation2 + $0x800] sm:$0xff]
    %v3944 = vld [vmem:[#allocation2 + $0x808] sm:$0xff]
    %v3945 = vld [vmem:[#allocation2 + $0x810] sm:$0xff]
    %v3946 = vld [vmem:[#allocation2 + $0x818] sm:$0xff]
    %v3947 = vld [vmem:[#allocation2 + $0x820] sm:$0xff]
    %v3948 = vld [vmem:[#allocation2 + $0x828] sm:$0xff]
    %v3949 = vld [vmem:[#allocation2 + $0x830] sm:$0xff]
    %v3950 = vld [vmem:[#allocation2 + $0x838] sm:$0xff]
    %v3951 = vld [vmem:[#allocation2 + $0x840] sm:$0xff]
    %v3952 = vld [vmem:[#allocation2 + $0x848] sm:$0xff]
    %v3953 = vld [vmem:[#allocation2 + $0x850] sm:$0xff]
    %v3954 = vld [vmem:[#allocation2 + $0x858] sm:$0xff]
    %v3955 = vld [vmem:[#allocation2 + $0x860] sm:$0xff]
    %v3956 = vld [vmem:[#allocation2 + $0x868] sm:$0xff]
    %v3957 = vld [vmem:[#allocation2 + $0x870] sm:$0xff]
    %v3958 = vld [vmem:[#allocation2 + $0x878] sm:$0xff]
    %v3959 = vld [vmem:[#allocation2 + $0x880] sm:$0xff]
    %v3960 = vld [vmem:[#allocation2 + $0x888] sm:$0xff]
    %v3961 = vld [vmem:[#allocation2 + $0x890] sm:$0xff]
    %v3962 = vld [vmem:[#allocation2 + $0x898] sm:$0xff]
    %v3963 = vld [vmem:[#allocation2 + $0x8a0] sm:$0xff]
    %v3964 = vld [vmem:[#allocation2 + $0x8a8] sm:$0xff]
    %v3965 = vld [vmem:[#allocation2 + $0x8b0] sm:$0xff]
    %v3966 = vld [vmem:[#allocation2 + $0x8b8] sm:$0xff]
    %v3967 = vld [vmem:[#allocation2 + $0x8c0] sm:$0xff]
    %v3968 = vld [vmem:[#allocation2 + $0x8c8] sm:$0xff]
    %v3969 = vld [vmem:[#allocation2 + $0x8d0] sm:$0xff]
    %v3970 = vld [vmem:[#allocation2 + $0x8d8] sm:$0xff]
    %v3971 = vld [vmem:[#allocation2 + $0x8e0] sm:$0xff]
    %v3972 = vld [vmem:[#allocation2 + $0x8e8] sm:$0xff]
    %v3973 = vld [vmem:[#allocation2 + $0x8f0] sm:$0xff]
    %v3974 = vld [vmem:[#allocation2 + $0x8f8] sm:$0xff]
    %v3975 = vld [vmem:[%s4] sm:$0xff]
    %v3976 = vld [vmem:[%s4 + $0x8] sm:$0xff]
    %v3977 = vld [vmem:[%s4 + $0x10] sm:$0xff]
    %v3978 = vld [vmem:[%s4 + $0x18] sm:$0xff]
    %v3979 = vld [vmem:[%s4 + $0x20] sm:$0xff]
    %v3980 = vld [vmem:[%s4 + $0x28] sm:$0xff]
    %v3981 = vld [vmem:[%s4 + $0x30] sm:$0xff]
    %v3982 = vld [vmem:[%s4 + $0x38] sm:$0xff]
    %v3983 = vld [vmem:[%s4 + $0x40] sm:$0xff]
    %v3984 = vld [vmem:[%s4 + $0x48] sm:$0xff]
    %v3985 = vld [vmem:[%s4 + $0x50] sm:$0xff]
    %v3986 = vld [vmem:[%s4 + $0x58] sm:$0xff]
    %v3987 = vld [vmem:[%s4 + $0x60] sm:$0xff]
    %v3988 = vld [vmem:[%s4 + $0x68] sm:$0xff]
    %v3989 = vld [vmem:[%s4 + $0x70] sm:$0xff]
    %v3990 = vld [vmem:[%s4 + $0x78] sm:$0xff]
    %v3991 = vld [vmem:[%s4 + $0x80] sm:$0xff]
    %v3992 = vld [vmem:[%s4 + $0x88] sm:$0xff]
    %v3993 = vld [vmem:[%s4 + $0x90] sm:$0xff]
    %v3994 = vld [vmem:[%s4 + $0x98] sm:$0xff]
    %v3995 = vld [vmem:[%s4 + $0xa0] sm:$0xff]
    %v3996 = vld [vmem:[%s4 + $0xa8] sm:$0xff]
    %v3997 = vld [vmem:[%s4 + $0xb0] sm:$0xff]
    %v3998 = vld [vmem:[%s4 + $0xb8] sm:$0xff]
    %v3999 = vld [vmem:[%s4 + $0xc0] sm:$0xff]
    %v4000 = vld [vmem:[%s4 + $0xc8] sm:$0xff]
    %v4001 = vld [vmem:[%s4 + $0xd0] sm:$0xff]
    %v4002 = vld [vmem:[%s4 + $0xd8] sm:$0xff]
    %v4003 = vld [vmem:[%s4 + $0xe0] sm:$0xff]
    %v4004 = vld [vmem:[%s4 + $0xe8] sm:$0xff]
    %v4005 = vld [vmem:[%s4 + $0xf0] sm:$0xff]
    %v4006 = vld [vmem:[%s4 + $0xf8] sm:$0xff]
    %4008 = vset.pattern.permute.xlu0 0
    %4009 = vperm.xlu0 %4008, %v3975
    %v4010 = vpop.permute.xlu0 %4009
    %4013 = vset.pattern.permute.xlu0 0
    %4014 = vperm.xlu0 %4013, %v3976
    %v4015 = vpop.permute.xlu0 %4014
    %4018 = vset.pattern.permute.xlu0 0
    %4019 = vperm.xlu0 %4018, %v3977
    %v4020 = vpop.permute.xlu0 %4019
    %4023 = vset.pattern.permute.xlu0 0
    %4024 = vperm.xlu0 %4023, %v3978
    %v4025 = vpop.permute.xlu0 %4024
    %4028 = vset.pattern.permute.xlu0 0
    %4029 = vperm.xlu0 %4028, %v3979
    %v4030 = vpop.permute.xlu0 %4029
    %4033 = vset.pattern.permute.xlu0 0
    %4034 = vperm.xlu0 %4033, %v3980
    %v4035 = vpop.permute.xlu0 %4034
    %4038 = vset.pattern.permute.xlu0 0
    %4039 = vperm.xlu0 %4038, %v3981
    %v4040 = vpop.permute.xlu0 %4039
    %4043 = vset.pattern.permute.xlu0 0
    %4044 = vperm.xlu0 %4043, %v3982
    %v4045 = vpop.permute.xlu0 %4044
    %4048 = vset.pattern.permute.xlu0 0
    %4049 = vperm.xlu0 %4048, %v3983
    %v4050 = vpop.permute.xlu0 %4049
    %4053 = vset.pattern.permute.xlu0 0
    %4054 = vperm.xlu0 %4053, %v3984
    %v4055 = vpop.permute.xlu0 %4054
    %4058 = vset.pattern.permute.xlu0 0
    %4059 = vperm.xlu0 %4058, %v3985
    %v4060 = vpop.permute.xlu0 %4059
    %4063 = vset.pattern.permute.xlu0 0
    %4064 = vperm.xlu0 %4063, %v3986
    %v4065 = vpop.permute.xlu0 %4064
    %4068 = vset.pattern.permute.xlu0 0
    %4069 = vperm.xlu0 %4068, %v3987
    %v4070 = vpop.permute.xlu0 %4069
    %4073 = vset.pattern.permute.xlu0 0
    %4074 = vperm.xlu0 %4073, %v3988
    %v4075 = vpop.permute.xlu0 %4074
    %4078 = vset.pattern.permute.xlu0 0
    %4079 = vperm.xlu0 %4078, %v3989
    %v4080 = vpop.permute.xlu0 %4079
    %4083 = vset.pattern.permute.xlu0 0
    %4084 = vperm.xlu0 %4083, %v3990
    %v4085 = vpop.permute.xlu0 %4084
    %4088 = vset.pattern.permute.xlu0 0
    %4089 = vperm.xlu0 %4088, %v3991
    %v4090 = vpop.permute.xlu0 %4089
    %4093 = vset.pattern.permute.xlu0 0
    %4094 = vperm.xlu0 %4093, %v3992
    %v4095 = vpop.permute.xlu0 %4094
    %4098 = vset.pattern.permute.xlu0 0
    %4099 = vperm.xlu0 %4098, %v3993
    %v4100 = vpop.permute.xlu0 %4099
    %4103 = vset.pattern.permute.xlu0 0
    %4104 = vperm.xlu0 %4103, %v3994
    %v4105 = vpop.permute.xlu0 %4104
    %4108 = vset.pattern.permute.xlu0 0
    %4109 = vperm.xlu0 %4108, %v3995
    %v4110 = vpop.permute.xlu0 %4109
    %4113 = vset.pattern.permute.xlu0 0
    %4114 = vperm.xlu0 %4113, %v3996
    %v4115 = vpop.permute.xlu0 %4114
    %4118 = vset.pattern.permute.xlu0 0
    %4119 = vperm.xlu0 %4118, %v3997
    %v4120 = vpop.permute.xlu0 %4119
    %4123 = vset.pattern.permute.xlu0 0
    %4124 = vperm.xlu0 %4123, %v3998
    %v4125 = vpop.permute.xlu0 %4124
    %4128 = vset.pattern.permute.xlu0 0
    %4129 = vperm.xlu0 %4128, %v3999
    %v4130 = vpop.permute.xlu0 %4129
    %4133 = vset.pattern.permute.xlu0 0
    %4134 = vperm.xlu0 %4133, %v4000
    %v4135 = vpop.permute.xlu0 %4134
    %4138 = vset.pattern.permute.xlu0 0
    %4139 = vperm.xlu0 %4138, %v4001
    %v4140 = vpop.permute.xlu0 %4139
    %4143 = vset.pattern.permute.xlu0 0
    %4144 = vperm.xlu0 %4143, %v4002
    %v4145 = vpop.permute.xlu0 %4144
    %4148 = vset.pattern.permute.xlu0 0
    %4149 = vperm.xlu0 %4148, %v4003
    %v4150 = vpop.permute.xlu0 %4149
    %4153 = vset.pattern.permute.xlu0 0
    %4154 = vperm.xlu0 %4153, %v4004
    %v4155 = vpop.permute.xlu0 %4154
    %4158 = vset.pattern.permute.xlu0 0
    %4159 = vperm.xlu0 %4158, %v4005
    %v4160 = vpop.permute.xlu0 %4159
    %4163 = vset.pattern.permute.xlu0 0
    %4164 = vperm.xlu0 %4163, %v4006
    %v4165 = vpop.permute.xlu0 %4164
    %v4327 = vunpack.c.l.b16 %v3527
    %v4328 = vunpack.c.h.b16 %v3527
    %v4329 = vunpack.c.l.b16 %v3528
    %v4330 = vunpack.c.h.b16 %v3528
    %v4331 = vunpack.c.l.b16 %v3529
    %v4332 = vunpack.c.h.b16 %v3529
    %v4333 = vunpack.c.l.b16 %v3530
    %v4334 = vunpack.c.h.b16 %v3530
    %v4335 = vunpack.c.l.b16 %v3531
    %v4336 = vunpack.c.l.b16 %v3532
    %v4337 = vunpack.c.h.b16 %v3532
    %v4338 = vunpack.c.l.b16 %v3533
    %v4339 = vunpack.c.h.b16 %v3533
    %v4340 = vunpack.c.l.b16 %v3534
    %v4341 = vunpack.c.h.b16 %v3534
    %v4342 = vunpack.c.l.b16 %v3535
    %v4343 = vunpack.c.h.b16 %v3535
    %v4344 = vunpack.c.l.b16 %v3536
    %v4345 = vunpack.c.l.b16 %v3537
    %v4346 = vunpack.c.h.b16 %v3537
    %v4347 = vunpack.c.l.b16 %v3538
    %v4348 = vunpack.c.h.b16 %v3538
    %v4349 = vunpack.c.l.b16 %v3539
    %v4350 = vunpack.c.h.b16 %v3539
    %v4351 = vunpack.c.l.b16 %v3540
    %v4352 = vunpack.c.h.b16 %v3540
    %v4353 = vunpack.c.l.b16 %v3541
    %v4354 = vunpack.c.l.b16 %v3542
    %v4355 = vunpack.c.h.b16 %v3542
    %v4356 = vunpack.c.l.b16 %v3543
    %v4357 = vunpack.c.h.b16 %v3543
    %v4358 = vunpack.c.l.b16 %v3544
    %v4359 = vunpack.c.h.b16 %v3544
    %v4360 = vunpack.c.l.b16 %v3545
    %v4361 = vunpack.c.h.b16 %v3545
    %v4362 = vunpack.c.l.b16 %v3546
    %v4363 = vunpack.c.l.b16 %v3547
    %v4364 = vunpack.c.h.b16 %v3547
    %v4365 = vunpack.c.l.b16 %v3548
    %v4366 = vunpack.c.h.b16 %v3548
    %v4367 = vunpack.c.l.b16 %v3549
    %v4368 = vunpack.c.h.b16 %v3549
    %v4369 = vunpack.c.l.b16 %v3550
    %v4370 = vunpack.c.h.b16 %v3550
    %v4371 = vunpack.c.l.b16 %v3551
    %v4372 = vunpack.c.l.b16 %v3552
    %v4373 = vunpack.c.h.b16 %v3552
    %v4374 = vunpack.c.l.b16 %v3553
    %v4375 = vunpack.c.h.b16 %v3553
    %v4376 = vunpack.c.l.b16 %v3554
    %v4377 = vunpack.c.h.b16 %v3554
    %v4378 = vunpack.c.l.b16 %v3555
    %v4379 = vunpack.c.h.b16 %v3555
    %v4380 = vunpack.c.l.b16 %v3556
    %v4381 = vunpack.c.l.b16 %v3557
    %v4382 = vunpack.c.h.b16 %v3557
    %v4383 = vunpack.c.l.b16 %v3558
    %v4384 = vunpack.c.h.b16 %v3558
    %v4385 = vunpack.c.l.b16 %v3559
    %v4386 = vunpack.c.h.b16 %v3559
    %v4387 = vunpack.c.l.b16 %v3560
    %v4388 = vunpack.c.h.b16 %v3560
    %v4389 = vunpack.c.l.b16 %v3561
    %v4390 = vunpack.c.l.b16 %v3562
    %v4391 = vunpack.c.h.b16 %v3562
    %v4392 = vunpack.c.l.b16 %v3563
    %v4393 = vunpack.c.h.b16 %v3563
    %v4394 = vunpack.c.l.b16 %v3564
    %v4395 = vunpack.c.h.b16 %v3564
    %v4396 = vunpack.c.l.b16 %v3565
    %v4397 = vunpack.c.h.b16 %v3565
    %v4398 = vunpack.c.l.b16 %v3566
    %v4399 = vunpack.c.l.b16 %v3567
    %v4400 = vunpack.c.h.b16 %v3567
    %v4401 = vunpack.c.l.b16 %v3568
    %v4402 = vunpack.c.h.b16 %v3568
    %v4403 = vunpack.c.l.b16 %v3569
    %v4404 = vunpack.c.h.b16 %v3569
    %v4405 = vunpack.c.l.b16 %v3570
    %v4406 = vunpack.c.h.b16 %v3570
    %v4407 = vunpack.c.l.b16 %v3571
    %v4408 = vunpack.c.l.b16 %v3572
    %v4409 = vunpack.c.h.b16 %v3572
    %v4410 = vunpack.c.l.b16 %v3573
    %v4411 = vunpack.c.h.b16 %v3573
    %v4412 = vunpack.c.l.b16 %v3574
    %v4413 = vunpack.c.h.b16 %v3574
    %v4414 = vunpack.c.l.b16 %v3575
    %v4415 = vunpack.c.h.b16 %v3575
    %v4416 = vunpack.c.l.b16 %v3576
    %v4417 = vunpack.c.l.b16 %v3577
    %v4418 = vunpack.c.h.b16 %v3577
    %v4419 = vunpack.c.l.b16 %v3578
    %v4420 = vunpack.c.h.b16 %v3578
    %v4421 = vunpack.c.l.b16 %v3579
    %v4422 = vunpack.c.h.b16 %v3579
    %v4423 = vunpack.c.l.b16 %v3580
    %v4424 = vunpack.c.h.b16 %v3580
    %v4425 = vunpack.c.l.b16 %v3581
    %v4426 = vunpack.c.l.b16 %v3582
    %v4427 = vunpack.c.h.b16 %v3582
    %v4428 = vunpack.c.l.b16 %v3583
    %v4429 = vunpack.c.h.b16 %v3583
    %v4430 = vunpack.c.l.b16 %v3584
    %v4431 = vunpack.c.h.b16 %v3584
    %v4432 = vunpack.c.l.b16 %v3585
    %v4433 = vunpack.c.h.b16 %v3585
    %v4434 = vunpack.c.l.b16 %v3586
    %v4435 = vunpack.c.l.b16 %v3587
    %v4436 = vunpack.c.h.b16 %v3587
    %v4437 = vunpack.c.l.b16 %v3588
    %v4438 = vunpack.c.h.b16 %v3588
    %v4439 = vunpack.c.l.b16 %v3589
    %v4440 = vunpack.c.h.b16 %v3589
    %v4441 = vunpack.c.l.b16 %v3590
    %v4442 = vunpack.c.h.b16 %v3590
    %v4443 = vunpack.c.l.b16 %v3591
    %v4444 = vunpack.c.l.b16 %v3592
    %v4445 = vunpack.c.h.b16 %v3592
    %v4446 = vunpack.c.l.b16 %v3593
    %v4447 = vunpack.c.h.b16 %v3593
    %v4448 = vunpack.c.l.b16 %v3594
    %v4449 = vunpack.c.h.b16 %v3594
    %v4450 = vunpack.c.l.b16 %v3595
    %v4451 = vunpack.c.h.b16 %v3595
    %v4452 = vunpack.c.l.b16 %v3596
    %v4453 = vunpack.c.l.b16 %v3597
    %v4454 = vunpack.c.h.b16 %v3597
    %v4455 = vunpack.c.l.b16 %v3598
    %v4456 = vunpack.c.h.b16 %v3598
    %v4457 = vunpack.c.l.b16 %v3599
    %v4458 = vunpack.c.h.b16 %v3599
    %v4459 = vunpack.c.l.b16 %v3600
    %v4460 = vunpack.c.h.b16 %v3600
    %v4461 = vunpack.c.l.b16 %v3601
    %v4462 = vunpack.c.l.b16 %v3602
    %v4463 = vunpack.c.h.b16 %v3602
    %v4464 = vunpack.c.l.b16 %v3603
    %v4465 = vunpack.c.h.b16 %v3603
    %v4466 = vunpack.c.l.b16 %v3604
    %v4467 = vunpack.c.h.b16 %v3604
    %v4468 = vunpack.c.l.b16 %v3605
    %v4469 = vunpack.c.h.b16 %v3605
    %v4470 = vunpack.c.l.b16 %v3606
    %v4471 = vunpack.c.l.b16 %v3607
    %v4472 = vunpack.c.h.b16 %v3607
    %v4473 = vunpack.c.l.b16 %v3608
    %v4474 = vunpack.c.h.b16 %v3608
    %v4475 = vunpack.c.l.b16 %v3609
    %v4476 = vunpack.c.h.b16 %v3609
    %v4477 = vunpack.c.l.b16 %v3610
    %v4478 = vunpack.c.h.b16 %v3610
    %v4479 = vunpack.c.l.b16 %v3611
    %v4480 = vunpack.c.l.b16 %v3612
    %v4481 = vunpack.c.h.b16 %v3612
    %v4482 = vunpack.c.l.b16 %v3613
    %v4483 = vunpack.c.h.b16 %v3613
    %v4484 = vunpack.c.l.b16 %v3614
    %v4485 = vunpack.c.h.b16 %v3614
    %v4486 = vunpack.c.l.b16 %v3615
    %v4487 = vunpack.c.h.b16 %v3615
    %v4488 = vunpack.c.l.b16 %v3616
    %v4489 = vunpack.c.l.b16 %v3617
    %v4490 = vunpack.c.h.b16 %v3617
    %v4491 = vunpack.c.l.b16 %v3618
    %v4492 = vunpack.c.h.b16 %v3618
    %v4493 = vunpack.c.l.b16 %v3619
    %v4494 = vunpack.c.h.b16 %v3619
    %v4495 = vunpack.c.l.b16 %v3620
    %v4496 = vunpack.c.h.b16 %v3620
    %v4497 = vunpack.c.l.b16 %v3621
    %v4498 = vunpack.c.l.b16 %v3622
    %v4499 = vunpack.c.h.b16 %v3622
    %v4500 = vunpack.c.l.b16 %v3623
    %v4501 = vunpack.c.h.b16 %v3623
    %v4502 = vunpack.c.l.b16 %v3624
    %v4503 = vunpack.c.h.b16 %v3624
    %v4504 = vunpack.c.l.b16 %v3625
    %v4505 = vunpack.c.h.b16 %v3625
    %v4506 = vunpack.c.l.b16 %v3626
    %v4507 = vunpack.c.l.b16 %v3627
    %v4508 = vunpack.c.h.b16 %v3627
    %v4509 = vunpack.c.l.b16 %v3628
    %v4510 = vunpack.c.h.b16 %v3628
    %v4511 = vunpack.c.l.b16 %v3629
    %v4512 = vunpack.c.h.b16 %v3629
    %v4513 = vunpack.c.l.b16 %v3630
    %v4514 = vunpack.c.h.b16 %v3630
    %v4515 = vunpack.c.l.b16 %v3631
    %v4516 = vunpack.c.l.b16 %v3632
    %v4517 = vunpack.c.h.b16 %v3632
    %v4518 = vunpack.c.l.b16 %v3633
    %v4519 = vunpack.c.h.b16 %v3633
    %v4520 = vunpack.c.l.b16 %v3634
    %v4521 = vunpack.c.h.b16 %v3634
    %v4522 = vunpack.c.l.b16 %v3635
    %v4523 = vunpack.c.h.b16 %v3635
    %v4524 = vunpack.c.l.b16 %v3636
    %v4525 = vunpack.c.l.b16 %v3637
    %v4526 = vunpack.c.h.b16 %v3637
    %v4527 = vunpack.c.l.b16 %v3638
    %v4528 = vunpack.c.h.b16 %v3638
    %v4529 = vunpack.c.l.b16 %v3639
    %v4530 = vunpack.c.h.b16 %v3639
    %v4531 = vunpack.c.l.b16 %v3640
    %v4532 = vunpack.c.h.b16 %v3640
    %v4533 = vunpack.c.l.b16 %v3641
    %v4534 = vunpack.c.l.b16 %v3642
    %v4535 = vunpack.c.h.b16 %v3642
    %v4536 = vunpack.c.l.b16 %v3643
    %v4537 = vunpack.c.h.b16 %v3643
    %v4538 = vunpack.c.l.b16 %v3644
    %v4539 = vunpack.c.h.b16 %v3644
    %v4540 = vunpack.c.l.b16 %v3645
    %v4541 = vunpack.c.h.b16 %v3645
    %v4542 = vunpack.c.l.b16 %v3646
    %v4543 = vunpack.c.l.b16 %v3647
    %v4544 = vunpack.c.h.b16 %v3647
    %v4545 = vunpack.c.l.b16 %v3648
    %v4546 = vunpack.c.h.b16 %v3648
    %v4547 = vunpack.c.l.b16 %v3649
    %v4548 = vunpack.c.h.b16 %v3649
    %v4549 = vunpack.c.l.b16 %v3650
    %v4550 = vunpack.c.h.b16 %v3650
    %v4551 = vunpack.c.l.b16 %v3651
    %v4552 = vunpack.c.l.b16 %v3652
    %v4553 = vunpack.c.h.b16 %v3652
    %v4554 = vunpack.c.l.b16 %v3653
    %v4555 = vunpack.c.h.b16 %v3653
    %v4556 = vunpack.c.l.b16 %v3654
    %v4557 = vunpack.c.h.b16 %v3654
    %v4558 = vunpack.c.l.b16 %v3655
    %v4559 = vunpack.c.h.b16 %v3655
    %v4560 = vunpack.c.l.b16 %v3656
    %v4561 = vunpack.c.l.b16 %v3657
    %v4562 = vunpack.c.h.b16 %v3657
    %v4563 = vunpack.c.l.b16 %v3658
    %v4564 = vunpack.c.h.b16 %v3658
    %v4565 = vunpack.c.l.b16 %v3659
    %v4566 = vunpack.c.h.b16 %v3659
    %v4567 = vunpack.c.l.b16 %v3660
    %v4568 = vunpack.c.h.b16 %v3660
    %v4569 = vunpack.c.l.b16 %v3661
    %v4570 = vunpack.c.l.b16 %v3662
    %v4571 = vunpack.c.h.b16 %v3662
    %v4572 = vunpack.c.l.b16 %v3663
    %v4573 = vunpack.c.h.b16 %v3663
    %v4574 = vunpack.c.l.b16 %v3664
    %v4575 = vunpack.c.h.b16 %v3664
    %v4576 = vunpack.c.l.b16 %v3665
    %v4577 = vunpack.c.h.b16 %v3665
    %v4578 = vunpack.c.l.b16 %v3666
    %v4579 = vunpack.c.l.b16 %v3667
    %v4580 = vunpack.c.h.b16 %v3667
    %v4581 = vunpack.c.l.b16 %v3668
    %v4582 = vunpack.c.h.b16 %v3668
    %v4583 = vunpack.c.l.b16 %v3669
    %v4584 = vunpack.c.h.b16 %v3669
    %v4585 = vunpack.c.l.b16 %v3670
    %v4586 = vunpack.c.h.b16 %v3670
    %v4587 = vunpack.c.l.b16 %v3671
    %v4588 = vunpack.c.l.b16 %v3672
    %v4589 = vunpack.c.h.b16 %v3672
    %v4590 = vunpack.c.l.b16 %v3673
    %v4591 = vunpack.c.h.b16 %v3673
    %v4592 = vunpack.c.l.b16 %v3674
    %v4593 = vunpack.c.h.b16 %v3674
    %v4594 = vunpack.c.l.b16 %v3675
    %v4595 = vunpack.c.h.b16 %v3675
    %v4596 = vunpack.c.l.b16 %v3676
    %v4597 = vunpack.c.l.b16 %v3677
    %v4598 = vunpack.c.h.b16 %v3677
    %v4599 = vunpack.c.l.b16 %v3678
    %v4600 = vunpack.c.h.b16 %v3678
    %v4601 = vunpack.c.l.b16 %v3679
    %v4602 = vunpack.c.h.b16 %v3679
    %v4603 = vunpack.c.l.b16 %v3680
    %v4604 = vunpack.c.h.b16 %v3680
    %v4605 = vunpack.c.l.b16 %v3681
    %v4606 = vunpack.c.l.b16 %v3682
    %v4607 = vunpack.c.h.b16 %v3682
    %v4608 = vunpack.c.l.b16 %v3683
    %v4609 = vunpack.c.h.b16 %v3683
    %v4610 = vunpack.c.l.b16 %v3684
    %v4611 = vunpack.c.h.b16 %v3684
    %v4612 = vunpack.c.l.b16 %v3685
    %v4613 = vunpack.c.h.b16 %v3685
    %v4614 = vunpack.c.l.b16 %v3686
    %v4615 = vpack.c.b16 %v4336, %v4327
    %v4616 = vpack.c.b16 %v4337, %v4328
    %v4617 = vpack.c.b16 %v4338, %v4329
    %v4618 = vpack.c.b16 %v4339, %v4330
    %v4619 = vpack.c.b16 %v4340, %v4331
    %v4620 = vpack.c.b16 %v4341, %v4332
    %v4621 = vpack.c.b16 %v4342, %v4333
    %v4622 = vpack.c.b16 %v4343, %v4334
    %v4623 = vpack.c.b16 %v4344, %v4335
    %v4624 = vpack.c.b16 %v4354, %v4345
    %v4625 = vpack.c.b16 %v4355, %v4346
    %v4626 = vpack.c.b16 %v4356, %v4347
    %v4627 = vpack.c.b16 %v4357, %v4348
    %v4628 = vpack.c.b16 %v4358, %v4349
    %v4629 = vpack.c.b16 %v4359, %v4350
    %v4630 = vpack.c.b16 %v4360, %v4351
    %v4631 = vpack.c.b16 %v4361, %v4352
    %v4632 = vpack.c.b16 %v4362, %v4353
    %v4633 = vpack.c.b16 %v4372, %v4363
    %v4634 = vpack.c.b16 %v4373, %v4364
    %v4635 = vpack.c.b16 %v4374, %v4365
    %v4636 = vpack.c.b16 %v4375, %v4366
    %v4637 = vpack.c.b16 %v4376, %v4367
    %v4638 = vpack.c.b16 %v4377, %v4368
    %v4639 = vpack.c.b16 %v4378, %v4369
    %v4640 = vpack.c.b16 %v4379, %v4370
    %v4641 = vpack.c.b16 %v4380, %v4371
    %v4642 = vpack.c.b16 %v4390, %v4381
    %v4643 = vpack.c.b16 %v4391, %v4382
    %v4644 = vpack.c.b16 %v4392, %v4383
    %v4645 = vpack.c.b16 %v4393, %v4384
    %v4646 = vpack.c.b16 %v4394, %v4385
    %v4647 = vpack.c.b16 %v4395, %v4386
    %v4648 = vpack.c.b16 %v4396, %v4387
    %v4649 = vpack.c.b16 %v4397, %v4388
    %v4650 = vpack.c.b16 %v4398, %v4389
    %v4651 = vpack.c.b16 %v4408, %v4399
    %v4652 = vpack.c.b16 %v4409, %v4400
    %v4653 = vpack.c.b16 %v4410, %v4401
    %v4654 = vpack.c.b16 %v4411, %v4402
    %v4655 = vpack.c.b16 %v4412, %v4403
    %v4656 = vpack.c.b16 %v4413, %v4404
    %v4657 = vpack.c.b16 %v4414, %v4405
    %v4658 = vpack.c.b16 %v4415, %v4406
    %v4659 = vpack.c.b16 %v4416, %v4407
    %v4660 = vpack.c.b16 %v4426, %v4417
    %v4661 = vpack.c.b16 %v4427, %v4418
    %v4662 = vpack.c.b16 %v4428, %v4419
    %v4663 = vpack.c.b16 %v4429, %v4420
    %v4664 = vpack.c.b16 %v4430, %v4421
    %v4665 = vpack.c.b16 %v4431, %v4422
    %v4666 = vpack.c.b16 %v4432, %v4423
    %v4667 = vpack.c.b16 %v4433, %v4424
    %v4668 = vpack.c.b16 %v4434, %v4425
    %v4669 = vpack.c.b16 %v4444, %v4435
    %v4670 = vpack.c.b16 %v4445, %v4436
    %v4671 = vpack.c.b16 %v4446, %v4437
    %v4672 = vpack.c.b16 %v4447, %v4438
    %v4673 = vpack.c.b16 %v4448, %v4439
    %v4674 = vpack.c.b16 %v4449, %v4440
    %v4675 = vpack.c.b16 %v4450, %v4441
    %v4676 = vpack.c.b16 %v4451, %v4442
    %v4677 = vpack.c.b16 %v4452, %v4443
    %v4678 = vpack.c.b16 %v4462, %v4453
    %v4679 = vpack.c.b16 %v4463, %v4454
    %v4680 = vpack.c.b16 %v4464, %v4455
    %v4681 = vpack.c.b16 %v4465, %v4456
    %v4682 = vpack.c.b16 %v4466, %v4457
    %v4683 = vpack.c.b16 %v4467, %v4458
    %v4684 = vpack.c.b16 %v4468, %v4459
    %v4685 = vpack.c.b16 %v4469, %v4460
    %v4686 = vpack.c.b16 %v4470, %v4461
    %v4687 = vpack.c.b16 %v4480, %v4471
    %v4688 = vpack.c.b16 %v4481, %v4472
    %v4689 = vpack.c.b16 %v4482, %v4473
    %v4690 = vpack.c.b16 %v4483, %v4474
    %v4691 = vpack.c.b16 %v4484, %v4475
    %v4692 = vpack.c.b16 %v4485, %v4476
    %v4693 = vpack.c.b16 %v4486, %v4477
    %v4694 = vpack.c.b16 %v4487, %v4478
    %v4695 = vpack.c.b16 %v4488, %v4479
    %v4696 = vpack.c.b16 %v4498, %v4489
    %v4697 = vpack.c.b16 %v4499, %v4490
    %v4698 = vpack.c.b16 %v4500, %v4491
    %v4699 = vpack.c.b16 %v4501, %v4492
    %v4700 = vpack.c.b16 %v4502, %v4493
    %v4701 = vpack.c.b16 %v4503, %v4494
    %v4702 = vpack.c.b16 %v4504, %v4495
    %v4703 = vpack.c.b16 %v4505, %v4496
    %v4704 = vpack.c.b16 %v4506, %v4497
    %v4705 = vpack.c.b16 %v4516, %v4507
    %v4706 = vpack.c.b16 %v4517, %v4508
    %v4707 = vpack.c.b16 %v4518, %v4509
    %v4708 = vpack.c.b16 %v4519, %v4510
    %v4709 = vpack.c.b16 %v4520, %v4511
    %v4710 = vpack.c.b16 %v4521, %v4512
    %v4711 = vpack.c.b16 %v4522, %v4513
    %v4712 = vpack.c.b16 %v4523, %v4514
    %v4713 = vpack.c.b16 %v4524, %v4515
    %v4714 = vpack.c.b16 %v4534, %v4525
    %v4715 = vpack.c.b16 %v4535, %v4526
    %v4716 = vpack.c.b16 %v4536, %v4527
    %v4717 = vpack.c.b16 %v4537, %v4528
    %v4718 = vpack.c.b16 %v4538, %v4529
    %v4719 = vpack.c.b16 %v4539, %v4530
    %v4720 = vpack.c.b16 %v4540, %v4531
    %v4721 = vpack.c.b16 %v4541, %v4532
    %v4722 = vpack.c.b16 %v4542, %v4533
    %v4723 = vpack.c.b16 %v4552, %v4543
    %v4724 = vpack.c.b16 %v4553, %v4544
    %v4725 = vpack.c.b16 %v4554, %v4545
    %v4726 = vpack.c.b16 %v4555, %v4546
    %v4727 = vpack.c.b16 %v4556, %v4547
    %v4728 = vpack.c.b16 %v4557, %v4548
    %v4729 = vpack.c.b16 %v4558, %v4549
    %v4730 = vpack.c.b16 %v4559, %v4550
    %v4731 = vpack.c.b16 %v4560, %v4551
    %v4732 = vpack.c.b16 %v4570, %v4561
    %v4733 = vpack.c.b16 %v4571, %v4562
    %v4734 = vpack.c.b16 %v4572, %v4563
    %v4735 = vpack.c.b16 %v4573, %v4564
    %v4736 = vpack.c.b16 %v4574, %v4565
    %v4737 = vpack.c.b16 %v4575, %v4566
    %v4738 = vpack.c.b16 %v4576, %v4567
    %v4739 = vpack.c.b16 %v4577, %v4568
    %v4740 = vpack.c.b16 %v4578, %v4569
    %v4741 = vpack.c.b16 %v4588, %v4579
    %v4742 = vpack.c.b16 %v4589, %v4580
    %v4743 = vpack.c.b16 %v4590, %v4581
    %v4744 = vpack.c.b16 %v4591, %v4582
    %v4745 = vpack.c.b16 %v4592, %v4583
    %v4746 = vpack.c.b16 %v4593, %v4584
    %v4747 = vpack.c.b16 %v4594, %v4585
    %v4748 = vpack.c.b16 %v4595, %v4586
    %v4749 = vpack.c.b16 %v4596, %v4587
    %v4750 = vpack.c.b16 %v4606, %v4597
    %v4751 = vpack.c.b16 %v4607, %v4598
    %v4752 = vpack.c.b16 %v4608, %v4599
    %v4753 = vpack.c.b16 %v4609, %v4600
    %v4754 = vpack.c.b16 %v4610, %v4601
    %v4755 = vpack.c.b16 %v4611, %v4602
    %v4756 = vpack.c.b16 %v4612, %v4603
    %v4757 = vpack.c.b16 %v4613, %v4604
    %v4758 = vpack.c.b16 %v4614, %v4605
    %4903 = vmatprep.subr.bf16.mxu0 %v3688
    %4904 = vmatpush1.bf16.msra.mxu0 %v3687
    %4905 = vmatprep.subr.bf16.mxu0 %v3692
    %4906 = vmatpush1.bf16.msra.mxu0 %v3691
    %4907 = vmatprep.subr.bf16.mxu0 %v3696
    %4908 = vmatpush1.bf16.msra.mxu0 %v3695
    %4909 = vmatprep.subr.bf16.mxu0 %v3700
    %4910 = vmatpush1.bf16.msra.mxu0 %v3699
    %4911 = vmatprep.subr.bf16.mxu0 %v3704
    %4912 = vmatpush1.bf16.msra.mxu0 %v3703
    %4913 = vmatprep.subr.bf16.mxu0 %v3708
    %4914 = vmatpush1.bf16.msra.mxu0 %v3707
    %4915 = vmatprep.subr.bf16.mxu0 %v3712
    %4916 = vmatpush1.bf16.msra.mxu0 %v3711
    %4917 = vmatprep.subr.bf16.mxu0 %v3716
    %4918 = vmatpush1.bf16.msra.mxu0 %v3715
    %4919 = vmatprep.subr.bf16.mxu0 %v3720
    %4920 = vmatpush1.bf16.msra.mxu0 %v3719
    %4921 = vmatprep.subr.bf16.mxu0 %v3724
    %4922 = vmatpush1.bf16.msra.mxu0 %v3723
    %4923 = vmatprep.subr.bf16.mxu0 %v3728
    %4924 = vmatpush1.bf16.msra.mxu0 %v3727
    %4925 = vmatprep.subr.bf16.mxu0 %v3732
    %4926 = vmatpush1.bf16.msra.mxu0 %v3731
    %4927 = vmatprep.subr.bf16.mxu0 %v3736
    %4928 = vmatpush1.bf16.msra.mxu0 %v3735
    %4929 = vmatprep.subr.bf16.mxu0 %v3740
    %4930 = vmatpush1.bf16.msra.mxu0 %v3739
    %4931 = vmatprep.subr.bf16.mxu0 %v3744
    %4932 = vmatpush1.bf16.msra.mxu0 %v3743
    %4933 = vmatprep.subr.bf16.mxu0 %v3748
    %4934 = vmatpush1.bf16.msra.mxu0 %v3747
    %4935 = vmatprep.mubr.bf16.mxu0 %v4616
    %4936 = vmatmul.mubr.bf16.gmra.mrb[0].mxu0 %v4615
    %v4937 = vpop.f32.mrb[0].mxu0
    %v4938 = vadd.f32 %v4010, %v4937
    %v4939 = vpop.f32.mrb[0].mxu0
    %v4940 = vadd.f32 %v4010, %v4939
    %v4941 = vpop.f32.mrb[0].mxu0
    %v4942 = vadd.f32 %v4015, %v4941
    %v4943 = vpop.f32.mrb[0].mxu0
    %v4944 = vadd.f32 %v4015, %v4943
    %4945 = vmatprep.mubr.bf16.mxu0 %v4625
    %4946 = vmatmul.mubr.bf16.gmra.mrb[0].mxu0 %v4624
    %v4947 = vpop.f32.mrb[0].mxu0
    %v4948 = vadd.f32 %v4020, %v4947
    %v4949 = vpop.f32.mrb[0].mxu0
    %v4950 = vadd.f32 %v4020, %v4949
    %v4951 = vpop.f32.mrb[0].mxu0
    %v4952 = vadd.f32 %v4025, %v4951
    %v4953 = vpop.f32.mrb[0].mxu0
    %v4954 = vadd.f32 %v4025, %v4953
    %4955 = vmatprep.mubr.bf16.mxu0 %v4634
    %4956 = vmatmul.mubr.bf16.gmra.mrb[0].mxu0 %v4633
    %v4957 = vpop.f32.mrb[0].mxu0
    %v4958 = vadd.f32 %v4030, %v4957
    %v4959 = vpop.f32.mrb[0].mxu0
    %v4960 = vadd.f32 %v4030, %v4959
    %v4961 = vpop.f32.mrb[0].mxu0
    %v4962 = vadd.f32 %v4035, %v4961
    %v4963 = vpop.f32.mrb[0].mxu0
    %v4964 = vadd.f32 %v4035, %v4963
    %4965 = vmatprep.mubr.bf16.mxu0 %v4643
    %4966 = vmatmul.mubr.bf16.gmra.mrb[0].mxu0 %v4642
    %v4967 = vpop.f32.mrb[0].mxu0
    %v4968 = vadd.f32 %v4040, %v4967
    %v4969 = vpop.f32.mrb[0].mxu0
    %v4970 = vadd.f32 %v4040, %v4969
    %v4971 = vpop.f32.mrb[0].mxu0
    %v4972 = vadd.f32 %v4045, %v4971
    %v4973 = vpop.f32.mrb[0].mxu0
    %v4974 = vadd.f32 %v4045, %v4973
    %4975 = vmatprep.mubr.bf16.mxu0 %v4652
    %4976 = vmatmul.mubr.bf16.gmra.mrb[0].mxu0 %v4651
    %v4977 = vpop.f32.mrb[0].mxu0
    %v4978 = vadd.f32 %v4050, %v4977
    %v4979 = vpop.f32.mrb[0].mxu0
    %v4980 = vadd.f32 %v4050, %v4979
    %v4981 = vpop.f32.mrb[0].mxu0
    %v4982 = vadd.f32 %v4055, %v4981
    %v4983 = vpop.f32.mrb[0].mxu0
    %v4984 = vadd.f32 %v4055, %v4983
    %4985 = vmatprep.mubr.bf16.mxu0 %v4661
    %4986 = vmatmul.mubr.bf16.gmra.mrb[0].mxu0 %v4660
    %v4987 = vpop.f32.mrb[0].mxu0
    %v4988 = vadd.f32 %v4060, %v4987
    %v4989 = vpop.f32.mrb[0].mxu0
    %v4990 = vadd.f32 %v4060, %v4989
    %v4991 = vpop.f32.mrb[0].mxu0
    %v4992 = vadd.f32 %v4065, %v4991
    %v4993 = vpop.f32.mrb[0].mxu0
    %v4994 = vadd.f32 %v4065, %v4993
    %4995 = vmatprep.mubr.bf16.mxu0 %v4670
    %4996 = vmatmul.mubr.bf16.gmra.mrb[0].mxu0 %v4669
    %v4997 = vpop.f32.mrb[0].mxu0
    %v4998 = vadd.f32 %v4070, %v4997
    %v4999 = vpop.f32.mrb[0].mxu0
    %v5000 = vadd.f32 %v4070, %v4999
    %v5001 = vpop.f32.mrb[0].mxu0
    %v5002 = vadd.f32 %v4075, %v5001
    %v5003 = vpop.f32.mrb[0].mxu0
    %v5004 = vadd.f32 %v4075, %v5003
    %5005 = vmatprep.mubr.bf16.mxu0 %v4679
    %5006 = vmatmul.mubr.bf16.gmra.mrb[0].mxu0 %v4678
    %v5007 = vpop.f32.mrb[0].mxu0
    %v5008 = vadd.f32 %v4080, %v5007
    %v5009 = vpop.f32.mrb[0].mxu0
    %v5010 = vadd.f32 %v4080, %v5009
    %v5011 = vpop.f32.mrb[0].mxu0
    %v5012 = vadd.f32 %v4085, %v5011
    %v5013 = vpop.f32.mrb[0].mxu0
    %v5014 = vadd.f32 %v4085, %v5013
    %5015 = vmatprep.mubr.bf16.mxu0 %v4688
    %5016 = vmatmul.mubr.bf16.gmra.mrb[0].mxu0 %v4687
    %v5017 = vpop.f32.mrb[0].mxu0
    %v5018 = vadd.f32 %v4090, %v5017
    %v5019 = vpop.f32.mrb[0].mxu0
    %v5020 = vadd.f32 %v4090, %v5019
    %v5021 = vpop.f32.mrb[0].mxu0
    %v5022 = vadd.f32 %v4095, %v5021
    %v5023 = vpop.f32.mrb[0].mxu0
    %v5024 = vadd.f32 %v4095, %v5023
    %5025 = vmatprep.mubr.bf16.mxu0 %v4697
    %5026 = vmatmul.mubr.bf16.gmra.mrb[0].mxu0 %v4696
    %v5027 = vpop.f32.mrb[0].mxu0
    %v5028 = vadd.f32 %v4100, %v5027
    %v5029 = vpop.f32.mrb[0].mxu0
    %v5030 = vadd.f32 %v4100, %v5029
    %v5031 = vpop.f32.mrb[0].mxu0
    %v5032 = vadd.f32 %v4105, %v5031
    %v5033 = vpop.f32.mrb[0].mxu0
    %v5034 = vadd.f32 %v4105, %v5033
    %5035 = vmatprep.mubr.bf16.mxu0 %v4706
    %5036 = vmatmul.mubr.bf16.gmra.mrb[0].mxu0 %v4705
    %v5037 = vpop.f32.mrb[0].mxu0
    %v5038 = vadd.f32 %v4110, %v5037
    %v5039 = vpop.f32.mrb[0].mxu0
    %v5040 = vadd.f32 %v4110, %v5039
    %v5041 = vpop.f32.mrb[0].mxu0
    %v5042 = vadd.f32 %v4115, %v5041
    %v5043 = vpop.f32.mrb[0].mxu0
    %v5044 = vadd.f32 %v4115, %v5043
    %5045 = vmatprep.mubr.bf16.mxu0 %v4715
    %5046 = vmatmul.mubr.bf16.gmra.mrb[0].mxu0 %v4714
    %v5047 = vpop.f32.mrb[0].mxu0
    %v5048 = vadd.f32 %v4120, %v5047
    %v5049 = vpop.f32.mrb[0].mxu0
    %v5050 = vadd.f32 %v4120, %v5049
    %v5051 = vpop.f32.mrb[0].mxu0
    %v5052 = vadd.f32 %v4125, %v5051
    %v5053 = vpop.f32.mrb[0].mxu0
    %v5054 = vadd.f32 %v4125, %v5053
    %5055 = vmatprep.mubr.bf16.mxu0 %v4724
    %5056 = vmatmul.mubr.bf16.gmra.mrb[0].mxu0 %v4723
    %v5057 = vpop.f32.mrb[0].mxu0
    %v5058 = vadd.f32 %v4130, %v5057
    %v5059 = vpop.f32.mrb[0].mxu0
    %v5060 = vadd.f32 %v4130, %v5059
    %v5061 = vpop.f32.mrb[0].mxu0
    %v5062 = vadd.f32 %v4135, %v5061
    %v5063 = vpop.f32.mrb[0].mxu0
    %v5064 = vadd.f32 %v4135, %v5063
    %5065 = vmatprep.mubr.bf16.mxu0 %v4733
    %5066 = vmatmul.mubr.bf16.gmra.mrb[0].mxu0 %v4732
    %v5067 = vpop.f32.mrb[0].mxu0
    %v5068 = vadd.f32 %v4140, %v5067
    %v5069 = vpop.f32.mrb[0].mxu0
    %v5070 = vadd.f32 %v4140, %v5069
    %v5071 = vpop.f32.mrb[0].mxu0
    %v5072 = vadd.f32 %v4145, %v5071
    %v5073 = vpop.f32.mrb[0].mxu0
    %v5074 = vadd.f32 %v4145, %v5073
    %5075 = vmatprep.mubr.bf16.mxu0 %v4742
    %5076 = vmatmul.mubr.bf16.gmra.mrb[0].mxu0 %v4741
    %v5077 = vpop.f32.mrb[0].mxu0
    %v5078 = vadd.f32 %v4150, %v5077
    %v5079 = vpop.f32.mrb[0].mxu0
    %v5080 = vadd.f32 %v4150, %v5079
    %v5081 = vpop.f32.mrb[0].mxu0
    %v5082 = vadd.f32 %v4155, %v5081
    %v5083 = vpop.f32.mrb[0].mxu0
    %v5084 = vadd.f32 %v4155, %v5083
    %5085 = vmatprep.mubr.bf16.mxu0 %v4751
    %5086 = vmatmul.mubr.bf16.gmra.mrb[0].mxu0 %v4750
    %v5087 = vpop.f32.mrb[0].mxu0
    %v5088 = vadd.f32 %v4160, %v5087
    %v5089 = vpop.f32.mrb[0].mxu0
    %v5090 = vadd.f32 %v4160, %v5089
    %v5091 = vpop.f32.mrb[0].mxu0
    %v5092 = vadd.f32 %v4165, %v5091
    %v5093 = vpop.f32.mrb[0].mxu0
    %v5094 = vadd.f32 %v4165, %v5093
    %5095 = vdwg.mxu0
    %5096 = vmatprep.subr.bf16.mxu0 %v3752
    %5097 = vmatpush1.bf16.msra.mxu0 %v3751
    %5098 = vmatprep.subr.bf16.mxu0 %v3756
    %5099 = vmatpush1.bf16.msra.mxu0 %v3755
    %5100 = vmatprep.subr.bf16.mxu0 %v3760
    %5101 = vmatpush1.bf16.msra.mxu0 %v3759
    %5102 = vmatprep.subr.bf16.mxu0 %v3764
    %5103 = vmatpush1.bf16.msra.mxu0 %v3763
    %5104 = vmatprep.subr.bf16.mxu0 %v3768
    %5105 = vmatpush1.bf16.msra.mxu0 %v3767
    %5106 = vmatprep.subr.bf16.mxu0 %v3772
    %5107 = vmatpush1.bf16.msra.mxu0 %v3771
    %5108 = vmatprep.subr.bf16.mxu0 %v3776
    %5109 = vmatpush1.bf16.msra.mxu0 %v3775
    %5110 = vmatprep.subr.bf16.mxu0 %v3780
    %5111 = vmatpush1.bf16.msra.mxu0 %v3779
    %5112 = vmatprep.subr.bf16.mxu0 %v3784
    %5113 = vmatpush1.bf16.msra.mxu0 %v3783
    %5114 = vmatprep.subr.bf16.mxu0 %v3788
    %5115 = vmatpush1.bf16.msra.mxu0 %v3787
    %5116 = vmatprep.subr.bf16.mxu0 %v3792
    %5117 = vmatpush1.bf16.msra.mxu0 %v3791
    %5118 = vmatprep.subr.bf16.mxu0 %v3796
    %5119 = vmatpush1.bf16.msra.mxu0 %v3795
    %5120 = vmatprep.subr.bf16.mxu0 %v3800
    %5121 = vmatpush1.bf16.msra.mxu0 %v3799
    %5122 = vmatprep.subr.bf16.mxu0 %v3804
    %5123 = vmatpush1.bf16.msra.mxu0 %v3803
    %5124 = vmatprep.subr.bf16.mxu0 %v3808
    %5125 = vmatpush1.bf16.msra.mxu0 %v3807
    %5126 = vmatprep.subr.bf16.mxu0 %v3812
    %5127 = vmatpush1.bf16.msra.mxu0 %v3811
    %5128 = vmatprep.mubr.bf16.mxu0 %v4618
    %5129 = vmatmul.mubr.bf16.gmra.mrb[0].mxu0 %v4617
    %v5130 = vpop.f32.mrb[0].mxu0
    %v5131 = vadd.f32 %v4938, %v5130
    %v5132 = vpop.f32.mrb[0].mxu0
    %v5133 = vadd.f32 %v4940, %v5132
    %v5134 = vpop.f32.mrb[0].mxu0
    %v5135 = vadd.f32 %v4942, %v5134
    %v5136 = vpop.f32.mrb[0].mxu0
    %v5137 = vadd.f32 %v4944, %v5136
    %5138 = vmatprep.mubr.bf16.mxu0 %v4627
    %5139 = vmatmul.mubr.bf16.gmra.mrb[0].mxu0 %v4626
    %v5140 = vpop.f32.mrb[0].mxu0
    %v5141 = vadd.f32 %v4948, %v5140
    %v5142 = vpop.f32.mrb[0].mxu0
    %v5143 = vadd.f32 %v4950, %v5142
    %v5144 = vpop.f32.mrb[0].mxu0
    %v5145 = vadd.f32 %v4952, %v5144
    %v5146 = vpop.f32.mrb[0].mxu0
    %v5147 = vadd.f32 %v4954, %v5146
    %5148 = vmatprep.mubr.bf16.mxu0 %v4636
    %5149 = vmatmul.mubr.bf16.gmra.mrb[0].mxu0 %v4635
    %v5150 = vpop.f32.mrb[0].mxu0
    %v5151 = vadd.f32 %v4958, %v5150
    %v5152 = vpop.f32.mrb[0].mxu0
    %v5153 = vadd.f32 %v4960, %v5152
    %v5154 = vpop.f32.mrb[0].mxu0
    %v5155 = vadd.f32 %v4962, %v5154
    %v5156 = vpop.f32.mrb[0].mxu0
    %v5157 = vadd.f32 %v4964, %v5156
    %5158 = vmatprep.mubr.bf16.mxu0 %v4645
    %5159 = vmatmul.mubr.bf16.gmra.mrb[0].mxu0 %v4644
    %v5160 = vpop.f32.mrb[0].mxu0
    %v5161 = vadd.f32 %v4968, %v5160
    %v5162 = vpop.f32.mrb[0].mxu0
    %v5163 = vadd.f32 %v4970, %v5162
    %v5164 = vpop.f32.mrb[0].mxu0
    %v5165 = vadd.f32 %v4972, %v5164
    %v5166 = vpop.f32.mrb[0].mxu0
    %v5167 = vadd.f32 %v4974, %v5166
    %5168 = vmatprep.mubr.bf16.mxu0 %v4654
    %5169 = vmatmul.mubr.bf16.gmra.mrb[0].mxu0 %v4653
    %v5170 = vpop.f32.mrb[0].mxu0
    %v5171 = vadd.f32 %v4978, %v5170
    %v5172 = vpop.f32.mrb[0].mxu0
    %v5173 = vadd.f32 %v4980, %v5172
    %v5174 = vpop.f32.mrb[0].mxu0
    %v5175 = vadd.f32 %v4982, %v5174
    %v5176 = vpop.f32.mrb[0].mxu0
    %v5177 = vadd.f32 %v4984, %v5176
    %5178 = vmatprep.mubr.bf16.mxu0 %v4663
    %5179 = vmatmul.mubr.bf16.gmra.mrb[0].mxu0 %v4662
    %v5180 = vpop.f32.mrb[0].mxu0
    %v5181 = vadd.f32 %v4988, %v5180
    %v5182 = vpop.f32.mrb[0].mxu0
    %v5183 = vadd.f32 %v4990, %v5182
    %v5184 = vpop.f32.mrb[0].mxu0
    %v5185 = vadd.f32 %v4992, %v5184
    %v5186 = vpop.f32.mrb[0].mxu0
    %v5187 = vadd.f32 %v4994, %v5186
    %5188 = vmatprep.mubr.bf16.mxu0 %v4672
    %5189 = vmatmul.mubr.bf16.gmra.mrb[0].mxu0 %v4671
    %v5190 = vpop.f32.mrb[0].mxu0
    %v5191 = vadd.f32 %v4998, %v5190
    %v5192 = vpop.f32.mrb[0].mxu0
    %v5193 = vadd.f32 %v5000, %v5192
    %v5194 = vpop.f32.mrb[0].mxu0
    %v5195 = vadd.f32 %v5002, %v5194
    %v5196 = vpop.f32.mrb[0].mxu0
    %v5197 = vadd.f32 %v5004, %v5196
    %5198 = vmatprep.mubr.bf16.mxu0 %v4681
    %5199 = vmatmul.mubr.bf16.gmra.mrb[0].mxu0 %v4680
    %v5200 = vpop.f32.mrb[0].mxu0
    %v5201 = vadd.f32 %v5008, %v5200
    %v5202 = vpop.f32.mrb[0].mxu0
    %v5203 = vadd.f32 %v5010, %v5202
    %v5204 = vpop.f32.mrb[0].mxu0
    %v5205 = vadd.f32 %v5012, %v5204
    %v5206 = vpop.f32.mrb[0].mxu0
    %v5207 = vadd.f32 %v5014, %v5206
    %5208 = vmatprep.mubr.bf16.mxu0 %v4690
    %5209 = vmatmul.mubr.bf16.gmra.mrb[0].mxu0 %v4689
    %v5210 = vpop.f32.mrb[0].mxu0
    %v5211 = vadd.f32 %v5018, %v5210
    %v5212 = vpop.f32.mrb[0].mxu0
    %v5213 = vadd.f32 %v5020, %v5212
    %v5214 = vpop.f32.mrb[0].mxu0
    %v5215 = vadd.f32 %v5022, %v5214
    %v5216 = vpop.f32.mrb[0].mxu0
    %v5217 = vadd.f32 %v5024, %v5216
    %5218 = vmatprep.mubr.bf16.mxu0 %v4699
    %5219 = vmatmul.mubr.bf16.gmra.mrb[0].mxu0 %v4698
    %v5220 = vpop.f32.mrb[0].mxu0
    %v5221 = vadd.f32 %v5028, %v5220
    %v5222 = vpop.f32.mrb[0].mxu0
    %v5223 = vadd.f32 %v5030, %v5222
    %v5224 = vpop.f32.mrb[0].mxu0
    %v5225 = vadd.f32 %v5032, %v5224
    %v5226 = vpop.f32.mrb[0].mxu0
    %v5227 = vadd.f32 %v5034, %v5226
    %5228 = vmatprep.mubr.bf16.mxu0 %v4708
    %5229 = vmatmul.mubr.bf16.gmra.mrb[0].mxu0 %v4707
    %v5230 = vpop.f32.mrb[0].mxu0
    %v5231 = vadd.f32 %v5038, %v5230
    %v5232 = vpop.f32.mrb[0].mxu0
    %v5233 = vadd.f32 %v5040, %v5232
    %v5234 = vpop.f32.mrb[0].mxu0
    %v5235 = vadd.f32 %v5042, %v5234
    %v5236 = vpop.f32.mrb[0].mxu0
    %v5237 = vadd.f32 %v5044, %v5236
    %5238 = vmatprep.mubr.bf16.mxu0 %v4717
    %5239 = vmatmul.mubr.bf16.gmra.mrb[0].mxu0 %v4716
    %v5240 = vpop.f32.mrb[0].mxu0
    %v5241 = vadd.f32 %v5048, %v5240
    %v5242 = vpop.f32.mrb[0].mxu0
    %v5243 = vadd.f32 %v5050, %v5242
    %v5244 = vpop.f32.mrb[0].mxu0
    %v5245 = vadd.f32 %v5052, %v5244
    %v5246 = vpop.f32.mrb[0].mxu0
    %v5247 = vadd.f32 %v5054, %v5246
    %5248 = vmatprep.mubr.bf16.mxu0 %v4726
    %5249 = vmatmul.mubr.bf16.gmra.mrb[0].mxu0 %v4725
    %v5250 = vpop.f32.mrb[0].mxu0
    %v5251 = vadd.f32 %v5058, %v5250
    %v5252 = vpop.f32.mrb[0].mxu0
    %v5253 = vadd.f32 %v5060, %v5252
    %v5254 = vpop.f32.mrb[0].mxu0
    %v5255 = vadd.f32 %v5062, %v5254
    %v5256 = vpop.f32.mrb[0].mxu0
    %v5257 = vadd.f32 %v5064, %v5256
    %5258 = vmatprep.mubr.bf16.mxu0 %v4735
    %5259 = vmatmul.mubr.bf16.gmra.mrb[0].mxu0 %v4734
    %v5260 = vpop.f32.mrb[0].mxu0
    %v5261 = vadd.f32 %v5068, %v5260
    %v5262 = vpop.f32.mrb[0].mxu0
    %v5263 = vadd.f32 %v5070, %v5262
    %v5264 = vpop.f32.mrb[0].mxu0
    %v5265 = vadd.f32 %v5072, %v5264
    %v5266 = vpop.f32.mrb[0].mxu0
    %v5267 = vadd.f32 %v5074, %v5266
    %5268 = vmatprep.mubr.bf16.mxu0 %v4744
    %5269 = vmatmul.mubr.bf16.gmra.mrb[0].mxu0 %v4743
    %v5270 = vpop.f32.mrb[0].mxu0
    %v5271 = vadd.f32 %v5078, %v5270
    %v5272 = vpop.f32.mrb[0].mxu0
    %v5273 = vadd.f32 %v5080, %v5272
    %v5274 = vpop.f32.mrb[0].mxu0
    %v5275 = vadd.f32 %v5082, %v5274
    %v5276 = vpop.f32.mrb[0].mxu0
    %v5277 = vadd.f32 %v5084, %v5276
    %5278 = vmatprep.mubr.bf16.mxu0 %v4753
    %5279 = vmatmul.mubr.bf16.gmra.mrb[0].mxu0 %v4752
    %v5280 = vpop.f32.mrb[0].mxu0
    %v5281 = vadd.f32 %v5088, %v5280
    %v5282 = vpop.f32.mrb[0].mxu0
    %v5283 = vadd.f32 %v5090, %v5282
    %v5284 = vpop.f32.mrb[0].mxu0
    %v5285 = vadd.f32 %v5092, %v5284
    %v5286 = vpop.f32.mrb[0].mxu0
    %v5287 = vadd.f32 %v5094, %v5286
    %5288 = vdwg.mxu0
    %5289 = vmatprep.subr.bf16.mxu0 %v3816
    %5290 = vmatpush1.bf16.msra.mxu0 %v3815
    %5291 = vmatprep.subr.bf16.mxu0 %v3820
    %5292 = vmatpush1.bf16.msra.mxu0 %v3819
    %5293 = vmatprep.subr.bf16.mxu0 %v3824
    %5294 = vmatpush1.bf16.msra.mxu0 %v3823
    %5295 = vmatprep.subr.bf16.mxu0 %v3828
    %5296 = vmatpush1.bf16.msra.mxu0 %v3827
    %5297 = vmatprep.subr.bf16.mxu0 %v3832
    %5298 = vmatpush1.bf16.msra.mxu0 %v3831
    %5299 = vmatprep.subr.bf16.mxu0 %v3836
    %5300 = vmatpush1.bf16.msra.mxu0 %v3835
    %5301 = vmatprep.subr.bf16.mxu0 %v3840
    %5302 = vmatpush1.bf16.msra.mxu0 %v3839
    %5303 = vmatprep.subr.bf16.mxu0 %v3844
    %5304 = vmatpush1.bf16.msra.mxu0 %v3843
    %5305 = vmatprep.subr.bf16.mxu0 %v3848
    %5306 = vmatpush1.bf16.msra.mxu0 %v3847
    %5307 = vmatprep.subr.bf16.mxu0 %v3852
    %5308 = vmatpush1.bf16.msra.mxu0 %v3851
    %5309 = vmatprep.subr.bf16.mxu0 %v3856
    %5310 = vmatpush1.bf16.msra.mxu0 %v3855
    %5311 = vmatprep.subr.bf16.mxu0 %v3860
    %5312 = vmatpush1.bf16.msra.mxu0 %v3859
    %5313 = vmatprep.subr.bf16.mxu0 %v3864
    %5314 = vmatpush1.bf16.msra.mxu0 %v3863
    %5315 = vmatprep.subr.bf16.mxu0 %v3868
    %5316 = vmatpush1.bf16.msra.mxu0 %v3867
    %5317 = vmatprep.subr.bf16.mxu0 %v3872
    %5318 = vmatpush1.bf16.msra.mxu0 %v3871
    %5319 = vmatprep.subr.bf16.mxu0 %v3876
    %5320 = vmatpush1.bf16.msra.mxu0 %v3875
    %5321 = vmatprep.mubr.bf16.mxu0 %v4620
    %5322 = vmatmul.mubr.bf16.gmra.mrb[0].mxu0 %v4619
    %v5323 = vpop.f32.mrb[0].mxu0
    %v5324 = vadd.f32 %v5131, %v5323
    %v5325 = vpop.f32.mrb[0].mxu0
    %v5326 = vadd.f32 %v5133, %v5325
    %v5327 = vpop.f32.mrb[0].mxu0
    %v5328 = vadd.f32 %v5135, %v5327
    %v5329 = vpop.f32.mrb[0].mxu0
    %v5330 = vadd.f32 %v5137, %v5329
    %5331 = vmatprep.mubr.bf16.mxu0 %v4629
    %5332 = vmatmul.mubr.bf16.gmra.mrb[0].mxu0 %v4628
    %v5333 = vpop.f32.mrb[0].mxu0
    %v5334 = vadd.f32 %v5141, %v5333
    %v5335 = vpop.f32.mrb[0].mxu0
    %v5336 = vadd.f32 %v5143, %v5335
    %v5337 = vpop.f32.mrb[0].mxu0
    %v5338 = vadd.f32 %v5145, %v5337
    %v5339 = vpop.f32.mrb[0].mxu0
    %v5340 = vadd.f32 %v5147, %v5339
    %5341 = vmatprep.mubr.bf16.mxu0 %v4638
    %5342 = vmatmul.mubr.bf16.gmra.mrb[0].mxu0 %v4637
    %v5343 = vpop.f32.mrb[0].mxu0
    %v5344 = vadd.f32 %v5151, %v5343
    %v5345 = vpop.f32.mrb[0].mxu0
    %v5346 = vadd.f32 %v5153, %v5345
    %v5347 = vpop.f32.mrb[0].mxu0
    %v5348 = vadd.f32 %v5155, %v5347
    %v5349 = vpop.f32.mrb[0].mxu0
    %v5350 = vadd.f32 %v5157, %v5349
    %5351 = vmatprep.mubr.bf16.mxu0 %v4647
    %5352 = vmatmul.mubr.bf16.gmra.mrb[0].mxu0 %v4646
    %v5353 = vpop.f32.mrb[0].mxu0
    %v5354 = vadd.f32 %v5161, %v5353
    %v5355 = vpop.f32.mrb[0].mxu0
    %v5356 = vadd.f32 %v5163, %v5355
    %v5357 = vpop.f32.mrb[0].mxu0
    %v5358 = vadd.f32 %v5165, %v5357
    %v5359 = vpop.f32.mrb[0].mxu0
    %v5360 = vadd.f32 %v5167, %v5359
    %5361 = vmatprep.mubr.bf16.mxu0 %v4656
    %5362 = vmatmul.mubr.bf16.gmra.mrb[0].mxu0 %v4655
    %v5363 = vpop.f32.mrb[0].mxu0
    %v5364 = vadd.f32 %v5171, %v5363
    %v5365 = vpop.f32.mrb[0].mxu0
    %v5366 = vadd.f32 %v5173, %v5365
    %v5367 = vpop.f32.mrb[0].mxu0
    %v5368 = vadd.f32 %v5175, %v5367
    %v5369 = vpop.f32.mrb[0].mxu0
    %v5370 = vadd.f32 %v5177, %v5369
    %5371 = vmatprep.mubr.bf16.mxu0 %v4665
    %5372 = vmatmul.mubr.bf16.gmra.mrb[0].mxu0 %v4664
    %v5373 = vpop.f32.mrb[0].mxu0
    %v5374 = vadd.f32 %v5181, %v5373
    %v5375 = vpop.f32.mrb[0].mxu0
    %v5376 = vadd.f32 %v5183, %v5375
    %v5377 = vpop.f32.mrb[0].mxu0
    %v5378 = vadd.f32 %v5185, %v5377
    %v5379 = vpop.f32.mrb[0].mxu0
    %v5380 = vadd.f32 %v5187, %v5379
    %5381 = vmatprep.mubr.bf16.mxu0 %v4674
    %5382 = vmatmul.mubr.bf16.gmra.mrb[0].mxu0 %v4673
    %v5383 = vpop.f32.mrb[0].mxu0
    %v5384 = vadd.f32 %v5191, %v5383
    %v5385 = vpop.f32.mrb[0].mxu0
    %v5386 = vadd.f32 %v5193, %v5385
    %v5387 = vpop.f32.mrb[0].mxu0
    %v5388 = vadd.f32 %v5195, %v5387
    %v5389 = vpop.f32.mrb[0].mxu0
    %v5390 = vadd.f32 %v5197, %v5389
    %5391 = vmatprep.mubr.bf16.mxu0 %v4683
    %5392 = vmatmul.mubr.bf16.gmra.mrb[0].mxu0 %v4682
    %v5393 = vpop.f32.mrb[0].mxu0
    %v5394 = vadd.f32 %v5201, %v5393
    %v5395 = vpop.f32.mrb[0].mxu0
    %v5396 = vadd.f32 %v5203, %v5395
    %v5397 = vpop.f32.mrb[0].mxu0
    %v5398 = vadd.f32 %v5205, %v5397
    %v5399 = vpop.f32.mrb[0].mxu0
    %v5400 = vadd.f32 %v5207, %v5399
    %5401 = vmatprep.mubr.bf16.mxu0 %v4692
    %5402 = vmatmul.mubr.bf16.gmra.mrb[0].mxu0 %v4691
    %v5403 = vpop.f32.mrb[0].mxu0
    %v5404 = vadd.f32 %v5211, %v5403
    %v5405 = vpop.f32.mrb[0].mxu0
    %v5406 = vadd.f32 %v5213, %v5405
    %v5407 = vpop.f32.mrb[0].mxu0
    %v5408 = vadd.f32 %v5215, %v5407
    %v5409 = vpop.f32.mrb[0].mxu0
    %v5410 = vadd.f32 %v5217, %v5409
    %5411 = vmatprep.mubr.bf16.mxu0 %v4701
    %5412 = vmatmul.mubr.bf16.gmra.mrb[0].mxu0 %v4700
    %v5413 = vpop.f32.mrb[0].mxu0
    %v5414 = vadd.f32 %v5221, %v5413
    %v5415 = vpop.f32.mrb[0].mxu0
    %v5416 = vadd.f32 %v5223, %v5415
    %v5417 = vpop.f32.mrb[0].mxu0
    %v5418 = vadd.f32 %v5225, %v5417
    %v5419 = vpop.f32.mrb[0].mxu0
    %v5420 = vadd.f32 %v5227, %v5419
    %5421 = vmatprep.mubr.bf16.mxu0 %v4710
    %5422 = vmatmul.mubr.bf16.gmra.mrb[0].mxu0 %v4709
    %v5423 = vpop.f32.mrb[0].mxu0
    %v5424 = vadd.f32 %v5231, %v5423
    %v5425 = vpop.f32.mrb[0].mxu0
    %v5426 = vadd.f32 %v5233, %v5425
    %v5427 = vpop.f32.mrb[0].mxu0
    %v5428 = vadd.f32 %v5235, %v5427
    %v5429 = vpop.f32.mrb[0].mxu0
    %v5430 = vadd.f32 %v5237, %v5429
    %5431 = vmatprep.mubr.bf16.mxu0 %v4719
    %5432 = vmatmul.mubr.bf16.gmra.mrb[0].mxu0 %v4718
    %v5433 = vpop.f32.mrb[0].mxu0
    %v5434 = vadd.f32 %v5241, %v5433
    %v5435 = vpop.f32.mrb[0].mxu0
    %v5436 = vadd.f32 %v5243, %v5435
    %v5437 = vpop.f32.mrb[0].mxu0
    %v5438 = vadd.f32 %v5245, %v5437
    %v5439 = vpop.f32.mrb[0].mxu0
    %v5440 = vadd.f32 %v5247, %v5439
    %5441 = vmatprep.mubr.bf16.mxu0 %v4728
    %5442 = vmatmul.mubr.bf16.gmra.mrb[0].mxu0 %v4727
    %v5443 = vpop.f32.mrb[0].mxu0
    %v5444 = vadd.f32 %v5251, %v5443
    %v5445 = vpop.f32.mrb[0].mxu0
    %v5446 = vadd.f32 %v5253, %v5445
    %v5447 = vpop.f32.mrb[0].mxu0
    %v5448 = vadd.f32 %v5255, %v5447
    %v5449 = vpop.f32.mrb[0].mxu0
    %v5450 = vadd.f32 %v5257, %v5449
    %5451 = vmatprep.mubr.bf16.mxu0 %v4737
    %5452 = vmatmul.mubr.bf16.gmra.mrb[0].mxu0 %v4736
    %v5453 = vpop.f32.mrb[0].mxu0
    %v5454 = vadd.f32 %v5261, %v5453
    %v5455 = vpop.f32.mrb[0].mxu0
    %v5456 = vadd.f32 %v5263, %v5455
    %v5457 = vpop.f32.mrb[0].mxu0
    %v5458 = vadd.f32 %v5265, %v5457
    %v5459 = vpop.f32.mrb[0].mxu0
    %v5460 = vadd.f32 %v5267, %v5459
    %5461 = vmatprep.mubr.bf16.mxu0 %v4746
    %5462 = vmatmul.mubr.bf16.gmra.mrb[0].mxu0 %v4745
    %v5463 = vpop.f32.mrb[0].mxu0
    %v5464 = vadd.f32 %v5271, %v5463
    %v5465 = vpop.f32.mrb[0].mxu0
    %v5466 = vadd.f32 %v5273, %v5465
    %v5467 = vpop.f32.mrb[0].mxu0
    %v5468 = vadd.f32 %v5275, %v5467
    %v5469 = vpop.f32.mrb[0].mxu0
    %v5470 = vadd.f32 %v5277, %v5469
    %5471 = vmatprep.mubr.bf16.mxu0 %v4755
    %5472 = vmatmul.mubr.bf16.gmra.mrb[0].mxu0 %v4754
    %v5473 = vpop.f32.mrb[0].mxu0
    %v5474 = vadd.f32 %v5281, %v5473
    %v5475 = vpop.f32.mrb[0].mxu0
    %v5476 = vadd.f32 %v5283, %v5475
    %v5477 = vpop.f32.mrb[0].mxu0
    %v5478 = vadd.f32 %v5285, %v5477
    %v5479 = vpop.f32.mrb[0].mxu0
    %v5480 = vadd.f32 %v5287, %v5479
    %5481 = vdwg.mxu0
    %5482 = vmatprep.subr.bf16.mxu0 %v3880
    %5483 = vmatpush1.bf16.msra.mxu0 %v3879
    %5484 = vmatprep.subr.bf16.mxu0 %v3884
    %5485 = vmatpush1.bf16.msra.mxu0 %v3883
    %5486 = vmatprep.subr.bf16.mxu0 %v3888
    %5487 = vmatpush1.bf16.msra.mxu0 %v3887
    %5488 = vmatprep.subr.bf16.mxu0 %v3892
    %5489 = vmatpush1.bf16.msra.mxu0 %v3891
    %5490 = vmatprep.subr.bf16.mxu0 %v3896
    %5491 = vmatpush1.bf16.msra.mxu0 %v3895
    %5492 = vmatprep.subr.bf16.mxu0 %v3900
    %5493 = vmatpush1.bf16.msra.mxu0 %v3899
    %5494 = vmatprep.subr.bf16.mxu0 %v3904
    %5495 = vmatpush1.bf16.msra.mxu0 %v3903
    %5496 = vmatprep.subr.bf16.mxu0 %v3908
    %5497 = vmatpush1.bf16.msra.mxu0 %v3907
    %5498 = vmatprep.subr.bf16.mxu0 %v3912
    %5499 = vmatpush1.bf16.msra.mxu0 %v3911
    %5500 = vmatprep.subr.bf16.mxu0 %v3916
    %5501 = vmatpush1.bf16.msra.mxu0 %v3915
    %5502 = vmatprep.subr.bf16.mxu0 %v3920
    %5503 = vmatpush1.bf16.msra.mxu0 %v3919
    %5504 = vmatprep.subr.bf16.mxu0 %v3924
    %5505 = vmatpush1.bf16.msra.mxu0 %v3923
    %5506 = vmatprep.subr.bf16.mxu0 %v3928
    %5507 = vmatpush1.bf16.msra.mxu0 %v3927
    %5508 = vmatprep.subr.bf16.mxu0 %v3932
    %5509 = vmatpush1.bf16.msra.mxu0 %v3931
    %5510 = vmatprep.subr.bf16.mxu0 %v3936
    %5511 = vmatpush1.bf16.msra.mxu0 %v3935
    %5512 = vmatprep.subr.bf16.mxu0 %v3940
    %5513 = vmatpush1.bf16.msra.mxu0 %v3939
    %5514 = vmatprep.mubr.bf16.mxu0 %v4622
    %5515 = vmatmul.mubr.bf16.gmra.mrb[0].mxu0 %v4621
    %v5516 = vpop.f32.mrb[0].mxu0
    %v5517 = vadd.f32 %v5324, %v5516
    %v5518 = vpop.f32.mrb[0].mxu0
    %v5519 = vadd.f32 %v5326, %v5518
    %v5520 = vpop.f32.mrb[0].mxu0
    %v5521 = vadd.f32 %v5328, %v5520
    %v5522 = vpop.f32.mrb[0].mxu0
    %v5523 = vadd.f32 %v5330, %v5522
    %5524 = vmatprep.mubr.bf16.mxu0 %v4631
    %5525 = vmatmul.mubr.bf16.gmra.mrb[0].mxu0 %v4630
    %v5526 = vpop.f32.mrb[0].mxu0
    %v5527 = vadd.f32 %v5334, %v5526
    %v5528 = vpop.f32.mrb[0].mxu0
    %v5529 = vadd.f32 %v5336, %v5528
    %v5530 = vpop.f32.mrb[0].mxu0
    %v5531 = vadd.f32 %v5338, %v5530
    %v5532 = vpop.f32.mrb[0].mxu0
    %v5533 = vadd.f32 %v5340, %v5532
    %5534 = vmatprep.mubr.bf16.mxu0 %v4640
    %5535 = vmatmul.mubr.bf16.gmra.mrb[0].mxu0 %v4639
    %v5536 = vpop.f32.mrb[0].mxu0
    %v5537 = vadd.f32 %v5344, %v5536
    %v5538 = vpop.f32.mrb[0].mxu0
    %v5539 = vadd.f32 %v5346, %v5538
    %v5540 = vpop.f32.mrb[0].mxu0
    %v5541 = vadd.f32 %v5348, %v5540
    %v5542 = vpop.f32.mrb[0].mxu0
    %v5543 = vadd.f32 %v5350, %v5542
    %5544 = vmatprep.mubr.bf16.mxu0 %v4649
    %5545 = vmatmul.mubr.bf16.gmra.mrb[0].mxu0 %v4648
    %v5546 = vpop.f32.mrb[0].mxu0
    %v5547 = vadd.f32 %v5354, %v5546
    %v5548 = vpop.f32.mrb[0].mxu0
    %v5549 = vadd.f32 %v5356, %v5548
    %v5550 = vpop.f32.mrb[0].mxu0
    %v5551 = vadd.f32 %v5358, %v5550
    %v5552 = vpop.f32.mrb[0].mxu0
    %v5553 = vadd.f32 %v5360, %v5552
    %5554 = vmatprep.mubr.bf16.mxu0 %v4658
    %5555 = vmatmul.mubr.bf16.gmra.mrb[0].mxu0 %v4657
    %v5556 = vpop.f32.mrb[0].mxu0
    %v5557 = vadd.f32 %v5364, %v5556
    %v5558 = vpop.f32.mrb[0].mxu0
    %v5559 = vadd.f32 %v5366, %v5558
    %v5560 = vpop.f32.mrb[0].mxu0
    %v5561 = vadd.f32 %v5368, %v5560
    %v5562 = vpop.f32.mrb[0].mxu0
    %v5563 = vadd.f32 %v5370, %v5562
    %5564 = vmatprep.mubr.bf16.mxu0 %v4667
    %5565 = vmatmul.mubr.bf16.gmra.mrb[0].mxu0 %v4666
    %v5566 = vpop.f32.mrb[0].mxu0
    %v5567 = vadd.f32 %v5374, %v5566
    %v5568 = vpop.f32.mrb[0].mxu0
    %v5569 = vadd.f32 %v5376, %v5568
    %v5570 = vpop.f32.mrb[0].mxu0
    %v5571 = vadd.f32 %v5378, %v5570
    %v5572 = vpop.f32.mrb[0].mxu0
    %v5573 = vadd.f32 %v5380, %v5572
    %5574 = vmatprep.mubr.bf16.mxu0 %v4676
    %5575 = vmatmul.mubr.bf16.gmra.mrb[0].mxu0 %v4675
    %v5576 = vpop.f32.mrb[0].mxu0
    %v5577 = vadd.f32 %v5384, %v5576
    %v5578 = vpop.f32.mrb[0].mxu0
    %v5579 = vadd.f32 %v5386, %v5578
    %v5580 = vpop.f32.mrb[0].mxu0
    %v5581 = vadd.f32 %v5388, %v5580
    %v5582 = vpop.f32.mrb[0].mxu0
    %v5583 = vadd.f32 %v5390, %v5582
    %5584 = vmatprep.mubr.bf16.mxu0 %v4685
    %5585 = vmatmul.mubr.bf16.gmra.mrb[0].mxu0 %v4684
    %v5586 = vpop.f32.mrb[0].mxu0
    %v5587 = vadd.f32 %v5394, %v5586
    %v5588 = vpop.f32.mrb[0].mxu0
    %v5589 = vadd.f32 %v5396, %v5588
    %v5590 = vpop.f32.mrb[0].mxu0
    %v5591 = vadd.f32 %v5398, %v5590
    %v5592 = vpop.f32.mrb[0].mxu0
    %v5593 = vadd.f32 %v5400, %v5592
    %5594 = vmatprep.mubr.bf16.mxu0 %v4694
    %5595 = vmatmul.mubr.bf16.gmra.mrb[0].mxu0 %v4693
    %v5596 = vpop.f32.mrb[0].mxu0
    %v5597 = vadd.f32 %v5404, %v5596
    %v5598 = vpop.f32.mrb[0].mxu0
    %v5599 = vadd.f32 %v5406, %v5598
    %v5600 = vpop.f32.mrb[0].mxu0
    %v5601 = vadd.f32 %v5408, %v5600
    %v5602 = vpop.f32.mrb[0].mxu0
    %v5603 = vadd.f32 %v5410, %v5602
    %5604 = vmatprep.mubr.bf16.mxu0 %v4703
    %5605 = vmatmul.mubr.bf16.gmra.mrb[0].mxu0 %v4702
    %v5606 = vpop.f32.mrb[0].mxu0
    %v5607 = vadd.f32 %v5414, %v5606
    %v5608 = vpop.f32.mrb[0].mxu0
    %v5609 = vadd.f32 %v5416, %v5608
    %v5610 = vpop.f32.mrb[0].mxu0
    %v5611 = vadd.f32 %v5418, %v5610
    %v5612 = vpop.f32.mrb[0].mxu0
    %v5613 = vadd.f32 %v5420, %v5612
    %5614 = vmatprep.mubr.bf16.mxu0 %v4712
    %5615 = vmatmul.mubr.bf16.gmra.mrb[0].mxu0 %v4711
    %v5616 = vpop.f32.mrb[0].mxu0
    %v5617 = vadd.f32 %v5424, %v5616
    %v5618 = vpop.f32.mrb[0].mxu0
    %v5619 = vadd.f32 %v5426, %v5618
    %v5620 = vpop.f32.mrb[0].mxu0
    %v5621 = vadd.f32 %v5428, %v5620
    %v5622 = vpop.f32.mrb[0].mxu0
    %v5623 = vadd.f32 %v5430, %v5622
    %5624 = vmatprep.mubr.bf16.mxu0 %v4721
    %5625 = vmatmul.mubr.bf16.gmra.mrb[0].mxu0 %v4720
    %v5626 = vpop.f32.mrb[0].mxu0
    %v5627 = vadd.f32 %v5434, %v5626
    %v5628 = vpop.f32.mrb[0].mxu0
    %v5629 = vadd.f32 %v5436, %v5628
    %v5630 = vpop.f32.mrb[0].mxu0
    %v5631 = vadd.f32 %v5438, %v5630
    %v5632 = vpop.f32.mrb[0].mxu0
    %v5633 = vadd.f32 %v5440, %v5632
    %5634 = vmatprep.mubr.bf16.mxu0 %v4730
    %5635 = vmatmul.mubr.bf16.gmra.mrb[0].mxu0 %v4729
    %v5636 = vpop.f32.mrb[0].mxu0
    %v5637 = vadd.f32 %v5444, %v5636
    %v5638 = vpop.f32.mrb[0].mxu0
    %v5639 = vadd.f32 %v5446, %v5638
    %v5640 = vpop.f32.mrb[0].mxu0
    %v5641 = vadd.f32 %v5448, %v5640
    %v5642 = vpop.f32.mrb[0].mxu0
    %v5643 = vadd.f32 %v5450, %v5642
    %5644 = vmatprep.mubr.bf16.mxu0 %v4739
    %5645 = vmatmul.mubr.bf16.gmra.mrb[0].mxu0 %v4738
    %v5646 = vpop.f32.mrb[0].mxu0
    %v5647 = vadd.f32 %v5454, %v5646
    %v5648 = vpop.f32.mrb[0].mxu0
    %v5649 = vadd.f32 %v5456, %v5648
    %v5650 = vpop.f32.mrb[0].mxu0
    %v5651 = vadd.f32 %v5458, %v5650
    %v5652 = vpop.f32.mrb[0].mxu0
    %v5653 = vadd.f32 %v5460, %v5652
    %5654 = vmatprep.mubr.bf16.mxu0 %v4748
    %5655 = vmatmul.mubr.bf16.gmra.mrb[0].mxu0 %v4747
    %v5656 = vpop.f32.mrb[0].mxu0
    %v5657 = vadd.f32 %v5464, %v5656
    %v5658 = vpop.f32.mrb[0].mxu0
    %v5659 = vadd.f32 %v5466, %v5658
    %v5660 = vpop.f32.mrb[0].mxu0
    %v5661 = vadd.f32 %v5468, %v5660
    %v5662 = vpop.f32.mrb[0].mxu0
    %v5663 = vadd.f32 %v5470, %v5662
    %5664 = vmatprep.mubr.bf16.mxu0 %v4757
    %5665 = vmatmul.mubr.bf16.gmra.mrb[0].mxu0 %v4756
    %v5666 = vpop.f32.mrb[0].mxu0
    %v5667 = vadd.f32 %v5474, %v5666
    %v5668 = vpop.f32.mrb[0].mxu0
    %v5669 = vadd.f32 %v5476, %v5668
    %v5670 = vpop.f32.mrb[0].mxu0
    %v5671 = vadd.f32 %v5478, %v5670
    %v5672 = vpop.f32.mrb[0].mxu0
    %v5673 = vadd.f32 %v5480, %v5672
    %5674 = vdwg.mxu0
    %5675 = vmatprep.subr.bf16.mxu0 %v3944
    %5676 = vmatpush1.bf16.msra.mxu0 %v3943
    %5677 = vmatprep.subr.bf16.mxu0 %v3948
    %5678 = vmatpush1.bf16.msra.mxu0 %v3947
    %5679 = vmatprep.subr.bf16.mxu0 %v3952
    %5680 = vmatpush1.bf16.msra.mxu0 %v3951
    %5681 = vmatprep.subr.bf16.mxu0 %v3956
    %5682 = vmatpush1.bf16.msra.mxu0 %v3955
    %5683 = vmatprep.subr.bf16.mxu0 %v3960
    %5684 = vmatpush1.bf16.msra.mxu0 %v3959
    %5685 = vmatprep.subr.bf16.mxu0 %v3964
    %5686 = vmatpush1.bf16.msra.mxu0 %v3963
    %5687 = vmatprep.subr.bf16.mxu0 %v3968
    %5688 = vmatpush1.bf16.msra.mxu0 %v3967
    %5689 = vmatprep.subr.bf16.mxu0 %v3972
    %5690 = vmatpush1.bf16.msra.mxu0 %v3971
    %5691 = vmatprep.subr.bf16.mxu0 0
    %5692 = vmatpush1.bf16.msra.mxu0 0
    %5693 = vmatprep.subr.bf16.mxu0 0
    %5694 = vmatpush1.bf16.msra.mxu0 0
    %5695 = vmatprep.subr.bf16.mxu0 0
    %5696 = vmatpush1.bf16.msra.mxu0 0
    %5697 = vmatprep.subr.bf16.mxu0 0
    %5698 = vmatpush1.bf16.msra.mxu0 0
    %5699 = vmatprep.subr.bf16.mxu0 0
    %5700 = vmatpush1.bf16.msra.mxu0 0
    %5701 = vmatprep.subr.bf16.mxu0 0
    %5702 = vmatpush1.bf16.msra.mxu0 0
    %5703 = vmatprep.subr.bf16.mxu0 0
    %5704 = vmatpush1.bf16.msra.mxu0 0
    %5705 = vmatprep.subr.bf16.mxu0 0
    %5706 = vmatpush1.bf16.msra.mxu0 0
    %5707 = vmatprep.mubr.bf16.mxu0 0
    %5708 = vmatmul.mubr.bf16.gmra.mrb[0].mxu0 %v4623
    %v5709 = vpop.f32.mrb[0].mxu0
    %v5710 = vadd.f32 %v5517, %v5709
    %v5711 = vpop.f32.mrb[0].mxu0
    %v5712 = vadd.f32 %v5519, %v5711
    %v5713 = vpop.f32.mrb[0].mxu0
    %v5714 = vadd.f32 %v5521, %v5713
    %v5715 = vpop.f32.mrb[0].mxu0
    %v5716 = vadd.f32 %v5523, %v5715
    %5717 = vmatprep.mubr.bf16.mxu0 0
    %5718 = vmatmul.mubr.bf16.gmra.mrb[0].mxu0 %v4632
    %v5719 = vpop.f32.mrb[0].mxu0
    %v5720 = vadd.f32 %v5527, %v5719
    %v5721 = vpop.f32.mrb[0].mxu0
    %v5722 = vadd.f32 %v5529, %v5721
    %v5723 = vpop.f32.mrb[0].mxu0
    %v5724 = vadd.f32 %v5531, %v5723
    %v5725 = vpop.f32.mrb[0].mxu0
    %v5726 = vadd.f32 %v5533, %v5725
    %5727 = vmatprep.mubr.bf16.mxu0 0
    %5728 = vmatmul.mubr.bf16.gmra.mrb[0].mxu0 %v4641
    %v5729 = vpop.f32.mrb[0].mxu0
    %v5730 = vadd.f32 %v5537, %v5729
    %v5731 = vpop.f32.mrb[0].mxu0
    %v5732 = vadd.f32 %v5539, %v5731
    %v5733 = vpop.f32.mrb[0].mxu0
    %v5734 = vadd.f32 %v5541, %v5733
    %v5735 = vpop.f32.mrb[0].mxu0
    %v5736 = vadd.f32 %v5543, %v5735
    %5737 = vmatprep.mubr.bf16.mxu0 0
    %5738 = vmatmul.mubr.bf16.gmra.mrb[0].mxu0 %v4650
    %v5739 = vpop.f32.mrb[0].mxu0
    %v5740 = vadd.f32 %v5547, %v5739
    %v5741 = vpop.f32.mrb[0].mxu0
    %v5742 = vadd.f32 %v5549, %v5741
    %v5743 = vpop.f32.mrb[0].mxu0
    %v5744 = vadd.f32 %v5551, %v5743
    %v5745 = vpop.f32.mrb[0].mxu0
    %v5746 = vadd.f32 %v5553, %v5745
    %5747 = vmatprep.mubr.bf16.mxu0 0
    %5748 = vmatmul.mubr.bf16.gmra.mrb[0].mxu0 %v4659
    %v5749 = vpop.f32.mrb[0].mxu0
    %v5750 = vadd.f32 %v5557, %v5749
    %v5751 = vpop.f32.mrb[0].mxu0
    %v5752 = vadd.f32 %v5559, %v5751
    %v5753 = vpop.f32.mrb[0].mxu0
    %v5754 = vadd.f32 %v5561, %v5753
    %v5755 = vpop.f32.mrb[0].mxu0
    %v5756 = vadd.f32 %v5563, %v5755
    %5757 = vmatprep.mubr.bf16.mxu0 0
    %5758 = vmatmul.mubr.bf16.gmra.mrb[0].mxu0 %v4668
    %v5759 = vpop.f32.mrb[0].mxu0
    %v5760 = vadd.f32 %v5567, %v5759
    %v5761 = vpop.f32.mrb[0].mxu0
    %v5762 = vadd.f32 %v5569, %v5761
    %v5763 = vpop.f32.mrb[0].mxu0
    %v5764 = vadd.f32 %v5571, %v5763
    %v5765 = vpop.f32.mrb[0].mxu0
    %v5766 = vadd.f32 %v5573, %v5765
    %5767 = vmatprep.mubr.bf16.mxu0 0
    %5768 = vmatmul.mubr.bf16.gmra.mrb[0].mxu0 %v4677
    %v5769 = vpop.f32.mrb[0].mxu0
    %v5770 = vadd.f32 %v5577, %v5769
    %v5771 = vpop.f32.mrb[0].mxu0
    %v5772 = vadd.f32 %v5579, %v5771
    %v5773 = vpop.f32.mrb[0].mxu0
    %v5774 = vadd.f32 %v5581, %v5773
    %v5775 = vpop.f32.mrb[0].mxu0
    %v5776 = vadd.f32 %v5583, %v5775
    %5777 = vmatprep.mubr.bf16.mxu0 0
    %5778 = vmatmul.mubr.bf16.gmra.mrb[0].mxu0 %v4686
    %v5779 = vpop.f32.mrb[0].mxu0
    %v5780 = vadd.f32 %v5587, %v5779
    %v5781 = vpop.f32.mrb[0].mxu0
    %v5782 = vadd.f32 %v5589, %v5781
    %v5783 = vpop.f32.mrb[0].mxu0
    %v5784 = vadd.f32 %v5591, %v5783
    %v5785 = vpop.f32.mrb[0].mxu0
    %v5786 = vadd.f32 %v5593, %v5785
    %5787 = vmatprep.mubr.bf16.mxu0 0
    %5788 = vmatmul.mubr.bf16.gmra.mrb[0].mxu0 %v4695
    %v5789 = vpop.f32.mrb[0].mxu0
    %v5790 = vadd.f32 %v5597, %v5789
    %v5791 = vpop.f32.mrb[0].mxu0
    %v5792 = vadd.f32 %v5599, %v5791
    %v5793 = vpop.f32.mrb[0].mxu0
    %v5794 = vadd.f32 %v5601, %v5793
    %v5795 = vpop.f32.mrb[0].mxu0
    %v5796 = vadd.f32 %v5603, %v5795
    %5797 = vmatprep.mubr.bf16.mxu0 0
    %5798 = vmatmul.mubr.bf16.gmra.mrb[0].mxu0 %v4704
    %v5799 = vpop.f32.mrb[0].mxu0
    %v5800 = vadd.f32 %v5607, %v5799
    %v5801 = vpop.f32.mrb[0].mxu0
    %v5802 = vadd.f32 %v5609, %v5801
    %v5803 = vpop.f32.mrb[0].mxu0
    %v5804 = vadd.f32 %v5611, %v5803
    %v5805 = vpop.f32.mrb[0].mxu0
    %v5806 = vadd.f32 %v5613, %v5805
    %5807 = vmatprep.mubr.bf16.mxu0 0
    %5808 = vmatmul.mubr.bf16.gmra.mrb[0].mxu0 %v4713
    %v5809 = vpop.f32.mrb[0].mxu0
    %v5810 = vadd.f32 %v5617, %v5809
    %v5811 = vpop.f32.mrb[0].mxu0
    %v5812 = vadd.f32 %v5619, %v5811
    %v5813 = vpop.f32.mrb[0].mxu0
    %v5814 = vadd.f32 %v5621, %v5813
    %v5815 = vpop.f32.mrb[0].mxu0
    %v5816 = vadd.f32 %v5623, %v5815
    %5817 = vmatprep.mubr.bf16.mxu0 0
    %5818 = vmatmul.mubr.bf16.gmra.mrb[0].mxu0 %v4722
    %v5819 = vpop.f32.mrb[0].mxu0
    %v5820 = vadd.f32 %v5627, %v5819
    %v5821 = vpop.f32.mrb[0].mxu0
    %v5822 = vadd.f32 %v5629, %v5821
    %v5823 = vpop.f32.mrb[0].mxu0
    %v5824 = vadd.f32 %v5631, %v5823
    %v5825 = vpop.f32.mrb[0].mxu0
    %v5826 = vadd.f32 %v5633, %v5825
    %5827 = vmatprep.mubr.bf16.mxu0 0
    %5828 = vmatmul.mubr.bf16.gmra.mrb[0].mxu0 %v4731
    %v5829 = vpop.f32.mrb[0].mxu0
    %v5830 = vadd.f32 %v5637, %v5829
    %v5831 = vpop.f32.mrb[0].mxu0
    %v5832 = vadd.f32 %v5639, %v5831
    %v5833 = vpop.f32.mrb[0].mxu0
    %v5834 = vadd.f32 %v5641, %v5833
    %v5835 = vpop.f32.mrb[0].mxu0
    %v5836 = vadd.f32 %v5643, %v5835
    %5837 = vmatprep.mubr.bf16.mxu0 0
    %5838 = vmatmul.mubr.bf16.gmra.mrb[0].mxu0 %v4740
    %v5839 = vpop.f32.mrb[0].mxu0
    %v5840 = vadd.f32 %v5647, %v5839
    %v5841 = vpop.f32.mrb[0].mxu0
    %v5842 = vadd.f32 %v5649, %v5841
    %v5843 = vpop.f32.mrb[0].mxu0
    %v5844 = vadd.f32 %v5651, %v5843
    %v5845 = vpop.f32.mrb[0].mxu0
    %v5846 = vadd.f32 %v5653, %v5845
    %5847 = vmatprep.mubr.bf16.mxu0 0
    %5848 = vmatmul.mubr.bf16.gmra.mrb[0].mxu0 %v4749
    %v5849 = vpop.f32.mrb[0].mxu0
    %v5850 = vadd.f32 %v5657, %v5849
    %v5851 = vpop.f32.mrb[0].mxu0
    %v5852 = vadd.f32 %v5659, %v5851
    %v5853 = vpop.f32.mrb[0].mxu0
    %v5854 = vadd.f32 %v5661, %v5853
    %v5855 = vpop.f32.mrb[0].mxu0
    %v5856 = vadd.f32 %v5663, %v5855
    %5857 = vmatprep.mubr.bf16.mxu0 0
    %5858 = vmatmul.mubr.bf16.gmra.mrb[0].mxu0 %v4758
    %v5859 = vpop.f32.mrb[0].mxu0
    %v5860 = vadd.f32 %v5667, %v5859
    %v5861 = vpop.f32.mrb[0].mxu0
    %v5862 = vadd.f32 %v5669, %v5861
    %v5863 = vpop.f32.mrb[0].mxu0
    %v5864 = vadd.f32 %v5671, %v5863
    %v5865 = vpop.f32.mrb[0].mxu0
    %v5866 = vadd.f32 %v5673, %v5865
    %5867 = vdwg.mxu0
    %5868 = vmatprep.subr.bf16.mxu0 %v3690
    %5869 = vmatpush1.bf16.msra.mxu0 %v3689
    %5870 = vmatprep.subr.bf16.mxu0 %v3694
    %5871 = vmatpush1.bf16.msra.mxu0 %v3693
    %5872 = vmatprep.subr.bf16.mxu0 %v3698
    %5873 = vmatpush1.bf16.msra.mxu0 %v3697
    %5874 = vmatprep.subr.bf16.mxu0 %v3702
    %5875 = vmatpush1.bf16.msra.mxu0 %v3701
    %5876 = vmatprep.subr.bf16.mxu0 %v3706
    %5877 = vmatpush1.bf16.msra.mxu0 %v3705
    %5878 = vmatprep.subr.bf16.mxu0 %v3710
    %5879 = vmatpush1.bf16.msra.mxu0 %v3709
    %5880 = vmatprep.subr.bf16.mxu0 %v3714
    %5881 = vmatpush1.bf16.msra.mxu0 %v3713
    %5882 = vmatprep.subr.bf16.mxu0 %v3718
    %5883 = vmatpush1.bf16.msra.mxu0 %v3717
    %5884 = vmatprep.subr.bf16.mxu0 %v3722
    %5885 = vmatpush1.bf16.msra.mxu0 %v3721
    %5886 = vmatprep.subr.bf16.mxu0 %v3726
    %5887 = vmatpush1.bf16.msra.mxu0 %v3725
    %5888 = vmatprep.subr.bf16.mxu0 %v3730
    %5889 = vmatpush1.bf16.msra.mxu0 %v3729
    %5890 = vmatprep.subr.bf16.mxu0 %v3734
    %5891 = vmatpush1.bf16.msra.mxu0 %v3733
    %5892 = vmatprep.subr.bf16.mxu0 %v3738
    %5893 = vmatpush1.bf16.msra.mxu0 %v3737
    %5894 = vmatprep.subr.bf16.mxu0 %v3742
    %5895 = vmatpush1.bf16.msra.mxu0 %v3741
    %5896 = vmatprep.subr.bf16.mxu0 %v3746
    %5897 = vmatpush1.bf16.msra.mxu0 %v3745
    %5898 = vmatprep.subr.bf16.mxu0 %v3750
    %5899 = vmatpush1.bf16.msra.mxu0 %v3749
    %5900 = vmatprep.mubr.bf16.mxu0 %v4616
    %5901 = vmatmul.mubr.bf16.gmra.mrb[0].mxu0 %v4615
    %v5902 = vpop.f32.mrb[0].mxu0
    %v5903 = vadd.f32 %v4010, %v5902
    %v5904 = vpop.f32.mrb[0].mxu0
    %v5905 = vadd.f32 %v4010, %v5904
    %v5906 = vpop.f32.mrb[0].mxu0
    %v5907 = vadd.f32 %v4015, %v5906
    %v5908 = vpop.f32.mrb[0].mxu0
    %v5909 = vadd.f32 %v4015, %v5908
    %5910 = vmatprep.mubr.bf16.mxu0 %v4625
    %5911 = vmatmul.mubr.bf16.gmra.mrb[0].mxu0 %v4624
    %v5912 = vpop.f32.mrb[0].mxu0
    %v5913 = vadd.f32 %v4020, %v5912
    %v5914 = vpop.f32.mrb[0].mxu0
    %v5915 = vadd.f32 %v4020, %v5914
    %v5916 = vpop.f32.mrb[0].mxu0
    %v5917 = vadd.f32 %v4025, %v5916
    %v5918 = vpop.f32.mrb[0].mxu0
    %v5919 = vadd.f32 %v4025, %v5918
    %5920 = vmatprep.mubr.bf16.mxu0 %v4634
    %5921 = vmatmul.mubr.bf16.gmra.mrb[0].mxu0 %v4633
    %v5922 = vpop.f32.mrb[0].mxu0
    %v5923 = vadd.f32 %v4030, %v5922
    %v5924 = vpop.f32.mrb[0].mxu0
    %v5925 = vadd.f32 %v4030, %v5924
    %v5926 = vpop.f32.mrb[0].mxu0
    %v5927 = vadd.f32 %v4035, %v5926
    %v5928 = vpop.f32.mrb[0].mxu0
    %v5929 = vadd.f32 %v4035, %v5928
    %5930 = vmatprep.mubr.bf16.mxu0 %v4643
    %5931 = vmatmul.mubr.bf16.gmra.mrb[0].mxu0 %v4642
    %v5932 = vpop.f32.mrb[0].mxu0
    %v5933 = vadd.f32 %v4040, %v5932
    %v5934 = vpop.f32.mrb[0].mxu0
    %v5935 = vadd.f32 %v4040, %v5934
    %v5936 = vpop.f32.mrb[0].mxu0
    %v5937 = vadd.f32 %v4045, %v5936
    %v5938 = vpop.f32.mrb[0].mxu0
    %v5939 = vadd.f32 %v4045, %v5938
    %5940 = vmatprep.mubr.bf16.mxu0 %v4652
    %5941 = vmatmul.mubr.bf16.gmra.mrb[0].mxu0 %v4651
    %v5942 = vpop.f32.mrb[0].mxu0
    %v5943 = vadd.f32 %v4050, %v5942
    %v5944 = vpop.f32.mrb[0].mxu0
    %v5945 = vadd.f32 %v4050, %v5944
    %v5946 = vpop.f32.mrb[0].mxu0
    %v5947 = vadd.f32 %v4055, %v5946
    %v5948 = vpop.f32.mrb[0].mxu0
    %v5949 = vadd.f32 %v4055, %v5948
    %5950 = vmatprep.mubr.bf16.mxu0 %v4661
    %5951 = vmatmul.mubr.bf16.gmra.mrb[0].mxu0 %v4660
    %v5952 = vpop.f32.mrb[0].mxu0
    %v5953 = vadd.f32 %v4060, %v5952
    %v5954 = vpop.f32.mrb[0].mxu0
    %v5955 = vadd.f32 %v4060, %v5954
    %v5956 = vpop.f32.mrb[0].mxu0
    %v5957 = vadd.f32 %v4065, %v5956
    %v5958 = vpop.f32.mrb[0].mxu0
    %v5959 = vadd.f32 %v4065, %v5958
    %5960 = vmatprep.mubr.bf16.mxu0 %v4670
    %5961 = vmatmul.mubr.bf16.gmra.mrb[0].mxu0 %v4669
    %v5962 = vpop.f32.mrb[0].mxu0
    %v5963 = vadd.f32 %v4070, %v5962
    %v5964 = vpop.f32.mrb[0].mxu0
    %v5965 = vadd.f32 %v4070, %v5964
    %v5966 = vpop.f32.mrb[0].mxu0
    %v5967 = vadd.f32 %v4075, %v5966
    %v5968 = vpop.f32.mrb[0].mxu0
    %v5969 = vadd.f32 %v4075, %v5968
    %5970 = vmatprep.mubr.bf16.mxu0 %v4679
    %5971 = vmatmul.mubr.bf16.gmra.mrb[0].mxu0 %v4678
    %v5972 = vpop.f32.mrb[0].mxu0
    %v5973 = vadd.f32 %v4080, %v5972
    %v5974 = vpop.f32.mrb[0].mxu0
    %v5975 = vadd.f32 %v4080, %v5974
    %v5976 = vpop.f32.mrb[0].mxu0
    %v5977 = vadd.f32 %v4085, %v5976
    %v5978 = vpop.f32.mrb[0].mxu0
    %v5979 = vadd.f32 %v4085, %v5978
    %5980 = vmatprep.mubr.bf16.mxu0 %v4688
    %5981 = vmatmul.mubr.bf16.gmra.mrb[0].mxu0 %v4687
    %v5982 = vpop.f32.mrb[0].mxu0
    %v5983 = vadd.f32 %v4090, %v5982
    %v5984 = vpop.f32.mrb[0].mxu0
    %v5985 = vadd.f32 %v4090, %v5984
    %v5986 = vpop.f32.mrb[0].mxu0
    %v5987 = vadd.f32 %v4095, %v5986
    %v5988 = vpop.f32.mrb[0].mxu0
    %v5989 = vadd.f32 %v4095, %v5988
    %5990 = vmatprep.mubr.bf16.mxu0 %v4697
    %5991 = vmatmul.mubr.bf16.gmra.mrb[0].mxu0 %v4696
    %v5992 = vpop.f32.mrb[0].mxu0
    %v5993 = vadd.f32 %v4100, %v5992
    %v5994 = vpop.f32.mrb[0].mxu0
    %v5995 = vadd.f32 %v4100, %v5994
    %v5996 = vpop.f32.mrb[0].mxu0
    %v5997 = vadd.f32 %v4105, %v5996
    %v5998 = vpop.f32.mrb[0].mxu0
    %v5999 = vadd.f32 %v4105, %v5998
    %6000 = vmatprep.mubr.bf16.mxu0 %v4706
    %6001 = vmatmul.mubr.bf16.gmra.mrb[0].mxu0 %v4705
    %v6002 = vpop.f32.mrb[0].mxu0
    %v6003 = vadd.f32 %v4110, %v6002
    %v6004 = vpop.f32.mrb[0].mxu0
    %v6005 = vadd.f32 %v4110, %v6004
    %v6006 = vpop.f32.mrb[0].mxu0
    %v6007 = vadd.f32 %v4115, %v6006
    %v6008 = vpop.f32.mrb[0].mxu0
    %v6009 = vadd.f32 %v4115, %v6008
    %6010 = vmatprep.mubr.bf16.mxu0 %v4715
    %6011 = vmatmul.mubr.bf16.gmra.mrb[0].mxu0 %v4714
    %v6012 = vpop.f32.mrb[0].mxu0
    %v6013 = vadd.f32 %v4120, %v6012
    %v6014 = vpop.f32.mrb[0].mxu0
    %v6015 = vadd.f32 %v4120, %v6014
    %v6016 = vpop.f32.mrb[0].mxu0
    %v6017 = vadd.f32 %v4125, %v6016
    %v6018 = vpop.f32.mrb[0].mxu0
    %v6019 = vadd.f32 %v4125, %v6018
    %6020 = vmatprep.mubr.bf16.mxu0 %v4724
    %6021 = vmatmul.mubr.bf16.gmra.mrb[0].mxu0 %v4723
    %v6022 = vpop.f32.mrb[0].mxu0
    %v6023 = vadd.f32 %v4130, %v6022
    %v6024 = vpop.f32.mrb[0].mxu0
    %v6025 = vadd.f32 %v4130, %v6024
    %v6026 = vpop.f32.mrb[0].mxu0
    %v6027 = vadd.f32 %v4135, %v6026
    %v6028 = vpop.f32.mrb[0].mxu0
    %v6029 = vadd.f32 %v4135, %v6028
    %6030 = vmatprep.mubr.bf16.mxu0 %v4733
    %6031 = vmatmul.mubr.bf16.gmra.mrb[0].mxu0 %v4732
    %v6032 = vpop.f32.mrb[0].mxu0
    %v6033 = vadd.f32 %v4140, %v6032
    %v6034 = vpop.f32.mrb[0].mxu0
    %v6035 = vadd.f32 %v4140, %v6034
    %v6036 = vpop.f32.mrb[0].mxu0
    %v6037 = vadd.f32 %v4145, %v6036
    %v6038 = vpop.f32.mrb[0].mxu0
    %v6039 = vadd.f32 %v4145, %v6038
    %6040 = vmatprep.mubr.bf16.mxu0 %v4742
    %6041 = vmatmul.mubr.bf16.gmra.mrb[0].mxu0 %v4741
    %v6042 = vpop.f32.mrb[0].mxu0
    %v6043 = vadd.f32 %v4150, %v6042
    %v6044 = vpop.f32.mrb[0].mxu0
    %v6045 = vadd.f32 %v4150, %v6044
    %v6046 = vpop.f32.mrb[0].mxu0
    %v6047 = vadd.f32 %v4155, %v6046
    %v6048 = vpop.f32.mrb[0].mxu0
    %v6049 = vadd.f32 %v4155, %v6048
    %6050 = vmatprep.mubr.bf16.mxu0 %v4751
    %6051 = vmatmul.mubr.bf16.gmra.mrb[0].mxu0 %v4750
    %v6052 = vpop.f32.mrb[0].mxu0
    %v6053 = vadd.f32 %v4160, %v6052
    %v6054 = vpop.f32.mrb[0].mxu0
    %v6055 = vadd.f32 %v4160, %v6054
    %v6056 = vpop.f32.mrb[0].mxu0
    %v6057 = vadd.f32 %v4165, %v6056
    %v6058 = vpop.f32.mrb[0].mxu0
    %v6059 = vadd.f32 %v4165, %v6058
    %6060 = vdwg.mxu0
    %6061 = vmatprep.subr.bf16.mxu0 %v3754
    %6062 = vmatpush1.bf16.msra.mxu0 %v3753
    %6063 = vmatprep.subr.bf16.mxu0 %v3758
    %6064 = vmatpush1.bf16.msra.mxu0 %v3757
    %6065 = vmatprep.subr.bf16.mxu0 %v3762
    %6066 = vmatpush1.bf16.msra.mxu0 %v3761
    %6067 = vmatprep.subr.bf16.mxu0 %v3766
    %6068 = vmatpush1.bf16.msra.mxu0 %v3765
    %6069 = vmatprep.subr.bf16.mxu0 %v3770
    %6070 = vmatpush1.bf16.msra.mxu0 %v3769
    %6071 = vmatprep.subr.bf16.mxu0 %v3774
    %6072 = vmatpush1.bf16.msra.mxu0 %v3773
    %6073 = vmatprep.subr.bf16.mxu0 %v3778
    %6074 = vmatpush1.bf16.msra.mxu0 %v3777
    %6075 = vmatprep.subr.bf16.mxu0 %v3782
    %6076 = vmatpush1.bf16.msra.mxu0 %v3781
    %6077 = vmatprep.subr.bf16.mxu0 %v3786
    %6078 = vmatpush1.bf16.msra.mxu0 %v3785
    %6079 = vmatprep.subr.bf16.mxu0 %v3790
    %6080 = vmatpush1.bf16.msra.mxu0 %v3789
    %6081 = vmatprep.subr.bf16.mxu0 %v3794
    %6082 = vmatpush1.bf16.msra.mxu0 %v3793
    %6083 = vmatprep.subr.bf16.mxu0 %v3798
    %6084 = vmatpush1.bf16.msra.mxu0 %v3797
    %6085 = vmatprep.subr.bf16.mxu0 %v3802
    %6086 = vmatpush1.bf16.msra.mxu0 %v3801
    %6087 = vmatprep.subr.bf16.mxu0 %v3806
    %6088 = vmatpush1.bf16.msra.mxu0 %v3805
    %6089 = vmatprep.subr.bf16.mxu0 %v3810
    %6090 = vmatpush1.bf16.msra.mxu0 %v3809
    %6091 = vmatprep.subr.bf16.mxu0 %v3814
    %6092 = vmatpush1.bf16.msra.mxu0 %v3813
    %6093 = vmatprep.mubr.bf16.mxu0 %v4618
    %6094 = vmatmul.mubr.bf16.gmra.mrb[0].mxu0 %v4617
    %v6095 = vpop.f32.mrb[0].mxu0
    %v6096 = vadd.f32 %v5903, %v6095
    %v6097 = vpop.f32.mrb[0].mxu0
    %v6098 = vadd.f32 %v5905, %v6097
    %v6099 = vpop.f32.mrb[0].mxu0
    %v6100 = vadd.f32 %v5907, %v6099
    %v6101 = vpop.f32.mrb[0].mxu0
    %v6102 = vadd.f32 %v5909, %v6101
    %6103 = vmatprep.mubr.bf16.mxu0 %v4627
    %6104 = vmatmul.mubr.bf16.gmra.mrb[0].mxu0 %v4626
    %v6105 = vpop.f32.mrb[0].mxu0
    %v6106 = vadd.f32 %v5913, %v6105
    %v6107 = vpop.f32.mrb[0].mxu0
    %v6108 = vadd.f32 %v5915, %v6107
    %v6109 = vpop.f32.mrb[0].mxu0
    %v6110 = vadd.f32 %v5917, %v6109
    %v6111 = vpop.f32.mrb[0].mxu0
    %v6112 = vadd.f32 %v5919, %v6111
    %6113 = vmatprep.mubr.bf16.mxu0 %v4636
    %6114 = vmatmul.mubr.bf16.gmra.mrb[0].mxu0 %v4635
    %v6115 = vpop.f32.mrb[0].mxu0
    %v6116 = vadd.f32 %v5923, %v6115
    %v6117 = vpop.f32.mrb[0].mxu0
    %v6118 = vadd.f32 %v5925, %v6117
    %v6119 = vpop.f32.mrb[0].mxu0
    %v6120 = vadd.f32 %v5927, %v6119
    %v6121 = vpop.f32.mrb[0].mxu0
    %v6122 = vadd.f32 %v5929, %v6121
    %6123 = vmatprep.mubr.bf16.mxu0 %v4645
    %6124 = vmatmul.mubr.bf16.gmra.mrb[0].mxu0 %v4644
    %v6125 = vpop.f32.mrb[0].mxu0
    %v6126 = vadd.f32 %v5933, %v6125
    %v6127 = vpop.f32.mrb[0].mxu0
    %v6128 = vadd.f32 %v5935, %v6127
    %v6129 = vpop.f32.mrb[0].mxu0
    %v6130 = vadd.f32 %v5937, %v6129
    %v6131 = vpop.f32.mrb[0].mxu0
    %v6132 = vadd.f32 %v5939, %v6131
    %6133 = vmatprep.mubr.bf16.mxu0 %v4654
    %6134 = vmatmul.mubr.bf16.gmra.mrb[0].mxu0 %v4653
    %v6135 = vpop.f32.mrb[0].mxu0
    %v6136 = vadd.f32 %v5943, %v6135
    %v6137 = vpop.f32.mrb[0].mxu0
    %v6138 = vadd.f32 %v5945, %v6137
    %v6139 = vpop.f32.mrb[0].mxu0
    %v6140 = vadd.f32 %v5947, %v6139
    %v6141 = vpop.f32.mrb[0].mxu0
    %v6142 = vadd.f32 %v5949, %v6141
    %6143 = vmatprep.mubr.bf16.mxu0 %v4663
    %6144 = vmatmul.mubr.bf16.gmra.mrb[0].mxu0 %v4662
    %v6145 = vpop.f32.mrb[0].mxu0
    %v6146 = vadd.f32 %v5953, %v6145
    %v6147 = vpop.f32.mrb[0].mxu0
    %v6148 = vadd.f32 %v5955, %v6147
    %v6149 = vpop.f32.mrb[0].mxu0
    %v6150 = vadd.f32 %v5957, %v6149
    %v6151 = vpop.f32.mrb[0].mxu0
    %v6152 = vadd.f32 %v5959, %v6151
    %6153 = vmatprep.mubr.bf16.mxu0 %v4672
    %6154 = vmatmul.mubr.bf16.gmra.mrb[0].mxu0 %v4671
    %v6155 = vpop.f32.mrb[0].mxu0
    %v6156 = vadd.f32 %v5963, %v6155
    %v6157 = vpop.f32.mrb[0].mxu0
    %v6158 = vadd.f32 %v5965, %v6157
    %v6159 = vpop.f32.mrb[0].mxu0
    %v6160 = vadd.f32 %v5967, %v6159
    %v6161 = vpop.f32.mrb[0].mxu0
    %v6162 = vadd.f32 %v5969, %v6161
    %6163 = vmatprep.mubr.bf16.mxu0 %v4681
    %6164 = vmatmul.mubr.bf16.gmra.mrb[0].mxu0 %v4680
    %v6165 = vpop.f32.mrb[0].mxu0
    %v6166 = vadd.f32 %v5973, %v6165
    %v6167 = vpop.f32.mrb[0].mxu0
    %v6168 = vadd.f32 %v5975, %v6167
    %v6169 = vpop.f32.mrb[0].mxu0
    %v6170 = vadd.f32 %v5977, %v6169
    %v6171 = vpop.f32.mrb[0].mxu0
    %v6172 = vadd.f32 %v5979, %v6171
    %6173 = vmatprep.mubr.bf16.mxu0 %v4690
    %6174 = vmatmul.mubr.bf16.gmra.mrb[0].mxu0 %v4689
    %v6175 = vpop.f32.mrb[0].mxu0
    %v6176 = vadd.f32 %v5983, %v6175
    %v6177 = vpop.f32.mrb[0].mxu0
    %v6178 = vadd.f32 %v5985, %v6177
    %v6179 = vpop.f32.mrb[0].mxu0
    %v6180 = vadd.f32 %v5987, %v6179
    %v6181 = vpop.f32.mrb[0].mxu0
    %v6182 = vadd.f32 %v5989, %v6181
    %6183 = vmatprep.mubr.bf16.mxu0 %v4699
    %6184 = vmatmul.mubr.bf16.gmra.mrb[0].mxu0 %v4698
    %v6185 = vpop.f32.mrb[0].mxu0
    %v6186 = vadd.f32 %v5993, %v6185
    %v6187 = vpop.f32.mrb[0].mxu0
    %v6188 = vadd.f32 %v5995, %v6187
    %v6189 = vpop.f32.mrb[0].mxu0
    %v6190 = vadd.f32 %v5997, %v6189
    %v6191 = vpop.f32.mrb[0].mxu0
    %v6192 = vadd.f32 %v5999, %v6191
    %6193 = vmatprep.mubr.bf16.mxu0 %v4708
    %6194 = vmatmul.mubr.bf16.gmra.mrb[0].mxu0 %v4707
    %v6195 = vpop.f32.mrb[0].mxu0
    %v6196 = vadd.f32 %v6003, %v6195
    %v6197 = vpop.f32.mrb[0].mxu0
    %v6198 = vadd.f32 %v6005, %v6197
    %v6199 = vpop.f32.mrb[0].mxu0
    %v6200 = vadd.f32 %v6007, %v6199
    %v6201 = vpop.f32.mrb[0].mxu0
    %v6202 = vadd.f32 %v6009, %v6201
    %6203 = vmatprep.mubr.bf16.mxu0 %v4717
    %6204 = vmatmul.mubr.bf16.gmra.mrb[0].mxu0 %v4716
    %v6205 = vpop.f32.mrb[0].mxu0
    %v6206 = vadd.f32 %v6013, %v6205
    %v6207 = vpop.f32.mrb[0].mxu0
    %v6208 = vadd.f32 %v6015, %v6207
    %v6209 = vpop.f32.mrb[0].mxu0
    %v6210 = vadd.f32 %v6017, %v6209
    %v6211 = vpop.f32.mrb[0].mxu0
    %v6212 = vadd.f32 %v6019, %v6211
    %6213 = vmatprep.mubr.bf16.mxu0 %v4726
    %6214 = vmatmul.mubr.bf16.gmra.mrb[0].mxu0 %v4725
    %v6215 = vpop.f32.mrb[0].mxu0
    %v6216 = vadd.f32 %v6023, %v6215
    %v6217 = vpop.f32.mrb[0].mxu0
    %v6218 = vadd.f32 %v6025, %v6217
    %v6219 = vpop.f32.mrb[0].mxu0
    %v6220 = vadd.f32 %v6027, %v6219
    %v6221 = vpop.f32.mrb[0].mxu0
    %v6222 = vadd.f32 %v6029, %v6221
    %6223 = vmatprep.mubr.bf16.mxu0 %v4735
    %6224 = vmatmul.mubr.bf16.gmra.mrb[0].mxu0 %v4734
    %v6225 = vpop.f32.mrb[0].mxu0
    %v6226 = vadd.f32 %v6033, %v6225
    %v6227 = vpop.f32.mrb[0].mxu0
    %v6228 = vadd.f32 %v6035, %v6227
    %v6229 = vpop.f32.mrb[0].mxu0
    %v6230 = vadd.f32 %v6037, %v6229
    %v6231 = vpop.f32.mrb[0].mxu0
    %v6232 = vadd.f32 %v6039, %v6231
    %6233 = vmatprep.mubr.bf16.mxu0 %v4744
    %6234 = vmatmul.mubr.bf16.gmra.mrb[0].mxu0 %v4743
    %v6235 = vpop.f32.mrb[0].mxu0
    %v6236 = vadd.f32 %v6043, %v6235
    %v6237 = vpop.f32.mrb[0].mxu0
    %v6238 = vadd.f32 %v6045, %v6237
    %v6239 = vpop.f32.mrb[0].mxu0
    %v6240 = vadd.f32 %v6047, %v6239
    %v6241 = vpop.f32.mrb[0].mxu0
    %v6242 = vadd.f32 %v6049, %v6241
    %6243 = vmatprep.mubr.bf16.mxu0 %v4753
    %6244 = vmatmul.mubr.bf16.gmra.mrb[0].mxu0 %v4752
    %v6245 = vpop.f32.mrb[0].mxu0
    %v6246 = vadd.f32 %v6053, %v6245
    %v6247 = vpop.f32.mrb[0].mxu0
    %v6248 = vadd.f32 %v6055, %v6247
    %v6249 = vpop.f32.mrb[0].mxu0
    %v6250 = vadd.f32 %v6057, %v6249
    %v6251 = vpop.f32.mrb[0].mxu0
    %v6252 = vadd.f32 %v6059, %v6251
    %6253 = vdwg.mxu0
    %6254 = vmatprep.subr.bf16.mxu0 %v3818
    %6255 = vmatpush1.bf16.msra.mxu0 %v3817
    %6256 = vmatprep.subr.bf16.mxu0 %v3822
    %6257 = vmatpush1.bf16.msra.mxu0 %v3821
    %6258 = vmatprep.subr.bf16.mxu0 %v3826
    %6259 = vmatpush1.bf16.msra.mxu0 %v3825
    %6260 = vmatprep.subr.bf16.mxu0 %v3830
    %6261 = vmatpush1.bf16.msra.mxu0 %v3829
    %6262 = vmatprep.subr.bf16.mxu0 %v3834
    %6263 = vmatpush1.bf16.msra.mxu0 %v3833
    %6264 = vmatprep.subr.bf16.mxu0 %v3838
    %6265 = vmatpush1.bf16.msra.mxu0 %v3837
    %6266 = vmatprep.subr.bf16.mxu0 %v3842
    %6267 = vmatpush1.bf16.msra.mxu0 %v3841
    %6268 = vmatprep.subr.bf16.mxu0 %v3846
    %6269 = vmatpush1.bf16.msra.mxu0 %v3845
    %6270 = vmatprep.subr.bf16.mxu0 %v3850
    %6271 = vmatpush1.bf16.msra.mxu0 %v3849
    %6272 = vmatprep.subr.bf16.mxu0 %v3854
    %6273 = vmatpush1.bf16.msra.mxu0 %v3853
    %6274 = vmatprep.subr.bf16.mxu0 %v3858
    %6275 = vmatpush1.bf16.msra.mxu0 %v3857
    %6276 = vmatprep.subr.bf16.mxu0 %v3862
    %6277 = vmatpush1.bf16.msra.mxu0 %v3861
    %6278 = vmatprep.subr.bf16.mxu0 %v3866
    %6279 = vmatpush1.bf16.msra.mxu0 %v3865
    %6280 = vmatprep.subr.bf16.mxu0 %v3870
    %6281 = vmatpush1.bf16.msra.mxu0 %v3869
    %6282 = vmatprep.subr.bf16.mxu0 %v3874
    %6283 = vmatpush1.bf16.msra.mxu0 %v3873
    %6284 = vmatprep.subr.bf16.mxu0 %v3878
    %6285 = vmatpush1.bf16.msra.mxu0 %v3877
    %6286 = vmatprep.mubr.bf16.mxu0 %v4620
    %6287 = vmatmul.mubr.bf16.gmra.mrb[0].mxu0 %v4619
    %v6288 = vpop.f32.mrb[0].mxu0
    %v6289 = vadd.f32 %v6096, %v6288
    %v6290 = vpop.f32.mrb[0].mxu0
    %v6291 = vadd.f32 %v6098, %v6290
    %v6292 = vpop.f32.mrb[0].mxu0
    %v6293 = vadd.f32 %v6100, %v6292
    %v6294 = vpop.f32.mrb[0].mxu0
    %v6295 = vadd.f32 %v6102, %v6294
    %6296 = vmatprep.mubr.bf16.mxu0 %v4629
    %6297 = vmatmul.mubr.bf16.gmra.mrb[0].mxu0 %v4628
    %v6298 = vpop.f32.mrb[0].mxu0
    %v6299 = vadd.f32 %v6106, %v6298
    %v6300 = vpop.f32.mrb[0].mxu0
    %v6301 = vadd.f32 %v6108, %v6300
    %v6302 = vpop.f32.mrb[0].mxu0
    %v6303 = vadd.f32 %v6110, %v6302
    %v6304 = vpop.f32.mrb[0].mxu0
    %v6305 = vadd.f32 %v6112, %v6304
    %6306 = vmatprep.mubr.bf16.mxu0 %v4638
    %6307 = vmatmul.mubr.bf16.gmra.mrb[0].mxu0 %v4637
    %v6308 = vpop.f32.mrb[0].mxu0
    %v6309 = vadd.f32 %v6116, %v6308
    %v6310 = vpop.f32.mrb[0].mxu0
    %v6311 = vadd.f32 %v6118, %v6310
    %v6312 = vpop.f32.mrb[0].mxu0
    %v6313 = vadd.f32 %v6120, %v6312
    %v6314 = vpop.f32.mrb[0].mxu0
    %v6315 = vadd.f32 %v6122, %v6314
    %6316 = vmatprep.mubr.bf16.mxu0 %v4647
    %6317 = vmatmul.mubr.bf16.gmra.mrb[0].mxu0 %v4646
    %v6318 = vpop.f32.mrb[0].mxu0
    %v6319 = vadd.f32 %v6126, %v6318
    %v6320 = vpop.f32.mrb[0].mxu0
    %v6321 = vadd.f32 %v6128, %v6320
    %v6322 = vpop.f32.mrb[0].mxu0
    %v6323 = vadd.f32 %v6130, %v6322
    %v6324 = vpop.f32.mrb[0].mxu0
    %v6325 = vadd.f32 %v6132, %v6324
    %6326 = vmatprep.mubr.bf16.mxu0 %v4656
    %6327 = vmatmul.mubr.bf16.gmra.mrb[0].mxu0 %v4655
    %v6328 = vpop.f32.mrb[0].mxu0
    %v6329 = vadd.f32 %v6136, %v6328
    %v6330 = vpop.f32.mrb[0].mxu0
    %v6331 = vadd.f32 %v6138, %v6330
    %v6332 = vpop.f32.mrb[0].mxu0
    %v6333 = vadd.f32 %v6140, %v6332
    %v6334 = vpop.f32.mrb[0].mxu0
    %v6335 = vadd.f32 %v6142, %v6334
    %6336 = vmatprep.mubr.bf16.mxu0 %v4665
    %6337 = vmatmul.mubr.bf16.gmra.mrb[0].mxu0 %v4664
    %v6338 = vpop.f32.mrb[0].mxu0
    %v6339 = vadd.f32 %v6146, %v6338
    %v6340 = vpop.f32.mrb[0].mxu0
    %v6341 = vadd.f32 %v6148, %v6340
    %v6342 = vpop.f32.mrb[0].mxu0
    %v6343 = vadd.f32 %v6150, %v6342
    %v6344 = vpop.f32.mrb[0].mxu0
    %v6345 = vadd.f32 %v6152, %v6344
    %6346 = vmatprep.mubr.bf16.mxu0 %v4674
    %6347 = vmatmul.mubr.bf16.gmra.mrb[0].mxu0 %v4673
    %v6348 = vpop.f32.mrb[0].mxu0
    %v6349 = vadd.f32 %v6156, %v6348
    %v6350 = vpop.f32.mrb[0].mxu0
    %v6351 = vadd.f32 %v6158, %v6350
    %v6352 = vpop.f32.mrb[0].mxu0
    %v6353 = vadd.f32 %v6160, %v6352
    %v6354 = vpop.f32.mrb[0].mxu0
    %v6355 = vadd.f32 %v6162, %v6354
    %6356 = vmatprep.mubr.bf16.mxu0 %v4683
    %6357 = vmatmul.mubr.bf16.gmra.mrb[0].mxu0 %v4682
    %v6358 = vpop.f32.mrb[0].mxu0
    %v6359 = vadd.f32 %v6166, %v6358
    %v6360 = vpop.f32.mrb[0].mxu0
    %v6361 = vadd.f32 %v6168, %v6360
    %v6362 = vpop.f32.mrb[0].mxu0
    %v6363 = vadd.f32 %v6170, %v6362
    %v6364 = vpop.f32.mrb[0].mxu0
    %v6365 = vadd.f32 %v6172, %v6364
    %6366 = vmatprep.mubr.bf16.mxu0 %v4692
    %6367 = vmatmul.mubr.bf16.gmra.mrb[0].mxu0 %v4691
    %v6368 = vpop.f32.mrb[0].mxu0
    %v6369 = vadd.f32 %v6176, %v6368
    %v6370 = vpop.f32.mrb[0].mxu0
    %v6371 = vadd.f32 %v6178, %v6370
    %v6372 = vpop.f32.mrb[0].mxu0
    %v6373 = vadd.f32 %v6180, %v6372
    %v6374 = vpop.f32.mrb[0].mxu0
    %v6375 = vadd.f32 %v6182, %v6374
    %6376 = vmatprep.mubr.bf16.mxu0 %v4701
    %6377 = vmatmul.mubr.bf16.gmra.mrb[0].mxu0 %v4700
    %v6378 = vpop.f32.mrb[0].mxu0
    %v6379 = vadd.f32 %v6186, %v6378
    %v6380 = vpop.f32.mrb[0].mxu0
    %v6381 = vadd.f32 %v6188, %v6380
    %v6382 = vpop.f32.mrb[0].mxu0
    %v6383 = vadd.f32 %v6190, %v6382
    %v6384 = vpop.f32.mrb[0].mxu0
    %v6385 = vadd.f32 %v6192, %v6384
    %6386 = vmatprep.mubr.bf16.mxu0 %v4710
    %6387 = vmatmul.mubr.bf16.gmra.mrb[0].mxu0 %v4709
    %v6388 = vpop.f32.mrb[0].mxu0
    %v6389 = vadd.f32 %v6196, %v6388
    %v6390 = vpop.f32.mrb[0].mxu0
    %v6391 = vadd.f32 %v6198, %v6390
    %v6392 = vpop.f32.mrb[0].mxu0
    %v6393 = vadd.f32 %v6200, %v6392
    %v6394 = vpop.f32.mrb[0].mxu0
    %v6395 = vadd.f32 %v6202, %v6394
    %6396 = vmatprep.mubr.bf16.mxu0 %v4719
    %6397 = vmatmul.mubr.bf16.gmra.mrb[0].mxu0 %v4718
    %v6398 = vpop.f32.mrb[0].mxu0
    %v6399 = vadd.f32 %v6206, %v6398
    %v6400 = vpop.f32.mrb[0].mxu0
    %v6401 = vadd.f32 %v6208, %v6400
    %v6402 = vpop.f32.mrb[0].mxu0
    %v6403 = vadd.f32 %v6210, %v6402
    %v6404 = vpop.f32.mrb[0].mxu0
    %v6405 = vadd.f32 %v6212, %v6404
    %6406 = vmatprep.mubr.bf16.mxu0 %v4728
    %6407 = vmatmul.mubr.bf16.gmra.mrb[0].mxu0 %v4727
    %v6408 = vpop.f32.mrb[0].mxu0
    %v6409 = vadd.f32 %v6216, %v6408
    %v6410 = vpop.f32.mrb[0].mxu0
    %v6411 = vadd.f32 %v6218, %v6410
    %v6412 = vpop.f32.mrb[0].mxu0
    %v6413 = vadd.f32 %v6220, %v6412
    %v6414 = vpop.f32.mrb[0].mxu0
    %v6415 = vadd.f32 %v6222, %v6414
    %6416 = vmatprep.mubr.bf16.mxu0 %v4737
    %6417 = vmatmul.mubr.bf16.gmra.mrb[0].mxu0 %v4736
    %v6418 = vpop.f32.mrb[0].mxu0
    %v6419 = vadd.f32 %v6226, %v6418
    %v6420 = vpop.f32.mrb[0].mxu0
    %v6421 = vadd.f32 %v6228, %v6420
    %v6422 = vpop.f32.mrb[0].mxu0
    %v6423 = vadd.f32 %v6230, %v6422
    %v6424 = vpop.f32.mrb[0].mxu0
    %v6425 = vadd.f32 %v6232, %v6424
    %6426 = vmatprep.mubr.bf16.mxu0 %v4746
    %6427 = vmatmul.mubr.bf16.gmra.mrb[0].mxu0 %v4745
    %v6428 = vpop.f32.mrb[0].mxu0
    %v6429 = vadd.f32 %v6236, %v6428
    %v6430 = vpop.f32.mrb[0].mxu0
    %v6431 = vadd.f32 %v6238, %v6430
    %v6432 = vpop.f32.mrb[0].mxu0
    %v6433 = vadd.f32 %v6240, %v6432
    %v6434 = vpop.f32.mrb[0].mxu0
    %v6435 = vadd.f32 %v6242, %v6434
    %6436 = vmatprep.mubr.bf16.mxu0 %v4755
    %6437 = vmatmul.mubr.bf16.gmra.mrb[0].mxu0 %v4754
    %v6438 = vpop.f32.mrb[0].mxu0
    %v6439 = vadd.f32 %v6246, %v6438
    %v6440 = vpop.f32.mrb[0].mxu0
    %v6441 = vadd.f32 %v6248, %v6440
    %v6442 = vpop.f32.mrb[0].mxu0
    %v6443 = vadd.f32 %v6250, %v6442
    %v6444 = vpop.f32.mrb[0].mxu0
    %v6445 = vadd.f32 %v6252, %v6444
    %6446 = vdwg.mxu0
    %6447 = vmatprep.subr.bf16.mxu0 %v3882
    %6448 = vmatpush1.bf16.msra.mxu0 %v3881
    %6449 = vmatprep.subr.bf16.mxu0 %v3886
    %6450 = vmatpush1.bf16.msra.mxu0 %v3885
    %6451 = vmatprep.subr.bf16.mxu0 %v3890
    %6452 = vmatpush1.bf16.msra.mxu0 %v3889
    %6453 = vmatprep.subr.bf16.mxu0 %v3894
    %6454 = vmatpush1.bf16.msra.mxu0 %v3893
    %6455 = vmatprep.subr.bf16.mxu0 %v3898
    %6456 = vmatpush1.bf16.msra.mxu0 %v3897
    %6457 = vmatprep.subr.bf16.mxu0 %v3902
    %6458 = vmatpush1.bf16.msra.mxu0 %v3901
    %6459 = vmatprep.subr.bf16.mxu0 %v3906
    %6460 = vmatpush1.bf16.msra.mxu0 %v3905
    %6461 = vmatprep.subr.bf16.mxu0 %v3910
    %6462 = vmatpush1.bf16.msra.mxu0 %v3909
    %6463 = vmatprep.subr.bf16.mxu0 %v3914
    %6464 = vmatpush1.bf16.msra.mxu0 %v3913
    %6465 = vmatprep.subr.bf16.mxu0 %v3918
    %6466 = vmatpush1.bf16.msra.mxu0 %v3917
    %6467 = vmatprep.subr.bf16.mxu0 %v3922
    %6468 = vmatpush1.bf16.msra.mxu0 %v3921
    %6469 = vmatprep.subr.bf16.mxu0 %v3926
    %6470 = vmatpush1.bf16.msra.mxu0 %v3925
    %6471 = vmatprep.subr.bf16.mxu0 %v3930
    %6472 = vmatpush1.bf16.msra.mxu0 %v3929
    %6473 = vmatprep.subr.bf16.mxu0 %v3934
    %6474 = vmatpush1.bf16.msra.mxu0 %v3933
    %6475 = vmatprep.subr.bf16.mxu0 %v3938
    %6476 = vmatpush1.bf16.msra.mxu0 %v3937
    %6477 = vmatprep.subr.bf16.mxu0 %v3942
    %6478 = vmatpush1.bf16.msra.mxu0 %v3941
    %6479 = vmatprep.mubr.bf16.mxu0 %v4622
    %6480 = vmatmul.mubr.bf16.gmra.mrb[0].mxu0 %v4621
    %v6481 = vpop.f32.mrb[0].mxu0
    %v6482 = vadd.f32 %v6289, %v6481
    %v6483 = vpop.f32.mrb[0].mxu0
    %v6484 = vadd.f32 %v6291, %v6483
    %v6485 = vpop.f32.mrb[0].mxu0
    %v6486 = vadd.f32 %v6293, %v6485
    %v6487 = vpop.f32.mrb[0].mxu0
    %v6488 = vadd.f32 %v6295, %v6487
    %6489 = vmatprep.mubr.bf16.mxu0 %v4631
    %6490 = vmatmul.mubr.bf16.gmra.mrb[0].mxu0 %v4630
    %v6491 = vpop.f32.mrb[0].mxu0
    %v6492 = vadd.f32 %v6299, %v6491
    %v6493 = vpop.f32.mrb[0].mxu0
    %v6494 = vadd.f32 %v6301, %v6493
    %v6495 = vpop.f32.mrb[0].mxu0
    %v6496 = vadd.f32 %v6303, %v6495
    %v6497 = vpop.f32.mrb[0].mxu0
    %v6498 = vadd.f32 %v6305, %v6497
    %6499 = vmatprep.mubr.bf16.mxu0 %v4640
    %6500 = vmatmul.mubr.bf16.gmra.mrb[0].mxu0 %v4639
    %v6501 = vpop.f32.mrb[0].mxu0
    %v6502 = vadd.f32 %v6309, %v6501
    %v6503 = vpop.f32.mrb[0].mxu0
    %v6504 = vadd.f32 %v6311, %v6503
    %v6505 = vpop.f32.mrb[0].mxu0
    %v6506 = vadd.f32 %v6313, %v6505
    %v6507 = vpop.f32.mrb[0].mxu0
    %v6508 = vadd.f32 %v6315, %v6507
    %6509 = vmatprep.mubr.bf16.mxu0 %v4649
    %6510 = vmatmul.mubr.bf16.gmra.mrb[0].mxu0 %v4648
    %v6511 = vpop.f32.mrb[0].mxu0
    %v6512 = vadd.f32 %v6319, %v6511
    %v6513 = vpop.f32.mrb[0].mxu0
    %v6514 = vadd.f32 %v6321, %v6513
    %v6515 = vpop.f32.mrb[0].mxu0
    %v6516 = vadd.f32 %v6323, %v6515
    %v6517 = vpop.f32.mrb[0].mxu0
    %v6518 = vadd.f32 %v6325, %v6517
    %6519 = vmatprep.mubr.bf16.mxu0 %v4658
    %6520 = vmatmul.mubr.bf16.gmra.mrb[0].mxu0 %v4657
    %v6521 = vpop.f32.mrb[0].mxu0
    %v6522 = vadd.f32 %v6329, %v6521
    %v6523 = vpop.f32.mrb[0].mxu0
    %v6524 = vadd.f32 %v6331, %v6523
    %v6525 = vpop.f32.mrb[0].mxu0
    %v6526 = vadd.f32 %v6333, %v6525
    %v6527 = vpop.f32.mrb[0].mxu0
    %v6528 = vadd.f32 %v6335, %v6527
    %6529 = vmatprep.mubr.bf16.mxu0 %v4667
    %6530 = vmatmul.mubr.bf16.gmra.mrb[0].mxu0 %v4666
    %v6531 = vpop.f32.mrb[0].mxu0
    %v6532 = vadd.f32 %v6339, %v6531
    %v6533 = vpop.f32.mrb[0].mxu0
    %v6534 = vadd.f32 %v6341, %v6533
    %v6535 = vpop.f32.mrb[0].mxu0
    %v6536 = vadd.f32 %v6343, %v6535
    %v6537 = vpop.f32.mrb[0].mxu0
    %v6538 = vadd.f32 %v6345, %v6537
    %6539 = vmatprep.mubr.bf16.mxu0 %v4676
    %6540 = vmatmul.mubr.bf16.gmra.mrb[0].mxu0 %v4675
    %v6541 = vpop.f32.mrb[0].mxu0
    %v6542 = vadd.f32 %v6349, %v6541
    %v6543 = vpop.f32.mrb[0].mxu0
    %v6544 = vadd.f32 %v6351, %v6543
    %v6545 = vpop.f32.mrb[0].mxu0
    %v6546 = vadd.f32 %v6353, %v6545
    %v6547 = vpop.f32.mrb[0].mxu0
    %v6548 = vadd.f32 %v6355, %v6547
    %6549 = vmatprep.mubr.bf16.mxu0 %v4685
    %6550 = vmatmul.mubr.bf16.gmra.mrb[0].mxu0 %v4684
    %v6551 = vpop.f32.mrb[0].mxu0
    %v6552 = vadd.f32 %v6359, %v6551
    %v6553 = vpop.f32.mrb[0].mxu0
    %v6554 = vadd.f32 %v6361, %v6553
    %v6555 = vpop.f32.mrb[0].mxu0
    %v6556 = vadd.f32 %v6363, %v6555
    %v6557 = vpop.f32.mrb[0].mxu0
    %v6558 = vadd.f32 %v6365, %v6557
    %6559 = vmatprep.mubr.bf16.mxu0 %v4694
    %6560 = vmatmul.mubr.bf16.gmra.mrb[0].mxu0 %v4693
    %v6561 = vpop.f32.mrb[0].mxu0
    %v6562 = vadd.f32 %v6369, %v6561
    %v6563 = vpop.f32.mrb[0].mxu0
    %v6564 = vadd.f32 %v6371, %v6563
    %v6565 = vpop.f32.mrb[0].mxu0
    %v6566 = vadd.f32 %v6373, %v6565
    %v6567 = vpop.f32.mrb[0].mxu0
    %v6568 = vadd.f32 %v6375, %v6567
    %6569 = vmatprep.mubr.bf16.mxu0 %v4703
    %6570 = vmatmul.mubr.bf16.gmra.mrb[0].mxu0 %v4702
    %v6571 = vpop.f32.mrb[0].mxu0
    %v6572 = vadd.f32 %v6379, %v6571
    %v6573 = vpop.f32.mrb[0].mxu0
    %v6574 = vadd.f32 %v6381, %v6573
    %v6575 = vpop.f32.mrb[0].mxu0
    %v6576 = vadd.f32 %v6383, %v6575
    %v6577 = vpop.f32.mrb[0].mxu0
    %v6578 = vadd.f32 %v6385, %v6577
    %6579 = vmatprep.mubr.bf16.mxu0 %v4712
    %6580 = vmatmul.mubr.bf16.gmra.mrb[0].mxu0 %v4711
    %v6581 = vpop.f32.mrb[0].mxu0
    %v6582 = vadd.f32 %v6389, %v6581
    %v6583 = vpop.f32.mrb[0].mxu0
    %v6584 = vadd.f32 %v6391, %v6583
    %v6585 = vpop.f32.mrb[0].mxu0
    %v6586 = vadd.f32 %v6393, %v6585
    %v6587 = vpop.f32.mrb[0].mxu0
    %v6588 = vadd.f32 %v6395, %v6587
    %6589 = vmatprep.mubr.bf16.mxu0 %v4721
    %6590 = vmatmul.mubr.bf16.gmra.mrb[0].mxu0 %v4720
    %v6591 = vpop.f32.mrb[0].mxu0
    %v6592 = vadd.f32 %v6399, %v6591
    %v6593 = vpop.f32.mrb[0].mxu0
    %v6594 = vadd.f32 %v6401, %v6593
    %v6595 = vpop.f32.mrb[0].mxu0
    %v6596 = vadd.f32 %v6403, %v6595
    %v6597 = vpop.f32.mrb[0].mxu0
    %v6598 = vadd.f32 %v6405, %v6597
    %6599 = vmatprep.mubr.bf16.mxu0 %v4730
    %6600 = vmatmul.mubr.bf16.gmra.mrb[0].mxu0 %v4729
    %v6601 = vpop.f32.mrb[0].mxu0
    %v6602 = vadd.f32 %v6409, %v6601
    %v6603 = vpop.f32.mrb[0].mxu0
    %v6604 = vadd.f32 %v6411, %v6603
    %v6605 = vpop.f32.mrb[0].mxu0
    %v6606 = vadd.f32 %v6413, %v6605
    %v6607 = vpop.f32.mrb[0].mxu0
    %v6608 = vadd.f32 %v6415, %v6607
    %6609 = vmatprep.mubr.bf16.mxu0 %v4739
    %6610 = vmatmul.mubr.bf16.gmra.mrb[0].mxu0 %v4738
    %v6611 = vpop.f32.mrb[0].mxu0
    %v6612 = vadd.f32 %v6419, %v6611
    %v6613 = vpop.f32.mrb[0].mxu0
    %v6614 = vadd.f32 %v6421, %v6613
    %v6615 = vpop.f32.mrb[0].mxu0
    %v6616 = vadd.f32 %v6423, %v6615
    %v6617 = vpop.f32.mrb[0].mxu0
    %v6618 = vadd.f32 %v6425, %v6617
    %6619 = vmatprep.mubr.bf16.mxu0 %v4748
    %6620 = vmatmul.mubr.bf16.gmra.mrb[0].mxu0 %v4747
    %v6621 = vpop.f32.mrb[0].mxu0
    %v6622 = vadd.f32 %v6429, %v6621
    %v6623 = vpop.f32.mrb[0].mxu0
    %v6624 = vadd.f32 %v6431, %v6623
    %v6625 = vpop.f32.mrb[0].mxu0
    %v6626 = vadd.f32 %v6433, %v6625
    %v6627 = vpop.f32.mrb[0].mxu0
    %v6628 = vadd.f32 %v6435, %v6627
    %6629 = vmatprep.mubr.bf16.mxu0 %v4757
    %6630 = vmatmul.mubr.bf16.gmra.mrb[0].mxu0 %v4756
    %v6631 = vpop.f32.mrb[0].mxu0
    %v6632 = vadd.f32 %v6439, %v6631
    %v6633 = vpop.f32.mrb[0].mxu0
    %v6634 = vadd.f32 %v6441, %v6633
    %v6635 = vpop.f32.mrb[0].mxu0
    %v6636 = vadd.f32 %v6443, %v6635
    %v6637 = vpop.f32.mrb[0].mxu0
    %v6638 = vadd.f32 %v6445, %v6637
    %6639 = vdwg.mxu0
    %6640 = vmatprep.subr.bf16.mxu0 %v3946
    %6641 = vmatpush1.bf16.msra.mxu0 %v3945
    %6642 = vmatprep.subr.bf16.mxu0 %v3950
    %6643 = vmatpush1.bf16.msra.mxu0 %v3949
    %6644 = vmatprep.subr.bf16.mxu0 %v3954
    %6645 = vmatpush1.bf16.msra.mxu0 %v3953
    %6646 = vmatprep.subr.bf16.mxu0 %v3958
    %6647 = vmatpush1.bf16.msra.mxu0 %v3957
    %6648 = vmatprep.subr.bf16.mxu0 %v3962
    %6649 = vmatpush1.bf16.msra.mxu0 %v3961
    %6650 = vmatprep.subr.bf16.mxu0 %v3966
    %6651 = vmatpush1.bf16.msra.mxu0 %v3965
    %6652 = vmatprep.subr.bf16.mxu0 %v3970
    %6653 = vmatpush1.bf16.msra.mxu0 %v3969
    %6654 = vmatprep.subr.bf16.mxu0 %v3974
    %6655 = vmatpush1.bf16.msra.mxu0 %v3973
    %6656 = vmatprep.subr.bf16.mxu0 0
    %6657 = vmatpush1.bf16.msra.mxu0 0
    %6658 = vmatprep.subr.bf16.mxu0 0
    %6659 = vmatpush1.bf16.msra.mxu0 0
    %6660 = vmatprep.subr.bf16.mxu0 0
    %6661 = vmatpush1.bf16.msra.mxu0 0
    %6662 = vmatprep.subr.bf16.mxu0 0
    %6663 = vmatpush1.bf16.msra.mxu0 0
    %6664 = vmatprep.subr.bf16.mxu0 0
    %6665 = vmatpush1.bf16.msra.mxu0 0
    %6666 = vmatprep.subr.bf16.mxu0 0
    %6667 = vmatpush1.bf16.msra.mxu0 0
    %6668 = vmatprep.subr.bf16.mxu0 0
    %6669 = vmatpush1.bf16.msra.mxu0 0
    %6670 = vmatprep.subr.bf16.mxu0 0
    %6671 = vmatpush1.bf16.msra.mxu0 0
    %6672 = vmatprep.mubr.bf16.mxu0 0
    %6673 = vmatmul.mubr.bf16.gmra.mrb[0].mxu0 %v4623
    %v6674 = vpop.f32.mrb[0].mxu0
    %v6675 = vadd.f32 %v6482, %v6674
    %v6676 = vpop.f32.mrb[0].mxu0
    %v6677 = vadd.f32 %v6484, %v6676
    %v6678 = vpop.f32.mrb[0].mxu0
    %v6679 = vadd.f32 %v6486, %v6678
    %v6680 = vpop.f32.mrb[0].mxu0
    %v6681 = vadd.f32 %v6488, %v6680
    %6682 = vmatprep.mubr.bf16.mxu0 0
    %6683 = vmatmul.mubr.bf16.gmra.mrb[0].mxu0 %v4632
    %v6684 = vpop.f32.mrb[0].mxu0
    %v6685 = vadd.f32 %v6492, %v6684
    %v6686 = vpop.f32.mrb[0].mxu0
    %v6687 = vadd.f32 %v6494, %v6686
    %v6688 = vpop.f32.mrb[0].mxu0
    %v6689 = vadd.f32 %v6496, %v6688
    %v6690 = vpop.f32.mrb[0].mxu0
    %v6691 = vadd.f32 %v6498, %v6690
    %6692 = vmatprep.mubr.bf16.mxu0 0
    %6693 = vmatmul.mubr.bf16.gmra.mrb[0].mxu0 %v4641
    %v6694 = vpop.f32.mrb[0].mxu0
    %v6695 = vadd.f32 %v6502, %v6694
    %v6696 = vpop.f32.mrb[0].mxu0
    %v6697 = vadd.f32 %v6504, %v6696
    %v6698 = vpop.f32.mrb[0].mxu0
    %v6699 = vadd.f32 %v6506, %v6698
    %v6700 = vpop.f32.mrb[0].mxu0
    %v6701 = vadd.f32 %v6508, %v6700
    %6702 = vmatprep.mubr.bf16.mxu0 0
    %6703 = vmatmul.mubr.bf16.gmra.mrb[0].mxu0 %v4650
    %v6704 = vpop.f32.mrb[0].mxu0
    %v6705 = vadd.f32 %v6512, %v6704
    %v6706 = vpop.f32.mrb[0].mxu0
    %v6707 = vadd.f32 %v6514, %v6706
    %v6708 = vpop.f32.mrb[0].mxu0
    %v6709 = vadd.f32 %v6516, %v6708
    %v6710 = vpop.f32.mrb[0].mxu0
    %v6711 = vadd.f32 %v6518, %v6710
    %6712 = vmatprep.mubr.bf16.mxu0 0
    %6713 = vmatmul.mubr.bf16.gmra.mrb[0].mxu0 %v4659
    %v6714 = vpop.f32.mrb[0].mxu0
    %v6715 = vadd.f32 %v6522, %v6714
    %v6716 = vpop.f32.mrb[0].mxu0
    %v6717 = vadd.f32 %v6524, %v6716
    %v6718 = vpop.f32.mrb[0].mxu0
    %v6719 = vadd.f32 %v6526, %v6718
    %v6720 = vpop.f32.mrb[0].mxu0
    %v6721 = vadd.f32 %v6528, %v6720
    %6722 = vmatprep.mubr.bf16.mxu0 0
    %6723 = vmatmul.mubr.bf16.gmra.mrb[0].mxu0 %v4668
    %v6724 = vpop.f32.mrb[0].mxu0
    %v6725 = vadd.f32 %v6532, %v6724
    %v6726 = vpop.f32.mrb[0].mxu0
    %v6727 = vadd.f32 %v6534, %v6726
    %v6728 = vpop.f32.mrb[0].mxu0
    %v6729 = vadd.f32 %v6536, %v6728
    %v6730 = vpop.f32.mrb[0].mxu0
    %v6731 = vadd.f32 %v6538, %v6730
    %6732 = vmatprep.mubr.bf16.mxu0 0
    %6733 = vmatmul.mubr.bf16.gmra.mrb[0].mxu0 %v4677
    %v6734 = vpop.f32.mrb[0].mxu0
    %v6735 = vadd.f32 %v6542, %v6734
    %v6736 = vpop.f32.mrb[0].mxu0
    %v6737 = vadd.f32 %v6544, %v6736
    %v6738 = vpop.f32.mrb[0].mxu0
    %v6739 = vadd.f32 %v6546, %v6738
    %v6740 = vpop.f32.mrb[0].mxu0
    %v6741 = vadd.f32 %v6548, %v6740
    %6742 = vmatprep.mubr.bf16.mxu0 0
    %6743 = vmatmul.mubr.bf16.gmra.mrb[0].mxu0 %v4686
    %v6744 = vpop.f32.mrb[0].mxu0
    %v6745 = vadd.f32 %v6552, %v6744
    %v6746 = vpop.f32.mrb[0].mxu0
    %v6747 = vadd.f32 %v6554, %v6746
    %v6748 = vpop.f32.mrb[0].mxu0
    %v6749 = vadd.f32 %v6556, %v6748
    %v6750 = vpop.f32.mrb[0].mxu0
    %v6751 = vadd.f32 %v6558, %v6750
    %6752 = vmatprep.mubr.bf16.mxu0 0
    %6753 = vmatmul.mubr.bf16.gmra.mrb[0].mxu0 %v4695
    %v6754 = vpop.f32.mrb[0].mxu0
    %v6755 = vadd.f32 %v6562, %v6754
    %v6756 = vpop.f32.mrb[0].mxu0
    %v6757 = vadd.f32 %v6564, %v6756
    %v6758 = vpop.f32.mrb[0].mxu0
    %v6759 = vadd.f32 %v6566, %v6758
    %v6760 = vpop.f32.mrb[0].mxu0
    %v6761 = vadd.f32 %v6568, %v6760
    %6762 = vmatprep.mubr.bf16.mxu0 0
    %6763 = vmatmul.mubr.bf16.gmra.mrb[0].mxu0 %v4704
    %v6764 = vpop.f32.mrb[0].mxu0
    %v6765 = vadd.f32 %v6572, %v6764
    %v6766 = vpop.f32.mrb[0].mxu0
    %v6767 = vadd.f32 %v6574, %v6766
    %v6768 = vpop.f32.mrb[0].mxu0
    %v6769 = vadd.f32 %v6576, %v6768
    %v6770 = vpop.f32.mrb[0].mxu0
    %v6771 = vadd.f32 %v6578, %v6770
    %6772 = vmatprep.mubr.bf16.mxu0 0
    %6773 = vmatmul.mubr.bf16.gmra.mrb[0].mxu0 %v4713
    %v6774 = vpop.f32.mrb[0].mxu0
    %v6775 = vadd.f32 %v6582, %v6774
    %v6776 = vpop.f32.mrb[0].mxu0
    %v6777 = vadd.f32 %v6584, %v6776
    %v6778 = vpop.f32.mrb[0].mxu0
    %v6779 = vadd.f32 %v6586, %v6778
    %v6780 = vpop.f32.mrb[0].mxu0
    %v6781 = vadd.f32 %v6588, %v6780
    %6782 = vmatprep.mubr.bf16.mxu0 0
    %6783 = vmatmul.mubr.bf16.gmra.mrb[0].mxu0 %v4722
    %v6784 = vpop.f32.mrb[0].mxu0
    %v6785 = vadd.f32 %v6592, %v6784
    %v6786 = vpop.f32.mrb[0].mxu0
    %v6787 = vadd.f32 %v6594, %v6786
    %v6788 = vpop.f32.mrb[0].mxu0
    %v6789 = vadd.f32 %v6596, %v6788
    %v6790 = vpop.f32.mrb[0].mxu0
    %v6791 = vadd.f32 %v6598, %v6790
    %6792 = vmatprep.mubr.bf16.mxu0 0
    %6793 = vmatmul.mubr.bf16.gmra.mrb[0].mxu0 %v4731
    %v6794 = vpop.f32.mrb[0].mxu0
    %v6795 = vadd.f32 %v6602, %v6794
    %v6796 = vpop.f32.mrb[0].mxu0
    %v6797 = vadd.f32 %v6604, %v6796
    %v6798 = vpop.f32.mrb[0].mxu0
    %v6799 = vadd.f32 %v6606, %v6798
    %v6800 = vpop.f32.mrb[0].mxu0
    %v6801 = vadd.f32 %v6608, %v6800
    %6802 = vmatprep.mubr.bf16.mxu0 0
    %6803 = vmatmul.mubr.bf16.gmra.mrb[0].mxu0 %v4740
    %v6804 = vpop.f32.mrb[0].mxu0
    %v6805 = vadd.f32 %v6612, %v6804
    %v6806 = vpop.f32.mrb[0].mxu0
    %v6807 = vadd.f32 %v6614, %v6806
    %v6808 = vpop.f32.mrb[0].mxu0
    %v6809 = vadd.f32 %v6616, %v6808
    %v6810 = vpop.f32.mrb[0].mxu0
    %v6811 = vadd.f32 %v6618, %v6810
    %6812 = vmatprep.mubr.bf16.mxu0 0
    %6813 = vmatmul.mubr.bf16.gmra.mrb[0].mxu0 %v4749
    %v6814 = vpop.f32.mrb[0].mxu0
    %v6815 = vadd.f32 %v6622, %v6814
    %v6816 = vpop.f32.mrb[0].mxu0
    %v6817 = vadd.f32 %v6624, %v6816
    %v6818 = vpop.f32.mrb[0].mxu0
    %v6819 = vadd.f32 %v6626, %v6818
    %v6820 = vpop.f32.mrb[0].mxu0
    %v6821 = vadd.f32 %v6628, %v6820
    %6822 = vmatprep.mubr.bf16.mxu0 0
    %6823 = vmatmul.mubr.bf16.gmra.mrb[0].mxu0 %v4758
    %v6824 = vpop.f32.mrb[0].mxu0
    %v6825 = vadd.f32 %v6632, %v6824
    %v6826 = vpop.f32.mrb[0].mxu0
    %v6827 = vadd.f32 %v6634, %v6826
    %v6828 = vpop.f32.mrb[0].mxu0
    %v6829 = vadd.f32 %v6636, %v6828
    %v6830 = vpop.f32.mrb[0].mxu0
    %v6831 = vadd.f32 %v6638, %v6830
    %6832 = vdwg.mxu0
    %vm6833 = vcmp.ge.f32.partialorder %v5710, 0.0
    %vm6834 = vcmp.ge.f32.partialorder %v5712, 0.0
    %vm6835 = vcmp.ge.f32.partialorder %v6675, 0.0
    %vm6836 = vcmp.ge.f32.partialorder %v6677, 0.0
    %vm6837 = vcmp.ge.f32.partialorder %v5714, 0.0
    %vm6838 = vcmp.ge.f32.partialorder %v5716, 0.0
    %vm6839 = vcmp.ge.f32.partialorder %v6679, 0.0
    %vm6840 = vcmp.ge.f32.partialorder %v6681, 0.0
    %vm6841 = vcmp.ge.f32.partialorder %v5720, 0.0
    %vm6842 = vcmp.ge.f32.partialorder %v5722, 0.0
    %vm6843 = vcmp.ge.f32.partialorder %v6685, 0.0
    %vm6844 = vcmp.ge.f32.partialorder %v6687, 0.0
    %vm6845 = vcmp.ge.f32.partialorder %v5724, 0.0
    %vm6846 = vcmp.ge.f32.partialorder %v5726, 0.0
    %vm6847 = vcmp.ge.f32.partialorder %v6689, 0.0
    %vm6848 = vcmp.ge.f32.partialorder %v6691, 0.0
    %vm6849 = vcmp.ge.f32.partialorder %v5730, 0.0
    %vm6850 = vcmp.ge.f32.partialorder %v5732, 0.0
    %vm6851 = vcmp.ge.f32.partialorder %v6695, 0.0
    %vm6852 = vcmp.ge.f32.partialorder %v6697, 0.0
    %vm6853 = vcmp.ge.f32.partialorder %v5734, 0.0
    %vm6854 = vcmp.ge.f32.partialorder %v5736, 0.0
    %vm6855 = vcmp.ge.f32.partialorder %v6699, 0.0
    %vm6856 = vcmp.ge.f32.partialorder %v6701, 0.0
    %vm6857 = vcmp.ge.f32.partialorder %v5740, 0.0
    %vm6858 = vcmp.ge.f32.partialorder %v5742, 0.0
    %vm6859 = vcmp.ge.f32.partialorder %v6705, 0.0
    %vm6860 = vcmp.ge.f32.partialorder %v6707, 0.0
    %vm6861 = vcmp.ge.f32.partialorder %v5744, 0.0
    %vm6862 = vcmp.ge.f32.partialorder %v5746, 0.0
    %vm6863 = vcmp.ge.f32.partialorder %v6709, 0.0
    %vm6864 = vcmp.ge.f32.partialorder %v6711, 0.0
    %vm6865 = vcmp.ge.f32.partialorder %v5750, 0.0
    %vm6866 = vcmp.ge.f32.partialorder %v5752, 0.0
    %vm6867 = vcmp.ge.f32.partialorder %v6715, 0.0
    %vm6868 = vcmp.ge.f32.partialorder %v6717, 0.0
    %vm6869 = vcmp.ge.f32.partialorder %v5754, 0.0
    %vm6870 = vcmp.ge.f32.partialorder %v5756, 0.0
    %vm6871 = vcmp.ge.f32.partialorder %v6719, 0.0
    %vm6872 = vcmp.ge.f32.partialorder %v6721, 0.0
    %vm6873 = vcmp.ge.f32.partialorder %v5760, 0.0
    %vm6874 = vcmp.ge.f32.partialorder %v5762, 0.0
    %vm6875 = vcmp.ge.f32.partialorder %v6725, 0.0
    %vm6876 = vcmp.ge.f32.partialorder %v6727, 0.0
    %vm6877 = vcmp.ge.f32.partialorder %v5764, 0.0
    %vm6878 = vcmp.ge.f32.partialorder %v5766, 0.0
    %vm6879 = vcmp.ge.f32.partialorder %v6729, 0.0
    %vm6880 = vcmp.ge.f32.partialorder %v6731, 0.0
    %vm6881 = vcmp.ge.f32.partialorder %v5770, 0.0
    %vm6882 = vcmp.ge.f32.partialorder %v5772, 0.0
    %vm6883 = vcmp.ge.f32.partialorder %v6735, 0.0
    %vm6884 = vcmp.ge.f32.partialorder %v6737, 0.0
    %vm6885 = vcmp.ge.f32.partialorder %v5774, 0.0
    %vm6886 = vcmp.ge.f32.partialorder %v5776, 0.0
    %vm6887 = vcmp.ge.f32.partialorder %v6739, 0.0
    %vm6888 = vcmp.ge.f32.partialorder %v6741, 0.0
    %vm6889 = vcmp.ge.f32.partialorder %v5780, 0.0
    %vm6890 = vcmp.ge.f32.partialorder %v5782, 0.0
    %vm6891 = vcmp.ge.f32.partialorder %v6745, 0.0
    %vm6892 = vcmp.ge.f32.partialorder %v6747, 0.0
    %vm6893 = vcmp.ge.f32.partialorder %v5784, 0.0
    %vm6894 = vcmp.ge.f32.partialorder %v5786, 0.0
    %vm6895 = vcmp.ge.f32.partialorder %v6749, 0.0
    %vm6896 = vcmp.ge.f32.partialorder %v6751, 0.0
    %vm6897 = vcmp.ge.f32.partialorder %v5790, 0.0
    %vm6898 = vcmp.ge.f32.partialorder %v5792, 0.0
    %vm6899 = vcmp.ge.f32.partialorder %v6755, 0.0
    %vm6900 = vcmp.ge.f32.partialorder %v6757, 0.0
    %vm6901 = vcmp.ge.f32.partialorder %v5794, 0.0
    %vm6902 = vcmp.ge.f32.partialorder %v5796, 0.0
    %vm6903 = vcmp.ge.f32.partialorder %v6759, 0.0
    %vm6904 = vcmp.ge.f32.partialorder %v6761, 0.0
    %vm6905 = vcmp.ge.f32.partialorder %v5800, 0.0
    %vm6906 = vcmp.ge.f32.partialorder %v5802, 0.0
    %vm6907 = vcmp.ge.f32.partialorder %v6765, 0.0
    %vm6908 = vcmp.ge.f32.partialorder %v6767, 0.0
    %vm6909 = vcmp.ge.f32.partialorder %v5804, 0.0
    %vm6910 = vcmp.ge.f32.partialorder %v5806, 0.0
    %vm6911 = vcmp.ge.f32.partialorder %v6769, 0.0
    %vm6912 = vcmp.ge.f32.partialorder %v6771, 0.0
    %vm6913 = vcmp.ge.f32.partialorder %v5810, 0.0
    %vm6914 = vcmp.ge.f32.partialorder %v5812, 0.0
    %vm6915 = vcmp.ge.f32.partialorder %v6775, 0.0
    %vm6916 = vcmp.ge.f32.partialorder %v6777, 0.0
    %vm6917 = vcmp.ge.f32.partialorder %v5814, 0.0
    %vm6918 = vcmp.ge.f32.partialorder %v5816, 0.0
    %vm6919 = vcmp.ge.f32.partialorder %v6779, 0.0
    %vm6920 = vcmp.ge.f32.partialorder %v6781, 0.0
    %vm6921 = vcmp.ge.f32.partialorder %v5820, 0.0
    %vm6922 = vcmp.ge.f32.partialorder %v5822, 0.0
    %vm6923 = vcmp.ge.f32.partialorder %v6785, 0.0
    %vm6924 = vcmp.ge.f32.partialorder %v6787, 0.0
    %vm6925 = vcmp.ge.f32.partialorder %v5824, 0.0
    %vm6926 = vcmp.ge.f32.partialorder %v5826, 0.0
    %vm6927 = vcmp.ge.f32.partialorder %v6789, 0.0
    %vm6928 = vcmp.ge.f32.partialorder %v6791, 0.0
    %vm6929 = vcmp.ge.f32.partialorder %v5830, 0.0
    %vm6930 = vcmp.ge.f32.partialorder %v5832, 0.0
    %vm6931 = vcmp.ge.f32.partialorder %v6795, 0.0
    %vm6932 = vcmp.ge.f32.partialorder %v6797, 0.0
    %vm6933 = vcmp.ge.f32.partialorder %v5834, 0.0
    %vm6934 = vcmp.ge.f32.partialorder %v5836, 0.0
    %vm6935 = vcmp.ge.f32.partialorder %v6799, 0.0
    %vm6936 = vcmp.ge.f32.partialorder %v6801, 0.0
    %vm6937 = vcmp.ge.f32.partialorder %v5840, 0.0
    %vm6938 = vcmp.ge.f32.partialorder %v5842, 0.0
    %vm6939 = vcmp.ge.f32.partialorder %v6805, 0.0
    %vm6940 = vcmp.ge.f32.partialorder %v6807, 0.0
    %vm6941 = vcmp.ge.f32.partialorder %v5844, 0.0
    %vm6942 = vcmp.ge.f32.partialorder %v5846, 0.0
    %vm6943 = vcmp.ge.f32.partialorder %v6809, 0.0
    %vm6944 = vcmp.ge.f32.partialorder %v6811, 0.0
    %vm6945 = vcmp.ge.f32.partialorder %v5850, 0.0
    %vm6946 = vcmp.ge.f32.partialorder %v5852, 0.0
    %vm6947 = vcmp.ge.f32.partialorder %v6815, 0.0
    %vm6948 = vcmp.ge.f32.partialorder %v6817, 0.0
    %vm6949 = vcmp.ge.f32.partialorder %v5854, 0.0
    %vm6950 = vcmp.ge.f32.partialorder %v5856, 0.0
    %vm6951 = vcmp.ge.f32.partialorder %v6819, 0.0
    %vm6952 = vcmp.ge.f32.partialorder %v6821, 0.0
    %vm6953 = vcmp.ge.f32.partialorder %v5860, 0.0
    %vm6954 = vcmp.ge.f32.partialorder %v5862, 0.0
    %vm6955 = vcmp.ge.f32.partialorder %v6825, 0.0
    %vm6956 = vcmp.ge.f32.partialorder %v6827, 0.0
    %vm6957 = vcmp.ge.f32.partialorder %v5864, 0.0
    %vm6958 = vcmp.ge.f32.partialorder %v5866, 0.0
    %vm6959 = vcmp.ge.f32.partialorder %v6829, 0.0
    %vm6960 = vcmp.ge.f32.partialorder %v6831, 0.0
    %v6961 = vmul.f32 %v5710, 0.01
    %v6962 = vmul.f32 %v5712, 0.01
    %v6963 = vmul.f32 %v6675, 0.01
    %v6964 = vmul.f32 %v6677, 0.01
    %v6965 = vmul.f32 %v5714, 0.01
    %v6966 = vmul.f32 %v5716, 0.01
    %v6967 = vmul.f32 %v6679, 0.01
    %v6968 = vmul.f32 %v6681, 0.01
    %v6969 = vmul.f32 %v5720, 0.01
    %v6970 = vmul.f32 %v5722, 0.01
    %v6971 = vmul.f32 %v6685, 0.01
    %v6972 = vmul.f32 %v6687, 0.01
    %v6973 = vmul.f32 %v5724, 0.01
    %v6974 = vmul.f32 %v5726, 0.01
    %v6975 = vmul.f32 %v6689, 0.01
    %v6976 = vmul.f32 %v6691, 0.01
    %v6977 = vmul.f32 %v5730, 0.01
    %v6978 = vmul.f32 %v5732, 0.01
    %v6979 = vmul.f32 %v6695, 0.01
    %v6980 = vmul.f32 %v6697, 0.01
    %v6981 = vmul.f32 %v5734, 0.01
    %v6982 = vmul.f32 %v5736, 0.01
    %v6983 = vmul.f32 %v6699, 0.01
    %v6984 = vmul.f32 %v6701, 0.01
    %v6985 = vmul.f32 %v5740, 0.01
    %v6986 = vmul.f32 %v5742, 0.01
    %v6987 = vmul.f32 %v6705, 0.01
    %v6988 = vmul.f32 %v6707, 0.01
    %v6989 = vmul.f32 %v5744, 0.01
    %v6990 = vmul.f32 %v5746, 0.01
    %v6991 = vmul.f32 %v6709, 0.01
    %v6992 = vmul.f32 %v6711, 0.01
    %v6993 = vmul.f32 %v5750, 0.01
    %v6994 = vmul.f32 %v5752, 0.01
    %v6995 = vmul.f32 %v6715, 0.01
    %v6996 = vmul.f32 %v6717, 0.01
    %v6997 = vmul.f32 %v5754, 0.01
    %v6998 = vmul.f32 %v5756, 0.01
    %v6999 = vmul.f32 %v6719, 0.01
    %v7000 = vmul.f32 %v6721, 0.01
    %v7001 = vmul.f32 %v5760, 0.01
    %v7002 = vmul.f32 %v5762, 0.01
    %v7003 = vmul.f32 %v6725, 0.01
    %v7004 = vmul.f32 %v6727, 0.01
    %v7005 = vmul.f32 %v5764, 0.01
    %v7006 = vmul.f32 %v5766, 0.01
    %v7007 = vmul.f32 %v6729, 0.01
    %v7008 = vmul.f32 %v6731, 0.01
    %v7009 = vmul.f32 %v5770, 0.01
    %v7010 = vmul.f32 %v5772, 0.01
    %v7011 = vmul.f32 %v6735, 0.01
    %v7012 = vmul.f32 %v6737, 0.01
    %v7013 = vmul.f32 %v5774, 0.01
    %v7014 = vmul.f32 %v5776, 0.01
    %v7015 = vmul.f32 %v6739, 0.01
    %v7016 = vmul.f32 %v6741, 0.01
    %v7017 = vmul.f32 %v5780, 0.01
    %v7018 = vmul.f32 %v5782, 0.01
    %v7019 = vmul.f32 %v6745, 0.01
    %v7020 = vmul.f32 %v6747, 0.01
    %v7021 = vmul.f32 %v5784, 0.01
    %v7022 = vmul.f32 %v5786, 0.01
    %v7023 = vmul.f32 %v6749, 0.01
    %v7024 = vmul.f32 %v6751, 0.01
    %v7025 = vmul.f32 %v5790, 0.01
    %v7026 = vmul.f32 %v5792, 0.01
    %v7027 = vmul.f32 %v6755, 0.01
    %v7028 = vmul.f32 %v6757, 0.01
    %v7029 = vmul.f32 %v5794, 0.01
    %v7030 = vmul.f32 %v5796, 0.01
    %v7031 = vmul.f32 %v6759, 0.01
    %v7032 = vmul.f32 %v6761, 0.01
    %v7033 = vmul.f32 %v5800, 0.01
    %v7034 = vmul.f32 %v5802, 0.01
    %v7035 = vmul.f32 %v6765, 0.01
    %v7036 = vmul.f32 %v6767, 0.01
    %v7037 = vmul.f32 %v5804, 0.01
    %v7038 = vmul.f32 %v5806, 0.01
    %v7039 = vmul.f32 %v6769, 0.01
    %v7040 = vmul.f32 %v6771, 0.01
    %v7041 = vmul.f32 %v5810, 0.01
    %v7042 = vmul.f32 %v5812, 0.01
    %v7043 = vmul.f32 %v6775, 0.01
    %v7044 = vmul.f32 %v6777, 0.01
    %v7045 = vmul.f32 %v5814, 0.01
    %v7046 = vmul.f32 %v5816, 0.01
    %v7047 = vmul.f32 %v6779, 0.01
    %v7048 = vmul.f32 %v6781, 0.01
    %v7049 = vmul.f32 %v5820, 0.01
    %v7050 = vmul.f32 %v5822, 0.01
    %v7051 = vmul.f32 %v6785, 0.01
    %v7052 = vmul.f32 %v6787, 0.01
    %v7053 = vmul.f32 %v5824, 0.01
    %v7054 = vmul.f32 %v5826, 0.01
    %v7055 = vmul.f32 %v6789, 0.01
    %v7056 = vmul.f32 %v6791, 0.01
    %v7057 = vmul.f32 %v5830, 0.01
    %v7058 = vmul.f32 %v5832, 0.01
    %v7059 = vmul.f32 %v6795, 0.01
    %v7060 = vmul.f32 %v6797, 0.01
    %v7061 = vmul.f32 %v5834, 0.01
    %v7062 = vmul.f32 %v5836, 0.01
    %v7063 = vmul.f32 %v6799, 0.01
    %v7064 = vmul.f32 %v6801, 0.01
    %v7065 = vmul.f32 %v5840, 0.01
    %v7066 = vmul.f32 %v5842, 0.01
    %v7067 = vmul.f32 %v6805, 0.01
    %v7068 = vmul.f32 %v6807, 0.01
    %v7069 = vmul.f32 %v5844, 0.01
    %v7070 = vmul.f32 %v5846, 0.01
    %v7071 = vmul.f32 %v6809, 0.01
    %v7072 = vmul.f32 %v6811, 0.01
    %v7073 = vmul.f32 %v5850, 0.01
    %v7074 = vmul.f32 %v5852, 0.01
    %v7075 = vmul.f32 %v6815, 0.01
    %v7076 = vmul.f32 %v6817, 0.01
    %v7077 = vmul.f32 %v5854, 0.01
    %v7078 = vmul.f32 %v5856, 0.01
    %v7079 = vmul.f32 %v6819, 0.01
    %v7080 = vmul.f32 %v6821, 0.01
    %v7081 = vmul.f32 %v5860, 0.01
    %v7082 = vmul.f32 %v5862, 0.01
    %v7083 = vmul.f32 %v6825, 0.01
    %v7084 = vmul.f32 %v6827, 0.01
    %v7085 = vmul.f32 %v5864, 0.01
    %v7086 = vmul.f32 %v5866, 0.01
    %v7087 = vmul.f32 %v6829, 0.01
    %v7088 = vmul.f32 %v6831, 0.01
    %v7089 = vsel %vm6833, %v5710, %v6961
    %v7090 = vsel %vm6834, %v5712, %v6962
    %v7091 = vsel %vm6835, %v6675, %v6963
    %v7092 = vsel %vm6836, %v6677, %v6964
    %v7093 = vsel %vm6837, %v5714, %v6965
    %v7094 = vsel %vm6838, %v5716, %v6966
    %v7095 = vsel %vm6839, %v6679, %v6967
    %v7096 = vsel %vm6840, %v6681, %v6968
    %v7097 = vsel %vm6841, %v5720, %v6969
    %v7098 = vsel %vm6842, %v5722, %v6970
    %v7099 = vsel %vm6843, %v6685, %v6971
    %v7100 = vsel %vm6844, %v6687, %v6972
    %v7101 = vsel %vm6845, %v5724, %v6973
    %v7102 = vsel %vm6846, %v5726, %v6974
    %v7103 = vsel %vm6847, %v6689, %v6975
    %v7104 = vsel %vm6848, %v6691, %v6976
    %v7105 = vsel %vm6849, %v5730, %v6977
    %v7106 = vsel %vm6850, %v5732, %v6978
    %v7107 = vsel %vm6851, %v6695, %v6979
    %v7108 = vsel %vm6852, %v6697, %v6980
    %v7109 = vsel %vm6853, %v5734, %v6981
    %v7110 = vsel %vm6854, %v5736, %v6982
    %v7111 = vsel %vm6855, %v6699, %v6983
    %v7112 = vsel %vm6856, %v6701, %v6984
    %v7113 = vsel %vm6857, %v5740, %v6985
    %v7114 = vsel %vm6858, %v5742, %v6986
    %v7115 = vsel %vm6859, %v6705, %v6987
    %v7116 = vsel %vm6860, %v6707, %v6988
    %v7117 = vsel %vm6861, %v5744, %v6989
    %v7118 = vsel %vm6862, %v5746, %v6990
    %v7119 = vsel %vm6863, %v6709, %v6991
    %v7120 = vsel %vm6864, %v6711, %v6992
    %v7121 = vsel %vm6865, %v5750, %v6993
    %v7122 = vsel %vm6866, %v5752, %v6994
    %v7123 = vsel %vm6867, %v6715, %v6995
    %v7124 = vsel %vm6868, %v6717, %v6996
    %v7125 = vsel %vm6869, %v5754, %v6997
    %v7126 = vsel %vm6870, %v5756, %v6998
    %v7127 = vsel %vm6871, %v6719, %v6999
    %v7128 = vsel %vm6872, %v6721, %v7000
    %v7129 = vsel %vm6873, %v5760, %v7001
    %v7130 = vsel %vm6874, %v5762, %v7002
    %v7131 = vsel %vm6875, %v6725, %v7003
    %v7132 = vsel %vm6876, %v6727, %v7004
    %v7133 = vsel %vm6877, %v5764, %v7005
    %v7134 = vsel %vm6878, %v5766, %v7006
    %v7135 = vsel %vm6879, %v6729, %v7007
    %v7136 = vsel %vm6880, %v6731, %v7008
    %v7137 = vsel %vm6881, %v5770, %v7009
    %v7138 = vsel %vm6882, %v5772, %v7010
    %v7139 = vsel %vm6883, %v6735, %v7011
    %v7140 = vsel %vm6884, %v6737, %v7012
    %v7141 = vsel %vm6885, %v5774, %v7013
    %v7142 = vsel %vm6886, %v5776, %v7014
    %v7143 = vsel %vm6887, %v6739, %v7015
    %v7144 = vsel %vm6888, %v6741, %v7016
    %v7145 = vsel %vm6889, %v5780, %v7017
    %v7146 = vsel %vm6890, %v5782, %v7018
    %v7147 = vsel %vm6891, %v6745, %v7019
    %v7148 = vsel %vm6892, %v6747, %v7020
    %v7149 = vsel %vm6893, %v5784, %v7021
    %v7150 = vsel %vm6894, %v5786, %v7022
    %v7151 = vsel %vm6895, %v6749, %v7023
    %v7152 = vsel %vm6896, %v6751, %v7024
    %v7153 = vsel %vm6897, %v5790, %v7025
    %v7154 = vsel %vm6898, %v5792, %v7026
    %v7155 = vsel %vm6899, %v6755, %v7027
    %v7156 = vsel %vm6900, %v6757, %v7028
    %v7157 = vsel %vm6901, %v5794, %v7029
    %v7158 = vsel %vm6902, %v5796, %v7030
    %v7159 = vsel %vm6903, %v6759, %v7031
    %v7160 = vsel %vm6904, %v6761, %v7032
    %v7161 = vsel %vm6905, %v5800, %v7033
    %v7162 = vsel %vm6906, %v5802, %v7034
    %v7163 = vsel %vm6907, %v6765, %v7035
    %v7164 = vsel %vm6908, %v6767, %v7036
    %v7165 = vsel %vm6909, %v5804, %v7037
    %v7166 = vsel %vm6910, %v5806, %v7038
    %v7167 = vsel %vm6911, %v6769, %v7039
    %v7168 = vsel %vm6912, %v6771, %v7040
    %v7169 = vsel %vm6913, %v5810, %v7041
    %v7170 = vsel %vm6914, %v5812, %v7042
    %v7171 = vsel %vm6915, %v6775, %v7043
    %v7172 = vsel %vm6916, %v6777, %v7044
    %v7173 = vsel %vm6917, %v5814, %v7045
    %v7174 = vsel %vm6918, %v5816, %v7046
    %v7175 = vsel %vm6919, %v6779, %v7047
    %v7176 = vsel %vm6920, %v6781, %v7048
    %v7177 = vsel %vm6921, %v5820, %v7049
    %v7178 = vsel %vm6922, %v5822, %v7050
    %v7179 = vsel %vm6923, %v6785, %v7051
    %v7180 = vsel %vm6924, %v6787, %v7052
    %v7181 = vsel %vm6925, %v5824, %v7053
    %v7182 = vsel %vm6926, %v5826, %v7054
    %v7183 = vsel %vm6927, %v6789, %v7055
    %v7184 = vsel %vm6928, %v6791, %v7056
    %v7185 = vsel %vm6929, %v5830, %v7057
    %v7186 = vsel %vm6930, %v5832, %v7058
    %v7187 = vsel %vm6931, %v6795, %v7059
    %v7188 = vsel %vm6932, %v6797, %v7060
    %v7189 = vsel %vm6933, %v5834, %v7061
    %v7190 = vsel %vm6934, %v5836, %v7062
    %v7191 = vsel %vm6935, %v6799, %v7063
    %v7192 = vsel %vm6936, %v6801, %v7064
    %v7193 = vsel %vm6937, %v5840, %v7065
    %v7194 = vsel %vm6938, %v5842, %v7066
    %v7195 = vsel %vm6939, %v6805, %v7067
    %v7196 = vsel %vm6940, %v6807, %v7068
    %v7197 = vsel %vm6941, %v5844, %v7069
    %v7198 = vsel %vm6942, %v5846, %v7070
    %v7199 = vsel %vm6943, %v6809, %v7071
    %v7200 = vsel %vm6944, %v6811, %v7072
    %v7201 = vsel %vm6945, %v5850, %v7073
    %v7202 = vsel %vm6946, %v5852, %v7074
    %v7203 = vsel %vm6947, %v6815, %v7075
    %v7204 = vsel %vm6948, %v6817, %v7076
    %v7205 = vsel %vm6949, %v5854, %v7077
    %v7206 = vsel %vm6950, %v5856, %v7078
    %v7207 = vsel %vm6951, %v6819, %v7079
    %v7208 = vsel %vm6952, %v6821, %v7080
    %v7209 = vsel %vm6953, %v5860, %v7081
    %v7210 = vsel %vm6954, %v5862, %v7082
    %v7211 = vsel %vm6955, %v6825, %v7083
    %v7212 = vsel %vm6956, %v6827, %v7084
    %v7213 = vsel %vm6957, %v5864, %v7085
    %v7214 = vsel %vm6958, %v5866, %v7086
    %v7215 = vsel %vm6959, %v6829, %v7087
    %v7216 = vsel %vm6960, %v6831, %v7088
    %v7217 = vpack.c.bf16 %v7093, %v7089
    %v7218 = vpack.c.bf16 %v7094, %v7090
    %v7219 = vpack.c.bf16 %v7095, %v7091
    %v7220 = vpack.c.bf16 %v7096, %v7092
    %v7221 = vpack.c.bf16 %v7101, %v7097
    %v7222 = vpack.c.bf16 %v7102, %v7098
    %v7223 = vpack.c.bf16 %v7103, %v7099
    %v7224 = vpack.c.bf16 %v7104, %v7100
    %v7225 = vpack.c.bf16 %v7109, %v7105
    %v7226 = vpack.c.bf16 %v7110, %v7106
    %v7227 = vpack.c.bf16 %v7111, %v7107
    %v7228 = vpack.c.bf16 %v7112, %v7108
    %v7229 = vpack.c.bf16 %v7117, %v7113
    %v7230 = vpack.c.bf16 %v7118, %v7114
    %v7231 = vpack.c.bf16 %v7119, %v7115
    %v7232 = vpack.c.bf16 %v7120, %v7116
    %v7233 = vpack.c.bf16 %v7125, %v7121
    %v7234 = vpack.c.bf16 %v7126, %v7122
    %v7235 = vpack.c.bf16 %v7127, %v7123
    %v7236 = vpack.c.bf16 %v7128, %v7124
    %v7237 = vpack.c.bf16 %v7133, %v7129
    %v7238 = vpack.c.bf16 %v7134, %v7130
    %v7239 = vpack.c.bf16 %v7135, %v7131
    %v7240 = vpack.c.bf16 %v7136, %v7132
    %v7241 = vpack.c.bf16 %v7141, %v7137
    %v7242 = vpack.c.bf16 %v7142, %v7138
    %v7243 = vpack.c.bf16 %v7143, %v7139
    %v7244 = vpack.c.bf16 %v7144, %v7140
    %v7245 = vpack.c.bf16 %v7149, %v7145
    %v7246 = vpack.c.bf16 %v7150, %v7146
    %v7247 = vpack.c.bf16 %v7151, %v7147
    %v7248 = vpack.c.bf16 %v7152, %v7148
    %v7249 = vpack.c.bf16 %v7157, %v7153
    %v7250 = vpack.c.bf16 %v7158, %v7154
    %v7251 = vpack.c.bf16 %v7159, %v7155
    %v7252 = vpack.c.bf16 %v7160, %v7156
    %v7253 = vpack.c.bf16 %v7165, %v7161
    %v7254 = vpack.c.bf16 %v7166, %v7162
    %v7255 = vpack.c.bf16 %v7167, %v7163
    %v7256 = vpack.c.bf16 %v7168, %v7164
    %v7257 = vpack.c.bf16 %v7173, %v7169
    %v7258 = vpack.c.bf16 %v7174, %v7170
    %v7259 = vpack.c.bf16 %v7175, %v7171
    %v7260 = vpack.c.bf16 %v7176, %v7172
    %v7261 = vpack.c.bf16 %v7181, %v7177
    %v7262 = vpack.c.bf16 %v7182, %v7178
    %v7263 = vpack.c.bf16 %v7183, %v7179
    %v7264 = vpack.c.bf16 %v7184, %v7180
    %v7265 = vpack.c.bf16 %v7189, %v7185
    %v7266 = vpack.c.bf16 %v7190, %v7186
    %v7267 = vpack.c.bf16 %v7191, %v7187
    %v7268 = vpack.c.bf16 %v7192, %v7188
    %v7269 = vpack.c.bf16 %v7197, %v7193
    %v7270 = vpack.c.bf16 %v7198, %v7194
    %v7271 = vpack.c.bf16 %v7199, %v7195
    %v7272 = vpack.c.bf16 %v7200, %v7196
    %v7273 = vpack.c.bf16 %v7205, %v7201
    %v7274 = vpack.c.bf16 %v7206, %v7202
    %v7275 = vpack.c.bf16 %v7207, %v7203
    %v7276 = vpack.c.bf16 %v7208, %v7204
    %v7277 = vpack.c.bf16 %v7213, %v7209
    %v7278 = vpack.c.bf16 %v7214, %v7210
    %v7279 = vpack.c.bf16 %v7215, %v7211
    %v7280 = vpack.c.bf16 %v7216, %v7212
    %v7281 = vld [vmem:[%s5] sm:$0xff]
    %v7282 = vld [vmem:[%s5 + $0x8] sm:$0xff]
    %v7285 = vunpack.c.l.b16 %v7281
    %v7286 = vunpack.c.h.b16 %v7281
    %v7287 = vunpack.c.l.b16 %v7282
    %v7288 = vunpack.c.h.b16 %v7282
    %v7289 = vpack.c.b16 %v7287, %v7285
    %v7290 = vpack.c.b16 %v7288, %v7286
    %7293 = vmatprep.subr.bf16.mxu0 %v7218
    %7294 = vmatpush1.bf16.msra.mxu0 %v7217
    %7295 = vmatprep.subr.bf16.mxu0 %v7222
    %7296 = vmatpush1.bf16.msra.mxu0 %v7221
    %7297 = vmatprep.subr.bf16.mxu0 %v7226
    %7298 = vmatpush1.bf16.msra.mxu0 %v7225
    %7299 = vmatprep.subr.bf16.mxu0 %v7230
    %7300 = vmatpush1.bf16.msra.mxu0 %v7229
    %7301 = vmatprep.subr.bf16.mxu0 %v7234
    %7302 = vmatpush1.bf16.msra.mxu0 %v7233
    %7303 = vmatprep.subr.bf16.mxu0 %v7238
    %7304 = vmatpush1.bf16.msra.mxu0 %v7237
    %7305 = vmatprep.subr.bf16.mxu0 %v7242
    %7306 = vmatpush1.bf16.msra.mxu0 %v7241
    %7307 = vmatprep.subr.bf16.mxu0 %v7246
    %7308 = vmatpush1.bf16.msra.mxu0 %v7245
    %7309 = vmatprep.subr.bf16.mxu0 %v7250
    %7310 = vmatpush1.bf16.msra.mxu0 %v7249
    %7311 = vmatprep.subr.bf16.mxu0 %v7254
    %7312 = vmatpush1.bf16.msra.mxu0 %v7253
    %7313 = vmatprep.subr.bf16.mxu0 %v7258
    %7314 = vmatpush1.bf16.msra.mxu0 %v7257
    %7315 = vmatprep.subr.bf16.mxu0 %v7262
    %7316 = vmatpush1.bf16.msra.mxu0 %v7261
    %7317 = vmatprep.subr.bf16.mxu0 %v7266
    %7318 = vmatpush1.bf16.msra.mxu0 %v7265
    %7319 = vmatprep.subr.bf16.mxu0 %v7270
    %7320 = vmatpush1.bf16.msra.mxu0 %v7269
    %7321 = vmatprep.subr.bf16.mxu0 %v7274
    %7322 = vmatpush1.bf16.msra.mxu0 %v7273
    %7323 = vmatprep.subr.bf16.mxu0 %v7278
    %7324 = vmatpush1.bf16.msra.mxu0 %v7277
    %7325 = vmatprep.mubr.bf16.mxu0 %v7290
    %7326 = vmatmul.mubr.bf16.gmra.mrb[0].mxu0 %v7289
    %v7327 = vpop.f32.mrb[0].mxu0
    %v7328 = vadd.f32 0.0, %v7327
    %v7329 = vpop.f32.mrb[0].mxu0
    %v7330 = vadd.f32 0.0, %v7329
    %v7331 = vpop.f32.mrb[0].mxu0
    %v7332 = vadd.f32 0.0, %v7331
    %v7333 = vpop.f32.mrb[0].mxu0
    %v7334 = vadd.f32 0.0, %v7333
    %7335 = vdwg.mxu0
    %7336 = vmatprep.subr.bf16.mxu0 %v7220
    %7337 = vmatpush1.bf16.msra.mxu0 %v7219
    %7338 = vmatprep.subr.bf16.mxu0 %v7224
    %7339 = vmatpush1.bf16.msra.mxu0 %v7223
    %7340 = vmatprep.subr.bf16.mxu0 %v7228
    %7341 = vmatpush1.bf16.msra.mxu0 %v7227
    %7342 = vmatprep.subr.bf16.mxu0 %v7232
    %7343 = vmatpush1.bf16.msra.mxu0 %v7231
    %7344 = vmatprep.subr.bf16.mxu0 %v7236
    %7345 = vmatpush1.bf16.msra.mxu0 %v7235
    %7346 = vmatprep.subr.bf16.mxu0 %v7240
    %7347 = vmatpush1.bf16.msra.mxu0 %v7239
    %7348 = vmatprep.subr.bf16.mxu0 %v7244
    %7349 = vmatpush1.bf16.msra.mxu0 %v7243
    %7350 = vmatprep.subr.bf16.mxu0 %v7248
    %7351 = vmatpush1.bf16.msra.mxu0 %v7247
    %7352 = vmatprep.subr.bf16.mxu0 %v7252
    %7353 = vmatpush1.bf16.msra.mxu0 %v7251
    %7354 = vmatprep.subr.bf16.mxu0 %v7256
    %7355 = vmatpush1.bf16.msra.mxu0 %v7255
    %7356 = vmatprep.subr.bf16.mxu0 %v7260
    %7357 = vmatpush1.bf16.msra.mxu0 %v7259
    %7358 = vmatprep.subr.bf16.mxu0 %v7264
    %7359 = vmatpush1.bf16.msra.mxu0 %v7263
    %7360 = vmatprep.subr.bf16.mxu0 %v7268
    %7361 = vmatpush1.bf16.msra.mxu0 %v7267
    %7362 = vmatprep.subr.bf16.mxu0 %v7272
    %7363 = vmatpush1.bf16.msra.mxu0 %v7271
    %7364 = vmatprep.subr.bf16.mxu0 %v7276
    %7365 = vmatpush1.bf16.msra.mxu0 %v7275
    %7366 = vmatprep.subr.bf16.mxu0 %v7280
    %7367 = vmatpush1.bf16.msra.mxu0 %v7279
    %7368 = vmatprep.mubr.bf16.mxu0 %v7290
    %7369 = vmatmul.mubr.bf16.gmra.mrb[0].mxu0 %v7289
    %v7370 = vpop.f32.mrb[0].mxu0
    %v7371 = vadd.f32 0.0, %v7370
    %v7372 = vpop.f32.mrb[0].mxu0
    %v7373 = vadd.f32 0.0, %v7372
    %v7374 = vpop.f32.mrb[0].mxu0
    %v7375 = vadd.f32 0.0, %v7374
    %v7376 = vpop.f32.mrb[0].mxu0
    %v7377 = vadd.f32 0.0, %v7376
    %7378 = vdwg.mxu0
    %7379 = vrot.lane.b32.xlu0 %v7328, 17
    %v7380 = vpop.permute.xlu0 %7379
    %7381 = vrot.lane.b32.xlu0 %v7330, 17
    %v7382 = vpop.permute.xlu0 %7381
    %7383 = vrot.lane.b32.xlu0 %v7371, 17
    %v7384 = vpop.permute.xlu0 %7383
    %7385 = vrot.lane.b32.xlu0 %v7373, 17
    %v7386 = vpop.permute.xlu0 %7385
    %v7387 = vsel %vm832, %v7384, %v7386
    %v7388 = vsel %vm832, %v7382, %v7384
    %v7389 = vsel %vm832, %v7380, %v7382
    %v7390 = vsel %vm832, %v7386, %v7380
    %v7391 = vld [vmem:[%s6] ss:$8 sm:$0xf]
    %vm7392 = vcmp.gt.f32.partialorder %v7391, 0.5
    %v7397 = vcombine.low %v7390, %v7389
    %v7398 = vcombine.low %v7388, %v7387
    %v7400 = vunpack.c.l.s4 1966171168
    %v7401 = vunpack.c.0.s8 %v7400
    %v7402 = vlaneseq
    %v7403 = vshrl.u32 %v7402, 7
    %v7404 = vsub.s32 %v7401, %v7403
    %v7405 = vrot.slane %v7397, %v7404
    %v7407 = vunpack.c.l.s4 1966171168
    %v7408 = vunpack.c.0.s8 %v7407
    %v7409 = vlaneseq
    %v7410 = vshrl.u32 %v7409, 7
    %v7411 = vsub.s32 %v7408, %v7410
    %v7412 = vrot.slane %v7398, %v7411
    %v7413 = vcombine.low %v7405, %v7412
    %v7415 = vunpack.c.l.s4 1966171168
    %v7416 = vunpack.c.0.s8 %v7415
    %v7417 = vlaneseq
    %v7418 = vshrl.u32 %v7417, 7
    %v7419 = vsub.s32 %v7416, %v7418
    %v7420 = vrot.slane %v7413, %v7419
    %v7422 = vsel %vm7392, %v7420, 0.0
    %v7423 = vadd.f32 %v7422, 3.1807324e-06
    %v7428 = vrot.slane %v7328, 1
    %v7429 = vrot.slane %v7330, 1
    %v7430 = vrot.slane %v7371, 1
    %v7431 = vrot.slane %v7373, 1
    %7436 = vrot.lane.b32.xlu0 %v7428, 16
    %v7437 = vpop.permute.xlu0 %7436
    %7438 = vrot.lane.b32.xlu0 %v7429, 16
    %v7439 = vpop.permute.xlu0 %7438
    %7440 = vrot.lane.b32.xlu0 %v7430, 16
    %v7441 = vpop.permute.xlu0 %7440
    %7442 = vrot.lane.b32.xlu0 %v7431, 16
    %v7443 = vpop.permute.xlu0 %7442
    %v7444 = vsel %vm1176, %v7441, %v7443
    %v7445 = vsel %vm1176, %v7439, %v7441
    %v7446 = vsel %vm1176, %v7437, %v7439
    %v7447 = vsel %vm1176, %v7443, %v7437
    %v7448 = vld [vmem:[%s1241] ss:$8 sm:$0xf]
    %vm7449 = vcmp.gt.f32.partialorder %v7448, 0.5
    %v7454 = vcombine.low %v7447, %v7446
    %v7455 = vcombine.low %v7445, %v7444
    %v7457 = vunpack.c.l.s4 1966171168
    %v7458 = vunpack.c.0.s8 %v7457
    %v7459 = vlaneseq
    %v7460 = vshrl.u32 %v7459, 7
    %v7461 = vsub.s32 %v7458, %v7460
    %v7462 = vrot.slane %v7454, %v7461
    %v7464 = vunpack.c.l.s4 1966171168
    %v7465 = vunpack.c.0.s8 %v7464
    %v7466 = vlaneseq
    %v7467 = vshrl.u32 %v7466, 7
    %v7468 = vsub.s32 %v7465, %v7467
    %v7469 = vrot.slane %v7455, %v7468
    %v7470 = vcombine.low %v7462, %v7469
    %v7472 = vunpack.c.l.s4 1966171168
    %v7473 = vunpack.c.0.s8 %v7472
    %v7474 = vlaneseq
    %v7475 = vshrl.u32 %v7474, 7
    %v7476 = vsub.s32 %v7473, %v7475
    %v7477 = vrot.slane %v7470, %v7476
    %v7479 = vsel %vm7449, %v7477, 0.0
    %v7480 = vadd.f32 %v7423, %v7479
    %v7481 = vrot.slane %v7328, 2
    %v7482 = vrot.slane %v7330, 2
    %v7483 = vrot.slane %v7371, 2
    %v7484 = vrot.slane %v7373, 2
    %7489 = vrot.lane.b32.xlu0 %v7481, 15
    %v7490 = vpop.permute.xlu0 %7489
    %7491 = vrot.lane.b32.xlu0 %v7482, 15
    %v7492 = vpop.permute.xlu0 %7491
    %7493 = vrot.lane.b32.xlu0 %v7483, 15
    %v7494 = vpop.permute.xlu0 %7493
    %7495 = vrot.lane.b32.xlu0 %v7484, 15
    %v7496 = vpop.permute.xlu0 %7495
    %v7497 = vsel %vm1521, %v7494, %v7496
    %v7498 = vsel %vm1521, %v7492, %v7494
    %v7499 = vsel %vm1521, %v7490, %v7492
    %v7500 = vsel %vm1521, %v7496, %v7490
    %v7501 = vld [vmem:[%s1586] ss:$8 sm:$0xf]
    %vm7502 = vcmp.gt.f32.partialorder %v7501, 0.5
    %v7507 = vcombine.low %v7500, %v7499
    %v7508 = vcombine.low %v7498, %v7497
    %v7510 = vunpack.c.l.s4 1966171168
    %v7511 = vunpack.c.0.s8 %v7510
    %v7512 = vlaneseq
    %v7513 = vshrl.u32 %v7512, 7
    %v7514 = vsub.s32 %v7511, %v7513
    %v7515 = vrot.slane %v7507, %v7514
    %v7517 = vunpack.c.l.s4 1966171168
    %v7518 = vunpack.c.0.s8 %v7517
    %v7519 = vlaneseq
    %v7520 = vshrl.u32 %v7519, 7
    %v7521 = vsub.s32 %v7518, %v7520
    %v7522 = vrot.slane %v7508, %v7521
    %v7523 = vcombine.low %v7515, %v7522
    %v7525 = vunpack.c.l.s4 1966171168
    %v7526 = vunpack.c.0.s8 %v7525
    %v7527 = vlaneseq
    %v7528 = vshrl.u32 %v7527, 7
    %v7529 = vsub.s32 %v7526, %v7528
    %v7530 = vrot.slane %v7523, %v7529
    %v7532 = vsel %vm7502, %v7530, 0.0
    %v7533 = vadd.f32 %v7480, %v7532
    %v7534 = vrot.slane %v7328, 3
    %v7535 = vrot.slane %v7330, 3
    %v7536 = vrot.slane %v7371, 3
    %v7537 = vrot.slane %v7373, 3
    %7542 = vrot.lane.b32.xlu0 %v7534, 1
    %v7543 = vpop.permute.xlu0 %7542
    %7544 = vrot.lane.b32.xlu0 %v7535, 1
    %v7545 = vpop.permute.xlu0 %7544
    %7546 = vrot.lane.b32.xlu0 %v7536, 1
    %v7547 = vpop.permute.xlu0 %7546
    %7548 = vrot.lane.b32.xlu0 %v7537, 1
    %v7549 = vpop.permute.xlu0 %7548
    %v7550 = vsel %vm1866, %v7547, %v7549
    %v7551 = vsel %vm1866, %v7545, %v7547
    %v7552 = vsel %vm1866, %v7543, %v7545
    %v7553 = vsel %vm1866, %v7549, %v7543
    %v7554 = vld [vmem:[%s1931] ss:$8 sm:$0xf]
    %vm7555 = vcmp.gt.f32.partialorder %v7554, 0.5
    %v7560 = vcombine.low %v7553, %v7552
    %v7561 = vcombine.low %v7551, %v7550
    %v7563 = vunpack.c.l.s4 1966171168
    %v7564 = vunpack.c.0.s8 %v7563
    %v7565 = vlaneseq
    %v7566 = vshrl.u32 %v7565, 7
    %v7567 = vsub.s32 %v7564, %v7566
    %v7568 = vrot.slane %v7560, %v7567
    %v7570 = vunpack.c.l.s4 1966171168
    %v7571 = vunpack.c.0.s8 %v7570
    %v7572 = vlaneseq
    %v7573 = vshrl.u32 %v7572, 7
    %v7574 = vsub.s32 %v7571, %v7573
    %v7575 = vrot.slane %v7561, %v7574
    %v7576 = vcombine.low %v7568, %v7575
    %v7578 = vunpack.c.l.s4 1966171168
    %v7579 = vunpack.c.0.s8 %v7578
    %v7580 = vlaneseq
    %v7581 = vshrl.u32 %v7580, 7
    %v7582 = vsub.s32 %v7579, %v7581
    %v7583 = vrot.slane %v7576, %v7582
    %v7585 = vsel %vm7555, %v7583, 0.0
    %v7586 = vadd.f32 %v7533, %v7585
    %v7587 = vcombine.high %v7328, %v7330
    %v7588 = vcombine.high %v7371, %v7373
    %v7590 = vunpack.c.l.s4 1966171168
    %v7591 = vunpack.c.0.s8 %v7590
    %v7592 = vlaneseq
    %v7593 = vshrl.u32 %v7592, 7
    %v7594 = vsub.s32 %v7591, %v7593
    %v7595 = vrot.slane %v7587, %v7594
    %v7597 = vunpack.c.l.s4 1966171168
    %v7598 = vunpack.c.0.s8 %v7597
    %v7599 = vlaneseq
    %v7600 = vshrl.u32 %v7599, 7
    %v7601 = vsub.s32 %v7598, %v7600
    %v7602 = vrot.slane %v7588, %v7601
    %v7603 = vcombine.low %v7595, %v7602
    %v7605 = vunpack.c.l.s4 1966171168
    %v7606 = vunpack.c.0.s8 %v7605
    %v7607 = vlaneseq
    %v7608 = vshrl.u32 %v7607, 7
    %v7609 = vsub.s32 %v7606, %v7608
    %v7610 = vrot.slane %v7603, %v7609
    %v7612 = vadd.f32 %v7586, %v7610
    %v7613 = vrot.slane %v7328, 5
    %v7614 = vrot.slane %v7330, 5
    %v7615 = vrot.slane %v7371, 5
    %v7616 = vrot.slane %v7373, 5
    %7621 = vrot.lane.b32.xlu0 %v7613, 127
    %v7622 = vpop.permute.xlu0 %7621
    %7623 = vrot.lane.b32.xlu0 %v7614, 127
    %v7624 = vpop.permute.xlu0 %7623
    %7625 = vrot.lane.b32.xlu0 %v7615, 127
    %v7626 = vpop.permute.xlu0 %7625
    %7627 = vrot.lane.b32.xlu0 %v7616, 127
    %v7628 = vpop.permute.xlu0 %7627
    %v7629 = vsel %vm2275, %v7626, %v7628
    %v7630 = vsel %vm2275, %v7624, %v7626
    %v7631 = vsel %vm2275, %v7622, %v7624
    %v7632 = vsel %vm2275, %v7628, %v7622
    %v7633 = vld [vmem:[%s2340] ss:$8 sm:$0xf]
    %vm7634 = vcmp.gt.f32.partialorder %v7633, 0.5
    %v7639 = vcombine.low %v7631, %v7630
    %v7640 = vcombine.low %v7629, %v7632
    %v7642 = vunpack.c.l.s4 1966171168
    %v7643 = vunpack.c.0.s8 %v7642
    %v7644 = vlaneseq
    %v7645 = vshrl.u32 %v7644, 7
    %v7646 = vsub.s32 %v7643, %v7645
    %v7647 = vrot.slane %v7639, %v7646
    %v7649 = vunpack.c.l.s4 1966171168
    %v7650 = vunpack.c.0.s8 %v7649
    %v7651 = vlaneseq
    %v7652 = vshrl.u32 %v7651, 7
    %v7653 = vsub.s32 %v7650, %v7652
    %v7654 = vrot.slane %v7640, %v7653
    %v7655 = vcombine.low %v7647, %v7654
    %v7657 = vunpack.c.l.s4 1966171168
    %v7658 = vunpack.c.0.s8 %v7657
    %v7659 = vlaneseq
    %v7660 = vshrl.u32 %v7659, 7
    %v7661 = vsub.s32 %v7658, %v7660
    %v7662 = vrot.slane %v7655, %v7661
    %v7664 = vsel %vm7634, %v7662, 0.0
    %v7665 = vadd.f32 %v7612, %v7664
    %v7666 = vrot.slane %v7328, 6
    %v7667 = vrot.slane %v7330, 6
    %v7668 = vrot.slane %v7371, 6
    %v7669 = vrot.slane %v7373, 6
    %7674 = vrot.lane.b32.xlu0 %v7666, 113
    %v7675 = vpop.permute.xlu0 %7674
    %7676 = vrot.lane.b32.xlu0 %v7667, 113
    %v7677 = vpop.permute.xlu0 %7676
    %7678 = vrot.lane.b32.xlu0 %v7668, 113
    %v7679 = vpop.permute.xlu0 %7678
    %7680 = vrot.lane.b32.xlu0 %v7669, 113
    %v7681 = vpop.permute.xlu0 %7680
    %v7682 = vsel %vm2620, %v7679, %v7681
    %v7683 = vsel %vm2620, %v7677, %v7679
    %v7684 = vsel %vm2620, %v7675, %v7677
    %v7685 = vsel %vm2620, %v7681, %v7675
    %v7686 = vld [vmem:[%s2685] ss:$8 sm:$0xf]
    %vm7687 = vcmp.gt.f32.partialorder %v7686, 0.5
    %v7692 = vcombine.low %v7684, %v7683
    %v7693 = vcombine.low %v7682, %v7685
    %v7695 = vunpack.c.l.s4 1966171168
    %v7696 = vunpack.c.0.s8 %v7695
    %v7697 = vlaneseq
    %v7698 = vshrl.u32 %v7697, 7
    %v7699 = vsub.s32 %v7696, %v7698
    %v7700 = vrot.slane %v7692, %v7699
    %v7702 = vunpack.c.l.s4 1966171168
    %v7703 = vunpack.c.0.s8 %v7702
    %v7704 = vlaneseq
    %v7705 = vshrl.u32 %v7704, 7
    %v7706 = vsub.s32 %v7703, %v7705
    %v7707 = vrot.slane %v7693, %v7706
    %v7708 = vcombine.low %v7700, %v7707
    %v7710 = vunpack.c.l.s4 1966171168
    %v7711 = vunpack.c.0.s8 %v7710
    %v7712 = vlaneseq
    %v7713 = vshrl.u32 %v7712, 7
    %v7714 = vsub.s32 %v7711, %v7713
    %v7715 = vrot.slane %v7708, %v7714
    %v7717 = vsel %vm7687, %v7715, 0.0
    %v7718 = vadd.f32 %v7665, %v7717
    %v7719 = vrot.slane %v7328, 7
    %v7720 = vrot.slane %v7330, 7
    %v7721 = vrot.slane %v7371, 7
    %v7722 = vrot.slane %v7373, 7
    %7727 = vrot.lane.b32.xlu0 %v7719, 112
    %v7728 = vpop.permute.xlu0 %7727
    %7729 = vrot.lane.b32.xlu0 %v7720, 112
    %v7730 = vpop.permute.xlu0 %7729
    %7731 = vrot.lane.b32.xlu0 %v7721, 112
    %v7732 = vpop.permute.xlu0 %7731
    %7733 = vrot.lane.b32.xlu0 %v7722, 112
    %v7734 = vpop.permute.xlu0 %7733
    %v7735 = vsel %vm2965, %v7732, %v7734
    %v7736 = vsel %vm2965, %v7730, %v7732
    %v7737 = vsel %vm2965, %v7728, %v7730
    %v7738 = vsel %vm2965, %v7734, %v7728
    %v7739 = vld [vmem:[%s3030] ss:$8 sm:$0xf]
    %vm7740 = vcmp.gt.f32.partialorder %v7739, 0.5
    %v7745 = vcombine.low %v7737, %v7736
    %v7746 = vcombine.low %v7735, %v7738
    %v7748 = vunpack.c.l.s4 1966171168
    %v7749 = vunpack.c.0.s8 %v7748
    %v7750 = vlaneseq
    %v7751 = vshrl.u32 %v7750, 7
    %v7752 = vsub.s32 %v7749, %v7751
    %v7753 = vrot.slane %v7745, %v7752
    %v7755 = vunpack.c.l.s4 1966171168
    %v7756 = vunpack.c.0.s8 %v7755
    %v7757 = vlaneseq
    %v7758 = vshrl.u32 %v7757, 7
    %v7759 = vsub.s32 %v7756, %v7758
    %v7760 = vrot.slane %v7746, %v7759
    %v7761 = vcombine.low %v7753, %v7760
    %v7763 = vunpack.c.l.s4 1966171168
    %v7764 = vunpack.c.0.s8 %v7763
    %v7765 = vlaneseq
    %v7766 = vshrl.u32 %v7765, 7
    %v7767 = vsub.s32 %v7764, %v7766
    %v7768 = vrot.slane %v7761, %v7767
    %v7770 = vsel %vm7740, %v7768, 0.0
    %v7771 = vadd.f32 %v7718, %v7770
    %7772 = vrot.lane.b32.xlu0 %v7332, 111
    %v7773 = vpop.permute.xlu0 %7772
    %7774 = vrot.lane.b32.xlu0 %v7334, 111
    %v7775 = vpop.permute.xlu0 %7774
    %7776 = vrot.lane.b32.xlu0 %v7375, 111
    %v7777 = vpop.permute.xlu0 %7776
    %7778 = vrot.lane.b32.xlu0 %v7377, 111
    %v7779 = vpop.permute.xlu0 %7778
    %v7780 = vsel %vm3310, %v7777, %v7779
    %v7781 = vsel %vm3310, %v7775, %v7777
    %v7782 = vsel %vm3310, %v7773, %v7775
    %v7783 = vsel %vm3310, %v7779, %v7773
    %v7784 = vld [vmem:[%s3375] ss:$8 sm:$0xf]
    %vm7785 = vcmp.gt.f32.partialorder %v7784, 0.5
    %v7790 = vcombine.low %v7782, %v7781
    %v7791 = vcombine.low %v7780, %v7783
    %v7793 = vunpack.c.l.s4 1966171168
    %v7794 = vunpack.c.0.s8 %v7793
    %v7795 = vlaneseq
    %v7796 = vshrl.u32 %v7795, 7
    %v7797 = vsub.s32 %v7794, %v7796
    %v7798 = vrot.slane %v7790, %v7797
    %v7800 = vunpack.c.l.s4 1966171168
    %v7801 = vunpack.c.0.s8 %v7800
    %v7802 = vlaneseq
    %v7803 = vshrl.u32 %v7802, 7
    %v7804 = vsub.s32 %v7801, %v7803
    %v7805 = vrot.slane %v7791, %v7804
    %v7806 = vcombine.low %v7798, %v7805
    %v7808 = vunpack.c.l.s4 1966171168
    %v7809 = vunpack.c.0.s8 %v7808
    %v7810 = vlaneseq
    %v7811 = vshrl.u32 %v7810, 7
    %v7812 = vsub.s32 %v7809, %v7811
    %v7813 = vrot.slane %v7806, %v7812
    %v7815 = vsel %vm7785, %v7813, 0.0
    %v7816 = vadd.f32 %v7771, %v7815
    %v7817 = vld [vmem:[%s7] sm:$0xf]
    %v7818 = vadd.f32 %v7817, %v7816
    %v7819 = vld [vmem:[%s8] sm:$0xff]
    %v7820 = vld [vmem:[%s8 + $0x8] sm:$0xff]
    %v7821 = vld [vmem:[%s8 + $0x10] sm:$0xff]
    %v7822 = vld [vmem:[%s8 + $0x18] sm:$0xff]
    %v7823 = vld [vmem:[%s8 + $0x20] sm:$0xff]
    %v7824 = vld [vmem:[%s8 + $0x28] sm:$0xff]
    %v7825 = vld [vmem:[%s8 + $0x30] sm:$0xff]
    %v7826 = vld [vmem:[%s8 + $0x38] sm:$0xff]
    %v7827 = vld [vmem:[%s8 + $0x40] sm:$0xff]
    %v7828 = vld [vmem:[%s8 + $0x48] sm:$0xff]
    %v7829 = vld [vmem:[%s8 + $0x50] sm:$0xff]
    %v7830 = vld [vmem:[%s8 + $0x58] sm:$0xff]
    %v7831 = vld [vmem:[%s8 + $0x60] sm:$0xff]
    %v7832 = vld [vmem:[%s8 + $0x68] sm:$0xff]
    %v7833 = vld [vmem:[%s8 + $0x70] sm:$0xff]
    %v7834 = vld [vmem:[%s8 + $0x78] sm:$0xff]
    %v7835 = vld [vmem:[%s8 + $0x80] sm:$0xff]
    %v7836 = vld [vmem:[%s8 + $0x88] sm:$0xff]
    %v7837 = vld [vmem:[%s8 + $0x90] sm:$0xff]
    %v7838 = vld [vmem:[%s8 + $0x98] sm:$0xff]
    %v7839 = vld [vmem:[%s8 + $0xa0] sm:$0xff]
    %v7840 = vld [vmem:[%s8 + $0xa8] sm:$0xff]
    %v7841 = vld [vmem:[%s8 + $0xb0] sm:$0xff]
    %v7842 = vld [vmem:[%s8 + $0xb8] sm:$0xff]
    %v7843 = vld [vmem:[%s8 + $0xc0] sm:$0xff]
    %v7844 = vld [vmem:[%s8 + $0xc8] sm:$0xff]
    %v7845 = vld [vmem:[%s8 + $0xd0] sm:$0xff]
    %v7846 = vld [vmem:[%s8 + $0xd8] sm:$0xff]
    %v7847 = vld [vmem:[%s8 + $0xe0] sm:$0xff]
    %v7848 = vld [vmem:[%s8 + $0xe8] sm:$0xff]
    %v7849 = vld [vmem:[%s8 + $0xf0] sm:$0xff]
    %v7850 = vld [vmem:[%s8 + $0xf8] sm:$0xff]
    %v7852 = vlaneseq
    %v7853 = vshrl.u32 %v7852, 7
    %v7854 = vsub.s32 0, %v7853
    %v7855 = vrot.slane %v7818, %v7854
    %v7856 = vlaneseq
    %v7857 = vshrl.u32 %v7856, 7
    %v7858 = vsub.s32 1, %v7857
    %v7859 = vrot.slane %v7818, %v7858
    %7862 = vmatprep.subr.mxu0 0.0
    %7863 = vmatpush1.msra.mxu0 %v7819
    %7864 = vmatprep.subr.mxu0 0.0
    %7865 = vmatpush1.msra.mxu0 %v7820
    %7866 = vmatprep.subr.mxu0 0.0
    %7867 = vmatpush1.msra.mxu0 %v7821
    %7868 = vmatprep.subr.mxu0 0.0
    %7869 = vmatpush1.msra.mxu0 %v7822
    %7870 = vmatprep.subr.mxu0 0.0
    %7871 = vmatpush1.msra.mxu0 %v7823
    %7872 = vmatprep.subr.mxu0 0.0
    %7873 = vmatpush1.msra.mxu0 %v7824
    %7874 = vmatprep.subr.mxu0 0.0
    %7875 = vmatpush1.msra.mxu0 %v7825
    %7876 = vmatprep.subr.mxu0 0.0
    %7877 = vmatpush1.msra.mxu0 %v7826
    %7878 = vmatprep.subr.mxu0 0.0
    %7879 = vmatpush1.msra.mxu0 %v7827
    %7880 = vmatprep.subr.mxu0 0.0
    %7881 = vmatpush1.msra.mxu0 %v7828
    %7882 = vmatprep.subr.mxu0 0.0
    %7883 = vmatpush1.msra.mxu0 %v7829
    %7884 = vmatprep.subr.mxu0 0.0
    %7885 = vmatpush1.msra.mxu0 %v7830
    %7886 = vmatprep.subr.mxu0 0.0
    %7887 = vmatpush1.msra.mxu0 %v7831
    %7888 = vmatprep.subr.mxu0 0.0
    %7889 = vmatpush1.msra.mxu0 %v7832
    %7890 = vmatprep.subr.mxu0 0.0
    %7891 = vmatpush1.msra.mxu0 %v7833
    %7892 = vmatprep.subr.mxu0 0.0
    %7893 = vmatpush1.msra.mxu0 %v7834
    %7894 = vmatprep.subr.mxu0 0.0
    %7895 = vmatpush1.msra.mxu0 %v7835
    %7896 = vmatprep.subr.mxu0 0.0
    %7897 = vmatpush1.msra.mxu0 %v7836
    %7898 = vmatprep.subr.mxu0 0.0
    %7899 = vmatpush1.msra.mxu0 %v7837
    %7900 = vmatprep.subr.mxu0 0.0
    %7901 = vmatpush1.msra.mxu0 %v7838
    %7902 = vmatprep.subr.mxu0 0.0
    %7903 = vmatpush1.msra.mxu0 %v7839
    %7904 = vmatprep.subr.mxu0 0.0
    %7905 = vmatpush1.msra.mxu0 %v7840
    %7906 = vmatprep.subr.mxu0 0.0
    %7907 = vmatpush1.msra.mxu0 %v7841
    %7908 = vmatprep.subr.mxu0 0.0
    %7909 = vmatpush1.msra.mxu0 %v7842
    %7910 = vmatprep.subr.mxu0 0.0
    %7911 = vmatpush1.msra.mxu0 %v7843
    %7912 = vmatprep.subr.mxu0 0.0
    %7913 = vmatpush1.msra.mxu0 %v7844
    %7914 = vmatprep.subr.mxu0 0.0
    %7915 = vmatpush1.msra.mxu0 %v7845
    %7916 = vmatprep.subr.mxu0 0.0
    %7917 = vmatpush1.msra.mxu0 %v7846
    %7918 = vmatprep.subr.mxu0 0.0
    %7919 = vmatpush1.msra.mxu0 %v7847
    %7920 = vmatprep.subr.mxu0 0.0
    %7921 = vmatpush1.msra.mxu0 %v7848
    %7922 = vmatprep.subr.mxu0 0.0
    %7923 = vmatpush1.msra.mxu0 %v7849
    %7924 = vmatprep.subr.mxu0 0.0
    %7925 = vmatpush1.msra.mxu0 %v7850
    %7926 = vmatprep.mubr.f32.mxu0 %v7859
    %7927 = vmatmul.mubr.f32.gmra.mrb[0].mxu0 %v7855
    %v7928 = vpop.f32.mrb[0].mxu0
    %v7929 = vadd.f32 0.0, %v7928
    %v7930 = vpop.f32.mrb[0].mxu0
    %7931 = vdwg.mxu0
    %7932 = vst [vmem:[#allocation3] sm:$0x1] %v7929
    %v7933 = vld [vmem:[%s8] sm:$0xff]
    %v7934 = vld [vmem:[%s8 + $0x8] sm:$0xff]
    %v7935 = vld [vmem:[%s8 + $0x10] sm:$0xff]
    %v7936 = vld [vmem:[%s8 + $0x18] sm:$0xff]
    %v7937 = vld [vmem:[%s8 + $0x20] sm:$0xff]
    %v7938 = vld [vmem:[%s8 + $0x28] sm:$0xff]
    %v7939 = vld [vmem:[%s8 + $0x30] sm:$0xff]
    %v7940 = vld [vmem:[%s8 + $0x38] sm:$0xff]
    %v7941 = vld [vmem:[%s8 + $0x40] sm:$0xff]
    %v7942 = vld [vmem:[%s8 + $0x48] sm:$0xff]
    %v7943 = vld [vmem:[%s8 + $0x50] sm:$0xff]
    %v7944 = vld [vmem:[%s8 + $0x58] sm:$0xff]
    %v7945 = vld [vmem:[%s8 + $0x60] sm:$0xff]
    %v7946 = vld [vmem:[%s8 + $0x68] sm:$0xff]
    %v7947 = vld [vmem:[%s8 + $0x70] sm:$0xff]
    %v7948 = vld [vmem:[%s8 + $0x78] sm:$0xff]
    %v7949 = vld [vmem:[%s8 + $0x80] sm:$0xff]
    %v7950 = vld [vmem:[%s8 + $0x88] sm:$0xff]
    %v7951 = vld [vmem:[%s8 + $0x90] sm:$0xff]
    %v7952 = vld [vmem:[%s8 + $0x98] sm:$0xff]
    %v7953 = vld [vmem:[%s8 + $0xa0] sm:$0xff]
    %v7954 = vld [vmem:[%s8 + $0xa8] sm:$0xff]
    %v7955 = vld [vmem:[%s8 + $0xb0] sm:$0xff]
    %v7956 = vld [vmem:[%s8 + $0xb8] sm:$0xff]
    %v7957 = vld [vmem:[%s8 + $0xc0] sm:$0xff]
    %v7958 = vld [vmem:[%s8 + $0xc8] sm:$0xff]
    %v7959 = vld [vmem:[%s8 + $0xd0] sm:$0xff]
    %v7960 = vld [vmem:[%s8 + $0xd8] sm:$0xff]
    %v7961 = vld [vmem:[%s8 + $0xe0] sm:$0xff]
    %v7962 = vld [vmem:[%s8 + $0xe8] sm:$0xff]
    %v7963 = vld [vmem:[%s8 + $0xf0] sm:$0xff]
    %v7964 = vld [vmem:[%s8 + $0xf8] sm:$0xff]
    %v7965 = vlaneseq
    %v7966 = vshrl.u32 %v7965, 7
    %v7967 = vsub.s32 2, %v7966
    %v7968 = vrot.slane %v7818, %v7967
    %v7969 = vlaneseq
    %v7970 = vshrl.u32 %v7969, 7
    %v7971 = vsub.s32 3, %v7970
    %v7972 = vrot.slane %v7818, %v7971
    %7975 = vmatprep.subr.mxu0 0.0
    %7976 = vmatpush1.msra.mxu0 %v7933
    %7977 = vmatprep.subr.mxu0 0.0
    %7978 = vmatpush1.msra.mxu0 %v7934
    %7979 = vmatprep.subr.mxu0 0.0
    %7980 = vmatpush1.msra.mxu0 %v7935
    %7981 = vmatprep.subr.mxu0 0.0
    %7982 = vmatpush1.msra.mxu0 %v7936
    %7983 = vmatprep.subr.mxu0 0.0
    %7984 = vmatpush1.msra.mxu0 %v7937
    %7985 = vmatprep.subr.mxu0 0.0
    %7986 = vmatpush1.msra.mxu0 %v7938
    %7987 = vmatprep.subr.mxu0 0.0
    %7988 = vmatpush1.msra.mxu0 %v7939
    %7989 = vmatprep.subr.mxu0 0.0
    %7990 = vmatpush1.msra.mxu0 %v7940
    %7991 = vmatprep.subr.mxu0 0.0
    %7992 = vmatpush1.msra.mxu0 %v7941
    %7993 = vmatprep.subr.mxu0 0.0
    %7994 = vmatpush1.msra.mxu0 %v7942
    %7995 = vmatprep.subr.mxu0 0.0
    %7996 = vmatpush1.msra.mxu0 %v7943
    %7997 = vmatprep.subr.mxu0 0.0
    %7998 = vmatpush1.msra.mxu0 %v7944
    %7999 = vmatprep.subr.mxu0 0.0
    %8000 = vmatpush1.msra.mxu0 %v7945
    %8001 = vmatprep.subr.mxu0 0.0
    %8002 = vmatpush1.msra.mxu0 %v7946
    %8003 = vmatprep.subr.mxu0 0.0
    %8004 = vmatpush1.msra.mxu0 %v7947
    %8005 = vmatprep.subr.mxu0 0.0
    %8006 = vmatpush1.msra.mxu0 %v7948
    %8007 = vmatprep.subr.mxu0 0.0
    %8008 = vmatpush1.msra.mxu0 %v7949
    %8009 = vmatprep.subr.mxu0 0.0
    %8010 = vmatpush1.msra.mxu0 %v7950
    %8011 = vmatprep.subr.mxu0 0.0
    %8012 = vmatpush1.msra.mxu0 %v7951
    %8013 = vmatprep.subr.mxu0 0.0
    %8014 = vmatpush1.msra.mxu0 %v7952
    %8015 = vmatprep.subr.mxu0 0.0
    %8016 = vmatpush1.msra.mxu0 %v7953
    %8017 = vmatprep.subr.mxu0 0.0
    %8018 = vmatpush1.msra.mxu0 %v7954
    %8019 = vmatprep.subr.mxu0 0.0
    %8020 = vmatpush1.msra.mxu0 %v7955
    %8021 = vmatprep.subr.mxu0 0.0
    %8022 = vmatpush1.msra.mxu0 %v7956
    %8023 = vmatprep.subr.mxu0 0.0
    %8024 = vmatpush1.msra.mxu0 %v7957
    %8025 = vmatprep.subr.mxu0 0.0
    %8026 = vmatpush1.msra.mxu0 %v7958
    %8027 = vmatprep.subr.mxu0 0.0
    %8028 = vmatpush1.msra.mxu0 %v7959
    %8029 = vmatprep.subr.mxu0 0.0
    %8030 = vmatpush1.msra.mxu0 %v7960
    %8031 = vmatprep.subr.mxu0 0.0
    %8032 = vmatpush1.msra.mxu0 %v7961
    %8033 = vmatprep.subr.mxu0 0.0
    %8034 = vmatpush1.msra.mxu0 %v7962
    %8035 = vmatprep.subr.mxu0 0.0
    %8036 = vmatpush1.msra.mxu0 %v7963
    %8037 = vmatprep.subr.mxu0 0.0
    %8038 = vmatpush1.msra.mxu0 %v7964
    %8039 = vmatprep.mubr.f32.mxu0 %v7972
    %8040 = vmatmul.mubr.f32.gmra.mrb[0].mxu0 %v7968
    %v8041 = vpop.f32.mrb[0].mxu0
    %v8042 = vadd.f32 0.0, %v8041
    %v8043 = vpop.f32.mrb[0].mxu0
    %8044 = vdwg.mxu0
    %8045 = vst [vmem:[#allocation3 + $0x1] sm:$0x1] %v8042
    // Predicated region
    $region38: #{_forward_impl.1} parent=1 // pred_check
      _
    $region39: #{_forward_impl.1} parent=1 // pred_check_branch
      %8047 = sbr.rel (0) target = $region41
    $region40: #{_forward_impl.1} parent=1 // pred_region
      %s8049 = ssub.s32 32, 32
      %8050 = vsyncadd [#allocation4], %s8049
      %s8052 = sshll.u32 [#allocation3], 4
      %s8053 = int_to_ptr.vmem [resolvable:$true] %s8052
      %8055 = dma.vmem_to_hbm [thread:$0]  %s8053, 32, %s9, [#allocation4]
    $region41: #{_forward_impl.1} parent=1 // pred_fallthru
      _
    // Predicated region
    $region42: #{_forward_impl.1} parent=1 // pred_check
      _
    $region43: #{_forward_impl.1} parent=1 // pred_check_branch
      %8057 = sbr.rel (0) target = $region45
    $region44: #{_forward_impl.1} parent=1 // pred_region
      %8058 = dma.done [#allocation4], 32
    $region45: #{_forward_impl.1} parent=1 // pred_fallthru
      _
    %8059 = vsyncpa [#allocation4], 1

</llo_original>
